<compile_context>
chip_gen: v7x
topology: tpu7x:2x2x1
jax: 0.10.0
libtpu: 0.0.40
codegen_flags: <defaults>
</compile_context>

<pallas_src>
import jax
import jax.numpy as jnp
from jax import lax
from jax.experimental import pallas as pl
from jax.experimental.pallas import tpu as pltpu

DN_FILTERS = 128
BN_EPS = 1e-5

_VMEM_BUDGET = 48 * 1024 * 1024   # conservative vs v7x's 64 MiB per-TC VMEM


# ---------------------------------------------------------------------------
# Tiling / VMEM planning
# ---------------------------------------------------------------------------

def _vmem_step_bytes(bt, H, W, C=DN_FILTERS, in_bytes=4):
    """Rough per-grid-step VMEM requirement for the conv kernels."""
    act_in = bt * H * W * C * in_bytes          # input activation tile
    act_out = bt * H * W * C * 2                # bf16 intermediate output tile
    pad = bt * (H + 2) * (W + 2) * C * 2        # bf16 padded scratch
    patches = bt * H * W * 3 * C * 2            # one per-row im2col slab (bf16)
    acc = bt * H * W * C * 4                    # f32 matmul accumulator
    w = 9 * C * C * 2                           # resident bf16 weights
    # double-buffered ins/outs + scratch + temporaries + weights + headroom
    return 2 * (act_in + act_out) + pad + patches + acc + 2 * w + (2 << 20)


def _choose_batch_tile(N, H, W):
    """Largest divisor of N such that NT >= 2 (v7x megacore), VMEM fits, and
    we stop growing once M = bt*H*W >= 512 (MXU M-fill has saturated)."""
    best = 1
    bt = 1
    while bt <= N:
        if N % bt == 0:
            if N >= 2 and N // bt < 2:
                break                              # keep NT >= 2 for v7x's 2 TCs
            if _vmem_step_bytes(bt, H, W) > _VMEM_BUDGET:
                break
            best = bt
            if bt * H * W >= 512:
                break
        bt += 1
    return best


def _mosaic_params(bt, H, W):
    est = _vmem_step_bytes(bt, H, W)
    limit = int(min(max(2 * est, 32 << 20), 64 << 20))
    return pltpu.CompilerParams(dimension_semantics=("parallel",),
                                vmem_limit_bytes=limit)


# ---------------------------------------------------------------------------
# In-kernel helpers
# ---------------------------------------------------------------------------

def _fill_padded(pad_ref, interior, H, W):
    """Write `interior` (BT,H,W,C) into the (BT,H+2,W+2,C) scratch interior and
    zero the 1-pixel border.  Done every step: the scratch is per-core under
    megacore "parallel" sharding, so a program_id==0 guard would be unsafe."""
    BT = interior.shape[0]
    C = interior.shape[-1]
    zrow = jnp.zeros((BT, 1, W + 2, C), pad_ref.dtype)
    zcol = jnp.zeros((BT, H, 1, C), pad_ref.dtype)
    pad_ref[:, 0:1, :, :] = zrow
    pad_ref[:, H + 1:H + 2, :, :] = zrow
    pad_ref[:, 1:H + 1, 0:1, :] = zcol
    pad_ref[:, 1:H + 1, W + 1:W + 2, :] = zcol
    pad_ref[:, 1:H + 1, 1:W + 1, :] = interior


def _conv3x3(pad_ref, w_ref, H, W, C):
    """3x3 'same' conv as three K = 3*C matmuls (one per kernel row) on the
    MXU, accumulated in f32.  bf16 operands, f32 accumulation.  Same MXU work
    as a single K=9C matmul but a 3x smaller im2col slab."""
    acc = None
    for dy in range(3):
        taps = [pad_ref[:, dy:dy + H, dx:dx + W, :] for dx in range(3)]
        patches = jnp.concatenate(taps, axis=-1)          # (BT, H, W, 3C) bf16
        w_dy = w_ref[dy * 3 * C:(dy + 1) * 3 * C, :]      # (3C, C) bf16, 8-aligned slice
        part = lax.dot_general(
            patches, w_dy,
            dimension_numbers=(((3,), (0,)), ((), ())),
            preferred_element_type=jnp.float32)           # (BT, H, W, C) f32
        acc = part if acc is None else acc + part
    return acc


def _partial_stats(y, C):
    """One-pass per-tile, per-channel (sum, sum-of-squares) -> (1, 2, C) f32.
    Computed from the f32 accumulation (not the bf16-stored activation)."""
    yf = y.reshape(-1, C)
    s = jnp.sum(yf, axis=0, keepdims=True)
    ss = jnp.sum(yf * yf, axis=0, keepdims=True)
    return jnp.concatenate([s, ss], axis=0)[None]


# ---------------------------------------------------------------------------
# Kernels
# ---------------------------------------------------------------------------

def _conv1_kernel(x_ref, w_ref, h_ref, stats_ref, pad_ref):
    BT, H, W, C = x_ref.shape
    _fill_padded(pad_ref, x_ref[...].astype(pad_ref.dtype), H, W)
    y = _conv3x3(pad_ref, w_ref, H, W, C)          # f32 (bias dropped: BN cancels it)
    h_ref[...] = y.astype(h_ref.dtype)             # bf16 intermediate to HBM
    stats_ref[...] = _partial_stats(y, C)


def _bn_relu_conv2_kernel(h_ref, aff_ref, w_ref, h2_ref, stats_ref, pad_ref):
    BT, H, W, C = h_ref.shape
    aff = aff_ref[...]                             # (2, C): [scale, shift]
    scale = aff[0:1, :].reshape(1, 1, 1, C)
    shift = aff[1:2, :].reshape(1, 1, 1, C)
    a = jnp.maximum(h_ref[...].astype(jnp.float32) * scale + shift, 0.0)  # BN1 + ReLU
    _fill_padded(pad_ref, a.astype(pad_ref.dtype), H, W)
    y = _conv3x3(pad_ref, w_ref, H, W, C)
    h2_ref[...] = y.astype(h2_ref.dtype)           # bf16 intermediate to HBM
    stats_ref[...] = _partial_stats(y, C)


def _bn_residual_kernel(h2_ref, x_ref, aff_ref, out_ref):
    BT, H, W, C = h2_ref.shape
    aff = aff_ref[...]
    scale = aff[0:1, :].reshape(1, 1, 1, C)
    shift = aff[1:2, :].reshape(1, 1, 1, C)
    out_ref[...] = jnp.maximum(
        h2_ref[...].astype(jnp.float32) * scale + shift + x_ref[...], 0.0)


# ---------------------------------------------------------------------------
# pallas_call wrappers (batch-tiled grid, resident weights, parallel semantics)
# ---------------------------------------------------------------------------

def _act_spec(batch_tile, H, W, C):
    return pl.BlockSpec((batch_tile, H, W, C), lambda i: (i, 0, 0, 0))


def _call_conv1(x, w, batch_tile, cparams):
    N, H, W, C = x.shape
    NT = N // batch_tile
    spec_act = _act_spec(batch_tile, H, W, C)
    return pl.pallas_call(
        _conv1_kernel,
        grid=(NT,),
        in_specs=[spec_act,
                  pl.BlockSpec((9 * C, C), lambda i: (0, 0))],       # weights resident
        out_specs=(spec_act,
                   pl.BlockSpec((1, 2, C), lambda i: (i, 0, 0))),
        out_shape=(jax.ShapeDtypeStruct((N, H, W, C), jnp.bfloat16),  # bf16 h1
                   jax.ShapeDtypeStruct((NT, 2, C), jnp.float32)),
        scratch_shapes=[pltpu.VMEM((batch_tile, H + 2, W + 2, C), jnp.bfloat16)],
        compiler_params=cparams,
    )(x, w)


def _call_bn_relu_conv2(h1, aff1, w, batch_tile, cparams):
    N, H, W, C = h1.shape
    NT = N // batch_tile
    spec_act = _act_spec(batch_tile, H, W, C)
    return pl.pallas_call(
        _bn_relu_conv2_kernel,
        grid=(NT,),
        in_specs=[spec_act,
                  pl.BlockSpec((2, C), lambda i: (0, 0)),             # packed scale/shift
                  pl.BlockSpec((9 * C, C), lambda i: (0, 0))],
        out_specs=(spec_act,
                   pl.BlockSpec((1, 2, C), lambda i: (i, 0, 0))),
        out_shape=(jax.ShapeDtypeStruct((N, H, W, C), jnp.bfloat16),  # bf16 h2
                   jax.ShapeDtypeStruct((NT, 2, C), jnp.float32)),
        scratch_shapes=[pltpu.VMEM((batch_tile, H + 2, W + 2, C), jnp.bfloat16)],
        compiler_params=cparams,
    )(h1, aff1, w)


def _call_bn_residual(h2, x, aff2, batch_tile, cparams):
    N, H, W, C = h2.shape
    NT = N // batch_tile
    spec_act = _act_spec(batch_tile, H, W, C)
    return pl.pallas_call(
        _bn_residual_kernel,
        grid=(NT,),
        in_specs=[spec_act, spec_act,
                  pl.BlockSpec((2, C), lambda i: (0, 0))],
        out_specs=spec_act,
        out_shape=jax.ShapeDtypeStruct((N, H, W, C), jnp.float32),
        compiler_params=cparams,
    )(h2, x, aff2)


# ---------------------------------------------------------------------------
# Host-side glue
# ---------------------------------------------------------------------------

def _prep_weight(w_pt):
    """PyTorch (Cout, Cin, 3, 3) -> im2col layout (9*Cin, Cout), bf16 for the MXU.
    Row order is (dy, dx, cin), so a dy-slice of 3*Cin rows matches the per-row
    patches built inside the kernel."""
    w = jnp.transpose(w_pt, (2, 3, 1, 0))                    # (kh, kw, Cin, Cout)
    kh, kw, cin, cout = w.shape
    return w.reshape(kh * kw * cin, cout).astype(jnp.bfloat16)


def _fold_bn(partial_stats, gamma, beta, count):
    """Fold train-mode BN into per-channel (scale, shift), packed as (2, C).
    One-pass variance in f32; fine for activation-scale data (see reference)."""
    s = jnp.sum(partial_stats[:, 0, :], axis=0)
    ss = jnp.sum(partial_stats[:, 1, :], axis=0)
    mean = s / count
    var = ss / count - mean * mean                            # biased variance
    scale = gamma * lax.rsqrt(var + BN_EPS)
    shift = beta - mean * scale
    return jnp.stack([scale, shift]).astype(jnp.float32)


def residual_block(x_nchw, params, *, batch_tile=None):
    """x_nchw: (N, 128, H, W) float32.  Returns (N, 128, H, W) float32."""
    N, C, H, W = x_nchw.shape
    assert C == DN_FILTERS
    if batch_tile is None:
        batch_tile = _choose_batch_tile(N, H, W)
    assert N % batch_tile == 0

    x = jnp.transpose(x_nchw, (0, 2, 3, 1))                   # NHWC: channels -> lanes
    count = N * H * W
    cparams = _mosaic_params(batch_tile, H, W)

    w1 = _prep_weight(params["w1"])
    w2 = _prep_weight(params["w2"])
    # Conv biases b1/b2 are NOT used: batch-statistics BN cancels them exactly.
    # TODO(synk): this shortcut is only valid for train-mode (batch-stats) BN.

    h1, st1 = _call_conv1(x, w1, batch_tile, cparams)
    aff1 = _fold_bn(st1, params["g1"], params["be1"], count)
    h2, st2 = _call_bn_relu_conv2(h1, aff1, w2, batch_tile, cparams)
    aff2 = _fold_bn(st2, params["g2"], params["be2"], count)
    out = _call_bn_residual(h2, x, aff2, batch_tile, cparams)

    return jnp.transpose(out, (0, 3, 1, 2))                   # back to NCHW


# ---------------------------------------------------------------------------
# Reference + demo
# ---------------------------------------------------------------------------

def _reference(x_nchw, params):
    """Module semantics in JAX.  Conv operands are cast to bf16 (f32
    accumulation) to match the kernel's deliberate MXU precision choice;
    BN / bias / ReLU / residual remain f32."""
    x = jnp.transpose(x_nchw, (0, 2, 3, 1))

    def conv(h, w_pt, b):
        w = jnp.transpose(w_pt, (2, 3, 1, 0))                 # HWIO
        y = lax.conv_general_dilated(
            h.astype(jnp.bfloat16), w.astype(jnp.bfloat16), (1, 1), "SAME",
            dimension_numbers=("NHWC", "HWIO", "NHWC"),
            preferred_element_type=jnp.float32)
        return y + b                                          # bias kept; BN cancels it

    def bn(y, g, be):
        mean = jnp.mean(y, axis=(0, 1, 2))
        var = jnp.mean((y - mean) ** 2, axis=(0, 1, 2))
        return (y - mean) * lax.rsqrt(var + BN_EPS) * g + be

    h = jnp.maximum(bn(conv(x, params["w1"], params["b1"]), params["g1"], params["be1"]), 0.0)
    h = bn(conv(h, params["w2"], params["b2"]), params["g2"], params["be2"])
    out = jnp.maximum(h + x, 0.0)
    return jnp.transpose(out, (0, 3, 1, 2))


def _init_params(key):
    ks = jax.random.split(key, 8)
    C = DN_FILTERS
    scale = 1.0 / jnp.sqrt(C * 9.0)
    return {
        "w1": jax.random.normal(ks[0], (C, C, 3, 3), jnp.float32) * scale,
        "b1": jax.random.normal(ks[1], (C,), jnp.float32) * 0.05,
        "g1": 1.0 + 0.1 * jax.random.normal(ks[2], (C,), jnp.float32),
        "be1": 0.05 * jax.random.normal(ks[3], (C,), jnp.float32),
        "w2": jax.random.normal(ks[4], (C, C, 3, 3), jnp.float32) * scale,
        "b2": jax.random.normal(ks[5], (C,), jnp.float32) * 0.05,
        "g2": 1.0 + 0.1 * jax.random.normal(ks[6], (C,), jnp.float32),
        "be2": 0.05 * jax.random.normal(ks[7], (C,), jnp.float32),
    }


if __name__ == "__main__":
    key = jax.random.PRNGKey(0)
    k_x, k_p = jax.random.split(key)

    # N=8 lets the auto-chosen batch_tile reach 4 -> matmul M = 4*8*8 = 256
    # with NT = 2 grid steps (so v7x can still use both TensorCores).
    N, C, H, W = 8, DN_FILTERS, 8, 8
    x = jax.random.normal(k_x, (N, C, H, W), jnp.float32)
    params = _init_params(k_p)

    fn = jax.jit(lambda xi: residual_block(xi, params))
    out = jax.block_until_ready(fn(x))

    ref = jax.block_until_ready(_reference(x, params))
    assert out.shape == (N, C, H, W)
    max_err = float(jnp.max(jnp.abs(out - ref)))
    # Residual drift comes from the MXU vs XLA-conv accumulation order and from
    # storing the h1/h2 intermediates in bf16 (a deliberate HBM-traffic trade).
    assert jnp.allclose(out, ref, atol=2.5e-2, rtol=2.5e-2), max_err

    print("KERNEL_OK")
</pallas_src>

<mosaic_0001>
module attributes {stable_mosaic.version = 11 : i64} {
  func.func @_conv1_kernel(%arg0: i32, %arg1: memref<4x8x8x128xf32, #tpu.memory_space<vmem>>, %arg2: memref<1152x128xbf16, #tpu.memory_space<vmem>>, %arg3: memref<4x8x8x128xbf16, #tpu.memory_space<vmem>>, %arg4: memref<1x2x128xf32, #tpu.memory_space<vmem>>, %arg5: memref<4x10x10x128xbf16, #tpu.memory_space<vmem>>) attributes {dimension_semantics = [#tpu.dimension_semantics<parallel>], iteration_bounds = array<i64: 2>, scalar_prefetch = 0 : i64, scratch_operands = 1 : i64, tpu.core_type = #tpu.core_type<tc>, window_params = [{transform_indices = @transform_0, window_bounds = array<i64: 4, 8, 8, 128>}, {pipeline_mode = #tpu.pipeline_mode<synchronous>, transform_indices = @transform_1, window_bounds = array<i64: 1152, 128>}, {transform_indices = @transform_2, window_bounds = array<i64: 4, 8, 8, 128>}, {transform_indices = @transform_3, window_bounds = array<i64: 1, 2, 128>}]} {
    %c0 = arith.constant 0 : index
    %c0_0 = arith.constant 0 : index
    %c0_1 = arith.constant 0 : index
    %c0_2 = arith.constant 0 : index
    %0 = vector.load %arg1[%c0, %c0_0, %c0_1, %c0_2] : memref<4x8x8x128xf32, #tpu.memory_space<vmem>>, vector<4x8x8x128xf32>
    %1 = arith.truncf %0 : vector<4x8x8x128xf32> to vector<4x8x8x128xbf16>
    %cst = arith.constant 0.000000e+00 : bf16
    %2 = vector.broadcast %cst : bf16 to vector<4x1x10x128xbf16>
    %cst_3 = arith.constant 0.000000e+00 : bf16
    %3 = vector.broadcast %cst_3 : bf16 to vector<4x8x1x128xbf16>
    %c0_4 = arith.constant 0 : index
    %c0_5 = arith.constant 0 : index
    %c0_6 = arith.constant 0 : index
    %c0_7 = arith.constant 0 : index
    %4 = vector.load %arg5[%c0_4, %c0_5, %c0_6, %c0_7] : memref<4x10x10x128xbf16, #tpu.memory_space<vmem>>, vector<4x1x10x128xbf16>
    tpu.vector_store %arg5[%c0_4, %c0_5, %c0_6, %c0_7], %2 {strides = array<i32>} : memref<4x10x10x128xbf16, #tpu.memory_space<vmem>>, vector<4x1x10x128xbf16>,
    %c0_8 = arith.constant 0 : index
    %c9 = arith.constant 9 : index
    %c0_9 = arith.constant 0 : index
    %c0_10 = arith.constant 0 : index
    %5 = vector.load %arg5[%c0_8, %c9, %c0_9, %c0_10] : memref<4x10x10x128xbf16, #tpu.memory_space<vmem>>, vector<4x1x10x128xbf16>
    tpu.vector_store %arg5[%c0_8, %c9, %c0_9, %c0_10], %2 {strides = array<i32>} : memref<4x10x10x128xbf16, #tpu.memory_space<vmem>>, vector<4x1x10x128xbf16>,
    %c0_11 = arith.constant 0 : index
    %c1 = arith.constant 1 : index
    %c0_12 = arith.constant 0 : index
    %c0_13 = arith.constant 0 : index
    %6 = vector.load %arg5[%c0_11, %c1, %c0_12, %c0_13] : memref<4x10x10x128xbf16, #tpu.memory_space<vmem>>, vector<4x8x1x128xbf16>
    tpu.vector_store %arg5[%c0_11, %c1, %c0_12, %c0_13], %3 {strides = array<i32>} : memref<4x10x10x128xbf16, #tpu.memory_space<vmem>>, vector<4x8x1x128xbf16>,
    %c0_14 = arith.constant 0 : index
    %c1_15 = arith.constant 1 : index
    %c9_16 = arith.constant 9 : index
    %c0_17 = arith.constant 0 : index
    %7 = vector.load %arg5[%c0_14, %c1_15, %c9_16, %c0_17] : memref<4x10x10x128xbf16, #tpu.memory_space<vmem>>, vector<4x8x1x128xbf16>
    tpu.vector_store %arg5[%c0_14, %c1_15, %c9_16, %c0_17], %3 {strides = array<i32>} : memref<4x10x10x128xbf16, #tpu.memory_space<vmem>>, vector<4x8x1x128xbf16>,
    %c0_18 = arith.constant 0 : index
    %c1_19 = arith.constant 1 : index
    %c1_20 = arith.constant 1 : index
    %c0_21 = arith.constant 0 : index
    %8 = vector.load %arg5[%c0_18, %c1_19, %c1_20, %c0_21] : memref<4x10x10x128xbf16, #tpu.memory_space<vmem>>, vector<4x8x8x128xbf16>
    tpu.vector_store %arg5[%c0_18, %c1_19, %c1_20, %c0_21], %1 {strides = array<i32>} : memref<4x10x10x128xbf16, #tpu.memory_space<vmem>>, vector<4x8x8x128xbf16>,
    %c0_22 = arith.constant 0 : index
    %c0_23 = arith.constant 0 : index
    %c0_24 = arith.constant 0 : index
    %c0_25 = arith.constant 0 : index
    %9 = vector.load %arg5[%c0_22, %c0_23, %c0_24, %c0_25] : memref<4x10x10x128xbf16, #tpu.memory_space<vmem>>, vector<4x8x8x128xbf16>
    %c0_26 = arith.constant 0 : index
    %c0_27 = arith.constant 0 : index
    %c1_28 = arith.constant 1 : index
    %c0_29 = arith.constant 0 : index
    %10 = vector.load %arg5[%c0_26, %c0_27, %c1_28, %c0_29] : memref<4x10x10x128xbf16, #tpu.memory_space<vmem>>, vector<4x8x8x128xbf16>
    %c0_30 = arith.constant 0 : index
    %c0_31 = arith.constant 0 : index
    %c2 = arith.constant 2 : index
    %c0_32 = arith.constant 0 : index
    %11 = vector.load %arg5[%c0_30, %c0_31, %c2, %c0_32] : memref<4x10x10x128xbf16, #tpu.memory_space<vmem>>, vector<4x8x8x128xbf16>
    %12 = tpu.concatenate %9, %10, %11 in 3 : vector<4x8x8x128xbf16>, vector<4x8x8x128xbf16>, vector<4x8x8x128xbf16> -> vector<4x8x8x384xbf16>
    %c0_33 = arith.constant 0 : index
    %c0_34 = arith.constant 0 : index
    %13 = vector.load %arg2[%c0_33, %c0_34] : memref<1152x128xbf16, #tpu.memory_space<vmem>>, vector<384x128xbf16>
    %cst_35 = arith.constant dense<0.000000e+00> : vector<4x8x8x128xf32>
    %14 = tpu.matmul %12, %13, %cst_35 {dimension_numbers = #tpu.dot_dimension_numbers<[3], [0], [0, 1, 2], [1], [0, 0, 0, 1, 0, 2, 1, 1], [], []>} : vector<4x8x8x384xbf16>, vector<384x128xbf16>, vector<4x8x8x128xf32> -> vector<4x8x8x128xf32>
    %c0_36 = arith.constant 0 : index
    %c1_37 = arith.constant 1 : index
    %c0_38 = arith.constant 0 : index
    %c0_39 = arith.constant 0 : index
    %15 = vector.load %arg5[%c0_36, %c1_37, %c0_38, %c0_39] : memref<4x10x10x128xbf16, #tpu.memory_space<vmem>>, vector<4x8x8x128xbf16>
    %c0_40 = arith.constant 0 : index
    %c1_41 = arith.constant 1 : index
    %c1_42 = arith.constant 1 : index
    %c0_43 = arith.constant 0 : index
    %16 = vector.load %arg5[%c0_40, %c1_41, %c1_42, %c0_43] : memref<4x10x10x128xbf16, #tpu.memory_space<vmem>>, vector<4x8x8x128xbf16>
    %c0_44 = arith.constant 0 : index
    %c1_45 = arith.constant 1 : index
    %c2_46 = arith.constant 2 : index
    %c0_47 = arith.constant 0 : index
    %17 = vector.load %arg5[%c0_44, %c1_45, %c2_46, %c0_47] : memref<4x10x10x128xbf16, #tpu.memory_space<vmem>>, vector<4x8x8x128xbf16>
    %18 = tpu.concatenate %15, %16, %17 in 3 : vector<4x8x8x128xbf16>, vector<4x8x8x128xbf16>, vector<4x8x8x128xbf16> -> vector<4x8x8x384xbf16>
    %c384 = arith.constant 384 : index
    %c0_48 = arith.constant 0 : index
    %19 = vector.load %arg2[%c384, %c0_48] : memref<1152x128xbf16, #tpu.memory_space<vmem>>, vector<384x128xbf16>
    %cst_49 = arith.constant dense<0.000000e+00> : vector<4x8x8x128xf32>
    %20 = tpu.matmul %18, %19, %cst_49 {dimension_numbers = #tpu.dot_dimension_numbers<[3], [0], [0, 1, 2], [1], [0, 0, 0, 1, 0, 2, 1, 1], [], []>} : vector<4x8x8x384xbf16>, vector<384x128xbf16>, vector<4x8x8x128xf32> -> vector<4x8x8x128xf32>
    %21 = arith.addf %14, %20 : vector<4x8x8x128xf32>
    %c0_50 = arith.constant 0 : index
    %c2_51 = arith.constant 2 : index
    %c0_52 = arith.constant 0 : index
    %c0_53 = arith.constant 0 : index
    %22 = vector.load %arg5[%c0_50, %c2_51, %c0_52, %c0_53] : memref<4x10x10x128xbf16, #tpu.memory_space<vmem>>, vector<4x8x8x128xbf16>
    %c0_54 = arith.constant 0 : index
    %c2_55 = arith.constant 2 : index
    %c1_56 = arith.constant 1 : index
    %c0_57 = arith.constant 0 : index
    %23 = vector.load %arg5[%c0_54, %c2_55, %c1_56, %c0_57] : memref<4x10x10x128xbf16, #tpu.memory_space<vmem>>, vector<4x8x8x128xbf16>
    %c0_58 = arith.constant 0 : index
    %c2_59 = arith.constant 2 : index
    %c2_60 = arith.constant 2 : index
    %c0_61 = arith.constant 0 : index
    %24 = vector.load %arg5[%c0_58, %c2_59, %c2_60, %c0_61] : memref<4x10x10x128xbf16, #tpu.memory_space<vmem>>, vector<4x8x8x128xbf16>
    %25 = tpu.concatenate %22, %23, %24 in 3 : vector<4x8x8x128xbf16>, vector<4x8x8x128xbf16>, vector<4x8x8x128xbf16> -> vector<4x8x8x384xbf16>
    %c768 = arith.constant 768 : index
    %c0_62 = arith.constant 0 : index
    %26 = vector.load %arg2[%c768, %c0_62] : memref<1152x128xbf16, #tpu.memory_space<vmem>>, vector<384x128xbf16>
    %cst_63 = arith.constant dense<0.000000e+00> : vector<4x8x8x128xf32>
    %27 = tpu.matmul %25, %26, %cst_63 {dimension_numbers = #tpu.dot_dimension_numbers<[3], [0], [0, 1, 2], [1], [0, 0, 0, 1, 0, 2, 1, 1], [], []>} : vector<4x8x8x384xbf16>, vector<384x128xbf16>, vector<4x8x8x128xf32> -> vector<4x8x8x128xf32>
    %28 = arith.addf %21, %27 : vector<4x8x8x128xf32>
    %29 = arith.truncf %28 : vector<4x8x8x128xf32> to vector<4x8x8x128xbf16>
    %c0_64 = arith.constant 0 : index
    %c0_65 = arith.constant 0 : index
    %c0_66 = arith.constant 0 : index
    %c0_67 = arith.constant 0 : index
    %30 = vector.load %arg3[%c0_64, %c0_65, %c0_66, %c0_67] : memref<4x8x8x128xbf16, #tpu.memory_space<vmem>>, vector<4x8x8x128xbf16>
    tpu.vector_store %arg3[%c0_64, %c0_65, %c0_66, %c0_67], %29 {strides = array<i32>} : memref<4x8x8x128xbf16, #tpu.memory_space<vmem>>, vector<4x8x8x128xbf16>,
    %31 = vector.shape_cast %28 : vector<4x8x8x128xf32> to vector<256x128xf32>
    %cst_68 = arith.constant dense<0.000000e+00> : vector<128xf32>
    %32 = vector.multi_reduction <add>, %31, %cst_68 [0] : vector<256x128xf32> to vector<128xf32>
    %33 = vector.shape_cast %32 : vector<128xf32> to vector<1x128xf32>
    %34 = arith.mulf %31, %31 : vector<256x128xf32>
    %cst_69 = arith.constant dense<0.000000e+00> : vector<128xf32>
    %35 = vector.multi_reduction <add>, %34, %cst_69 [0] : vector<256x128xf32> to vector<128xf32>
    %36 = vector.shape_cast %35 : vector<128xf32> to vector<1x128xf32>
    %37 = tpu.concatenate %33, %36 in 0 : vector<1x128xf32>, vector<1x128xf32> -> vector<2x128xf32>
    %38 = vector.shape_cast %37 : vector<2x128xf32> to vector<1x2x128xf32>
    %c0_70 = arith.constant 0 : index
    %c0_71 = arith.constant 0 : index
    %c0_72 = arith.constant 0 : index
    %39 = vector.load %arg4[%c0_70, %c0_71, %c0_72] : memref<1x2x128xf32, #tpu.memory_space<vmem>>, vector<1x2x128xf32>
    tpu.vector_store %arg4[%c0_70, %c0_71, %c0_72], %38 {strides = array<i32>} : memref<1x2x128xf32, #tpu.memory_space<vmem>>, vector<1x2x128xf32>,
    return
  }
  func.func @transform_0(%arg0: i32) -> (i32, i32, i32, i32) {
    %c0_i32 = arith.constant 0 : i32
    %c0_i32_0 = arith.constant 0 : i32
    %c0_i32_1 = arith.constant 0 : i32
    %c0_i32_2 = arith.constant 0 : i32
    return %arg0, %c0_i32, %c0_i32_0, %c0_i32_1 : i32, i32, i32, i32
  }
  func.func @transform_1(%arg0: i32) -> (i32, i32) {
    %c0_i32 = arith.constant 0 : i32
    %c0_i32_0 = arith.constant 0 : i32
    %c0_i32_1 = arith.constant 0 : i32
    return %c0_i32, %c0_i32_0 : i32, i32
  }
  func.func @transform_2(%arg0: i32) -> (i32, i32, i32, i32) {
    %c0_i32 = arith.constant 0 : i32
    %c0_i32_0 = arith.constant 0 : i32
    %c0_i32_1 = arith.constant 0 : i32
    %c0_i32_2 = arith.constant 0 : i32
    return %arg0, %c0_i32, %c0_i32_0, %c0_i32_1 : i32, i32, i32, i32
  }
  func.func @transform_3(%arg0: i32) -> (i32, i32, i32) {
    %c0_i32 = arith.constant 0 : i32
    %c0_i32_0 = arith.constant 0 : i32
    %c0_i32_1 = arith.constant 0 : i32
    return %arg0, %c0_i32, %c0_i32_0 : i32, i32, i32
  }
}

module attributes {stable_mosaic.version = 11 : i64} {
  func.func @_bn_residual_kernel(%arg0: i32, %arg1: memref<4x8x8x128xbf16, #tpu.memory_space<vmem>>, %arg2: memref<4x8x8x128xf32, #tpu.memory_space<vmem>>, %arg3: memref<2x128xf32, #tpu.memory_space<vmem>>, %arg4: memref<4x8x8x128xf32, #tpu.memory_space<vmem>>) attributes {dimension_semantics = [#tpu.dimension_semantics<parallel>], iteration_bounds = array<i64: 2>, scalar_prefetch = 0 : i64, scratch_operands = 0 : i64, tpu.core_type = #tpu.core_type<tc>, window_params = [{transform_indices = @transform_0, window_bounds = array<i64: 4, 8, 8, 128>}, {transform_indices = @transform_1, window_bounds = array<i64: 4, 8, 8, 128>}, {pipeline_mode = #tpu.pipeline_mode<synchronous>, transform_indices = @transform_2, window_bounds = array<i64: 2, 128>}, {transform_indices = @transform_3, window_bounds = array<i64: 4, 8, 8, 128>}]} {
    %c0 = arith.constant 0 : index
    %c0_0 = arith.constant 0 : index
    %0 = vector.load %arg3[%c0, %c0_0] : memref<2x128xf32, #tpu.memory_space<vmem>>, vector<2x128xf32>
    %1 = vector.extract_strided_slice %0 {offsets = [0, 0], sizes = [1, 128], strides = [1, 1]} : vector<2x128xf32> to vector<1x128xf32>
    %2 = vector.shape_cast %1 : vector<1x128xf32> to vector<1x1x1x128xf32>
    %3 = vector.extract_strided_slice %0 {offsets = [1, 0], sizes = [1, 128], strides = [1, 1]} : vector<2x128xf32> to vector<1x128xf32>
    %4 = vector.shape_cast %3 : vector<1x128xf32> to vector<1x1x1x128xf32>
    %c0_1 = arith.constant 0 : index
    %c0_2 = arith.constant 0 : index
    %c0_3 = arith.constant 0 : index
    %c0_4 = arith.constant 0 : index
    %5 = vector.load %arg1[%c0_1, %c0_2, %c0_3, %c0_4] : memref<4x8x8x128xbf16, #tpu.memory_space<vmem>>, vector<4x8x8x128xbf16>
    %6 = arith.extf %5 : vector<4x8x8x128xbf16> to vector<4x8x8x128xf32>
    %7 = vector.broadcast %2 : vector<1x1x1x128xf32> to vector<4x8x8x128xf32>
    %8 = arith.mulf %6, %7 : vector<4x8x8x128xf32>
    %9 = vector.broadcast %4 : vector<1x1x1x128xf32> to vector<4x8x8x128xf32>
    %10 = arith.addf %8, %9 : vector<4x8x8x128xf32>
    %c0_5 = arith.constant 0 : index
    %c0_6 = arith.constant 0 : index
    %c0_7 = arith.constant 0 : index
    %c0_8 = arith.constant 0 : index
    %11 = vector.load %arg2[%c0_5, %c0_6, %c0_7, %c0_8] : memref<4x8x8x128xf32, #tpu.memory_space<vmem>>, vector<4x8x8x128xf32>
    %12 = arith.addf %10, %11 : vector<4x8x8x128xf32>
    %cst = arith.constant 0.000000e+00 : f32
    %13 = vector.broadcast %cst : f32 to vector<4x8x8x128xf32>
    %14 = arith.maximumf %12, %13 : vector<4x8x8x128xf32>
    %c0_9 = arith.constant 0 : index
    %c0_10 = arith.constant 0 : index
    %c0_11 = arith.constant 0 : index
    %c0_12 = arith.constant 0 : index
    %15 = vector.load %arg4[%c0_9, %c0_10, %c0_11, %c0_12] : memref<4x8x8x128xf32, #tpu.memory_space<vmem>>, vector<4x8x8x128xf32>
    tpu.vector_store %arg4[%c0_9, %c0_10, %c0_11, %c0_12], %14 {strides = array<i32>} : memref<4x8x8x128xf32, #tpu.memory_space<vmem>>, vector<4x8x8x128xf32>,
    return
  }
  func.func @transform_0(%arg0: i32) -> (i32, i32, i32, i32) {
    %c0_i32 = arith.constant 0 : i32
    %c0_i32_0 = arith.constant 0 : i32
    %c0_i32_1 = arith.constant 0 : i32
    %c0_i32_2 = arith.constant 0 : i32
    return %arg0, %c0_i32, %c0_i32_0, %c0_i32_1 : i32, i32, i32, i32
  }
  func.func @transform_1(%arg0: i32) -> (i32, i32, i32, i32) {
    %c0_i32 = arith.constant 0 : i32
    %c0_i32_0 = arith.constant 0 : i32
    %c0_i32_1 = arith.constant 0 : i32
    %c0_i32_2 = arith.constant 0 : i32
    return %arg0, %c0_i32, %c0_i32_0, %c0_i32_1 : i32, i32, i32, i32
  }
  func.func @transform_2(%arg0: i32) -> (i32, i32) {
    %c0_i32 = arith.constant 0 : i32
    %c0_i32_0 = arith.constant 0 : i32
    %c0_i32_1 = arith.constant 0 : i32
    return %c0_i32, %c0_i32_0 : i32, i32
  }
  func.func @transform_3(%arg0: i32) -> (i32, i32, i32, i32) {
    %c0_i32 = arith.constant 0 : i32
    %c0_i32_0 = arith.constant 0 : i32
    %c0_i32_1 = arith.constant 0 : i32
    %c0_i32_2 = arith.constant 0 : i32
    return %arg0, %c0_i32, %c0_i32_0, %c0_i32_1 : i32, i32, i32, i32
  }
}

module attributes {stable_mosaic.version = 11 : i64} {
  func.func @_bn_relu_conv2_kernel(%arg0: i32, %arg1: memref<4x8x8x128xbf16, #tpu.memory_space<vmem>>, %arg2: memref<2x128xf32, #tpu.memory_space<vmem>>, %arg3: memref<1152x128xbf16, #tpu.memory_space<vmem>>, %arg4: memref<4x8x8x128xbf16, #tpu.memory_space<vmem>>, %arg5: memref<1x2x128xf32, #tpu.memory_space<vmem>>, %arg6: memref<4x10x10x128xbf16, #tpu.memory_space<vmem>>) attributes {dimension_semantics = [#tpu.dimension_semantics<parallel>], iteration_bounds = array<i64: 2>, scalar_prefetch = 0 : i64, scratch_operands = 1 : i64, tpu.core_type = #tpu.core_type<tc>, window_params = [{transform_indices = @transform_0, window_bounds = array<i64: 4, 8, 8, 128>}, {pipeline_mode = #tpu.pipeline_mode<synchronous>, transform_indices = @transform_1, window_bounds = array<i64: 2, 128>}, {pipeline_mode = #tpu.pipeline_mode<synchronous>, transform_indices = @transform_2, window_bounds = array<i64: 1152, 128>}, {transform_indices = @transform_3, window_bounds = array<i64: 4, 8, 8, 128>}, {transform_indices = @transform_4, window_bounds = array<i64: 1, 2, 128>}]} {
    %c0 = arith.constant 0 : index
    %c0_0 = arith.constant 0 : index
    %0 = vector.load %arg2[%c0, %c0_0] : memref<2x128xf32, #tpu.memory_space<vmem>>, vector<2x128xf32>
    %1 = vector.extract_strided_slice %0 {offsets = [0, 0], sizes = [1, 128], strides = [1, 1]} : vector<2x128xf32> to vector<1x128xf32>
    %2 = vector.shape_cast %1 : vector<1x128xf32> to vector<1x1x1x128xf32>
    %3 = vector.extract_strided_slice %0 {offsets = [1, 0], sizes = [1, 128], strides = [1, 1]} : vector<2x128xf32> to vector<1x128xf32>
    %4 = vector.shape_cast %3 : vector<1x128xf32> to vector<1x1x1x128xf32>
    %c0_1 = arith.constant 0 : index
    %c0_2 = arith.constant 0 : index
    %c0_3 = arith.constant 0 : index
    %c0_4 = arith.constant 0 : index
    %5 = vector.load %arg1[%c0_1, %c0_2, %c0_3, %c0_4] : memref<4x8x8x128xbf16, #tpu.memory_space<vmem>>, vector<4x8x8x128xbf16>
    %6 = arith.extf %5 : vector<4x8x8x128xbf16> to vector<4x8x8x128xf32>
    %7 = vector.broadcast %2 : vector<1x1x1x128xf32> to vector<4x8x8x128xf32>
    %8 = arith.mulf %6, %7 : vector<4x8x8x128xf32>
    %9 = vector.broadcast %4 : vector<1x1x1x128xf32> to vector<4x8x8x128xf32>
    %10 = arith.addf %8, %9 : vector<4x8x8x128xf32>
    %cst = arith.constant 0.000000e+00 : f32
    %11 = vector.broadcast %cst : f32 to vector<4x8x8x128xf32>
    %12 = arith.maximumf %10, %11 : vector<4x8x8x128xf32>
    %13 = arith.truncf %12 : vector<4x8x8x128xf32> to vector<4x8x8x128xbf16>
    %cst_5 = arith.constant 0.000000e+00 : bf16
    %14 = vector.broadcast %cst_5 : bf16 to vector<4x1x10x128xbf16>
    %cst_6 = arith.constant 0.000000e+00 : bf16
    %15 = vector.broadcast %cst_6 : bf16 to vector<4x8x1x128xbf16>
    %c0_7 = arith.constant 0 : index
    %c0_8 = arith.constant 0 : index
    %c0_9 = arith.constant 0 : index
    %c0_10 = arith.constant 0 : index
    %16 = vector.load %arg6[%c0_7, %c0_8, %c0_9, %c0_10] : memref<4x10x10x128xbf16, #tpu.memory_space<vmem>>, vector<4x1x10x128xbf16>
    tpu.vector_store %arg6[%c0_7, %c0_8, %c0_9, %c0_10], %14 {strides = array<i32>} : memref<4x10x10x128xbf16, #tpu.memory_space<vmem>>, vector<4x1x10x128xbf16>,
    %c0_11 = arith.constant 0 : index
    %c9 = arith.constant 9 : index
    %c0_12 = arith.constant 0 : index
    %c0_13 = arith.constant 0 : index
    %17 = vector.load %arg6[%c0_11, %c9, %c0_12, %c0_13] : memref<4x10x10x128xbf16, #tpu.memory_space<vmem>>, vector<4x1x10x128xbf16>
    tpu.vector_store %arg6[%c0_11, %c9, %c0_12, %c0_13], %14 {strides = array<i32>} : memref<4x10x10x128xbf16, #tpu.memory_space<vmem>>, vector<4x1x10x128xbf16>,
    %c0_14 = arith.constant 0 : index
    %c1 = arith.constant 1 : index
    %c0_15 = arith.constant 0 : index
    %c0_16 = arith.constant 0 : index
    %18 = vector.load %arg6[%c0_14, %c1, %c0_15, %c0_16] : memref<4x10x10x128xbf16, #tpu.memory_space<vmem>>, vector<4x8x1x128xbf16>
    tpu.vector_store %arg6[%c0_14, %c1, %c0_15, %c0_16], %15 {strides = array<i32>} : memref<4x10x10x128xbf16, #tpu.memory_space<vmem>>, vector<4x8x1x128xbf16>,
    %c0_17 = arith.constant 0 : index
    %c1_18 = arith.constant 1 : index
    %c9_19 = arith.constant 9 : index
    %c0_20 = arith.constant 0 : index
    %19 = vector.load %arg6[%c0_17, %c1_18, %c9_19, %c0_20] : memref<4x10x10x128xbf16, #tpu.memory_space<vmem>>, vector<4x8x1x128xbf16>
    tpu.vector_store %arg6[%c0_17, %c1_18, %c9_19, %c0_20], %15 {strides = array<i32>} : memref<4x10x10x128xbf16, #tpu.memory_space<vmem>>, vector<4x8x1x128xbf16>,
    %c0_21 = arith.constant 0 : index
    %c1_22 = arith.constant 1 : index
    %c1_23 = arith.constant 1 : index
    %c0_24 = arith.constant 0 : index
    %20 = vector.load %arg6[%c0_21, %c1_22, %c1_23, %c0_24] : memref<4x10x10x128xbf16, #tpu.memory_space<vmem>>, vector<4x8x8x128xbf16>
    tpu.vector_store %arg6[%c0_21, %c1_22, %c1_23, %c0_24], %13 {strides = array<i32>} : memref<4x10x10x128xbf16, #tpu.memory_space<vmem>>, vector<4x8x8x128xbf16>,
    %c0_25 = arith.constant 0 : index
    %c0_26 = arith.constant 0 : index
    %c0_27 = arith.constant 0 : index
    %c0_28 = arith.constant 0 : index
    %21 = vector.load %arg6[%c0_25, %c0_26, %c0_27, %c0_28] : memref<4x10x10x128xbf16, #tpu.memory_space<vmem>>, vector<4x8x8x128xbf16>
    %c0_29 = arith.constant 0 : index
    %c0_30 = arith.constant 0 : index
    %c1_31 = arith.constant 1 : index
    %c0_32 = arith.constant 0 : index
    %22 = vector.load %arg6[%c0_29, %c0_30, %c1_31, %c0_32] : memref<4x10x10x128xbf16, #tpu.memory_space<vmem>>, vector<4x8x8x128xbf16>
    %c0_33 = arith.constant 0 : index
    %c0_34 = arith.constant 0 : index
    %c2 = arith.constant 2 : index
    %c0_35 = arith.constant 0 : index
    %23 = vector.load %arg6[%c0_33, %c0_34, %c2, %c0_35] : memref<4x10x10x128xbf16, #tpu.memory_space<vmem>>, vector<4x8x8x128xbf16>
    %24 = tpu.concatenate %21, %22, %23 in 3 : vector<4x8x8x128xbf16>, vector<4x8x8x128xbf16>, vector<4x8x8x128xbf16> -> vector<4x8x8x384xbf16>
    %c0_36 = arith.constant 0 : index
    %c0_37 = arith.constant 0 : index
    %25 = vector.load %arg3[%c0_36, %c0_37] : memref<1152x128xbf16, #tpu.memory_space<vmem>>, vector<384x128xbf16>
    %cst_38 = arith.constant dense<0.000000e+00> : vector<4x8x8x128xf32>
    %26 = tpu.matmul %24, %25, %cst_38 {dimension_numbers = #tpu.dot_dimension_numbers<[3], [0], [0, 1, 2], [1], [0, 0, 0, 1, 0, 2, 1, 1], [], []>} : vector<4x8x8x384xbf16>, vector<384x128xbf16>, vector<4x8x8x128xf32> -> vector<4x8x8x128xf32>
    %c0_39 = arith.constant 0 : index
    %c1_40 = arith.constant 1 : index
    %c0_41 = arith.constant 0 : index
    %c0_42 = arith.constant 0 : index
    %27 = vector.load %arg6[%c0_39, %c1_40, %c0_41, %c0_42] : memref<4x10x10x128xbf16, #tpu.memory_space<vmem>>, vector<4x8x8x128xbf16>
    %c0_43 = arith.constant 0 : index
    %c1_44 = arith.constant 1 : index
    %c1_45 = arith.constant 1 : index
    %c0_46 = arith.constant 0 : index
    %28 = vector.load %arg6[%c0_43, %c1_44, %c1_45, %c0_46] : memref<4x10x10x128xbf16, #tpu.memory_space<vmem>>, vector<4x8x8x128xbf16>
    %c0_47 = arith.constant 0 : index
    %c1_48 = arith.constant 1 : index
    %c2_49 = arith.constant 2 : index
    %c0_50 = arith.constant 0 : index
    %29 = vector.load %arg6[%c0_47, %c1_48, %c2_49, %c0_50] : memref<4x10x10x128xbf16, #tpu.memory_space<vmem>>, vector<4x8x8x128xbf16>
    %30 = tpu.concatenate %27, %28, %29 in 3 : vector<4x8x8x128xbf16>, vector<4x8x8x128xbf16>, vector<4x8x8x128xbf16> -> vector<4x8x8x384xbf16>
    %c384 = arith.constant 384 : index
    %c0_51 = arith.constant 0 : index
    %31 = vector.load %arg3[%c384, %c0_51] : memref<1152x128xbf16, #tpu.memory_space<vmem>>, vector<384x128xbf16>
    %cst_52 = arith.constant dense<0.000000e+00> : vector<4x8x8x128xf32>
    %32 = tpu.matmul %30, %31, %cst_52 {dimension_numbers = #tpu.dot_dimension_numbers<[3], [0], [0, 1, 2], [1], [0, 0, 0, 1, 0, 2, 1, 1], [], []>} : vector<4x8x8x384xbf16>, vector<384x128xbf16>, vector<4x8x8x128xf32> -> vector<4x8x8x128xf32>
    %33 = arith.addf %26, %32 : vector<4x8x8x128xf32>
    %c0_53 = arith.constant 0 : index
    %c2_54 = arith.constant 2 : index
    %c0_55 = arith.constant 0 : index
    %c0_56 = arith.constant 0 : index
    %34 = vector.load %arg6[%c0_53, %c2_54, %c0_55, %c0_56] : memref<4x10x10x128xbf16, #tpu.memory_space<vmem>>, vector<4x8x8x128xbf16>
    %c0_57 = arith.constant 0 : index
    %c2_58 = arith.constant 2 : index
    %c1_59 = arith.constant 1 : index
    %c0_60 = arith.constant 0 : index
    %35 = vector.load %arg6[%c0_57, %c2_58, %c1_59, %c0_60] : memref<4x10x10x128xbf16, #tpu.memory_space<vmem>>, vector<4x8x8x128xbf16>
    %c0_61 = arith.constant 0 : index
    %c2_62 = arith.constant 2 : index
    %c2_63 = arith.constant 2 : index
    %c0_64 = arith.constant 0 : index
    %36 = vector.load %arg6[%c0_61, %c2_62, %c2_63, %c0_64] : memref<4x10x10x128xbf16, #tpu.memory_space<vmem>>, vector<4x8x8x128xbf16>
    %37 = tpu.concatenate %34, %35, %36 in 3 : vector<4x8x8x128xbf16>, vector<4x8x8x128xbf16>, vector<4x8x8x128xbf16> -> vector<4x8x8x384xbf16>
    %c768 = arith.constant 768 : index
    %c0_65 = arith.constant 0 : index
    %38 = vector.load %arg3[%c768, %c0_65] : memref<1152x128xbf16, #tpu.memory_space<vmem>>, vector<384x128xbf16>
    %cst_66 = arith.constant dense<0.000000e+00> : vector<4x8x8x128xf32>
    %39 = tpu.matmul %37, %38, %cst_66 {dimension_numbers = #tpu.dot_dimension_numbers<[3], [0], [0, 1, 2], [1], [0, 0, 0, 1, 0, 2, 1, 1], [], []>} : vector<4x8x8x384xbf16>, vector<384x128xbf16>, vector<4x8x8x128xf32> -> vector<4x8x8x128xf32>
    %40 = arith.addf %33, %39 : vector<4x8x8x128xf32>
    %41 = arith.truncf %40 : vector<4x8x8x128xf32> to vector<4x8x8x128xbf16>
    %c0_67 = arith.constant 0 : index
    %c0_68 = arith.constant 0 : index
    %c0_69 = arith.constant 0 : index
    %c0_70 = arith.constant 0 : index
    %42 = vector.load %arg4[%c0_67, %c0_68, %c0_69, %c0_70] : memref<4x8x8x128xbf16, #tpu.memory_space<vmem>>, vector<4x8x8x128xbf16>
    tpu.vector_store %arg4[%c0_67, %c0_68, %c0_69, %c0_70], %41 {strides = array<i32>} : memref<4x8x8x128xbf16, #tpu.memory_space<vmem>>, vector<4x8x8x128xbf16>,
    %43 = vector.shape_cast %40 : vector<4x8x8x128xf32> to vector<256x128xf32>
    %cst_71 = arith.constant dense<0.000000e+00> : vector<128xf32>
    %44 = vector.multi_reduction <add>, %43, %cst_71 [0] : vector<256x128xf32> to vector<128xf32>
    %45 = vector.shape_cast %44 : vector<128xf32> to vector<1x128xf32>
    %46 = arith.mulf %43, %43 : vector<256x128xf32>
    %cst_72 = arith.constant dense<0.000000e+00> : vector<128xf32>
    %47 = vector.multi_reduction <add>, %46, %cst_72 [0] : vector<256x128xf32> to vector<128xf32>
    %48 = vector.shape_cast %47 : vector<128xf32> to vector<1x128xf32>
    %49 = tpu.concatenate %45, %48 in 0 : vector<1x128xf32>, vector<1x128xf32> -> vector<2x128xf32>
    %50 = vector.shape_cast %49 : vector<2x128xf32> to vector<1x2x128xf32>
    %c0_73 = arith.constant 0 : index
    %c0_74 = arith.constant 0 : index
    %c0_75 = arith.constant 0 : index
    %51 = vector.load %arg5[%c0_73, %c0_74, %c0_75] : memref<1x2x128xf32, #tpu.memory_space<vmem>>, vector<1x2x128xf32>
    tpu.vector_store %arg5[%c0_73, %c0_74, %c0_75], %50 {strides = array<i32>} : memref<1x2x128xf32, #tpu.memory_space<vmem>>, vector<1x2x128xf32>,
    return
  }
  func.func @transform_0(%arg0: i32) -> (i32, i32, i32, i32) {
    %c0_i32 = arith.constant 0 : i32
    %c0_i32_0 = arith.constant 0 : i32
    %c0_i32_1 = arith.constant 0 : i32
    %c0_i32_2 = arith.constant 0 : i32
    return %arg0, %c0_i32, %c0_i32_0, %c0_i32_1 : i32, i32, i32, i32
  }
  func.func @transform_1(%arg0: i32) -> (i32, i32) {
    %c0_i32 = arith.constant 0 : i32
    %c0_i32_0 = arith.constant 0 : i32
    %c0_i32_1 = arith.constant 0 : i32
    return %c0_i32, %c0_i32_0 : i32, i32
  }
  func.func @transform_2(%arg0: i32) -> (i32, i32) {
    %c0_i32 = arith.constant 0 : i32
    %c0_i32_0 = arith.constant 0 : i32
    %c0_i32_1 = arith.constant 0 : i32
    return %c0_i32, %c0_i32_0 : i32, i32
  }
  func.func @transform_3(%arg0: i32) -> (i32, i32, i32, i32) {
    %c0_i32 = arith.constant 0 : i32
    %c0_i32_0 = arith.constant 0 : i32
    %c0_i32_1 = arith.constant 0 : i32
    %c0_i32_2 = arith.constant 0 : i32
    return %arg0, %c0_i32, %c0_i32_0, %c0_i32_1 : i32, i32, i32, i32
  }
  func.func @transform_4(%arg0: i32) -> (i32, i32, i32) {
    %c0_i32 = arith.constant 0 : i32
    %c0_i32_0 = arith.constant 0 : i32
    %c0_i32_1 = arith.constant 0 : i32
    return %arg0, %c0_i32, %c0_i32_0 : i32, i32, i32
  }
}

</mosaic_0001>

<llo_original>
// kernel: _lambda_.5
$region0: #{_lambda_.5}
  #allocation0 [shape = 'u32[]', space=smem, size = 0x4, offset = 0x4, fixed_abs, tag = 'smem constant byte address 0x4 - core index']
  #allocation1 [shape = 'u32[144,128]{1,0:T(1,128)}', space=vmem, size = 0x12000, scoped, tag = 'internal scratch']
  %s0 = inlined_call_operand.vmem [shape: bf16[8,8,8,128], index: 0, kind: input, shape index: {}]
  %s1 = inlined_call_operand.vmem [shape: f32[8,8,8,128], index: 1, kind: input, shape index: {}]
  %s2 = inlined_call_operand.vmem [shape: f32[2,128], index: 2, kind: input, shape index: {}]
  %s3 = inlined_call_operand.hbm [shape: f32[8,8,8,128], index: 3, kind: output, shape index: {}]
  %s4 = sld [smem:[#allocation0]]
  $region45: #{_lambda_.5} parent=0
    _
  %s6 = ssub.s32 1, %s4
  %s7 = scalar_select 0, %s6, %s4
  $region1: #{_lambda_.5} parent=0
    #allocation2 [shape = 'u8[262144]{0}', space=vmem, size = 0x40000, scoped, tag = 'output window, operand 0']
    #allocation3 [shape = 's32[2]{0}', space=sflag, size = 0x8, scoped, tag = 'scoped memory for _lambda_.5']
    %8 = vsyncpa [#allocation3], 0
    %s9 = scalar_lea.sflag [#allocation3], 1
    %10 = vsyncpa %s9, 0
    loop: start=0, step=1, limit=4
    $region2: #{_lambda_.5} parent=1 // loop_pre_header
      _
    $region3: #{_lambda_.5} parent=1 // loop_header
      %s12 = sphi 0, %s16
      %p13 = scmp.ge.s32.totalorder %s12, 4
      %s22 = sphi 0, %s24
      %s25 = sphi 0, %s22
      %s26 = sphi 0, %s25
      %s42 = sphi 0, %s26
      %s48 = sphi 0, %s50
      %s51 = sphi 0, %s48
      %s52 = sphi 0, %s51
      %s68 = sphi 0, %s52
      %s72 = sphi 0, %s72
      %s74 = sphi 0, %s72
      %s75 = sphi 0, %s74
      %s89 = sphi 0, %s75
      %s95 = sphi 0, %s97
      %s98 = sphi 0, %s95
      %s99 = sphi 0, %s98
      %s115 = sphi 0, %s99
    $region4: #{_lambda_.5} parent=1 // loop_header_branch
      %15 = sbr.rel (%p13) target = $region8
    $region5: #{_lambda_.5} parent=1 // loop_body
      %s17 = ssub.s32 %s12, 1
      %s18 = ssub.s32 %s12, 2
      %s19 = sadd.s32 %s12, 1
      %s20 = ssub.s32 %s12, %s19
      %p21 = scmp.eq.s32.totalorder %s20, 0
      %s23 = sadd.s32 %s22, 1
      %s24 = scalar_select %p21, %s22, %s23
      %p27 = pneg %p21
      %p28 = scmp.eq.s32.totalorder %s12, 1
      %p29 = por %p27, %p28
      %p30 = scmp.ne.s32.totalorder %s22, %s25
      %p31 = scmp.eq.s32.totalorder %s12, 0
      %p32 = por %p30, %p31
      %p33 = scmp.ne.s32.totalorder %s22, %s25
      %p34 = scmp.eq.s32.totalorder %s17, 1
      %p35 = por %p33, %p34
      %p36 = scmp.ne.s32.totalorder %s25, %s26
      %p37 = scmp.eq.s32.totalorder %s17, 0
      %p38 = por %p36, %p37
      %p39 = scmp.ne.s32.totalorder %s25, %s26
      %p40 = scmp.eq.s32.totalorder %s18, 1
      %p41 = por %p39, %p40
      %p43 = scmp.ne.s32.totalorder %s26, %s42
      %p44 = scmp.eq.s32.totalorder %s18, 0
      %p45 = por %p43, %p44
      %s46 = ssub.s32 %s12, %s19
      %p47 = scmp.eq.s32.totalorder %s46, 0
      %s49 = sadd.s32 %s48, 1
      %s50 = scalar_select %p47, %s48, %s49
      %p53 = pneg %p47
      %p54 = scmp.eq.s32.totalorder %s12, 1
      %p55 = por %p53, %p54
      %p56 = scmp.ne.s32.totalorder %s48, %s51
      %p57 = scmp.eq.s32.totalorder %s12, 0
      %p58 = por %p56, %p57
      %p59 = scmp.ne.s32.totalorder %s48, %s51
      %p60 = scmp.eq.s32.totalorder %s17, 1
      %p61 = por %p59, %p60
      %p62 = scmp.ne.s32.totalorder %s51, %s52
      %p63 = scmp.eq.s32.totalorder %s17, 0
      %p64 = por %p62, %p63
      %p65 = scmp.ne.s32.totalorder %s51, %s52
      %p66 = scmp.eq.s32.totalorder %s18, 1
      %p67 = por %p65, %p66
      %p69 = scmp.ne.s32.totalorder %s52, %s68
      %p70 = scmp.eq.s32.totalorder %s18, 0
      %p71 = por %p69, %p70
      %s73 = sadd.s32 %s72, 1
      %p76 = scmp.eq.s32.totalorder %s12, 1
      %p77 = scmp.ne.s32.totalorder %s72, %s74
      %p78 = scmp.eq.s32.totalorder %s12, 0
      %p79 = por %p77, %p78
      %p80 = scmp.ne.s32.totalorder %s72, %s74
      %p81 = scmp.eq.s32.totalorder %s17, 1
      %p82 = por %p80, %p81
      %p83 = scmp.ne.s32.totalorder %s74, %s75
      %p84 = scmp.eq.s32.totalorder %s17, 0
      %p85 = por %p83, %p84
      %p86 = scmp.ne.s32.totalorder %s74, %s75
      %p87 = scmp.eq.s32.totalorder %s18, 1
      %p88 = por %p86, %p87
      %p90 = scmp.ne.s32.totalorder %s75, %s89
      %p91 = scmp.eq.s32.totalorder %s18, 0
      %p92 = por %p90, %p91
      %s93 = ssub.s32 %s12, %s19
      %p94 = scmp.eq.s32.totalorder %s93, 0
      %s96 = sadd.s32 %s95, 1
      %s97 = scalar_select %p94, %s95, %s96
      %p100 = pneg %p94
      %p101 = scmp.eq.s32.totalorder %s12, 1
      %p102 = por %p100, %p101
      %p103 = scmp.ne.s32.totalorder %s95, %s98
      %p104 = scmp.eq.s32.totalorder %s12, 0
      %p105 = por %p103, %p104
      %p106 = scmp.ne.s32.totalorder %s95, %s98
      %p107 = scmp.eq.s32.totalorder %s17, 1
      %p108 = por %p106, %p107
      %p109 = scmp.ne.s32.totalorder %s98, %s99
      %p110 = scmp.eq.s32.totalorder %s17, 0
      %p111 = por %p109, %p110
      %p112 = scmp.ne.s32.totalorder %s98, %s99
      %p113 = scmp.eq.s32.totalorder %s18, 1
      %p114 = por %p112, %p113
      %p116 = scmp.ne.s32.totalorder %s99, %s115
      %p117 = scmp.eq.s32.totalorder %s18, 0
      %p118 = por %p116, %p117
      %p119 = scmp.le.s32.totalorder 1, %s12
      %p120 = scmp.lt.s32.totalorder %s12, 3
      %p121 = pnand %p119, %p120
      %p122 = pneg %p121
      // Predicated region
      $region9: #{_lambda_.5} parent=5 // pred_check
        _
      $region10: #{_lambda_.5} parent=5 // pred_check_branch
        %124 = sbr.rel (%p121) target = $region12
      $region11: #{_lambda_.5} parent=5 // pred_region
        %s125 = ssub.s32 %s12, 1
        // Predicated region
        $region13: #{_lambda_.5} parent=11 // pred_check
          %p126 = pneg %p85
        $region14: #{_lambda_.5} parent=11 // pred_check_branch
          %128 = sbr.rel (%p126) target = $region16
        $region15: #{_lambda_.5} parent=11 // pred_region
          _
        $region16: #{_lambda_.5} parent=11 // pred_fallthru
          _
      $region12: #{_lambda_.5} parent=5 // pred_fallthru
        _
      %p129 = scmp.lt.s32.totalorder %s12, 2
      // Predicated region
      $region17: #{_lambda_.5} parent=5 // pred_check
        %p130 = pneg %p129
      $region18: #{_lambda_.5} parent=5 // pred_check_branch
        %132 = sbr.rel (%p130) target = $region20
      $region19: #{_lambda_.5} parent=5 // pred_region
        // Predicated region
        $region21: #{_lambda_.5} parent=19 // pred_check
          %p133 = pneg %p32
        $region22: #{_lambda_.5} parent=19 // pred_check_branch
          %135 = sbr.rel (%p133) target = $region24
        $region23: #{_lambda_.5} parent=19 // pred_region
          %s136 = smul.u32 4, %s12
          %p137 = scmp.lt.s32.totalorder %s136, 7
          %s138 = scalar_select %p137, %s136, 7
          %s139 = smul.addr %s138, 8
          %s140 = smul.addr %s139, 4
          %s141 = scalar_lea.vmem %s0, %s140
          %s142 = smul.u32 4, %s12
        $region24: #{_lambda_.5} parent=19 // pred_fallthru
          _
        // Predicated region
        $region25: #{_lambda_.5} parent=19 // pred_check
          %p143 = pneg %p58
        $region26: #{_lambda_.5} parent=19 // pred_check_branch
          %145 = sbr.rel (%p143) target = $region28
        $region27: #{_lambda_.5} parent=19 // pred_region
          %s146 = smul.u32 4, %s12
          %p147 = scmp.lt.s32.totalorder %s146, 7
          %s148 = scalar_select %p147, %s146, 7
          %s149 = smul.addr %s148, 8
          %s150 = smul.addr %s149, 8
          %s151 = scalar_lea.vmem %s1, %s150
          %s152 = smul.u32 4, %s12
        $region28: #{_lambda_.5} parent=19 // pred_fallthru
          _
      $region20: #{_lambda_.5} parent=5 // pred_fallthru
        _
      %p153 = scmp.le.s32.totalorder 1, %s12
      %p154 = scmp.lt.s32.totalorder %s12, 3
      %p155 = pnand %p153, %p154
      %p156 = pneg %p155
      // Predicated region
      $region29: #{_lambda_.5} parent=5 // pred_check
        _
      $region30: #{_lambda_.5} parent=5 // pred_check_branch
        %158 = sbr.rel (%p155) target = $region32
      $region31: #{_lambda_.5} parent=5 // pred_region
        %s159 = ssub.s32 %s12, 1
        %s160 = smul.u32 4, %s17
        %p161 = scmp.lt.s32.totalorder %s160, 7
        %s162 = scalar_select %p161, %s160, 7
        %s163 = smul.addr %s162, 8
        %s164 = smul.addr %s163, 4
        %s165 = scalar_lea.vmem %s0, %s164
        %p166 = pneg %p38
        %p167 = pneg %p35
        %s168 = smul.u32 4, %s17
        %p169 = scmp.lt.s32.totalorder %s168, 7
        %s170 = scalar_select %p169, %s168, 7
        %s171 = smul.addr %s170, 8
        %s172 = smul.addr %s171, 8
        %s173 = scalar_lea.vmem %s1, %s172
        %p174 = pneg %p64
        %p175 = pneg %p61
        %p176 = pneg %p85
        %p177 = pneg %p82
        %p178 = pneg %p111
        %p179 = pneg %p108
        %s180 = sand.u32 %s98, 1
        %s181 = scalar_lea.sflag [#allocation3], %s180
        %s182 = sand.u32 %s98, 1
        %s183 = smul.addr %s182, 256
        %s184 = scalar_lea.vmem [#allocation2], %s183
        %s185 = smul.u32 4, %s17
        %p186 = scmp.lt.s32.totalorder %s185, 7
        %s187 = scalar_select %p186, %s185, 7
        %s188 = smul.addr %s187, 8
        %s189 = smul.addr %s188, 4
        %s190 = scalar_lea.vmem %s0, %s189
        %s191 = smul.u32 4, %s17
        %s192 = smul.u32 4, %s17
        %p193 = scmp.lt.s32.totalorder %s192, 7
        %s194 = scalar_select %p193, %s192, 7
        %s195 = smul.addr %s194, 8
        %s196 = smul.addr %s195, 8
        %s197 = scalar_lea.vmem %s1, %s196
        %s198 = smul.u32 4, %s17
        %s199 = smul.u32 4, %s17
        %v200 = vld [vmem:[%s2] sm:$0x3]
        %v201 = vld [vmem:[%s190] sm:$0xf]
        %v202 = vld [vmem:[%s190 + $0x4] sm:$0xf]
        %v203 = vld [vmem:[%s190 + $0x8] sm:$0xf]
        %v204 = vld [vmem:[%s190 + $0xc] sm:$0xf]
        %v205 = vld [vmem:[%s190 + $0x10] sm:$0xf]
        %v206 = vld [vmem:[%s190 + $0x14] sm:$0xf]
        %v207 = vld [vmem:[%s190 + $0x18] sm:$0xf]
        %v208 = vld [vmem:[%s190 + $0x1c] sm:$0xf]
        %v209 = vld [vmem:[%s190 + $0x20] sm:$0xf]
        %v210 = vld [vmem:[%s190 + $0x24] sm:$0xf]
        %v211 = vld [vmem:[%s190 + $0x28] sm:$0xf]
        %v212 = vld [vmem:[%s190 + $0x2c] sm:$0xf]
        %v213 = vld [vmem:[%s190 + $0x30] sm:$0xf]
        %v214 = vld [vmem:[%s190 + $0x34] sm:$0xf]
        %v215 = vld [vmem:[%s190 + $0x38] sm:$0xf]
        %v216 = vld [vmem:[%s190 + $0x3c] sm:$0xf]
        %v217 = vld [vmem:[%s190 + $0x40] sm:$0xf]
        %v218 = vld [vmem:[%s190 + $0x44] sm:$0xf]
        %v219 = vld [vmem:[%s190 + $0x48] sm:$0xf]
        %v220 = vld [vmem:[%s190 + $0x4c] sm:$0xf]
        %v221 = vld [vmem:[%s190 + $0x50] sm:$0xf]
        %v222 = vld [vmem:[%s190 + $0x54] sm:$0xf]
        %v223 = vld [vmem:[%s190 + $0x58] sm:$0xf]
        %v224 = vld [vmem:[%s190 + $0x5c] sm:$0xf]
        %v225 = vld [vmem:[%s190 + $0x60] sm:$0xf]
        %v226 = vld [vmem:[%s190 + $0x64] sm:$0xf]
        %v227 = vld [vmem:[%s190 + $0x68] sm:$0xf]
        %v228 = vld [vmem:[%s190 + $0x6c] sm:$0xf]
        %v229 = vld [vmem:[%s190 + $0x70] sm:$0xf]
        %v230 = vld [vmem:[%s190 + $0x74] sm:$0xf]
        %v231 = vld [vmem:[%s190 + $0x78] sm:$0xf]
        %v232 = vld [vmem:[%s190 + $0x7c] sm:$0xf]
        %v233 = vunpack.c.l.bf16 %v201
        %v234 = vunpack.c.l.bf16 %v202
        %v235 = vunpack.c.l.bf16 %v203
        %v236 = vunpack.c.l.bf16 %v204
        %v237 = vunpack.c.l.bf16 %v205
        %v238 = vunpack.c.l.bf16 %v206
        %v239 = vunpack.c.l.bf16 %v207
        %v240 = vunpack.c.l.bf16 %v208
        %v241 = vunpack.c.l.bf16 %v209
        %v242 = vunpack.c.l.bf16 %v210
        %v243 = vunpack.c.l.bf16 %v211
        %v244 = vunpack.c.l.bf16 %v212
        %v245 = vunpack.c.l.bf16 %v213
        %v246 = vunpack.c.l.bf16 %v214
        %v247 = vunpack.c.l.bf16 %v215
        %v248 = vunpack.c.l.bf16 %v216
        %v249 = vunpack.c.l.bf16 %v217
        %v250 = vunpack.c.l.bf16 %v218
        %v251 = vunpack.c.l.bf16 %v219
        %v252 = vunpack.c.l.bf16 %v220
        %v253 = vunpack.c.l.bf16 %v221
        %v254 = vunpack.c.l.bf16 %v222
        %v255 = vunpack.c.l.bf16 %v223
        %v256 = vunpack.c.l.bf16 %v224
        %v257 = vunpack.c.l.bf16 %v225
        %v258 = vunpack.c.l.bf16 %v226
        %v259 = vunpack.c.l.bf16 %v227
        %v260 = vunpack.c.l.bf16 %v228
        %v261 = vunpack.c.l.bf16 %v229
        %v262 = vunpack.c.l.bf16 %v230
        %v263 = vunpack.c.l.bf16 %v231
        %v264 = vunpack.c.l.bf16 %v232
        %v265 = vlaneseq
        %v266 = vshrl.u32 %v265, 7
        %v267 = vsub.s32 0, %v266
        %v268 = vrot.slane %v200, %v267
        %v269 = vmul.f32 %v233, %v268
        %v270 = vmul.f32 %v234, %v268
        %v271 = vmul.f32 %v235, %v268
        %v272 = vmul.f32 %v236, %v268
        %v273 = vmul.f32 %v237, %v268
        %v274 = vmul.f32 %v238, %v268
        %v275 = vmul.f32 %v239, %v268
        %v276 = vmul.f32 %v240, %v268
        %v277 = vmul.f32 %v241, %v268
        %v278 = vmul.f32 %v242, %v268
        %v279 = vmul.f32 %v243, %v268
        %v280 = vmul.f32 %v244, %v268
        %v281 = vmul.f32 %v245, %v268
        %v282 = vmul.f32 %v246, %v268
        %v283 = vmul.f32 %v247, %v268
        %v284 = vmul.f32 %v248, %v268
        %v285 = vmul.f32 %v249, %v268
        %v286 = vmul.f32 %v250, %v268
        %v287 = vmul.f32 %v251, %v268
        %v288 = vmul.f32 %v252, %v268
        %v289 = vmul.f32 %v253, %v268
        %v290 = vmul.f32 %v254, %v268
        %v291 = vmul.f32 %v255, %v268
        %v292 = vmul.f32 %v256, %v268
        %v293 = vmul.f32 %v257, %v268
        %v294 = vmul.f32 %v258, %v268
        %v295 = vmul.f32 %v259, %v268
        %v296 = vmul.f32 %v260, %v268
        %v297 = vmul.f32 %v261, %v268
        %v298 = vmul.f32 %v262, %v268
        %v299 = vmul.f32 %v263, %v268
        %v300 = vmul.f32 %v264, %v268
        %v301 = vlaneseq
        %v302 = vshrl.u32 %v301, 7
        %v303 = vsub.s32 1, %v302
        %v304 = vrot.slane %v200, %v303
        %v305 = vadd.f32 %v269, %v304
        %v306 = vadd.f32 %v270, %v304
        %v307 = vadd.f32 %v271, %v304
        %v308 = vadd.f32 %v272, %v304
        %v309 = vadd.f32 %v273, %v304
        %v310 = vadd.f32 %v274, %v304
        %v311 = vadd.f32 %v275, %v304
        %v312 = vadd.f32 %v276, %v304
        %v313 = vadd.f32 %v277, %v304
        %v314 = vadd.f32 %v278, %v304
        %v315 = vadd.f32 %v279, %v304
        %v316 = vadd.f32 %v280, %v304
        %v317 = vadd.f32 %v281, %v304
        %v318 = vadd.f32 %v282, %v304
        %v319 = vadd.f32 %v283, %v304
        %v320 = vadd.f32 %v284, %v304
        %v321 = vadd.f32 %v285, %v304
        %v322 = vadd.f32 %v286, %v304
        %v323 = vadd.f32 %v287, %v304
        %v324 = vadd.f32 %v288, %v304
        %v325 = vadd.f32 %v289, %v304
        %v326 = vadd.f32 %v290, %v304
        %v327 = vadd.f32 %v291, %v304
        %v328 = vadd.f32 %v292, %v304
        %v329 = vadd.f32 %v293, %v304
        %v330 = vadd.f32 %v294, %v304
        %v331 = vadd.f32 %v295, %v304
        %v332 = vadd.f32 %v296, %v304
        %v333 = vadd.f32 %v297, %v304
        %v334 = vadd.f32 %v298, %v304
        %v335 = vadd.f32 %v299, %v304
        %v336 = vadd.f32 %v300, %v304
        %v337 = vld [vmem:[%s197] sm:$0xff]
        %v338 = vld [vmem:[%s197 + $0x8] sm:$0xff]
        %v339 = vld [vmem:[%s197 + $0x10] sm:$0xff]
        %v340 = vld [vmem:[%s197 + $0x18] sm:$0xff]
        %v341 = vld [vmem:[%s197 + $0x20] sm:$0xff]
        %v342 = vld [vmem:[%s197 + $0x28] sm:$0xff]
        %v343 = vld [vmem:[%s197 + $0x30] sm:$0xff]
        %v344 = vld [vmem:[%s197 + $0x38] sm:$0xff]
        %v345 = vld [vmem:[%s197 + $0x40] sm:$0xff]
        %v346 = vld [vmem:[%s197 + $0x48] sm:$0xff]
        %v347 = vld [vmem:[%s197 + $0x50] sm:$0xff]
        %v348 = vld [vmem:[%s197 + $0x58] sm:$0xff]
        %v349 = vld [vmem:[%s197 + $0x60] sm:$0xff]
        %v350 = vld [vmem:[%s197 + $0x68] sm:$0xff]
        %v351 = vld [vmem:[%s197 + $0x70] sm:$0xff]
        %v352 = vld [vmem:[%s197 + $0x78] sm:$0xff]
        %v353 = vld [vmem:[%s197 + $0x80] sm:$0xff]
        %v354 = vld [vmem:[%s197 + $0x88] sm:$0xff]
        %v355 = vld [vmem:[%s197 + $0x90] sm:$0xff]
        %v356 = vld [vmem:[%s197 + $0x98] sm:$0xff]
        %v357 = vld [vmem:[%s197 + $0xa0] sm:$0xff]
        %v358 = vld [vmem:[%s197 + $0xa8] sm:$0xff]
        %v359 = vld [vmem:[%s197 + $0xb0] sm:$0xff]
        %v360 = vld [vmem:[%s197 + $0xb8] sm:$0xff]
        %v361 = vld [vmem:[%s197 + $0xc0] sm:$0xff]
        %v362 = vld [vmem:[%s197 + $0xc8] sm:$0xff]
        %v363 = vld [vmem:[%s197 + $0xd0] sm:$0xff]
        %v364 = vld [vmem:[%s197 + $0xd8] sm:$0xff]
        %v365 = vld [vmem:[%s197 + $0xe0] sm:$0xff]
        %v366 = vld [vmem:[%s197 + $0xe8] sm:$0xff]
        %v367 = vld [vmem:[%s197 + $0xf0] sm:$0xff]
        %v368 = vld [vmem:[%s197 + $0xf8] sm:$0xff]
        %v369 = vadd.f32 %v305, %v337
        %v370 = vadd.f32 %v306, %v338
        %v371 = vadd.f32 %v307, %v339
        %v372 = vadd.f32 %v308, %v340
        %v373 = vadd.f32 %v309, %v341
        %v374 = vadd.f32 %v310, %v342
        %v375 = vadd.f32 %v311, %v343
        %v376 = vadd.f32 %v312, %v344
        %v377 = vadd.f32 %v313, %v345
        %v378 = vadd.f32 %v314, %v346
        %v379 = vadd.f32 %v315, %v347
        %v380 = vadd.f32 %v316, %v348
        %v381 = vadd.f32 %v317, %v349
        %v382 = vadd.f32 %v318, %v350
        %v383 = vadd.f32 %v319, %v351
        %v384 = vadd.f32 %v320, %v352
        %v385 = vadd.f32 %v321, %v353
        %v386 = vadd.f32 %v322, %v354
        %v387 = vadd.f32 %v323, %v355
        %v388 = vadd.f32 %v324, %v356
        %v389 = vadd.f32 %v325, %v357
        %v390 = vadd.f32 %v326, %v358
        %v391 = vadd.f32 %v327, %v359
        %v392 = vadd.f32 %v328, %v360
        %v393 = vadd.f32 %v329, %v361
        %v394 = vadd.f32 %v330, %v362
        %v395 = vadd.f32 %v331, %v363
        %v396 = vadd.f32 %v332, %v364
        %v397 = vadd.f32 %v333, %v365
        %v398 = vadd.f32 %v334, %v366
        %v399 = vadd.f32 %v335, %v367
        %v400 = vadd.f32 %v336, %v368
        %v401 = vmax.f32 %v369, 0.0
        %v402 = vmax.f32 %v370, 0.0
        %v403 = vmax.f32 %v371, 0.0
        %v404 = vmax.f32 %v372, 0.0
        %v405 = vmax.f32 %v373, 0.0
        %v406 = vmax.f32 %v374, 0.0
        %v407 = vmax.f32 %v375, 0.0
        %v408 = vmax.f32 %v376, 0.0
        %v409 = vmax.f32 %v377, 0.0
        %v410 = vmax.f32 %v378, 0.0
        %v411 = vmax.f32 %v379, 0.0
        %v412 = vmax.f32 %v380, 0.0
        %v413 = vmax.f32 %v381, 0.0
        %v414 = vmax.f32 %v382, 0.0
        %v415 = vmax.f32 %v383, 0.0
        %v416 = vmax.f32 %v384, 0.0
        %v417 = vmax.f32 %v385, 0.0
        %v418 = vmax.f32 %v386, 0.0
        %v419 = vmax.f32 %v387, 0.0
        %v420 = vmax.f32 %v388, 0.0
        %v421 = vmax.f32 %v389, 0.0
        %v422 = vmax.f32 %v390, 0.0
        %v423 = vmax.f32 %v391, 0.0
        %v424 = vmax.f32 %v392, 0.0
        %v425 = vmax.f32 %v393, 0.0
        %v426 = vmax.f32 %v394, 0.0
        %v427 = vmax.f32 %v395, 0.0
        %v428 = vmax.f32 %v396, 0.0
        %v429 = vmax.f32 %v397, 0.0
        %v430 = vmax.f32 %v398, 0.0
        %v431 = vmax.f32 %v399, 0.0
        %v432 = vmax.f32 %v400, 0.0
        %433 = vst [vmem:[%s184] sm:$0xff] %v401
        %434 = vst [vmem:[%s184 + $0x8] sm:$0xff] %v402
        %435 = vst [vmem:[%s184 + $0x10] sm:$0xff] %v403
        %436 = vst [vmem:[%s184 + $0x18] sm:$0xff] %v404
        %437 = vst [vmem:[%s184 + $0x20] sm:$0xff] %v405
        %438 = vst [vmem:[%s184 + $0x28] sm:$0xff] %v406
        %439 = vst [vmem:[%s184 + $0x30] sm:$0xff] %v407
        %440 = vst [vmem:[%s184 + $0x38] sm:$0xff] %v408
        %441 = vst [vmem:[%s184 + $0x40] sm:$0xff] %v409
        %442 = vst [vmem:[%s184 + $0x48] sm:$0xff] %v410
        %443 = vst [vmem:[%s184 + $0x50] sm:$0xff] %v411
        %444 = vst [vmem:[%s184 + $0x58] sm:$0xff] %v412
        %445 = vst [vmem:[%s184 + $0x60] sm:$0xff] %v413
        %446 = vst [vmem:[%s184 + $0x68] sm:$0xff] %v414
        %447 = vst [vmem:[%s184 + $0x70] sm:$0xff] %v415
        %448 = vst [vmem:[%s184 + $0x78] sm:$0xff] %v416
        %449 = vst [vmem:[%s184 + $0x80] sm:$0xff] %v417
        %450 = vst [vmem:[%s184 + $0x88] sm:$0xff] %v418
        %451 = vst [vmem:[%s184 + $0x90] sm:$0xff] %v419
        %452 = vst [vmem:[%s184 + $0x98] sm:$0xff] %v420
        %453 = vst [vmem:[%s184 + $0xa0] sm:$0xff] %v421
        %454 = vst [vmem:[%s184 + $0xa8] sm:$0xff] %v422
        %455 = vst [vmem:[%s184 + $0xb0] sm:$0xff] %v423
        %456 = vst [vmem:[%s184 + $0xb8] sm:$0xff] %v424
        %457 = vst [vmem:[%s184 + $0xc0] sm:$0xff] %v425
        %458 = vst [vmem:[%s184 + $0xc8] sm:$0xff] %v426
        %459 = vst [vmem:[%s184 + $0xd0] sm:$0xff] %v427
        %460 = vst [vmem:[%s184 + $0xd8] sm:$0xff] %v428
        %461 = vst [vmem:[%s184 + $0xe0] sm:$0xff] %v429
        %462 = vst [vmem:[%s184 + $0xe8] sm:$0xff] %v430
        %463 = vst [vmem:[%s184 + $0xf0] sm:$0xff] %v431
        %464 = vst [vmem:[%s184 + $0xf8] sm:$0xff] %v432
        %s465 = sand.u32 %s98, 1
        %s466 = scalar_lea.sflag [#allocation3], %s465
        %s467 = sand.u32 %s98, 1
        %s468 = smul.addr %s467, 256
        %s469 = scalar_lea.vmem [#allocation2], %s468
        // Predicated region
        $region33: #{_lambda_.5} parent=31 // pred_check
          %p470 = pneg %p108
        $region34: #{_lambda_.5} parent=31 // pred_check_branch
          %472 = sbr.rel (%p470) target = $region36
        $region35: #{_lambda_.5} parent=31 // pred_region
          %s473 = smul.u32 4, %s17
          %s475 = ssub.s32 4096, 4096
          %476 = vsyncadd %s466, %s475
          %s477 = smul.addr %s473, 8
          %s478 = smul.addr %s477, 128
          %s479 = scalar_lea.hbm %s3, %s478
          %s480 = sshll.u32 %s469, 4
          %s481 = int_to_ptr.vmem [resolvable:$true] %s480
          %486 = dma.vmem_to_hbm [thread:$0]  %s481, 4096, %s479, %s466, 128, 128, 8
        $region36: #{_lambda_.5} parent=31 // pred_fallthru
          _
      $region32: #{_lambda_.5} parent=5 // pred_fallthru
        _
      %p487 = scmp.le.s32.totalorder 2, %s12
      // Predicated region
      $region37: #{_lambda_.5} parent=5 // pred_check
        %p488 = pneg %p487
      $region38: #{_lambda_.5} parent=5 // pred_check_branch
        %490 = sbr.rel (%p488) target = $region40
      $region39: #{_lambda_.5} parent=5 // pred_region
        %s491 = ssub.s32 %s12, 2
        // Predicated region
        $region41: #{_lambda_.5} parent=39 // pred_check
          %p492 = pneg %p114
        $region42: #{_lambda_.5} parent=39 // pred_check_branch
          %494 = sbr.rel (%p492) target = $region44
        $region43: #{_lambda_.5} parent=39 // pred_region
          %s495 = sand.u32 %s99, 1
          %s496 = scalar_lea.sflag [#allocation3], %s495
          %s497 = sand.u32 %s99, 1
          %s498 = smul.addr %s497, 256
          %s499 = scalar_lea.vmem [#allocation2], %s498
          %500 = dma.done %s496, 4096
        $region44: #{_lambda_.5} parent=39 // pred_fallthru
          _
      $region40: #{_lambda_.5} parent=5 // pred_fallthru
        _
    $region6: #{_lambda_.5} parent=1 // loop_footer
      %s16 = sadd.s32 1, %s12
    $region7: #{_lambda_.5} parent=1 // loop_footer_branch
      %11 = sbr.rel target = $region3
    $region8: #{_lambda_.5} parent=1 // loop_exit
      _
    %501 = vsyncpa [#allocation3], 1
    %s502 = scalar_lea.sflag [#allocation3], 1
    %503 = vsyncpa %s502, 1

// kernel: _lambda_.3
$region0: #{_lambda_.3}
  #allocation0 [shape = 'u32[]', space=smem, size = 0x4, offset = 0x4, fixed_abs, tag = 'smem constant byte address 0x4 - core index']
  #allocation1 [shape = 'u32[144,128]{1,0:T(1,128)}', space=vmem, size = 0x12000, scoped, tag = 'internal scratch']
  #allocation2 [shape = 'bf16[4,10,10,128]{3,2,1,0:T(8,128)(2,1)}', space=vmem, size = 0x28000, scoped, tag = 'scratch operand']
  %s0 = inlined_call_operand.hbm [shape: f32[8,8,8,128], index: 0, kind: input, shape index: {}]
  %s1 = inlined_call_operand.hbm [shape: bf16[1152,128], index: 1, kind: input, shape index: {}]
  %s2 = inlined_call_operand.vmem [shape: bf16[8,8,8,128], index: 2, kind: output, shape index: {0}]
  %s3 = inlined_call_operand.vmem [shape: f32[2,2,128], index: 3, kind: output, shape index: {1}]
  %4 = xla_tuple %s2, %s3
  %s5 = sld [smem:[#allocation0]]
  $region57: #{_lambda_.3} parent=0
    _
  %s7 = ssub.s32 1, %s5
  %s8 = scalar_select 0, %s7, %s5
  $region1: #{_lambda_.3} parent=0
    #allocation3 [shape = 'u8[262144]{0}', space=vmem, size = 0x40000, scoped, tag = 'input window, operand 0']
    #allocation4 [shape = 's32[2]{0}', space=sflag, size = 0x8, scoped, tag = 'scoped memory for _lambda_.3']
    #allocation5 [shape = 'u8[294912]{0}', space=vmem, size = 0x48000, scoped, tag = 'input window, operand 1, single buffered']
    #allocation6 [shape = 's32[1]{0}', space=sflag, size = 0x4, scoped, tag = 'scoped memory for _lambda_.3']
    %9 = vsyncpa [#allocation4], 0
    %s10 = scalar_lea.sflag [#allocation4], 1
    %11 = vsyncpa %s10, 0
    %12 = vsyncpa [#allocation6], 0
    loop: start=0, step=1, limit=4
    $region2: #{_lambda_.3} parent=1 // loop_pre_header
      _
    $region3: #{_lambda_.3} parent=1 // loop_header
      %s14 = sphi 0, %s18
      %p15 = scmp.ge.s32.totalorder %s14, 4
      %s24 = sphi 0, %s26
      %s27 = sphi 0, %s24
      %s28 = sphi 0, %s27
      %s44 = sphi 0, %s28
      %s48 = sphi 0, %s48
      %s50 = sphi 0, %s48
      %s51 = sphi 0, %s50
      %s65 = sphi 0, %s51
      %s71 = sphi 0, %s73
      %s74 = sphi 0, %s71
      %s75 = sphi 0, %s74
      %s91 = sphi 0, %s75
      %s97 = sphi 0, %s99
      %s100 = sphi 0, %s97
      %s101 = sphi 0, %s100
      %s117 = sphi 0, %s101
    $region4: #{_lambda_.3} parent=1 // loop_header_branch
      %17 = sbr.rel (%p15) target = $region8
    $region5: #{_lambda_.3} parent=1 // loop_body
      %s19 = ssub.s32 %s14, 1
      %s20 = ssub.s32 %s14, 2
      %s21 = sadd.s32 %s14, 1
      %s22 = ssub.s32 %s14, %s21
      %p23 = scmp.eq.s32.totalorder %s22, 0
      %s25 = sadd.s32 %s24, 1
      %s26 = scalar_select %p23, %s24, %s25
      %p29 = pneg %p23
      %p30 = scmp.eq.s32.totalorder %s14, 1
      %p31 = por %p29, %p30
      %p32 = scmp.ne.s32.totalorder %s24, %s27
      %p33 = scmp.eq.s32.totalorder %s14, 0
      %p34 = por %p32, %p33
      %p35 = scmp.ne.s32.totalorder %s24, %s27
      %p36 = scmp.eq.s32.totalorder %s19, 1
      %p37 = por %p35, %p36
      %p38 = scmp.ne.s32.totalorder %s27, %s28
      %p39 = scmp.eq.s32.totalorder %s19, 0
      %p40 = por %p38, %p39
      %p41 = scmp.ne.s32.totalorder %s27, %s28
      %p42 = scmp.eq.s32.totalorder %s20, 1
      %p43 = por %p41, %p42
      %p45 = scmp.ne.s32.totalorder %s28, %s44
      %p46 = scmp.eq.s32.totalorder %s20, 0
      %p47 = por %p45, %p46
      %s49 = sadd.s32 %s48, 1
      %p52 = scmp.eq.s32.totalorder %s14, 1
      %p53 = scmp.ne.s32.totalorder %s48, %s50
      %p54 = scmp.eq.s32.totalorder %s14, 0
      %p55 = por %p53, %p54
      %p56 = scmp.ne.s32.totalorder %s48, %s50
      %p57 = scmp.eq.s32.totalorder %s19, 1
      %p58 = por %p56, %p57
      %p59 = scmp.ne.s32.totalorder %s50, %s51
      %p60 = scmp.eq.s32.totalorder %s19, 0
      %p61 = por %p59, %p60
      %p62 = scmp.ne.s32.totalorder %s50, %s51
      %p63 = scmp.eq.s32.totalorder %s20, 1
      %p64 = por %p62, %p63
      %p66 = scmp.ne.s32.totalorder %s51, %s65
      %p67 = scmp.eq.s32.totalorder %s20, 0
      %p68 = por %p66, %p67
      %s69 = ssub.s32 %s14, %s21
      %p70 = scmp.eq.s32.totalorder %s69, 0
      %s72 = sadd.s32 %s71, 1
      %s73 = scalar_select %p70, %s71, %s72
      %p76 = pneg %p70
      %p77 = scmp.eq.s32.totalorder %s14, 1
      %p78 = por %p76, %p77
      %p79 = scmp.ne.s32.totalorder %s71, %s74
      %p80 = scmp.eq.s32.totalorder %s14, 0
      %p81 = por %p79, %p80
      %p82 = scmp.ne.s32.totalorder %s71, %s74
      %p83 = scmp.eq.s32.totalorder %s19, 1
      %p84 = por %p82, %p83
      %p85 = scmp.ne.s32.totalorder %s74, %s75
      %p86 = scmp.eq.s32.totalorder %s19, 0
      %p87 = por %p85, %p86
      %p88 = scmp.ne.s32.totalorder %s74, %s75
      %p89 = scmp.eq.s32.totalorder %s20, 1
      %p90 = por %p88, %p89
      %p92 = scmp.ne.s32.totalorder %s75, %s91
      %p93 = scmp.eq.s32.totalorder %s20, 0
      %p94 = por %p92, %p93
      %s95 = ssub.s32 %s14, %s21
      %p96 = scmp.eq.s32.totalorder %s95, 0
      %s98 = sadd.s32 %s97, 1
      %s99 = scalar_select %p96, %s97, %s98
      %p102 = pneg %p96
      %p103 = scmp.eq.s32.totalorder %s14, 1
      %p104 = por %p102, %p103
      %p105 = scmp.ne.s32.totalorder %s97, %s100
      %p106 = scmp.eq.s32.totalorder %s14, 0
      %p107 = por %p105, %p106
      %p108 = scmp.ne.s32.totalorder %s97, %s100
      %p109 = scmp.eq.s32.totalorder %s19, 1
      %p110 = por %p108, %p109
      %p111 = scmp.ne.s32.totalorder %s100, %s101
      %p112 = scmp.eq.s32.totalorder %s19, 0
      %p113 = por %p111, %p112
      %p114 = scmp.ne.s32.totalorder %s100, %s101
      %p115 = scmp.eq.s32.totalorder %s20, 1
      %p116 = por %p114, %p115
      %p118 = scmp.ne.s32.totalorder %s101, %s117
      %p119 = scmp.eq.s32.totalorder %s20, 0
      %p120 = por %p118, %p119
      %p121 = scmp.le.s32.totalorder 1, %s14
      %p122 = scmp.lt.s32.totalorder %s14, 3
      %p123 = pnand %p121, %p122
      %p124 = pneg %p123
      // Predicated region
      $region9: #{_lambda_.3} parent=5 // pred_check
        _
      $region10: #{_lambda_.3} parent=5 // pred_check_branch
        %126 = sbr.rel (%p123) target = $region12
      $region11: #{_lambda_.3} parent=5 // pred_region
        %s127 = ssub.s32 %s14, 1
        // Predicated region
        $region13: #{_lambda_.3} parent=11 // pred_check
          %p128 = pneg %p61
        $region14: #{_lambda_.3} parent=11 // pred_check_branch
          %130 = sbr.rel (%p128) target = $region16
        $region15: #{_lambda_.3} parent=11 // pred_region
          %s132 = ssub.s32 9216, 9216
          %133 = vsyncadd [#allocation6], %s132
          %s134 = sshll.u32 [#allocation5], 4
          %s135 = int_to_ptr.vmem [resolvable:$true] %s134
          %140 = dma.hbm_to_vmem [thread:$0]  %s1, 9216, %s135, [#allocation6], 64, 64, 4
        $region16: #{_lambda_.3} parent=11 // pred_fallthru
          _
      $region12: #{_lambda_.3} parent=5 // pred_fallthru
        _
      %p141 = scmp.lt.s32.totalorder %s14, 2
      // Predicated region
      $region17: #{_lambda_.3} parent=5 // pred_check
        %p142 = pneg %p141
      $region18: #{_lambda_.3} parent=5 // pred_check_branch
        %144 = sbr.rel (%p142) target = $region20
      $region19: #{_lambda_.3} parent=5 // pred_region
        // Predicated region
        $region21: #{_lambda_.3} parent=19 // pred_check
          %p145 = pneg %p34
        $region22: #{_lambda_.3} parent=19 // pred_check_branch
          %147 = sbr.rel (%p145) target = $region24
        $region23: #{_lambda_.3} parent=19 // pred_region
          %s148 = sand.u32 %s24, 1
          %s149 = scalar_lea.sflag [#allocation4], %s148
          %s150 = sand.u32 %s24, 1
          %s151 = smul.addr %s150, 256
          %s152 = scalar_lea.vmem [#allocation3], %s151
          %s153 = smul.u32 4, %s14
          %s155 = ssub.s32 4096, 4096
          %156 = vsyncadd %s149, %s155
          %s157 = smul.addr %s153, 8
          %s158 = smul.addr %s157, 128
          %s159 = scalar_lea.hbm %s0, %s158
          %s160 = sshll.u32 %s152, 4
          %s161 = int_to_ptr.vmem [resolvable:$true] %s160
          %166 = dma.hbm_to_vmem [thread:$0]  %s159, 4096, %s161, %s149, 128, 128, 8
        $region24: #{_lambda_.3} parent=19 // pred_fallthru
          _
      $region20: #{_lambda_.3} parent=5 // pred_fallthru
        _
      %p167 = scmp.le.s32.totalorder 1, %s14
      %p168 = scmp.lt.s32.totalorder %s14, 3
      %p169 = pnand %p167, %p168
      %p170 = pneg %p169
      // Predicated region
      $region25: #{_lambda_.3} parent=5 // pred_check
        _
      $region26: #{_lambda_.3} parent=5 // pred_check_branch
        %172 = sbr.rel (%p169) target = $region28
      $region27: #{_lambda_.3} parent=5 // pred_region
        %s173 = ssub.s32 %s14, 1
        %s174 = sand.u32 %s27, 1
        %s175 = scalar_lea.sflag [#allocation4], %s174
        %s176 = sand.u32 %s27, 1
        %s177 = smul.addr %s176, 256
        %s178 = scalar_lea.vmem [#allocation3], %s177
        // Predicated region
        $region29: #{_lambda_.3} parent=27 // pred_check
          %p179 = pneg %p40
        $region30: #{_lambda_.3} parent=27 // pred_check_branch
          %181 = sbr.rel (%p179) target = $region32
        $region31: #{_lambda_.3} parent=27 // pred_region
          %182 = dma.done %s175, 4096
        $region32: #{_lambda_.3} parent=27 // pred_fallthru
          _
        // Predicated region
        $region33: #{_lambda_.3} parent=27 // pred_check
          %p183 = pneg %p61
        $region34: #{_lambda_.3} parent=27 // pred_check_branch
          %185 = sbr.rel (%p183) target = $region36
        $region35: #{_lambda_.3} parent=27 // pred_region
          %186 = dma.done [#allocation6], 9216
        $region36: #{_lambda_.3} parent=27 // pred_fallthru
          _
        %s187 = sand.u32 %s27, 1
        %s188 = scalar_lea.sflag [#allocation4], %s187
        %s189 = sand.u32 %s27, 1
        %s190 = smul.addr %s189, 256
        %s191 = scalar_lea.vmem [#allocation3], %s190
        %p192 = pneg %p40
        %p193 = pneg %p37
        %p194 = pneg %p61
        %p195 = pneg %p58
        %p196 = pneg %p87
        %p197 = pneg %p84
        %s198 = smul.u32 4, %s19
        %p199 = scmp.lt.s32.totalorder %s198, 7
        %s200 = scalar_select %p199, %s198, 7
        %s201 = smul.addr %s200, 8
        %s202 = smul.addr %s201, 4
        %s203 = scalar_lea.vmem %s2, %s202
        %p204 = pneg %p113
        %p205 = pneg %p110
        %p206 = scmp.lt.s32.totalorder %s19, 1
        %s207 = scalar_select %p206, %s19, 1
        %s208 = smul.addr %s207, 2
        %s209 = scalar_lea.vmem %s3, %s208
        %s210 = smul.u32 4, %s19
        %s211 = smul.u32 4, %s19
        %p212 = scmp.lt.s32.totalorder %s211, 7
        %s213 = scalar_select %p212, %s211, 7
        %s214 = smul.addr %s213, 8
        %s215 = smul.addr %s214, 4
        %s216 = scalar_lea.vmem %s2, %s215
        %s217 = smul.u32 4, %s19
        %p218 = scmp.lt.s32.totalorder %s19, 1
        %s219 = scalar_select %p218, %s19, 1
        %s220 = smul.addr %s219, 2
        %s221 = scalar_lea.vmem %s3, %s220
        %v223 = vld [vmem:[%s178] sm:$0xff]
        %v224 = vld [vmem:[%s178 + $0x8] sm:$0xff]
        %v225 = vld [vmem:[%s178 + $0x10] sm:$0xff]
        %v226 = vld [vmem:[%s178 + $0x18] sm:$0xff]
        %v227 = vld [vmem:[%s178 + $0x20] sm:$0xff]
        %v228 = vld [vmem:[%s178 + $0x28] sm:$0xff]
        %v229 = vld [vmem:[%s178 + $0x30] sm:$0xff]
        %v230 = vld [vmem:[%s178 + $0x38] sm:$0xff]
        %v231 = vld [vmem:[%s178 + $0x40] sm:$0xff]
        %v232 = vld [vmem:[%s178 + $0x48] sm:$0xff]
        %v233 = vld [vmem:[%s178 + $0x50] sm:$0xff]
        %v234 = vld [vmem:[%s178 + $0x58] sm:$0xff]
        %v235 = vld [vmem:[%s178 + $0x60] sm:$0xff]
        %v236 = vld [vmem:[%s178 + $0x68] sm:$0xff]
        %v237 = vld [vmem:[%s178 + $0x70] sm:$0xff]
        %v238 = vld [vmem:[%s178 + $0x78] sm:$0xff]
        %v239 = vld [vmem:[%s178 + $0x80] sm:$0xff]
        %v240 = vld [vmem:[%s178 + $0x88] sm:$0xff]
        %v241 = vld [vmem:[%s178 + $0x90] sm:$0xff]
        %v242 = vld [vmem:[%s178 + $0x98] sm:$0xff]
        %v243 = vld [vmem:[%s178 + $0xa0] sm:$0xff]
        %v244 = vld [vmem:[%s178 + $0xa8] sm:$0xff]
        %v245 = vld [vmem:[%s178 + $0xb0] sm:$0xff]
        %v246 = vld [vmem:[%s178 + $0xb8] sm:$0xff]
        %v247 = vld [vmem:[%s178 + $0xc0] sm:$0xff]
        %v248 = vld [vmem:[%s178 + $0xc8] sm:$0xff]
        %v249 = vld [vmem:[%s178 + $0xd0] sm:$0xff]
        %v250 = vld [vmem:[%s178 + $0xd8] sm:$0xff]
        %v251 = vld [vmem:[%s178 + $0xe0] sm:$0xff]
        %v252 = vld [vmem:[%s178 + $0xe8] sm:$0xff]
        %v253 = vld [vmem:[%s178 + $0xf0] sm:$0xff]
        %v254 = vld [vmem:[%s178 + $0xf8] sm:$0xff]
        %v255 = vpack.c.bf16 %v223, %v223
        %v256 = vpack.c.bf16 %v224, %v224
        %v257 = vpack.c.bf16 %v225, %v225
        %v258 = vpack.c.bf16 %v226, %v226
        %v259 = vpack.c.bf16 %v227, %v227
        %v260 = vpack.c.bf16 %v228, %v228
        %v261 = vpack.c.bf16 %v229, %v229
        %v262 = vpack.c.bf16 %v230, %v230
        %v263 = vpack.c.bf16 %v231, %v231
        %v264 = vpack.c.bf16 %v232, %v232
        %v265 = vpack.c.bf16 %v233, %v233
        %v266 = vpack.c.bf16 %v234, %v234
        %v267 = vpack.c.bf16 %v235, %v235
        %v268 = vpack.c.bf16 %v236, %v236
        %v269 = vpack.c.bf16 %v237, %v237
        %v270 = vpack.c.bf16 %v238, %v238
        %v271 = vpack.c.bf16 %v239, %v239
        %v272 = vpack.c.bf16 %v240, %v240
        %v273 = vpack.c.bf16 %v241, %v241
        %v274 = vpack.c.bf16 %v242, %v242
        %v275 = vpack.c.bf16 %v243, %v243
        %v276 = vpack.c.bf16 %v244, %v244
        %v277 = vpack.c.bf16 %v245, %v245
        %v278 = vpack.c.bf16 %v246, %v246
        %v279 = vpack.c.bf16 %v247, %v247
        %v280 = vpack.c.bf16 %v248, %v248
        %v281 = vpack.c.bf16 %v249, %v249
        %v282 = vpack.c.bf16 %v250, %v250
        %v283 = vpack.c.bf16 %v251, %v251
        %v284 = vpack.c.bf16 %v252, %v252
        %v285 = vpack.c.bf16 %v253, %v253
        %v286 = vpack.c.bf16 %v254, %v254
        %287 = vst [vmem:[#allocation2] sm:$0xf] 0
        %288 = vst [vmem:[#allocation2 + $0x4] sm:$0x1] 0
        %289 = vst [vmem:[#allocation2 + $0x50] sm:$0xf] 0
        %290 = vst [vmem:[#allocation2 + $0x54] sm:$0x1] 0
        %291 = vst [vmem:[#allocation2 + $0xa0] sm:$0xf] 0
        %292 = vst [vmem:[#allocation2 + $0xa4] sm:$0x1] 0
        %293 = vst [vmem:[#allocation2 + $0xf0] sm:$0xf] 0
        %294 = vst [vmem:[#allocation2 + $0xf4] sm:$0x1] 0
        %s295 = scalar_lea.vmem [#allocation2], 72
        %296 = vst [vmem:[%s295] sm:$0xf] 0
        %297 = vst [vmem:[%s295 + $0x4] sm:$0x1] 0
        %298 = vst [vmem:[%s295 + $0x50] sm:$0xf] 0
        %299 = vst [vmem:[%s295 + $0x54] sm:$0x1] 0
        %300 = vst [vmem:[%s295 + $0xa0] sm:$0xf] 0
        %301 = vst [vmem:[%s295 + $0xa4] sm:$0x1] 0
        %302 = vst [vmem:[%s295 + $0xf0] sm:$0xf] 0
        %303 = vst [vmem:[%s295 + $0xf4] sm:$0x1] 0
        %s304 = scalar_lea.vmem [#allocation2], 8
        %vm305 = vcmask 1040384
        %vm306 = vsmask.f32 256
        %vm307 = vmand %vm305, %vm306
        %v308 = vld [vmem:[%s304] sm:$0x1]
        %v309 = vsel %vm307, 0, %v308
        %310 = vst [vmem:[%s304] sm:$0x1] %v309
        %v311 = vld [vmem:[%s304 + $0x8] sm:$0x1]
        %v312 = vsel %vm307, 0, %v311
        %313 = vst [vmem:[%s304 + $0x8] sm:$0x1] %v312
        %v314 = vld [vmem:[%s304 + $0x10] sm:$0x1]
        %v315 = vsel %vm307, 0, %v314
        %316 = vst [vmem:[%s304 + $0x10] sm:$0x1] %v315
        %v317 = vld [vmem:[%s304 + $0x18] sm:$0x1]
        %v318 = vsel %vm307, 0, %v317
        %319 = vst [vmem:[%s304 + $0x18] sm:$0x1] %v318
        %v320 = vld [vmem:[%s304 + $0x20] sm:$0x1]
        %v321 = vsel %vm307, 0, %v320
        %322 = vst [vmem:[%s304 + $0x20] sm:$0x1] %v321
        %v323 = vld [vmem:[%s304 + $0x28] sm:$0x1]
        %v324 = vsel %vm307, 0, %v323
        %325 = vst [vmem:[%s304 + $0x28] sm:$0x1] %v324
        %v326 = vld [vmem:[%s304 + $0x30] sm:$0x1]
        %v327 = vsel %vm307, 0, %v326
        %328 = vst [vmem:[%s304 + $0x30] sm:$0x1] %v327
        %v329 = vld [vmem:[%s304 + $0x38] sm:$0x1]
        %v330 = vsel %vm307, 0, %v329
        %331 = vst [vmem:[%s304 + $0x38] sm:$0x1] %v330
        %v332 = vld [vmem:[%s304 + $0x50] sm:$0x1]
        %v333 = vsel %vm307, 0, %v332
        %334 = vst [vmem:[%s304 + $0x50] sm:$0x1] %v333
        %v335 = vld [vmem:[%s304 + $0x58] sm:$0x1]
        %v336 = vsel %vm307, 0, %v335
        %337 = vst [vmem:[%s304 + $0x58] sm:$0x1] %v336
        %v338 = vld [vmem:[%s304 + $0x60] sm:$0x1]
        %v339 = vsel %vm307, 0, %v338
        %340 = vst [vmem:[%s304 + $0x60] sm:$0x1] %v339
        %v341 = vld [vmem:[%s304 + $0x68] sm:$0x1]
        %v342 = vsel %vm307, 0, %v341
        %343 = vst [vmem:[%s304 + $0x68] sm:$0x1] %v342
        %v344 = vld [vmem:[%s304 + $0x70] sm:$0x1]
        %v345 = vsel %vm307, 0, %v344
        %346 = vst [vmem:[%s304 + $0x70] sm:$0x1] %v345
        %v347 = vld [vmem:[%s304 + $0x78] sm:$0x1]
        %v348 = vsel %vm307, 0, %v347
        %349 = vst [vmem:[%s304 + $0x78] sm:$0x1] %v348
        %v350 = vld [vmem:[%s304 + $0x80] sm:$0x1]
        %v351 = vsel %vm307, 0, %v350
        %352 = vst [vmem:[%s304 + $0x80] sm:$0x1] %v351
        %v353 = vld [vmem:[%s304 + $0x88] sm:$0x1]
        %v354 = vsel %vm307, 0, %v353
        %355 = vst [vmem:[%s304 + $0x88] sm:$0x1] %v354
        %v356 = vld [vmem:[%s304 + $0xa0] sm:$0x1]
        %v357 = vsel %vm307, 0, %v356
        %358 = vst [vmem:[%s304 + $0xa0] sm:$0x1] %v357
        %v359 = vld [vmem:[%s304 + $0xa8] sm:$0x1]
        %v360 = vsel %vm307, 0, %v359
        %361 = vst [vmem:[%s304 + $0xa8] sm:$0x1] %v360
        %v362 = vld [vmem:[%s304 + $0xb0] sm:$0x1]
        %v363 = vsel %vm307, 0, %v362
        %364 = vst [vmem:[%s304 + $0xb0] sm:$0x1] %v363
        %v365 = vld [vmem:[%s304 + $0xb8] sm:$0x1]
        %v366 = vsel %vm307, 0, %v365
        %367 = vst [vmem:[%s304 + $0xb8] sm:$0x1] %v366
        %v368 = vld [vmem:[%s304 + $0xc0] sm:$0x1]
        %v369 = vsel %vm307, 0, %v368
        %370 = vst [vmem:[%s304 + $0xc0] sm:$0x1] %v369
        %v371 = vld [vmem:[%s304 + $0xc8] sm:$0x1]
        %v372 = vsel %vm307, 0, %v371
        %373 = vst [vmem:[%s304 + $0xc8] sm:$0x1] %v372
        %v374 = vld [vmem:[%s304 + $0xd0] sm:$0x1]
        %v375 = vsel %vm307, 0, %v374
        %376 = vst [vmem:[%s304 + $0xd0] sm:$0x1] %v375
        %v377 = vld [vmem:[%s304 + $0xd8] sm:$0x1]
        %v378 = vsel %vm307, 0, %v377
        %379 = vst [vmem:[%s304 + $0xd8] sm:$0x1] %v378
        %v380 = vld [vmem:[%s304 + $0xf0] sm:$0x1]
        %v381 = vsel %vm307, 0, %v380
        %382 = vst [vmem:[%s304 + $0xf0] sm:$0x1] %v381
        %v383 = vld [vmem:[%s304 + $0xf8] sm:$0x1]
        %v384 = vsel %vm307, 0, %v383
        %385 = vst [vmem:[%s304 + $0xf8] sm:$0x1] %v384
        %v386 = vld [vmem:[%s304 + $0x100] sm:$0x1]
        %v387 = vsel %vm307, 0, %v386
        %388 = vst [vmem:[%s304 + $0x100] sm:$0x1] %v387
        %v389 = vld [vmem:[%s304 + $0x108] sm:$0x1]
        %v390 = vsel %vm307, 0, %v389
        %391 = vst [vmem:[%s304 + $0x108] sm:$0x1] %v390
        %v392 = vld [vmem:[%s304 + $0x110] sm:$0x1]
        %v393 = vsel %vm307, 0, %v392
        %394 = vst [vmem:[%s304 + $0x110] sm:$0x1] %v393
        %v395 = vld [vmem:[%s304 + $0x118] sm:$0x1]
        %v396 = vsel %vm307, 0, %v395
        %397 = vst [vmem:[%s304 + $0x118] sm:$0x1] %v396
        %v398 = vld [vmem:[%s304 + $0x120] sm:$0x1]
        %v399 = vsel %vm307, 0, %v398
        %400 = vst [vmem:[%s304 + $0x120] sm:$0x1] %v399
        %v401 = vld [vmem:[%s304 + $0x128] sm:$0x1]
        %v402 = vsel %vm307, 0, %v401
        %403 = vst [vmem:[%s304 + $0x128] sm:$0x1] %v402
        %vm404 = vsmask.f32 7938
        %vm405 = vmand %vm305, %vm404
        %v406 = vld [vmem:[%s304 + $0x4] sm:$0x1]
        %v407 = vsel %vm405, 0, %v406
        %408 = vst [vmem:[%s304 + $0x4] sm:$0x1] %v407
        %v409 = vld [vmem:[%s304 + $0xc] sm:$0x1]
        %v410 = vsel %vm405, 0, %v409
        %411 = vst [vmem:[%s304 + $0xc] sm:$0x1] %v410
        %v412 = vld [vmem:[%s304 + $0x14] sm:$0x1]
        %v413 = vsel %vm405, 0, %v412
        %414 = vst [vmem:[%s304 + $0x14] sm:$0x1] %v413
        %v415 = vld [vmem:[%s304 + $0x1c] sm:$0x1]
        %v416 = vsel %vm405, 0, %v415
        %417 = vst [vmem:[%s304 + $0x1c] sm:$0x1] %v416
        %v418 = vld [vmem:[%s304 + $0x24] sm:$0x1]
        %v419 = vsel %vm405, 0, %v418
        %420 = vst [vmem:[%s304 + $0x24] sm:$0x1] %v419
        %v421 = vld [vmem:[%s304 + $0x2c] sm:$0x1]
        %v422 = vsel %vm405, 0, %v421
        %423 = vst [vmem:[%s304 + $0x2c] sm:$0x1] %v422
        %v424 = vld [vmem:[%s304 + $0x34] sm:$0x1]
        %v425 = vsel %vm405, 0, %v424
        %426 = vst [vmem:[%s304 + $0x34] sm:$0x1] %v425
        %v427 = vld [vmem:[%s304 + $0x3c] sm:$0x1]
        %v428 = vsel %vm405, 0, %v427
        %429 = vst [vmem:[%s304 + $0x3c] sm:$0x1] %v428
        %v430 = vld [vmem:[%s304 + $0x54] sm:$0x1]
        %v431 = vsel %vm405, 0, %v430
        %432 = vst [vmem:[%s304 + $0x54] sm:$0x1] %v431
        %v433 = vld [vmem:[%s304 + $0x5c] sm:$0x1]
        %v434 = vsel %vm405, 0, %v433
        %435 = vst [vmem:[%s304 + $0x5c] sm:$0x1] %v434
        %v436 = vld [vmem:[%s304 + $0x64] sm:$0x1]
        %v437 = vsel %vm405, 0, %v436
        %438 = vst [vmem:[%s304 + $0x64] sm:$0x1] %v437
        %v439 = vld [vmem:[%s304 + $0x6c] sm:$0x1]
        %v440 = vsel %vm405, 0, %v439
        %441 = vst [vmem:[%s304 + $0x6c] sm:$0x1] %v440
        %v442 = vld [vmem:[%s304 + $0x74] sm:$0x1]
        %v443 = vsel %vm405, 0, %v442
        %444 = vst [vmem:[%s304 + $0x74] sm:$0x1] %v443
        %v445 = vld [vmem:[%s304 + $0x7c] sm:$0x1]
        %v446 = vsel %vm405, 0, %v445
        %447 = vst [vmem:[%s304 + $0x7c] sm:$0x1] %v446
        %v448 = vld [vmem:[%s304 + $0x84] sm:$0x1]
        %v449 = vsel %vm405, 0, %v448
        %450 = vst [vmem:[%s304 + $0x84] sm:$0x1] %v449
        %v451 = vld [vmem:[%s304 + $0x8c] sm:$0x1]
        %v452 = vsel %vm405, 0, %v451
        %453 = vst [vmem:[%s304 + $0x8c] sm:$0x1] %v452
        %v454 = vld [vmem:[%s304 + $0xa4] sm:$0x1]
        %v455 = vsel %vm405, 0, %v454
        %456 = vst [vmem:[%s304 + $0xa4] sm:$0x1] %v455
        %v457 = vld [vmem:[%s304 + $0xac] sm:$0x1]
        %v458 = vsel %vm405, 0, %v457
        %459 = vst [vmem:[%s304 + $0xac] sm:$0x1] %v458
        %v460 = vld [vmem:[%s304 + $0xb4] sm:$0x1]
        %v461 = vsel %vm405, 0, %v460
        %462 = vst [vmem:[%s304 + $0xb4] sm:$0x1] %v461
        %v463 = vld [vmem:[%s304 + $0xbc] sm:$0x1]
        %v464 = vsel %vm405, 0, %v463
        %465 = vst [vmem:[%s304 + $0xbc] sm:$0x1] %v464
        %v466 = vld [vmem:[%s304 + $0xc4] sm:$0x1]
        %v467 = vsel %vm405, 0, %v466
        %468 = vst [vmem:[%s304 + $0xc4] sm:$0x1] %v467
        %v469 = vld [vmem:[%s304 + $0xcc] sm:$0x1]
        %v470 = vsel %vm405, 0, %v469
        %471 = vst [vmem:[%s304 + $0xcc] sm:$0x1] %v470
        %v472 = vld [vmem:[%s304 + $0xd4] sm:$0x1]
        %v473 = vsel %vm405, 0, %v472
        %474 = vst [vmem:[%s304 + $0xd4] sm:$0x1] %v473
        %v475 = vld [vmem:[%s304 + $0xdc] sm:$0x1]
        %v476 = vsel %vm405, 0, %v475
        %477 = vst [vmem:[%s304 + $0xdc] sm:$0x1] %v476
        %v478 = vld [vmem:[%s304 + $0xf4] sm:$0x1]
        %v479 = vsel %vm405, 0, %v478
        %480 = vst [vmem:[%s304 + $0xf4] sm:$0x1] %v479
        %v481 = vld [vmem:[%s304 + $0xfc] sm:$0x1]
        %v482 = vsel %vm405, 0, %v481
        %483 = vst [vmem:[%s304 + $0xfc] sm:$0x1] %v482
        %v484 = vld [vmem:[%s304 + $0x104] sm:$0x1]
        %v485 = vsel %vm405, 0, %v484
        %486 = vst [vmem:[%s304 + $0x104] sm:$0x1] %v485
        %v487 = vld [vmem:[%s304 + $0x10c] sm:$0x1]
        %v488 = vsel %vm405, 0, %v487
        %489 = vst [vmem:[%s304 + $0x10c] sm:$0x1] %v488
        %v490 = vld [vmem:[%s304 + $0x114] sm:$0x1]
        %v491 = vsel %vm405, 0, %v490
        %492 = vst [vmem:[%s304 + $0x114] sm:$0x1] %v491
        %v493 = vld [vmem:[%s304 + $0x11c] sm:$0x1]
        %v494 = vsel %vm405, 0, %v493
        %495 = vst [vmem:[%s304 + $0x11c] sm:$0x1] %v494
        %v496 = vld [vmem:[%s304 + $0x124] sm:$0x1]
        %v497 = vsel %vm405, 0, %v496
        %498 = vst [vmem:[%s304 + $0x124] sm:$0x1] %v497
        %v499 = vld [vmem:[%s304 + $0x12c] sm:$0x1]
        %v500 = vsel %vm405, 0, %v499
        %501 = vst [vmem:[%s304 + $0x12c] sm:$0x1] %v500
        %v534 = vunpack.c.l.b16 %v255
        %v535 = vunpack.c.l.b16 %v256
        %v536 = vunpack.c.l.b16 %v257
        %v537 = vunpack.c.l.b16 %v258
        %v538 = vunpack.c.l.b16 %v259
        %v539 = vunpack.c.l.b16 %v260
        %v540 = vunpack.c.l.b16 %v261
        %v541 = vunpack.c.l.b16 %v262
        %v542 = vunpack.c.l.b16 %v263
        %v543 = vunpack.c.l.b16 %v264
        %v544 = vunpack.c.l.b16 %v265
        %v545 = vunpack.c.l.b16 %v266
        %v546 = vunpack.c.l.b16 %v267
        %v547 = vunpack.c.l.b16 %v268
        %v548 = vunpack.c.l.b16 %v269
        %v549 = vunpack.c.l.b16 %v270
        %v550 = vunpack.c.l.b16 %v271
        %v551 = vunpack.c.l.b16 %v272
        %v552 = vunpack.c.l.b16 %v273
        %v553 = vunpack.c.l.b16 %v274
        %v554 = vunpack.c.l.b16 %v275
        %v555 = vunpack.c.l.b16 %v276
        %v556 = vunpack.c.l.b16 %v277
        %v557 = vunpack.c.l.b16 %v278
        %v558 = vunpack.c.l.b16 %v279
        %v559 = vunpack.c.l.b16 %v280
        %v560 = vunpack.c.l.b16 %v281
        %v561 = vunpack.c.l.b16 %v282
        %v562 = vunpack.c.l.b16 %v283
        %v563 = vunpack.c.l.b16 %v284
        %v564 = vunpack.c.l.b16 %v285
        %v565 = vunpack.c.l.b16 %v286
        %v566 = vpack.c.b16 %v534, %v534
        %v567 = vpack.c.b16 %v535, %v535
        %v568 = vpack.c.b16 %v536, %v536
        %v569 = vpack.c.b16 %v537, %v537
        %v570 = vpack.c.b16 %v538, %v538
        %v571 = vpack.c.b16 %v539, %v539
        %v572 = vpack.c.b16 %v540, %v540
        %v573 = vpack.c.b16 %v541, %v541
        %v574 = vpack.c.b16 %v542, %v542
        %v575 = vpack.c.b16 %v543, %v543
        %v576 = vpack.c.b16 %v544, %v544
        %v577 = vpack.c.b16 %v545, %v545
        %v578 = vpack.c.b16 %v546, %v546
        %v579 = vpack.c.b16 %v547, %v547
        %v580 = vpack.c.b16 %v548, %v548
        %v581 = vpack.c.b16 %v549, %v549
        %v582 = vpack.c.b16 %v550, %v550
        %v583 = vpack.c.b16 %v551, %v551
        %v584 = vpack.c.b16 %v552, %v552
        %v585 = vpack.c.b16 %v553, %v553
        %v586 = vpack.c.b16 %v554, %v554
        %v587 = vpack.c.b16 %v555, %v555
        %v588 = vpack.c.b16 %v556, %v556
        %v589 = vpack.c.b16 %v557, %v557
        %v590 = vpack.c.b16 %v558, %v558
        %v591 = vpack.c.b16 %v559, %v559
        %v592 = vpack.c.b16 %v560, %v560
        %v593 = vpack.c.b16 %v561, %v561
        %v594 = vpack.c.b16 %v562, %v562
        %v595 = vpack.c.b16 %v563, %v563
        %v596 = vpack.c.b16 %v564, %v564
        %v597 = vpack.c.b16 %v565, %v565
        %v599 = vshrl.u32 %v566, 16
        %v601 = vrot.slane %v599, 7
        %v602 = vshll.u32 %v566, 16
        %v604 = vor.u32 %v601, %v602
        %v605 = vrot.slane %v601, 4
        %v607 = vshrl.u32 %v567, 16
        %v609 = vrot.slane %v607, 7
        %v610 = vshll.u32 %v567, 16
        %v612 = vor.u32 %v609, %v610
        %v613 = vrot.slane %v609, 4
        %v615 = vshrl.u32 %v568, 16
        %v617 = vrot.slane %v615, 7
        %v618 = vshll.u32 %v568, 16
        %v620 = vor.u32 %v617, %v618
        %v621 = vrot.slane %v617, 4
        %v623 = vshrl.u32 %v569, 16
        %v625 = vrot.slane %v623, 7
        %v626 = vshll.u32 %v569, 16
        %v628 = vor.u32 %v625, %v626
        %v629 = vrot.slane %v625, 4
        %v631 = vshrl.u32 %v570, 16
        %v633 = vrot.slane %v631, 7
        %v634 = vshll.u32 %v570, 16
        %v636 = vor.u32 %v633, %v634
        %v637 = vrot.slane %v633, 4
        %v639 = vshrl.u32 %v571, 16
        %v641 = vrot.slane %v639, 7
        %v642 = vshll.u32 %v571, 16
        %v644 = vor.u32 %v641, %v642
        %v645 = vrot.slane %v641, 4
        %v647 = vshrl.u32 %v572, 16
        %v649 = vrot.slane %v647, 7
        %v650 = vshll.u32 %v572, 16
        %v652 = vor.u32 %v649, %v650
        %v653 = vrot.slane %v649, 4
        %v655 = vshrl.u32 %v573, 16
        %v657 = vrot.slane %v655, 7
        %v658 = vshll.u32 %v573, 16
        %v660 = vor.u32 %v657, %v658
        %v661 = vrot.slane %v657, 4
        %v663 = vshrl.u32 %v574, 16
        %v665 = vrot.slane %v663, 7
        %v666 = vshll.u32 %v574, 16
        %v668 = vor.u32 %v665, %v666
        %v669 = vrot.slane %v665, 4
        %v671 = vshrl.u32 %v575, 16
        %v673 = vrot.slane %v671, 7
        %v674 = vshll.u32 %v575, 16
        %v676 = vor.u32 %v673, %v674
        %v677 = vrot.slane %v673, 4
        %v679 = vshrl.u32 %v576, 16
        %v681 = vrot.slane %v679, 7
        %v682 = vshll.u32 %v576, 16
        %v684 = vor.u32 %v681, %v682
        %v685 = vrot.slane %v681, 4
        %v687 = vshrl.u32 %v577, 16
        %v689 = vrot.slane %v687, 7
        %v690 = vshll.u32 %v577, 16
        %v692 = vor.u32 %v689, %v690
        %v693 = vrot.slane %v689, 4
        %v695 = vshrl.u32 %v578, 16
        %v697 = vrot.slane %v695, 7
        %v698 = vshll.u32 %v578, 16
        %v700 = vor.u32 %v697, %v698
        %v701 = vrot.slane %v697, 4
        %v703 = vshrl.u32 %v579, 16
        %v705 = vrot.slane %v703, 7
        %v706 = vshll.u32 %v579, 16
        %v708 = vor.u32 %v705, %v706
        %v709 = vrot.slane %v705, 4
        %v711 = vshrl.u32 %v580, 16
        %v713 = vrot.slane %v711, 7
        %v714 = vshll.u32 %v580, 16
        %v716 = vor.u32 %v713, %v714
        %v717 = vrot.slane %v713, 4
        %v719 = vshrl.u32 %v581, 16
        %v721 = vrot.slane %v719, 7
        %v722 = vshll.u32 %v581, 16
        %v724 = vor.u32 %v721, %v722
        %v725 = vrot.slane %v721, 4
        %v727 = vshrl.u32 %v582, 16
        %v729 = vrot.slane %v727, 7
        %v730 = vshll.u32 %v582, 16
        %v732 = vor.u32 %v729, %v730
        %v733 = vrot.slane %v729, 4
        %v735 = vshrl.u32 %v583, 16
        %v737 = vrot.slane %v735, 7
        %v738 = vshll.u32 %v583, 16
        %v740 = vor.u32 %v737, %v738
        %v741 = vrot.slane %v737, 4
        %v743 = vshrl.u32 %v584, 16
        %v745 = vrot.slane %v743, 7
        %v746 = vshll.u32 %v584, 16
        %v748 = vor.u32 %v745, %v746
        %v749 = vrot.slane %v745, 4
        %v751 = vshrl.u32 %v585, 16
        %v753 = vrot.slane %v751, 7
        %v754 = vshll.u32 %v585, 16
        %v756 = vor.u32 %v753, %v754
        %v757 = vrot.slane %v753, 4
        %v759 = vshrl.u32 %v586, 16
        %v761 = vrot.slane %v759, 7
        %v762 = vshll.u32 %v586, 16
        %v764 = vor.u32 %v761, %v762
        %v765 = vrot.slane %v761, 4
        %v767 = vshrl.u32 %v587, 16
        %v769 = vrot.slane %v767, 7
        %v770 = vshll.u32 %v587, 16
        %v772 = vor.u32 %v769, %v770
        %v773 = vrot.slane %v769, 4
        %v775 = vshrl.u32 %v588, 16
        %v777 = vrot.slane %v775, 7
        %v778 = vshll.u32 %v588, 16
        %v780 = vor.u32 %v777, %v778
        %v781 = vrot.slane %v777, 4
        %v783 = vshrl.u32 %v589, 16
        %v785 = vrot.slane %v783, 7
        %v786 = vshll.u32 %v589, 16
        %v788 = vor.u32 %v785, %v786
        %v789 = vrot.slane %v785, 4
        %v791 = vshrl.u32 %v590, 16
        %v793 = vrot.slane %v791, 7
        %v794 = vshll.u32 %v590, 16
        %v796 = vor.u32 %v793, %v794
        %v797 = vrot.slane %v793, 4
        %v799 = vshrl.u32 %v591, 16
        %v801 = vrot.slane %v799, 7
        %v802 = vshll.u32 %v591, 16
        %v804 = vor.u32 %v801, %v802
        %v805 = vrot.slane %v801, 4
        %v807 = vshrl.u32 %v592, 16
        %v809 = vrot.slane %v807, 7
        %v810 = vshll.u32 %v592, 16
        %v812 = vor.u32 %v809, %v810
        %v813 = vrot.slane %v809, 4
        %v815 = vshrl.u32 %v593, 16
        %v817 = vrot.slane %v815, 7
        %v818 = vshll.u32 %v593, 16
        %v820 = vor.u32 %v817, %v818
        %v821 = vrot.slane %v817, 4
        %v823 = vshrl.u32 %v594, 16
        %v825 = vrot.slane %v823, 7
        %v826 = vshll.u32 %v594, 16
        %v828 = vor.u32 %v825, %v826
        %v829 = vrot.slane %v825, 4
        %v831 = vshrl.u32 %v595, 16
        %v833 = vrot.slane %v831, 7
        %v834 = vshll.u32 %v595, 16
        %v836 = vor.u32 %v833, %v834
        %v837 = vrot.slane %v833, 4
        %v839 = vshrl.u32 %v596, 16
        %v841 = vrot.slane %v839, 7
        %v842 = vshll.u32 %v596, 16
        %v844 = vor.u32 %v841, %v842
        %v845 = vrot.slane %v841, 4
        %v847 = vshrl.u32 %v597, 16
        %v849 = vrot.slane %v847, 7
        %v850 = vshll.u32 %v597, 16
        %v852 = vor.u32 %v849, %v850
        %v853 = vrot.slane %v849, 4
        %vm918 = vcmask 1043456
        %vm919 = vmand %vm918, %vm404
        %v920 = vld [vmem:[%s304] sm:$0xf]
        %v921 = vsel %vm919, %v604, %v920
        %922 = vst [vmem:[%s304] sm:$0xf] %v921
        %v923 = vld [vmem:[%s304 + $0x4] sm:$0x1]
        %v924 = vsel %vm307, %v605, %v923
        %925 = vst [vmem:[%s304 + $0x4] sm:$0x1] %v924
        %v926 = vld [vmem:[%s304 + $0x8] sm:$0xf]
        %v927 = vsel %vm919, %v612, %v926
        %928 = vst [vmem:[%s304 + $0x8] sm:$0xf] %v927
        %v929 = vld [vmem:[%s304 + $0xc] sm:$0x1]
        %v930 = vsel %vm307, %v613, %v929
        %931 = vst [vmem:[%s304 + $0xc] sm:$0x1] %v930
        %v932 = vld [vmem:[%s304 + $0x10] sm:$0xf]
        %v933 = vsel %vm919, %v620, %v932
        %934 = vst [vmem:[%s304 + $0x10] sm:$0xf] %v933
        %v935 = vld [vmem:[%s304 + $0x14] sm:$0x1]
        %v936 = vsel %vm307, %v621, %v935
        %937 = vst [vmem:[%s304 + $0x14] sm:$0x1] %v936
        %v938 = vld [vmem:[%s304 + $0x18] sm:$0xf]
        %v939 = vsel %vm919, %v628, %v938
        %940 = vst [vmem:[%s304 + $0x18] sm:$0xf] %v939
        %v941 = vld [vmem:[%s304 + $0x1c] sm:$0x1]
        %v942 = vsel %vm307, %v629, %v941
        %943 = vst [vmem:[%s304 + $0x1c] sm:$0x1] %v942
        %v944 = vld [vmem:[%s304 + $0x20] sm:$0xf]
        %v945 = vsel %vm919, %v636, %v944
        %946 = vst [vmem:[%s304 + $0x20] sm:$0xf] %v945
        %v947 = vld [vmem:[%s304 + $0x24] sm:$0x1]
        %v948 = vsel %vm307, %v637, %v947
        %949 = vst [vmem:[%s304 + $0x24] sm:$0x1] %v948
        %v950 = vld [vmem:[%s304 + $0x28] sm:$0xf]
        %v951 = vsel %vm919, %v644, %v950
        %952 = vst [vmem:[%s304 + $0x28] sm:$0xf] %v951
        %v953 = vld [vmem:[%s304 + $0x2c] sm:$0x1]
        %v954 = vsel %vm307, %v645, %v953
        %955 = vst [vmem:[%s304 + $0x2c] sm:$0x1] %v954
        %v956 = vld [vmem:[%s304 + $0x30] sm:$0xf]
        %v957 = vsel %vm919, %v652, %v956
        %958 = vst [vmem:[%s304 + $0x30] sm:$0xf] %v957
        %v959 = vld [vmem:[%s304 + $0x34] sm:$0x1]
        %v960 = vsel %vm307, %v653, %v959
        %961 = vst [vmem:[%s304 + $0x34] sm:$0x1] %v960
        %v962 = vld [vmem:[%s304 + $0x38] sm:$0xf]
        %v963 = vsel %vm919, %v660, %v962
        %964 = vst [vmem:[%s304 + $0x38] sm:$0xf] %v963
        %v965 = vld [vmem:[%s304 + $0x3c] sm:$0x1]
        %v966 = vsel %vm307, %v661, %v965
        %967 = vst [vmem:[%s304 + $0x3c] sm:$0x1] %v966
        %v968 = vld [vmem:[%s304 + $0x50] sm:$0xf]
        %v969 = vsel %vm919, %v668, %v968
        %970 = vst [vmem:[%s304 + $0x50] sm:$0xf] %v969
        %v971 = vld [vmem:[%s304 + $0x54] sm:$0x1]
        %v972 = vsel %vm307, %v669, %v971
        %973 = vst [vmem:[%s304 + $0x54] sm:$0x1] %v972
        %v974 = vld [vmem:[%s304 + $0x58] sm:$0xf]
        %v975 = vsel %vm919, %v676, %v974
        %976 = vst [vmem:[%s304 + $0x58] sm:$0xf] %v975
        %v977 = vld [vmem:[%s304 + $0x5c] sm:$0x1]
        %v978 = vsel %vm307, %v677, %v977
        %979 = vst [vmem:[%s304 + $0x5c] sm:$0x1] %v978
        %v980 = vld [vmem:[%s304 + $0x60] sm:$0xf]
        %v981 = vsel %vm919, %v684, %v980
        %982 = vst [vmem:[%s304 + $0x60] sm:$0xf] %v981
        %v983 = vld [vmem:[%s304 + $0x64] sm:$0x1]
        %v984 = vsel %vm307, %v685, %v983
        %985 = vst [vmem:[%s304 + $0x64] sm:$0x1] %v984
        %v986 = vld [vmem:[%s304 + $0x68] sm:$0xf]
        %v987 = vsel %vm919, %v692, %v986
        %988 = vst [vmem:[%s304 + $0x68] sm:$0xf] %v987
        %v989 = vld [vmem:[%s304 + $0x6c] sm:$0x1]
        %v990 = vsel %vm307, %v693, %v989
        %991 = vst [vmem:[%s304 + $0x6c] sm:$0x1] %v990
        %v992 = vld [vmem:[%s304 + $0x70] sm:$0xf]
        %v993 = vsel %vm919, %v700, %v992
        %994 = vst [vmem:[%s304 + $0x70] sm:$0xf] %v993
        %v995 = vld [vmem:[%s304 + $0x74] sm:$0x1]
        %v996 = vsel %vm307, %v701, %v995
        %997 = vst [vmem:[%s304 + $0x74] sm:$0x1] %v996
        %v998 = vld [vmem:[%s304 + $0x78] sm:$0xf]
        %v999 = vsel %vm919, %v708, %v998
        %1000 = vst [vmem:[%s304 + $0x78] sm:$0xf] %v999
        %v1001 = vld [vmem:[%s304 + $0x7c] sm:$0x1]
        %v1002 = vsel %vm307, %v709, %v1001
        %1003 = vst [vmem:[%s304 + $0x7c] sm:$0x1] %v1002
        %v1004 = vld [vmem:[%s304 + $0x80] sm:$0xf]
        %v1005 = vsel %vm919, %v716, %v1004
        %1006 = vst [vmem:[%s304 + $0x80] sm:$0xf] %v1005
        %v1007 = vld [vmem:[%s304 + $0x84] sm:$0x1]
        %v1008 = vsel %vm307, %v717, %v1007
        %1009 = vst [vmem:[%s304 + $0x84] sm:$0x1] %v1008
        %v1010 = vld [vmem:[%s304 + $0x88] sm:$0xf]
        %v1011 = vsel %vm919, %v724, %v1010
        %1012 = vst [vmem:[%s304 + $0x88] sm:$0xf] %v1011
        %v1013 = vld [vmem:[%s304 + $0x8c] sm:$0x1]
        %v1014 = vsel %vm307, %v725, %v1013
        %1015 = vst [vmem:[%s304 + $0x8c] sm:$0x1] %v1014
        %v1016 = vld [vmem:[%s304 + $0xa0] sm:$0xf]
        %v1017 = vsel %vm919, %v732, %v1016
        %1018 = vst [vmem:[%s304 + $0xa0] sm:$0xf] %v1017
        %v1019 = vld [vmem:[%s304 + $0xa4] sm:$0x1]
        %v1020 = vsel %vm307, %v733, %v1019
        %1021 = vst [vmem:[%s304 + $0xa4] sm:$0x1] %v1020
        %v1022 = vld [vmem:[%s304 + $0xa8] sm:$0xf]
        %v1023 = vsel %vm919, %v740, %v1022
        %1024 = vst [vmem:[%s304 + $0xa8] sm:$0xf] %v1023
        %v1025 = vld [vmem:[%s304 + $0xac] sm:$0x1]
        %v1026 = vsel %vm307, %v741, %v1025
        %1027 = vst [vmem:[%s304 + $0xac] sm:$0x1] %v1026
        %v1028 = vld [vmem:[%s304 + $0xb0] sm:$0xf]
        %v1029 = vsel %vm919, %v748, %v1028
        %1030 = vst [vmem:[%s304 + $0xb0] sm:$0xf] %v1029
        %v1031 = vld [vmem:[%s304 + $0xb4] sm:$0x1]
        %v1032 = vsel %vm307, %v749, %v1031
        %1033 = vst [vmem:[%s304 + $0xb4] sm:$0x1] %v1032
        %v1034 = vld [vmem:[%s304 + $0xb8] sm:$0xf]
        %v1035 = vsel %vm919, %v756, %v1034
        %1036 = vst [vmem:[%s304 + $0xb8] sm:$0xf] %v1035
        %v1037 = vld [vmem:[%s304 + $0xbc] sm:$0x1]
        %v1038 = vsel %vm307, %v757, %v1037
        %1039 = vst [vmem:[%s304 + $0xbc] sm:$0x1] %v1038
        %v1040 = vld [vmem:[%s304 + $0xc0] sm:$0xf]
        %v1041 = vsel %vm919, %v764, %v1040
        %1042 = vst [vmem:[%s304 + $0xc0] sm:$0xf] %v1041
        %v1043 = vld [vmem:[%s304 + $0xc4] sm:$0x1]
        %v1044 = vsel %vm307, %v765, %v1043
        %1045 = vst [vmem:[%s304 + $0xc4] sm:$0x1] %v1044
        %v1046 = vld [vmem:[%s304 + $0xc8] sm:$0xf]
        %v1047 = vsel %vm919, %v772, %v1046
        %1048 = vst [vmem:[%s304 + $0xc8] sm:$0xf] %v1047
        %v1049 = vld [vmem:[%s304 + $0xcc] sm:$0x1]
        %v1050 = vsel %vm307, %v773, %v1049
        %1051 = vst [vmem:[%s304 + $0xcc] sm:$0x1] %v1050
        %v1052 = vld [vmem:[%s304 + $0xd0] sm:$0xf]
        %v1053 = vsel %vm919, %v780, %v1052
        %1054 = vst [vmem:[%s304 + $0xd0] sm:$0xf] %v1053
        %v1055 = vld [vmem:[%s304 + $0xd4] sm:$0x1]
        %v1056 = vsel %vm307, %v781, %v1055
        %1057 = vst [vmem:[%s304 + $0xd4] sm:$0x1] %v1056
        %v1058 = vld [vmem:[%s304 + $0xd8] sm:$0xf]
        %v1059 = vsel %vm919, %v788, %v1058
        %1060 = vst [vmem:[%s304 + $0xd8] sm:$0xf] %v1059
        %v1061 = vld [vmem:[%s304 + $0xdc] sm:$0x1]
        %v1062 = vsel %vm307, %v789, %v1061
        %1063 = vst [vmem:[%s304 + $0xdc] sm:$0x1] %v1062
        %v1064 = vld [vmem:[%s304 + $0xf0] sm:$0xf]
        %v1065 = vsel %vm919, %v796, %v1064
        %1066 = vst [vmem:[%s304 + $0xf0] sm:$0xf] %v1065
        %v1067 = vld [vmem:[%s304 + $0xf4] sm:$0x1]
        %v1068 = vsel %vm307, %v797, %v1067
        %1069 = vst [vmem:[%s304 + $0xf4] sm:$0x1] %v1068
        %v1070 = vld [vmem:[%s304 + $0xf8] sm:$0xf]
        %v1071 = vsel %vm919, %v804, %v1070
        %1072 = vst [vmem:[%s304 + $0xf8] sm:$0xf] %v1071
        %v1073 = vld [vmem:[%s304 + $0xfc] sm:$0x1]
        %v1074 = vsel %vm307, %v805, %v1073
        %1075 = vst [vmem:[%s304 + $0xfc] sm:$0x1] %v1074
        %v1076 = vld [vmem:[%s304 + $0x100] sm:$0xf]
        %v1077 = vsel %vm919, %v812, %v1076
        %1078 = vst [vmem:[%s304 + $0x100] sm:$0xf] %v1077
        %v1079 = vld [vmem:[%s304 + $0x104] sm:$0x1]
        %v1080 = vsel %vm307, %v813, %v1079
        %1081 = vst [vmem:[%s304 + $0x104] sm:$0x1] %v1080
        %v1082 = vld [vmem:[%s304 + $0x108] sm:$0xf]
        %v1083 = vsel %vm919, %v820, %v1082
        %1084 = vst [vmem:[%s304 + $0x108] sm:$0xf] %v1083
        %v1085 = vld [vmem:[%s304 + $0x10c] sm:$0x1]
        %v1086 = vsel %vm307, %v821, %v1085
        %1087 = vst [vmem:[%s304 + $0x10c] sm:$0x1] %v1086
        %v1088 = vld [vmem:[%s304 + $0x110] sm:$0xf]
        %v1089 = vsel %vm919, %v828, %v1088
        %1090 = vst [vmem:[%s304 + $0x110] sm:$0xf] %v1089
        %v1091 = vld [vmem:[%s304 + $0x114] sm:$0x1]
        %v1092 = vsel %vm307, %v829, %v1091
        %1093 = vst [vmem:[%s304 + $0x114] sm:$0x1] %v1092
        %v1094 = vld [vmem:[%s304 + $0x118] sm:$0xf]
        %v1095 = vsel %vm919, %v836, %v1094
        %1096 = vst [vmem:[%s304 + $0x118] sm:$0xf] %v1095
        %v1097 = vld [vmem:[%s304 + $0x11c] sm:$0x1]
        %v1098 = vsel %vm307, %v837, %v1097
        %1099 = vst [vmem:[%s304 + $0x11c] sm:$0x1] %v1098
        %v1100 = vld [vmem:[%s304 + $0x120] sm:$0xf]
        %v1101 = vsel %vm919, %v844, %v1100
        %1102 = vst [vmem:[%s304 + $0x120] sm:$0xf] %v1101
        %v1103 = vld [vmem:[%s304 + $0x124] sm:$0x1]
        %v1104 = vsel %vm307, %v845, %v1103
        %1105 = vst [vmem:[%s304 + $0x124] sm:$0x1] %v1104
        %v1106 = vld [vmem:[%s304 + $0x128] sm:$0xf]
        %v1107 = vsel %vm919, %v852, %v1106
        %1108 = vst [vmem:[%s304 + $0x128] sm:$0xf] %v1107
        %v1109 = vld [vmem:[%s304 + $0x12c] sm:$0x1]
        %v1110 = vsel %vm307, %v853, %v1109
        %1111 = vst [vmem:[%s304 + $0x12c] sm:$0x1] %v1110
        %v1112 = vld [vmem:[#allocation2] sm:$0xf]
        %v1113 = vld [vmem:[#allocation2 + $0x8] sm:$0xf]
        %v1114 = vld [vmem:[#allocation2 + $0x10] sm:$0xf]
        %v1115 = vld [vmem:[#allocation2 + $0x18] sm:$0xf]
        %v1116 = vld [vmem:[#allocation2 + $0x20] sm:$0xf]
        %v1117 = vld [vmem:[#allocation2 + $0x28] sm:$0xf]
        %v1118 = vld [vmem:[#allocation2 + $0x30] sm:$0xf]
        %v1119 = vld [vmem:[#allocation2 + $0x38] sm:$0xf]
        %v1120 = vld [vmem:[#allocation2 + $0x50] sm:$0xf]
        %v1121 = vld [vmem:[#allocation2 + $0x58] sm:$0xf]
        %v1122 = vld [vmem:[#allocation2 + $0x60] sm:$0xf]
        %v1123 = vld [vmem:[#allocation2 + $0x68] sm:$0xf]
        %v1124 = vld [vmem:[#allocation2 + $0x70] sm:$0xf]
        %v1125 = vld [vmem:[#allocation2 + $0x78] sm:$0xf]
        %v1126 = vld [vmem:[#allocation2 + $0x80] sm:$0xf]
        %v1127 = vld [vmem:[#allocation2 + $0x88] sm:$0xf]
        %v1128 = vld [vmem:[#allocation2 + $0xa0] sm:$0xf]
        %v1129 = vld [vmem:[#allocation2 + $0xa8] sm:$0xf]
        %v1130 = vld [vmem:[#allocation2 + $0xb0] sm:$0xf]
        %v1131 = vld [vmem:[#allocation2 + $0xb8] sm:$0xf]
        %v1132 = vld [vmem:[#allocation2 + $0xc0] sm:$0xf]
        %v1133 = vld [vmem:[#allocation2 + $0xc8] sm:$0xf]
        %v1134 = vld [vmem:[#allocation2 + $0xd0] sm:$0xf]
        %v1135 = vld [vmem:[#allocation2 + $0xd8] sm:$0xf]
        %v1136 = vld [vmem:[#allocation2 + $0xf0] sm:$0xf]
        %v1137 = vld [vmem:[#allocation2 + $0xf8] sm:$0xf]
        %v1138 = vld [vmem:[#allocation2 + $0x100] sm:$0xf]
        %v1139 = vld [vmem:[#allocation2 + $0x108] sm:$0xf]
        %v1140 = vld [vmem:[#allocation2 + $0x110] sm:$0xf]
        %v1141 = vld [vmem:[#allocation2 + $0x118] sm:$0xf]
        %v1142 = vld [vmem:[#allocation2 + $0x120] sm:$0xf]
        %v1143 = vld [vmem:[#allocation2 + $0x128] sm:$0xf]
        %v1144 = vld [vmem:[#allocation2 + $0x4] sm:$0x1]
        %v1145 = vld [vmem:[#allocation2 + $0xc] sm:$0x1]
        %v1146 = vld [vmem:[#allocation2 + $0x14] sm:$0x1]
        %v1147 = vld [vmem:[#allocation2 + $0x1c] sm:$0x1]
        %v1148 = vld [vmem:[#allocation2 + $0x24] sm:$0x1]
        %v1149 = vld [vmem:[#allocation2 + $0x2c] sm:$0x1]
        %v1150 = vld [vmem:[#allocation2 + $0x34] sm:$0x1]
        %v1151 = vld [vmem:[#allocation2 + $0x3c] sm:$0x1]
        %v1152 = vld [vmem:[#allocation2 + $0x54] sm:$0x1]
        %v1153 = vld [vmem:[#allocation2 + $0x5c] sm:$0x1]
        %v1154 = vld [vmem:[#allocation2 + $0x64] sm:$0x1]
        %v1155 = vld [vmem:[#allocation2 + $0x6c] sm:$0x1]
        %v1156 = vld [vmem:[#allocation2 + $0x74] sm:$0x1]
        %v1157 = vld [vmem:[#allocation2 + $0x7c] sm:$0x1]
        %v1158 = vld [vmem:[#allocation2 + $0x84] sm:$0x1]
        %v1159 = vld [vmem:[#allocation2 + $0x8c] sm:$0x1]
        %v1160 = vld [vmem:[#allocation2 + $0xa4] sm:$0x1]
        %v1161 = vld [vmem:[#allocation2 + $0xac] sm:$0x1]
        %v1162 = vld [vmem:[#allocation2 + $0xb4] sm:$0x1]
        %v1163 = vld [vmem:[#allocation2 + $0xbc] sm:$0x1]
        %v1164 = vld [vmem:[#allocation2 + $0xc4] sm:$0x1]
        %v1165 = vld [vmem:[#allocation2 + $0xcc] sm:$0x1]
        %v1166 = vld [vmem:[#allocation2 + $0xd4] sm:$0x1]
        %v1167 = vld [vmem:[#allocation2 + $0xdc] sm:$0x1]
        %v1168 = vld [vmem:[#allocation2 + $0xf4] sm:$0x1]
        %v1169 = vld [vmem:[#allocation2 + $0xfc] sm:$0x1]
        %v1170 = vld [vmem:[#allocation2 + $0x104] sm:$0x1]
        %v1171 = vld [vmem:[#allocation2 + $0x10c] sm:$0x1]
        %v1172 = vld [vmem:[#allocation2 + $0x114] sm:$0x1]
        %v1173 = vld [vmem:[#allocation2 + $0x11c] sm:$0x1]
        %v1174 = vld [vmem:[#allocation2 + $0x124] sm:$0x1]
        %v1175 = vld [vmem:[#allocation2 + $0x12c] sm:$0x1]
        %v1176 = vld [vmem:[#allocation2] sm:$0xe]
        %v1177 = vld [vmem:[#allocation2 + $0x8] sm:$0xe]
        %v1178 = vld [vmem:[#allocation2 + $0x10] sm:$0xe]
        %v1179 = vld [vmem:[#allocation2 + $0x18] sm:$0xe]
        %v1180 = vld [vmem:[#allocation2 + $0x20] sm:$0xe]
        %v1181 = vld [vmem:[#allocation2 + $0x28] sm:$0xe]
        %v1182 = vld [vmem:[#allocation2 + $0x30] sm:$0xe]
        %v1183 = vld [vmem:[#allocation2 + $0x38] sm:$0xe]
        %v1184 = vld [vmem:[#allocation2 + $0x50] sm:$0xe]
        %v1185 = vld [vmem:[#allocation2 + $0x58] sm:$0xe]
        %v1186 = vld [vmem:[#allocation2 + $0x60] sm:$0xe]
        %v1187 = vld [vmem:[#allocation2 + $0x68] sm:$0xe]
        %v1188 = vld [vmem:[#allocation2 + $0x70] sm:$0xe]
        %v1189 = vld [vmem:[#allocation2 + $0x78] sm:$0xe]
        %v1190 = vld [vmem:[#allocation2 + $0x80] sm:$0xe]
        %v1191 = vld [vmem:[#allocation2 + $0x88] sm:$0xe]
        %v1192 = vld [vmem:[#allocation2 + $0xa0] sm:$0xe]
        %v1193 = vld [vmem:[#allocation2 + $0xa8] sm:$0xe]
        %v1194 = vld [vmem:[#allocation2 + $0xb0] sm:$0xe]
        %v1195 = vld [vmem:[#allocation2 + $0xb8] sm:$0xe]
        %v1196 = vld [vmem:[#allocation2 + $0xc0] sm:$0xe]
        %v1197 = vld [vmem:[#allocation2 + $0xc8] sm:$0xe]
        %v1198 = vld [vmem:[#allocation2 + $0xd0] sm:$0xe]
        %v1199 = vld [vmem:[#allocation2 + $0xd8] sm:$0xe]
        %v1200 = vld [vmem:[#allocation2 + $0xf0] sm:$0xe]
        %v1201 = vld [vmem:[#allocation2 + $0xf8] sm:$0xe]
        %v1202 = vld [vmem:[#allocation2 + $0x100] sm:$0xe]
        %v1203 = vld [vmem:[#allocation2 + $0x108] sm:$0xe]
        %v1204 = vld [vmem:[#allocation2 + $0x110] sm:$0xe]
        %v1205 = vld [vmem:[#allocation2 + $0x118] sm:$0xe]
        %v1206 = vld [vmem:[#allocation2 + $0x120] sm:$0xe]
        %v1207 = vld [vmem:[#allocation2 + $0x128] sm:$0xe]
        %v1272 = vunpack.c.l.b16 %v1112
        %v1273 = vunpack.c.l.b16 %v1144
        %v1274 = vunpack.c.l.b16 %v1113
        %v1275 = vunpack.c.l.b16 %v1145
        %v1276 = vunpack.c.l.b16 %v1114
        %v1277 = vunpack.c.l.b16 %v1146
        %v1278 = vunpack.c.l.b16 %v1115
        %v1279 = vunpack.c.l.b16 %v1147
        %v1280 = vunpack.c.l.b16 %v1116
        %v1281 = vunpack.c.l.b16 %v1148
        %v1282 = vunpack.c.l.b16 %v1117
        %v1283 = vunpack.c.l.b16 %v1149
        %v1284 = vunpack.c.l.b16 %v1118
        %v1285 = vunpack.c.l.b16 %v1150
        %v1286 = vunpack.c.l.b16 %v1119
        %v1287 = vunpack.c.l.b16 %v1151
        %v1288 = vunpack.c.l.b16 %v1120
        %v1289 = vunpack.c.l.b16 %v1152
        %v1290 = vunpack.c.l.b16 %v1121
        %v1291 = vunpack.c.l.b16 %v1153
        %v1292 = vunpack.c.l.b16 %v1122
        %v1293 = vunpack.c.l.b16 %v1154
        %v1294 = vunpack.c.l.b16 %v1123
        %v1295 = vunpack.c.l.b16 %v1155
        %v1296 = vunpack.c.l.b16 %v1124
        %v1297 = vunpack.c.l.b16 %v1156
        %v1298 = vunpack.c.l.b16 %v1125
        %v1299 = vunpack.c.l.b16 %v1157
        %v1300 = vunpack.c.l.b16 %v1126
        %v1301 = vunpack.c.l.b16 %v1158
        %v1302 = vunpack.c.l.b16 %v1127
        %v1303 = vunpack.c.l.b16 %v1159
        %v1304 = vunpack.c.l.b16 %v1128
        %v1305 = vunpack.c.l.b16 %v1160
        %v1306 = vunpack.c.l.b16 %v1129
        %v1307 = vunpack.c.l.b16 %v1161
        %v1308 = vunpack.c.l.b16 %v1130
        %v1309 = vunpack.c.l.b16 %v1162
        %v1310 = vunpack.c.l.b16 %v1131
        %v1311 = vunpack.c.l.b16 %v1163
        %v1312 = vunpack.c.l.b16 %v1132
        %v1313 = vunpack.c.l.b16 %v1164
        %v1314 = vunpack.c.l.b16 %v1133
        %v1315 = vunpack.c.l.b16 %v1165
        %v1316 = vunpack.c.l.b16 %v1134
        %v1317 = vunpack.c.l.b16 %v1166
        %v1318 = vunpack.c.l.b16 %v1135
        %v1319 = vunpack.c.l.b16 %v1167
        %v1320 = vunpack.c.l.b16 %v1136
        %v1321 = vunpack.c.l.b16 %v1168
        %v1322 = vunpack.c.l.b16 %v1137
        %v1323 = vunpack.c.l.b16 %v1169
        %v1324 = vunpack.c.l.b16 %v1138
        %v1325 = vunpack.c.l.b16 %v1170
        %v1326 = vunpack.c.l.b16 %v1139
        %v1327 = vunpack.c.l.b16 %v1171
        %v1328 = vunpack.c.l.b16 %v1140
        %v1329 = vunpack.c.l.b16 %v1172
        %v1330 = vunpack.c.l.b16 %v1141
        %v1331 = vunpack.c.l.b16 %v1173
        %v1332 = vunpack.c.l.b16 %v1142
        %v1333 = vunpack.c.l.b16 %v1174
        %v1334 = vunpack.c.l.b16 %v1143
        %v1335 = vunpack.c.l.b16 %v1175
        %v1336 = vpack.c.b16 %v1273, %v1272
        %v1337 = vpack.c.b16 %v1275, %v1274
        %v1338 = vpack.c.b16 %v1277, %v1276
        %v1339 = vpack.c.b16 %v1279, %v1278
        %v1340 = vpack.c.b16 %v1281, %v1280
        %v1341 = vpack.c.b16 %v1283, %v1282
        %v1342 = vpack.c.b16 %v1285, %v1284
        %v1343 = vpack.c.b16 %v1287, %v1286
        %v1344 = vpack.c.b16 %v1289, %v1288
        %v1345 = vpack.c.b16 %v1291, %v1290
        %v1346 = vpack.c.b16 %v1293, %v1292
        %v1347 = vpack.c.b16 %v1295, %v1294
        %v1348 = vpack.c.b16 %v1297, %v1296
        %v1349 = vpack.c.b16 %v1299, %v1298
        %v1350 = vpack.c.b16 %v1301, %v1300
        %v1351 = vpack.c.b16 %v1303, %v1302
        %v1352 = vpack.c.b16 %v1305, %v1304
        %v1353 = vpack.c.b16 %v1307, %v1306
        %v1354 = vpack.c.b16 %v1309, %v1308
        %v1355 = vpack.c.b16 %v1311, %v1310
        %v1356 = vpack.c.b16 %v1313, %v1312
        %v1357 = vpack.c.b16 %v1315, %v1314
        %v1358 = vpack.c.b16 %v1317, %v1316
        %v1359 = vpack.c.b16 %v1319, %v1318
        %v1360 = vpack.c.b16 %v1321, %v1320
        %v1361 = vpack.c.b16 %v1323, %v1322
        %v1362 = vpack.c.b16 %v1325, %v1324
        %v1363 = vpack.c.b16 %v1327, %v1326
        %v1364 = vpack.c.b16 %v1329, %v1328
        %v1365 = vpack.c.b16 %v1331, %v1330
        %v1366 = vpack.c.b16 %v1333, %v1332
        %v1367 = vpack.c.b16 %v1335, %v1334
        %v1369 = vshrl.u32 %v1336, 16
        %v1371 = vshll.u32 %v1336, 16
        %v1373 = vrot.slane %v1371, 1
        %v1374 = vor.u32 %v1369, %v1373
        %v1376 = vshrl.u32 %v1337, 16
        %v1378 = vshll.u32 %v1337, 16
        %v1380 = vrot.slane %v1378, 1
        %v1381 = vor.u32 %v1376, %v1380
        %v1383 = vshrl.u32 %v1338, 16
        %v1385 = vshll.u32 %v1338, 16
        %v1387 = vrot.slane %v1385, 1
        %v1388 = vor.u32 %v1383, %v1387
        %v1390 = vshrl.u32 %v1339, 16
        %v1392 = vshll.u32 %v1339, 16
        %v1394 = vrot.slane %v1392, 1
        %v1395 = vor.u32 %v1390, %v1394
        %v1397 = vshrl.u32 %v1340, 16
        %v1399 = vshll.u32 %v1340, 16
        %v1401 = vrot.slane %v1399, 1
        %v1402 = vor.u32 %v1397, %v1401
        %v1404 = vshrl.u32 %v1341, 16
        %v1406 = vshll.u32 %v1341, 16
        %v1408 = vrot.slane %v1406, 1
        %v1409 = vor.u32 %v1404, %v1408
        %v1411 = vshrl.u32 %v1342, 16
        %v1413 = vshll.u32 %v1342, 16
        %v1415 = vrot.slane %v1413, 1
        %v1416 = vor.u32 %v1411, %v1415
        %v1418 = vshrl.u32 %v1343, 16
        %v1420 = vshll.u32 %v1343, 16
        %v1422 = vrot.slane %v1420, 1
        %v1423 = vor.u32 %v1418, %v1422
        %v1425 = vshrl.u32 %v1344, 16
        %v1427 = vshll.u32 %v1344, 16
        %v1429 = vrot.slane %v1427, 1
        %v1430 = vor.u32 %v1425, %v1429
        %v1432 = vshrl.u32 %v1345, 16
        %v1434 = vshll.u32 %v1345, 16
        %v1436 = vrot.slane %v1434, 1
        %v1437 = vor.u32 %v1432, %v1436
        %v1439 = vshrl.u32 %v1346, 16
        %v1441 = vshll.u32 %v1346, 16
        %v1443 = vrot.slane %v1441, 1
        %v1444 = vor.u32 %v1439, %v1443
        %v1446 = vshrl.u32 %v1347, 16
        %v1448 = vshll.u32 %v1347, 16
        %v1450 = vrot.slane %v1448, 1
        %v1451 = vor.u32 %v1446, %v1450
        %v1453 = vshrl.u32 %v1348, 16
        %v1455 = vshll.u32 %v1348, 16
        %v1457 = vrot.slane %v1455, 1
        %v1458 = vor.u32 %v1453, %v1457
        %v1460 = vshrl.u32 %v1349, 16
        %v1462 = vshll.u32 %v1349, 16
        %v1464 = vrot.slane %v1462, 1
        %v1465 = vor.u32 %v1460, %v1464
        %v1467 = vshrl.u32 %v1350, 16
        %v1469 = vshll.u32 %v1350, 16
        %v1471 = vrot.slane %v1469, 1
        %v1472 = vor.u32 %v1467, %v1471
        %v1474 = vshrl.u32 %v1351, 16
        %v1476 = vshll.u32 %v1351, 16
        %v1478 = vrot.slane %v1476, 1
        %v1479 = vor.u32 %v1474, %v1478
        %v1481 = vshrl.u32 %v1352, 16
        %v1483 = vshll.u32 %v1352, 16
        %v1485 = vrot.slane %v1483, 1
        %v1486 = vor.u32 %v1481, %v1485
        %v1488 = vshrl.u32 %v1353, 16
        %v1490 = vshll.u32 %v1353, 16
        %v1492 = vrot.slane %v1490, 1
        %v1493 = vor.u32 %v1488, %v1492
        %v1495 = vshrl.u32 %v1354, 16
        %v1497 = vshll.u32 %v1354, 16
        %v1499 = vrot.slane %v1497, 1
        %v1500 = vor.u32 %v1495, %v1499
        %v1502 = vshrl.u32 %v1355, 16
        %v1504 = vshll.u32 %v1355, 16
        %v1506 = vrot.slane %v1504, 1
        %v1507 = vor.u32 %v1502, %v1506
        %v1509 = vshrl.u32 %v1356, 16
        %v1511 = vshll.u32 %v1356, 16
        %v1513 = vrot.slane %v1511, 1
        %v1514 = vor.u32 %v1509, %v1513
        %v1516 = vshrl.u32 %v1357, 16
        %v1518 = vshll.u32 %v1357, 16
        %v1520 = vrot.slane %v1518, 1
        %v1521 = vor.u32 %v1516, %v1520
        %v1523 = vshrl.u32 %v1358, 16
        %v1525 = vshll.u32 %v1358, 16
        %v1527 = vrot.slane %v1525, 1
        %v1528 = vor.u32 %v1523, %v1527
        %v1530 = vshrl.u32 %v1359, 16
        %v1532 = vshll.u32 %v1359, 16
        %v1534 = vrot.slane %v1532, 1
        %v1535 = vor.u32 %v1530, %v1534
        %v1537 = vshrl.u32 %v1360, 16
        %v1539 = vshll.u32 %v1360, 16
        %v1541 = vrot.slane %v1539, 1
        %v1542 = vor.u32 %v1537, %v1541
        %v1544 = vshrl.u32 %v1361, 16
        %v1546 = vshll.u32 %v1361, 16
        %v1548 = vrot.slane %v1546, 1
        %v1549 = vor.u32 %v1544, %v1548
        %v1551 = vshrl.u32 %v1362, 16
        %v1553 = vshll.u32 %v1362, 16
        %v1555 = vrot.slane %v1553, 1
        %v1556 = vor.u32 %v1551, %v1555
        %v1558 = vshrl.u32 %v1363, 16
        %v1560 = vshll.u32 %v1363, 16
        %v1562 = vrot.slane %v1560, 1
        %v1563 = vor.u32 %v1558, %v1562
        %v1565 = vshrl.u32 %v1364, 16
        %v1567 = vshll.u32 %v1364, 16
        %v1569 = vrot.slane %v1567, 1
        %v1570 = vor.u32 %v1565, %v1569
        %v1572 = vshrl.u32 %v1365, 16
        %v1574 = vshll.u32 %v1365, 16
        %v1576 = vrot.slane %v1574, 1
        %v1577 = vor.u32 %v1572, %v1576
        %v1579 = vshrl.u32 %v1366, 16
        %v1581 = vshll.u32 %v1366, 16
        %v1583 = vrot.slane %v1581, 1
        %v1584 = vor.u32 %v1579, %v1583
        %v1586 = vshrl.u32 %v1367, 16
        %v1588 = vshll.u32 %v1367, 16
        %v1590 = vrot.slane %v1588, 1
        %v1591 = vor.u32 %v1586, %v1590
        %v1624 = vunpack.c.l.b16 %v1176
        %v1625 = vunpack.c.l.b16 %v1177
        %v1626 = vunpack.c.l.b16 %v1178
        %v1627 = vunpack.c.l.b16 %v1179
        %v1628 = vunpack.c.l.b16 %v1180
        %v1629 = vunpack.c.l.b16 %v1181
        %v1630 = vunpack.c.l.b16 %v1182
        %v1631 = vunpack.c.l.b16 %v1183
        %v1632 = vunpack.c.l.b16 %v1184
        %v1633 = vunpack.c.l.b16 %v1185
        %v1634 = vunpack.c.l.b16 %v1186
        %v1635 = vunpack.c.l.b16 %v1187
        %v1636 = vunpack.c.l.b16 %v1188
        %v1637 = vunpack.c.l.b16 %v1189
        %v1638 = vunpack.c.l.b16 %v1190
        %v1639 = vunpack.c.l.b16 %v1191
        %v1640 = vunpack.c.l.b16 %v1192
        %v1641 = vunpack.c.l.b16 %v1193
        %v1642 = vunpack.c.l.b16 %v1194
        %v1643 = vunpack.c.l.b16 %v1195
        %v1644 = vunpack.c.l.b16 %v1196
        %v1645 = vunpack.c.l.b16 %v1197
        %v1646 = vunpack.c.l.b16 %v1198
        %v1647 = vunpack.c.l.b16 %v1199
        %v1648 = vunpack.c.l.b16 %v1200
        %v1649 = vunpack.c.l.b16 %v1201
        %v1650 = vunpack.c.l.b16 %v1202
        %v1651 = vunpack.c.l.b16 %v1203
        %v1652 = vunpack.c.l.b16 %v1204
        %v1653 = vunpack.c.l.b16 %v1205
        %v1654 = vunpack.c.l.b16 %v1206
        %v1655 = vunpack.c.l.b16 %v1207
        %v1656 = vpack.c.b16 %v1273, %v1624
        %v1657 = vpack.c.b16 %v1275, %v1625
        %v1658 = vpack.c.b16 %v1277, %v1626
        %v1659 = vpack.c.b16 %v1279, %v1627
        %v1660 = vpack.c.b16 %v1281, %v1628
        %v1661 = vpack.c.b16 %v1283, %v1629
        %v1662 = vpack.c.b16 %v1285, %v1630
        %v1663 = vpack.c.b16 %v1287, %v1631
        %v1664 = vpack.c.b16 %v1289, %v1632
        %v1665 = vpack.c.b16 %v1291, %v1633
        %v1666 = vpack.c.b16 %v1293, %v1634
        %v1667 = vpack.c.b16 %v1295, %v1635
        %v1668 = vpack.c.b16 %v1297, %v1636
        %v1669 = vpack.c.b16 %v1299, %v1637
        %v1670 = vpack.c.b16 %v1301, %v1638
        %v1671 = vpack.c.b16 %v1303, %v1639
        %v1672 = vpack.c.b16 %v1305, %v1640
        %v1673 = vpack.c.b16 %v1307, %v1641
        %v1674 = vpack.c.b16 %v1309, %v1642
        %v1675 = vpack.c.b16 %v1311, %v1643
        %v1676 = vpack.c.b16 %v1313, %v1644
        %v1677 = vpack.c.b16 %v1315, %v1645
        %v1678 = vpack.c.b16 %v1317, %v1646
        %v1679 = vpack.c.b16 %v1319, %v1647
        %v1680 = vpack.c.b16 %v1321, %v1648
        %v1681 = vpack.c.b16 %v1323, %v1649
        %v1682 = vpack.c.b16 %v1325, %v1650
        %v1683 = vpack.c.b16 %v1327, %v1651
        %v1684 = vpack.c.b16 %v1329, %v1652
        %v1685 = vpack.c.b16 %v1331, %v1653
        %v1686 = vpack.c.b16 %v1333, %v1654
        %v1687 = vpack.c.b16 %v1335, %v1655
        %v1688 = vrot.slane %v1656, 1
        %v1689 = vrot.slane %v1657, 1
        %v1690 = vrot.slane %v1658, 1
        %v1691 = vrot.slane %v1659, 1
        %v1692 = vrot.slane %v1660, 1
        %v1693 = vrot.slane %v1661, 1
        %v1694 = vrot.slane %v1662, 1
        %v1695 = vrot.slane %v1663, 1
        %v1696 = vrot.slane %v1664, 1
        %v1697 = vrot.slane %v1665, 1
        %v1698 = vrot.slane %v1666, 1
        %v1699 = vrot.slane %v1667, 1
        %v1700 = vrot.slane %v1668, 1
        %v1701 = vrot.slane %v1669, 1
        %v1702 = vrot.slane %v1670, 1
        %v1703 = vrot.slane %v1671, 1
        %v1704 = vrot.slane %v1672, 1
        %v1705 = vrot.slane %v1673, 1
        %v1706 = vrot.slane %v1674, 1
        %v1707 = vrot.slane %v1675, 1
        %v1708 = vrot.slane %v1676, 1
        %v1709 = vrot.slane %v1677, 1
        %v1710 = vrot.slane %v1678, 1
        %v1711 = vrot.slane %v1679, 1
        %v1712 = vrot.slane %v1680, 1
        %v1713 = vrot.slane %v1681, 1
        %v1714 = vrot.slane %v1682, 1
        %v1715 = vrot.slane %v1683, 1
        %v1716 = vrot.slane %v1684, 1
        %v1717 = vrot.slane %v1685, 1
        %v1718 = vrot.slane %v1686, 1
        %v1719 = vrot.slane %v1687, 1
        %v1720 = vld [vmem:[#allocation5] sm:$0xf]
        %v1721 = vld [vmem:[#allocation5 + $0x4] sm:$0xf]
        %v1722 = vld [vmem:[#allocation5 + $0x8] sm:$0xf]
        %v1723 = vld [vmem:[#allocation5 + $0xc] sm:$0xf]
        %v1724 = vld [vmem:[#allocation5 + $0x10] sm:$0xf]
        %v1725 = vld [vmem:[#allocation5 + $0x14] sm:$0xf]
        %v1726 = vld [vmem:[#allocation5 + $0x18] sm:$0xf]
        %v1727 = vld [vmem:[#allocation5 + $0x1c] sm:$0xf]
        %v1728 = vld [vmem:[#allocation5 + $0x20] sm:$0xf]
        %v1729 = vld [vmem:[#allocation5 + $0x24] sm:$0xf]
        %v1730 = vld [vmem:[#allocation5 + $0x28] sm:$0xf]
        %v1731 = vld [vmem:[#allocation5 + $0x2c] sm:$0xf]
        %v1732 = vld [vmem:[#allocation5 + $0x30] sm:$0xf]
        %v1733 = vld [vmem:[#allocation5 + $0x34] sm:$0xf]
        %v1734 = vld [vmem:[#allocation5 + $0x38] sm:$0xf]
        %v1735 = vld [vmem:[#allocation5 + $0x3c] sm:$0xf]
        %v1736 = vld [vmem:[#allocation5 + $0x40] sm:$0xf]
        %v1737 = vld [vmem:[#allocation5 + $0x44] sm:$0xf]
        %v1738 = vld [vmem:[#allocation5 + $0x48] sm:$0xf]
        %v1739 = vld [vmem:[#allocation5 + $0x4c] sm:$0xf]
        %v1740 = vld [vmem:[#allocation5 + $0x50] sm:$0xf]
        %v1741 = vld [vmem:[#allocation5 + $0x54] sm:$0xf]
        %v1742 = vld [vmem:[#allocation5 + $0x58] sm:$0xf]
        %v1743 = vld [vmem:[#allocation5 + $0x5c] sm:$0xf]
        %v1744 = vld [vmem:[#allocation5 + $0x60] sm:$0xf]
        %v1745 = vld [vmem:[#allocation5 + $0x64] sm:$0xf]
        %v1746 = vld [vmem:[#allocation5 + $0x68] sm:$0xf]
        %v1747 = vld [vmem:[#allocation5 + $0x6c] sm:$0xf]
        %v1748 = vld [vmem:[#allocation5 + $0x70] sm:$0xf]
        %v1749 = vld [vmem:[#allocation5 + $0x74] sm:$0xf]
        %v1750 = vld [vmem:[#allocation5 + $0x78] sm:$0xf]
        %v1751 = vld [vmem:[#allocation5 + $0x7c] sm:$0xf]
        %v1752 = vld [vmem:[#allocation5 + $0x80] sm:$0xf]
        %v1753 = vld [vmem:[#allocation5 + $0x84] sm:$0xf]
        %v1754 = vld [vmem:[#allocation5 + $0x88] sm:$0xf]
        %v1755 = vld [vmem:[#allocation5 + $0x8c] sm:$0xf]
        %v1756 = vld [vmem:[#allocation5 + $0x90] sm:$0xf]
        %v1757 = vld [vmem:[#allocation5 + $0x94] sm:$0xf]
        %v1758 = vld [vmem:[#allocation5 + $0x98] sm:$0xf]
        %v1759 = vld [vmem:[#allocation5 + $0x9c] sm:$0xf]
        %v1760 = vld [vmem:[#allocation5 + $0xa0] sm:$0xf]
        %v1761 = vld [vmem:[#allocation5 + $0xa4] sm:$0xf]
        %v1762 = vld [vmem:[#allocation5 + $0xa8] sm:$0xf]
        %v1763 = vld [vmem:[#allocation5 + $0xac] sm:$0xf]
        %v1764 = vld [vmem:[#allocation5 + $0xb0] sm:$0xf]
        %v1765 = vld [vmem:[#allocation5 + $0xb4] sm:$0xf]
        %v1766 = vld [vmem:[#allocation5 + $0xb8] sm:$0xf]
        %v1767 = vld [vmem:[#allocation5 + $0xbc] sm:$0xf]
        %v1768 = vld [vmem:[%s304] sm:$0xf]
        %v1769 = vld [vmem:[%s304 + $0x8] sm:$0xf]
        %v1770 = vld [vmem:[%s304 + $0x10] sm:$0xf]
        %v1771 = vld [vmem:[%s304 + $0x18] sm:$0xf]
        %v1772 = vld [vmem:[%s304 + $0x20] sm:$0xf]
        %v1773 = vld [vmem:[%s304 + $0x28] sm:$0xf]
        %v1774 = vld [vmem:[%s304 + $0x30] sm:$0xf]
        %v1775 = vld [vmem:[%s304 + $0x38] sm:$0xf]
        %v1776 = vld [vmem:[%s304 + $0x50] sm:$0xf]
        %v1777 = vld [vmem:[%s304 + $0x58] sm:$0xf]
        %v1778 = vld [vmem:[%s304 + $0x60] sm:$0xf]
        %v1779 = vld [vmem:[%s304 + $0x68] sm:$0xf]
        %v1780 = vld [vmem:[%s304 + $0x70] sm:$0xf]
        %v1781 = vld [vmem:[%s304 + $0x78] sm:$0xf]
        %v1782 = vld [vmem:[%s304 + $0x80] sm:$0xf]
        %v1783 = vld [vmem:[%s304 + $0x88] sm:$0xf]
        %v1784 = vld [vmem:[%s304 + $0xa0] sm:$0xf]
        %v1785 = vld [vmem:[%s304 + $0xa8] sm:$0xf]
        %v1786 = vld [vmem:[%s304 + $0xb0] sm:$0xf]
        %v1787 = vld [vmem:[%s304 + $0xb8] sm:$0xf]
        %v1788 = vld [vmem:[%s304 + $0xc0] sm:$0xf]
        %v1789 = vld [vmem:[%s304 + $0xc8] sm:$0xf]
        %v1790 = vld [vmem:[%s304 + $0xd0] sm:$0xf]
        %v1791 = vld [vmem:[%s304 + $0xd8] sm:$0xf]
        %v1792 = vld [vmem:[%s304 + $0xf0] sm:$0xf]
        %v1793 = vld [vmem:[%s304 + $0xf8] sm:$0xf]
        %v1794 = vld [vmem:[%s304 + $0x100] sm:$0xf]
        %v1795 = vld [vmem:[%s304 + $0x108] sm:$0xf]
        %v1796 = vld [vmem:[%s304 + $0x110] sm:$0xf]
        %v1797 = vld [vmem:[%s304 + $0x118] sm:$0xf]
        %v1798 = vld [vmem:[%s304 + $0x120] sm:$0xf]
        %v1799 = vld [vmem:[%s304 + $0x128] sm:$0xf]
        %v1800 = vld [vmem:[%s304 + $0x4] sm:$0x1]
        %v1801 = vld [vmem:[%s304 + $0xc] sm:$0x1]
        %v1802 = vld [vmem:[%s304 + $0x14] sm:$0x1]
        %v1803 = vld [vmem:[%s304 + $0x1c] sm:$0x1]
        %v1804 = vld [vmem:[%s304 + $0x24] sm:$0x1]
        %v1805 = vld [vmem:[%s304 + $0x2c] sm:$0x1]
        %v1806 = vld [vmem:[%s304 + $0x34] sm:$0x1]
        %v1807 = vld [vmem:[%s304 + $0x3c] sm:$0x1]
        %v1808 = vld [vmem:[%s304 + $0x54] sm:$0x1]
        %v1809 = vld [vmem:[%s304 + $0x5c] sm:$0x1]
        %v1810 = vld [vmem:[%s304 + $0x64] sm:$0x1]
        %v1811 = vld [vmem:[%s304 + $0x6c] sm:$0x1]
        %v1812 = vld [vmem:[%s304 + $0x74] sm:$0x1]
        %v1813 = vld [vmem:[%s304 + $0x7c] sm:$0x1]
        %v1814 = vld [vmem:[%s304 + $0x84] sm:$0x1]
        %v1815 = vld [vmem:[%s304 + $0x8c] sm:$0x1]
        %v1816 = vld [vmem:[%s304 + $0xa4] sm:$0x1]
        %v1817 = vld [vmem:[%s304 + $0xac] sm:$0x1]
        %v1818 = vld [vmem:[%s304 + $0xb4] sm:$0x1]
        %v1819 = vld [vmem:[%s304 + $0xbc] sm:$0x1]
        %v1820 = vld [vmem:[%s304 + $0xc4] sm:$0x1]
        %v1821 = vld [vmem:[%s304 + $0xcc] sm:$0x1]
        %v1822 = vld [vmem:[%s304 + $0xd4] sm:$0x1]
        %v1823 = vld [vmem:[%s304 + $0xdc] sm:$0x1]
        %v1824 = vld [vmem:[%s304 + $0xf4] sm:$0x1]
        %v1825 = vld [vmem:[%s304 + $0xfc] sm:$0x1]
        %v1826 = vld [vmem:[%s304 + $0x104] sm:$0x1]
        %v1827 = vld [vmem:[%s304 + $0x10c] sm:$0x1]
        %v1828 = vld [vmem:[%s304 + $0x114] sm:$0x1]
        %v1829 = vld [vmem:[%s304 + $0x11c] sm:$0x1]
        %v1830 = vld [vmem:[%s304 + $0x124] sm:$0x1]
        %v1831 = vld [vmem:[%s304 + $0x12c] sm:$0x1]
        %v1832 = vld [vmem:[%s304] sm:$0xe]
        %v1833 = vld [vmem:[%s304 + $0x8] sm:$0xe]
        %v1834 = vld [vmem:[%s304 + $0x10] sm:$0xe]
        %v1835 = vld [vmem:[%s304 + $0x18] sm:$0xe]
        %v1836 = vld [vmem:[%s304 + $0x20] sm:$0xe]
        %v1837 = vld [vmem:[%s304 + $0x28] sm:$0xe]
        %v1838 = vld [vmem:[%s304 + $0x30] sm:$0xe]
        %v1839 = vld [vmem:[%s304 + $0x38] sm:$0xe]
        %v1840 = vld [vmem:[%s304 + $0x50] sm:$0xe]
        %v1841 = vld [vmem:[%s304 + $0x58] sm:$0xe]
        %v1842 = vld [vmem:[%s304 + $0x60] sm:$0xe]
        %v1843 = vld [vmem:[%s304 + $0x68] sm:$0xe]
        %v1844 = vld [vmem:[%s304 + $0x70] sm:$0xe]
        %v1845 = vld [vmem:[%s304 + $0x78] sm:$0xe]
        %v1846 = vld [vmem:[%s304 + $0x80] sm:$0xe]
        %v1847 = vld [vmem:[%s304 + $0x88] sm:$0xe]
        %v1848 = vld [vmem:[%s304 + $0xa0] sm:$0xe]
        %v1849 = vld [vmem:[%s304 + $0xa8] sm:$0xe]
        %v1850 = vld [vmem:[%s304 + $0xb0] sm:$0xe]
        %v1851 = vld [vmem:[%s304 + $0xb8] sm:$0xe]
        %v1852 = vld [vmem:[%s304 + $0xc0] sm:$0xe]
        %v1853 = vld [vmem:[%s304 + $0xc8] sm:$0xe]
        %v1854 = vld [vmem:[%s304 + $0xd0] sm:$0xe]
        %v1855 = vld [vmem:[%s304 + $0xd8] sm:$0xe]
        %v1856 = vld [vmem:[%s304 + $0xf0] sm:$0xe]
        %v1857 = vld [vmem:[%s304 + $0xf8] sm:$0xe]
        %v1858 = vld [vmem:[%s304 + $0x100] sm:$0xe]
        %v1859 = vld [vmem:[%s304 + $0x108] sm:$0xe]
        %v1860 = vld [vmem:[%s304 + $0x110] sm:$0xe]
        %v1861 = vld [vmem:[%s304 + $0x118] sm:$0xe]
        %v1862 = vld [vmem:[%s304 + $0x120] sm:$0xe]
        %v1863 = vld [vmem:[%s304 + $0x128] sm:$0xe]
        %v1928 = vunpack.c.l.b16 %v1768
        %v1929 = vunpack.c.l.b16 %v1800
        %v1930 = vunpack.c.l.b16 %v1769
        %v1931 = vunpack.c.l.b16 %v1801
        %v1932 = vunpack.c.l.b16 %v1770
        %v1933 = vunpack.c.l.b16 %v1802
        %v1934 = vunpack.c.l.b16 %v1771
        %v1935 = vunpack.c.l.b16 %v1803
        %v1936 = vunpack.c.l.b16 %v1772
        %v1937 = vunpack.c.l.b16 %v1804
        %v1938 = vunpack.c.l.b16 %v1773
        %v1939 = vunpack.c.l.b16 %v1805
        %v1940 = vunpack.c.l.b16 %v1774
        %v1941 = vunpack.c.l.b16 %v1806
        %v1942 = vunpack.c.l.b16 %v1775
        %v1943 = vunpack.c.l.b16 %v1807
        %v1944 = vunpack.c.l.b16 %v1776
        %v1945 = vunpack.c.l.b16 %v1808
        %v1946 = vunpack.c.l.b16 %v1777
        %v1947 = vunpack.c.l.b16 %v1809
        %v1948 = vunpack.c.l.b16 %v1778
        %v1949 = vunpack.c.l.b16 %v1810
        %v1950 = vunpack.c.l.b16 %v1779
        %v1951 = vunpack.c.l.b16 %v1811
        %v1952 = vunpack.c.l.b16 %v1780
        %v1953 = vunpack.c.l.b16 %v1812
        %v1954 = vunpack.c.l.b16 %v1781
        %v1955 = vunpack.c.l.b16 %v1813
        %v1956 = vunpack.c.l.b16 %v1782
        %v1957 = vunpack.c.l.b16 %v1814
        %v1958 = vunpack.c.l.b16 %v1783
        %v1959 = vunpack.c.l.b16 %v1815
        %v1960 = vunpack.c.l.b16 %v1784
        %v1961 = vunpack.c.l.b16 %v1816
        %v1962 = vunpack.c.l.b16 %v1785
        %v1963 = vunpack.c.l.b16 %v1817
        %v1964 = vunpack.c.l.b16 %v1786
        %v1965 = vunpack.c.l.b16 %v1818
        %v1966 = vunpack.c.l.b16 %v1787
        %v1967 = vunpack.c.l.b16 %v1819
        %v1968 = vunpack.c.l.b16 %v1788
        %v1969 = vunpack.c.l.b16 %v1820
        %v1970 = vunpack.c.l.b16 %v1789
        %v1971 = vunpack.c.l.b16 %v1821
        %v1972 = vunpack.c.l.b16 %v1790
        %v1973 = vunpack.c.l.b16 %v1822
        %v1974 = vunpack.c.l.b16 %v1791
        %v1975 = vunpack.c.l.b16 %v1823
        %v1976 = vunpack.c.l.b16 %v1792
        %v1977 = vunpack.c.l.b16 %v1824
        %v1978 = vunpack.c.l.b16 %v1793
        %v1979 = vunpack.c.l.b16 %v1825
        %v1980 = vunpack.c.l.b16 %v1794
        %v1981 = vunpack.c.l.b16 %v1826
        %v1982 = vunpack.c.l.b16 %v1795
        %v1983 = vunpack.c.l.b16 %v1827
        %v1984 = vunpack.c.l.b16 %v1796
        %v1985 = vunpack.c.l.b16 %v1828
        %v1986 = vunpack.c.l.b16 %v1797
        %v1987 = vunpack.c.l.b16 %v1829
        %v1988 = vunpack.c.l.b16 %v1798
        %v1989 = vunpack.c.l.b16 %v1830
        %v1990 = vunpack.c.l.b16 %v1799
        %v1991 = vunpack.c.l.b16 %v1831
        %v1992 = vpack.c.b16 %v1929, %v1928
        %v1993 = vpack.c.b16 %v1931, %v1930
        %v1994 = vpack.c.b16 %v1933, %v1932
        %v1995 = vpack.c.b16 %v1935, %v1934
        %v1996 = vpack.c.b16 %v1937, %v1936
        %v1997 = vpack.c.b16 %v1939, %v1938
        %v1998 = vpack.c.b16 %v1941, %v1940
        %v1999 = vpack.c.b16 %v1943, %v1942
        %v2000 = vpack.c.b16 %v1945, %v1944
        %v2001 = vpack.c.b16 %v1947, %v1946
        %v2002 = vpack.c.b16 %v1949, %v1948
        %v2003 = vpack.c.b16 %v1951, %v1950
        %v2004 = vpack.c.b16 %v1953, %v1952
        %v2005 = vpack.c.b16 %v1955, %v1954
        %v2006 = vpack.c.b16 %v1957, %v1956
        %v2007 = vpack.c.b16 %v1959, %v1958
        %v2008 = vpack.c.b16 %v1961, %v1960
        %v2009 = vpack.c.b16 %v1963, %v1962
        %v2010 = vpack.c.b16 %v1965, %v1964
        %v2011 = vpack.c.b16 %v1967, %v1966
        %v2012 = vpack.c.b16 %v1969, %v1968
        %v2013 = vpack.c.b16 %v1971, %v1970
        %v2014 = vpack.c.b16 %v1973, %v1972
        %v2015 = vpack.c.b16 %v1975, %v1974
        %v2016 = vpack.c.b16 %v1977, %v1976
        %v2017 = vpack.c.b16 %v1979, %v1978
        %v2018 = vpack.c.b16 %v1981, %v1980
        %v2019 = vpack.c.b16 %v1983, %v1982
        %v2020 = vpack.c.b16 %v1985, %v1984
        %v2021 = vpack.c.b16 %v1987, %v1986
        %v2022 = vpack.c.b16 %v1989, %v1988
        %v2023 = vpack.c.b16 %v1991, %v1990
        %v2025 = vshrl.u32 %v1992, 16
        %v2027 = vshll.u32 %v1992, 16
        %v2029 = vrot.slane %v2027, 1
        %v2030 = vor.u32 %v2025, %v2029
        %v2032 = vshrl.u32 %v1993, 16
        %v2034 = vshll.u32 %v1993, 16
        %v2036 = vrot.slane %v2034, 1
        %v2037 = vor.u32 %v2032, %v2036
        %v2039 = vshrl.u32 %v1994, 16
        %v2041 = vshll.u32 %v1994, 16
        %v2043 = vrot.slane %v2041, 1
        %v2044 = vor.u32 %v2039, %v2043
        %v2046 = vshrl.u32 %v1995, 16
        %v2048 = vshll.u32 %v1995, 16
        %v2050 = vrot.slane %v2048, 1
        %v2051 = vor.u32 %v2046, %v2050
        %v2053 = vshrl.u32 %v1996, 16
        %v2055 = vshll.u32 %v1996, 16
        %v2057 = vrot.slane %v2055, 1
        %v2058 = vor.u32 %v2053, %v2057
        %v2060 = vshrl.u32 %v1997, 16
        %v2062 = vshll.u32 %v1997, 16
        %v2064 = vrot.slane %v2062, 1
        %v2065 = vor.u32 %v2060, %v2064
        %v2067 = vshrl.u32 %v1998, 16
        %v2069 = vshll.u32 %v1998, 16
        %v2071 = vrot.slane %v2069, 1
        %v2072 = vor.u32 %v2067, %v2071
        %v2074 = vshrl.u32 %v1999, 16
        %v2076 = vshll.u32 %v1999, 16
        %v2078 = vrot.slane %v2076, 1
        %v2079 = vor.u32 %v2074, %v2078
        %v2081 = vshrl.u32 %v2000, 16
        %v2083 = vshll.u32 %v2000, 16
        %v2085 = vrot.slane %v2083, 1
        %v2086 = vor.u32 %v2081, %v2085
        %v2088 = vshrl.u32 %v2001, 16
        %v2090 = vshll.u32 %v2001, 16
        %v2092 = vrot.slane %v2090, 1
        %v2093 = vor.u32 %v2088, %v2092
        %v2095 = vshrl.u32 %v2002, 16
        %v2097 = vshll.u32 %v2002, 16
        %v2099 = vrot.slane %v2097, 1
        %v2100 = vor.u32 %v2095, %v2099
        %v2102 = vshrl.u32 %v2003, 16
        %v2104 = vshll.u32 %v2003, 16
        %v2106 = vrot.slane %v2104, 1
        %v2107 = vor.u32 %v2102, %v2106
        %v2109 = vshrl.u32 %v2004, 16
        %v2111 = vshll.u32 %v2004, 16
        %v2113 = vrot.slane %v2111, 1
        %v2114 = vor.u32 %v2109, %v2113
        %v2116 = vshrl.u32 %v2005, 16
        %v2118 = vshll.u32 %v2005, 16
        %v2120 = vrot.slane %v2118, 1
        %v2121 = vor.u32 %v2116, %v2120
        %v2123 = vshrl.u32 %v2006, 16
        %v2125 = vshll.u32 %v2006, 16
        %v2127 = vrot.slane %v2125, 1
        %v2128 = vor.u32 %v2123, %v2127
        %v2130 = vshrl.u32 %v2007, 16
        %v2132 = vshll.u32 %v2007, 16
        %v2134 = vrot.slane %v2132, 1
        %v2135 = vor.u32 %v2130, %v2134
        %v2137 = vshrl.u32 %v2008, 16
        %v2139 = vshll.u32 %v2008, 16
        %v2141 = vrot.slane %v2139, 1
        %v2142 = vor.u32 %v2137, %v2141
        %v2144 = vshrl.u32 %v2009, 16
        %v2146 = vshll.u32 %v2009, 16
        %v2148 = vrot.slane %v2146, 1
        %v2149 = vor.u32 %v2144, %v2148
        %v2151 = vshrl.u32 %v2010, 16
        %v2153 = vshll.u32 %v2010, 16
        %v2155 = vrot.slane %v2153, 1
        %v2156 = vor.u32 %v2151, %v2155
        %v2158 = vshrl.u32 %v2011, 16
        %v2160 = vshll.u32 %v2011, 16
        %v2162 = vrot.slane %v2160, 1
        %v2163 = vor.u32 %v2158, %v2162
        %v2165 = vshrl.u32 %v2012, 16
        %v2167 = vshll.u32 %v2012, 16
        %v2169 = vrot.slane %v2167, 1
        %v2170 = vor.u32 %v2165, %v2169
        %v2172 = vshrl.u32 %v2013, 16
        %v2174 = vshll.u32 %v2013, 16
        %v2176 = vrot.slane %v2174, 1
        %v2177 = vor.u32 %v2172, %v2176
        %v2179 = vshrl.u32 %v2014, 16
        %v2181 = vshll.u32 %v2014, 16
        %v2183 = vrot.slane %v2181, 1
        %v2184 = vor.u32 %v2179, %v2183
        %v2186 = vshrl.u32 %v2015, 16
        %v2188 = vshll.u32 %v2015, 16
        %v2190 = vrot.slane %v2188, 1
        %v2191 = vor.u32 %v2186, %v2190
        %v2193 = vshrl.u32 %v2016, 16
        %v2195 = vshll.u32 %v2016, 16
        %v2197 = vrot.slane %v2195, 1
        %v2198 = vor.u32 %v2193, %v2197
        %v2200 = vshrl.u32 %v2017, 16
        %v2202 = vshll.u32 %v2017, 16
        %v2204 = vrot.slane %v2202, 1
        %v2205 = vor.u32 %v2200, %v2204
        %v2207 = vshrl.u32 %v2018, 16
        %v2209 = vshll.u32 %v2018, 16
        %v2211 = vrot.slane %v2209, 1
        %v2212 = vor.u32 %v2207, %v2211
        %v2214 = vshrl.u32 %v2019, 16
        %v2216 = vshll.u32 %v2019, 16
        %v2218 = vrot.slane %v2216, 1
        %v2219 = vor.u32 %v2214, %v2218
        %v2221 = vshrl.u32 %v2020, 16
        %v2223 = vshll.u32 %v2020, 16
        %v2225 = vrot.slane %v2223, 1
        %v2226 = vor.u32 %v2221, %v2225
        %v2228 = vshrl.u32 %v2021, 16
        %v2230 = vshll.u32 %v2021, 16
        %v2232 = vrot.slane %v2230, 1
        %v2233 = vor.u32 %v2228, %v2232
        %v2235 = vshrl.u32 %v2022, 16
        %v2237 = vshll.u32 %v2022, 16
        %v2239 = vrot.slane %v2237, 1
        %v2240 = vor.u32 %v2235, %v2239
        %v2242 = vshrl.u32 %v2023, 16
        %v2244 = vshll.u32 %v2023, 16
        %v2246 = vrot.slane %v2244, 1
        %v2247 = vor.u32 %v2242, %v2246
        %v2280 = vunpack.c.l.b16 %v1832
        %v2281 = vunpack.c.l.b16 %v1833
        %v2282 = vunpack.c.l.b16 %v1834
        %v2283 = vunpack.c.l.b16 %v1835
        %v2284 = vunpack.c.l.b16 %v1836
        %v2285 = vunpack.c.l.b16 %v1837
        %v2286 = vunpack.c.l.b16 %v1838
        %v2287 = vunpack.c.l.b16 %v1839
        %v2288 = vunpack.c.l.b16 %v1840
        %v2289 = vunpack.c.l.b16 %v1841
        %v2290 = vunpack.c.l.b16 %v1842
        %v2291 = vunpack.c.l.b16 %v1843
        %v2292 = vunpack.c.l.b16 %v1844
        %v2293 = vunpack.c.l.b16 %v1845
        %v2294 = vunpack.c.l.b16 %v1846
        %v2295 = vunpack.c.l.b16 %v1847
        %v2296 = vunpack.c.l.b16 %v1848
        %v2297 = vunpack.c.l.b16 %v1849
        %v2298 = vunpack.c.l.b16 %v1850
        %v2299 = vunpack.c.l.b16 %v1851
        %v2300 = vunpack.c.l.b16 %v1852
        %v2301 = vunpack.c.l.b16 %v1853
        %v2302 = vunpack.c.l.b16 %v1854
        %v2303 = vunpack.c.l.b16 %v1855
        %v2304 = vunpack.c.l.b16 %v1856
        %v2305 = vunpack.c.l.b16 %v1857
        %v2306 = vunpack.c.l.b16 %v1858
        %v2307 = vunpack.c.l.b16 %v1859
        %v2308 = vunpack.c.l.b16 %v1860
        %v2309 = vunpack.c.l.b16 %v1861
        %v2310 = vunpack.c.l.b16 %v1862
        %v2311 = vunpack.c.l.b16 %v1863
        %v2312 = vpack.c.b16 %v1929, %v2280
        %v2313 = vpack.c.b16 %v1931, %v2281
        %v2314 = vpack.c.b16 %v1933, %v2282
        %v2315 = vpack.c.b16 %v1935, %v2283
        %v2316 = vpack.c.b16 %v1937, %v2284
        %v2317 = vpack.c.b16 %v1939, %v2285
        %v2318 = vpack.c.b16 %v1941, %v2286
        %v2319 = vpack.c.b16 %v1943, %v2287
        %v2320 = vpack.c.b16 %v1945, %v2288
        %v2321 = vpack.c.b16 %v1947, %v2289
        %v2322 = vpack.c.b16 %v1949, %v2290
        %v2323 = vpack.c.b16 %v1951, %v2291
        %v2324 = vpack.c.b16 %v1953, %v2292
        %v2325 = vpack.c.b16 %v1955, %v2293
        %v2326 = vpack.c.b16 %v1957, %v2294
        %v2327 = vpack.c.b16 %v1959, %v2295
        %v2328 = vpack.c.b16 %v1961, %v2296
        %v2329 = vpack.c.b16 %v1963, %v2297
        %v2330 = vpack.c.b16 %v1965, %v2298
        %v2331 = vpack.c.b16 %v1967, %v2299
        %v2332 = vpack.c.b16 %v1969, %v2300
        %v2333 = vpack.c.b16 %v1971, %v2301
        %v2334 = vpack.c.b16 %v1973, %v2302
        %v2335 = vpack.c.b16 %v1975, %v2303
        %v2336 = vpack.c.b16 %v1977, %v2304
        %v2337 = vpack.c.b16 %v1979, %v2305
        %v2338 = vpack.c.b16 %v1981, %v2306
        %v2339 = vpack.c.b16 %v1983, %v2307
        %v2340 = vpack.c.b16 %v1985, %v2308
        %v2341 = vpack.c.b16 %v1987, %v2309
        %v2342 = vpack.c.b16 %v1989, %v2310
        %v2343 = vpack.c.b16 %v1991, %v2311
        %v2344 = vrot.slane %v2312, 1
        %v2345 = vrot.slane %v2313, 1
        %v2346 = vrot.slane %v2314, 1
        %v2347 = vrot.slane %v2315, 1
        %v2348 = vrot.slane %v2316, 1
        %v2349 = vrot.slane %v2317, 1
        %v2350 = vrot.slane %v2318, 1
        %v2351 = vrot.slane %v2319, 1
        %v2352 = vrot.slane %v2320, 1
        %v2353 = vrot.slane %v2321, 1
        %v2354 = vrot.slane %v2322, 1
        %v2355 = vrot.slane %v2323, 1
        %v2356 = vrot.slane %v2324, 1
        %v2357 = vrot.slane %v2325, 1
        %v2358 = vrot.slane %v2326, 1
        %v2359 = vrot.slane %v2327, 1
        %v2360 = vrot.slane %v2328, 1
        %v2361 = vrot.slane %v2329, 1
        %v2362 = vrot.slane %v2330, 1
        %v2363 = vrot.slane %v2331, 1
        %v2364 = vrot.slane %v2332, 1
        %v2365 = vrot.slane %v2333, 1
        %v2366 = vrot.slane %v2334, 1
        %v2367 = vrot.slane %v2335, 1
        %v2368 = vrot.slane %v2336, 1
        %v2369 = vrot.slane %v2337, 1
        %v2370 = vrot.slane %v2338, 1
        %v2371 = vrot.slane %v2339, 1
        %v2372 = vrot.slane %v2340, 1
        %v2373 = vrot.slane %v2341, 1
        %v2374 = vrot.slane %v2342, 1
        %v2375 = vrot.slane %v2343, 1
        %v2376 = vld [vmem:[#allocation5 + $0xc0] sm:$0xf]
        %v2377 = vld [vmem:[#allocation5 + $0xc4] sm:$0xf]
        %v2378 = vld [vmem:[#allocation5 + $0xc8] sm:$0xf]
        %v2379 = vld [vmem:[#allocation5 + $0xcc] sm:$0xf]
        %v2380 = vld [vmem:[#allocation5 + $0xd0] sm:$0xf]
        %v2381 = vld [vmem:[#allocation5 + $0xd4] sm:$0xf]
        %v2382 = vld [vmem:[#allocation5 + $0xd8] sm:$0xf]
        %v2383 = vld [vmem:[#allocation5 + $0xdc] sm:$0xf]
        %v2384 = vld [vmem:[#allocation5 + $0xe0] sm:$0xf]
        %v2385 = vld [vmem:[#allocation5 + $0xe4] sm:$0xf]
        %v2386 = vld [vmem:[#allocation5 + $0xe8] sm:$0xf]
        %v2387 = vld [vmem:[#allocation5 + $0xec] sm:$0xf]
        %v2388 = vld [vmem:[#allocation5 + $0xf0] sm:$0xf]
        %v2389 = vld [vmem:[#allocation5 + $0xf4] sm:$0xf]
        %v2390 = vld [vmem:[#allocation5 + $0xf8] sm:$0xf]
        %v2391 = vld [vmem:[#allocation5 + $0xfc] sm:$0xf]
        %v2392 = vld [vmem:[#allocation5 + $0x100] sm:$0xf]
        %v2393 = vld [vmem:[#allocation5 + $0x104] sm:$0xf]
        %v2394 = vld [vmem:[#allocation5 + $0x108] sm:$0xf]
        %v2395 = vld [vmem:[#allocation5 + $0x10c] sm:$0xf]
        %v2396 = vld [vmem:[#allocation5 + $0x110] sm:$0xf]
        %v2397 = vld [vmem:[#allocation5 + $0x114] sm:$0xf]
        %v2398 = vld [vmem:[#allocation5 + $0x118] sm:$0xf]
        %v2399 = vld [vmem:[#allocation5 + $0x11c] sm:$0xf]
        %v2400 = vld [vmem:[#allocation5 + $0x120] sm:$0xf]
        %v2401 = vld [vmem:[#allocation5 + $0x124] sm:$0xf]
        %v2402 = vld [vmem:[#allocation5 + $0x128] sm:$0xf]
        %v2403 = vld [vmem:[#allocation5 + $0x12c] sm:$0xf]
        %v2404 = vld [vmem:[#allocation5 + $0x130] sm:$0xf]
        %v2405 = vld [vmem:[#allocation5 + $0x134] sm:$0xf]
        %v2406 = vld [vmem:[#allocation5 + $0x138] sm:$0xf]
        %v2407 = vld [vmem:[#allocation5 + $0x13c] sm:$0xf]
        %v2408 = vld [vmem:[#allocation5 + $0x140] sm:$0xf]
        %v2409 = vld [vmem:[#allocation5 + $0x144] sm:$0xf]
        %v2410 = vld [vmem:[#allocation5 + $0x148] sm:$0xf]
        %v2411 = vld [vmem:[#allocation5 + $0x14c] sm:$0xf]
        %v2412 = vld [vmem:[#allocation5 + $0x150] sm:$0xf]
        %v2413 = vld [vmem:[#allocation5 + $0x154] sm:$0xf]
        %v2414 = vld [vmem:[#allocation5 + $0x158] sm:$0xf]
        %v2415 = vld [vmem:[#allocation5 + $0x15c] sm:$0xf]
        %v2416 = vld [vmem:[#allocation5 + $0x160] sm:$0xf]
        %v2417 = vld [vmem:[#allocation5 + $0x164] sm:$0xf]
        %v2418 = vld [vmem:[#allocation5 + $0x168] sm:$0xf]
        %v2419 = vld [vmem:[#allocation5 + $0x16c] sm:$0xf]
        %v2420 = vld [vmem:[#allocation5 + $0x170] sm:$0xf]
        %v2421 = vld [vmem:[#allocation5 + $0x174] sm:$0xf]
        %v2422 = vld [vmem:[#allocation5 + $0x178] sm:$0xf]
        %v2423 = vld [vmem:[#allocation5 + $0x17c] sm:$0xf]
        %v2424 = vunpack.c.l.b16 %v2030
        %v2425 = vunpack.c.l.b16 %v2344
        %v2426 = vunpack.c.l.b16 %v2037
        %v2427 = vunpack.c.l.b16 %v2345
        %v2428 = vunpack.c.l.b16 %v2044
        %v2429 = vunpack.c.l.b16 %v2346
        %v2430 = vunpack.c.l.b16 %v2051
        %v2431 = vunpack.c.l.b16 %v2347
        %v2432 = vunpack.c.l.b16 %v2058
        %v2433 = vunpack.c.l.b16 %v2348
        %v2434 = vunpack.c.l.b16 %v2065
        %v2435 = vunpack.c.l.b16 %v2349
        %v2436 = vunpack.c.l.b16 %v2072
        %v2437 = vunpack.c.l.b16 %v2350
        %v2438 = vunpack.c.l.b16 %v2079
        %v2439 = vunpack.c.l.b16 %v2351
        %v2440 = vunpack.c.l.b16 %v2086
        %v2441 = vunpack.c.l.b16 %v2352
        %v2442 = vunpack.c.l.b16 %v2093
        %v2443 = vunpack.c.l.b16 %v2353
        %v2444 = vunpack.c.l.b16 %v2100
        %v2445 = vunpack.c.l.b16 %v2354
        %v2446 = vunpack.c.l.b16 %v2107
        %v2447 = vunpack.c.l.b16 %v2355
        %v2448 = vunpack.c.l.b16 %v2114
        %v2449 = vunpack.c.l.b16 %v2356
        %v2450 = vunpack.c.l.b16 %v2121
        %v2451 = vunpack.c.l.b16 %v2357
        %v2452 = vunpack.c.l.b16 %v2128
        %v2453 = vunpack.c.l.b16 %v2358
        %v2454 = vunpack.c.l.b16 %v2135
        %v2455 = vunpack.c.l.b16 %v2359
        %v2456 = vunpack.c.l.b16 %v2142
        %v2457 = vunpack.c.l.b16 %v2360
        %v2458 = vunpack.c.l.b16 %v2149
        %v2459 = vunpack.c.l.b16 %v2361
        %v2460 = vunpack.c.l.b16 %v2156
        %v2461 = vunpack.c.l.b16 %v2362
        %v2462 = vunpack.c.l.b16 %v2163
        %v2463 = vunpack.c.l.b16 %v2363
        %v2464 = vunpack.c.l.b16 %v2170
        %v2465 = vunpack.c.l.b16 %v2364
        %v2466 = vunpack.c.l.b16 %v2177
        %v2467 = vunpack.c.l.b16 %v2365
        %v2468 = vunpack.c.l.b16 %v2184
        %v2469 = vunpack.c.l.b16 %v2366
        %v2470 = vunpack.c.l.b16 %v2191
        %v2471 = vunpack.c.l.b16 %v2367
        %v2472 = vunpack.c.l.b16 %v2198
        %v2473 = vunpack.c.l.b16 %v2368
        %v2474 = vunpack.c.l.b16 %v2205
        %v2475 = vunpack.c.l.b16 %v2369
        %v2476 = vunpack.c.l.b16 %v2212
        %v2477 = vunpack.c.l.b16 %v2370
        %v2478 = vunpack.c.l.b16 %v2219
        %v2479 = vunpack.c.l.b16 %v2371
        %v2480 = vunpack.c.l.b16 %v2226
        %v2481 = vunpack.c.l.b16 %v2372
        %v2482 = vunpack.c.l.b16 %v2233
        %v2483 = vunpack.c.l.b16 %v2373
        %v2484 = vunpack.c.l.b16 %v2240
        %v2485 = vunpack.c.l.b16 %v2374
        %v2486 = vunpack.c.l.b16 %v2247
        %v2487 = vunpack.c.l.b16 %v2375
        %v2488 = vpack.c.b16 %v1930, %v1928
        %v2489 = vpack.c.b16 %v2426, %v2424
        %v2490 = vpack.c.b16 %v2427, %v2425
        %v2491 = vpack.c.b16 %v1934, %v1932
        %v2492 = vpack.c.b16 %v2430, %v2428
        %v2493 = vpack.c.b16 %v2431, %v2429
        %v2494 = vpack.c.b16 %v1938, %v1936
        %v2495 = vpack.c.b16 %v2434, %v2432
        %v2496 = vpack.c.b16 %v2435, %v2433
        %v2497 = vpack.c.b16 %v1942, %v1940
        %v2498 = vpack.c.b16 %v2438, %v2436
        %v2499 = vpack.c.b16 %v2439, %v2437
        %v2500 = vpack.c.b16 %v1946, %v1944
        %v2501 = vpack.c.b16 %v2442, %v2440
        %v2502 = vpack.c.b16 %v2443, %v2441
        %v2503 = vpack.c.b16 %v1950, %v1948
        %v2504 = vpack.c.b16 %v2446, %v2444
        %v2505 = vpack.c.b16 %v2447, %v2445
        %v2506 = vpack.c.b16 %v1954, %v1952
        %v2507 = vpack.c.b16 %v2450, %v2448
        %v2508 = vpack.c.b16 %v2451, %v2449
        %v2509 = vpack.c.b16 %v1958, %v1956
        %v2510 = vpack.c.b16 %v2454, %v2452
        %v2511 = vpack.c.b16 %v2455, %v2453
        %v2512 = vpack.c.b16 %v1962, %v1960
        %v2513 = vpack.c.b16 %v2458, %v2456
        %v2514 = vpack.c.b16 %v2459, %v2457
        %v2515 = vpack.c.b16 %v1966, %v1964
        %v2516 = vpack.c.b16 %v2462, %v2460
        %v2517 = vpack.c.b16 %v2463, %v2461
        %v2518 = vpack.c.b16 %v1970, %v1968
        %v2519 = vpack.c.b16 %v2466, %v2464
        %v2520 = vpack.c.b16 %v2467, %v2465
        %v2521 = vpack.c.b16 %v1974, %v1972
        %v2522 = vpack.c.b16 %v2470, %v2468
        %v2523 = vpack.c.b16 %v2471, %v2469
        %v2524 = vpack.c.b16 %v1978, %v1976
        %v2525 = vpack.c.b16 %v2474, %v2472
        %v2526 = vpack.c.b16 %v2475, %v2473
        %v2527 = vpack.c.b16 %v1982, %v1980
        %v2528 = vpack.c.b16 %v2478, %v2476
        %v2529 = vpack.c.b16 %v2479, %v2477
        %v2530 = vpack.c.b16 %v1986, %v1984
        %v2531 = vpack.c.b16 %v2482, %v2480
        %v2532 = vpack.c.b16 %v2483, %v2481
        %v2533 = vpack.c.b16 %v1990, %v1988
        %v2534 = vpack.c.b16 %v2486, %v2484
        %v2535 = vpack.c.b16 %v2487, %v2485
        %v2632 = vunpack.c.l.b16 %v2376
        %v2633 = vunpack.c.l.b16 %v2377
        %v2634 = vunpack.c.l.b16 %v2378
        %v2635 = vunpack.c.l.b16 %v2379
        %v2636 = vunpack.c.l.b16 %v2380
        %v2637 = vunpack.c.l.b16 %v2381
        %v2638 = vunpack.c.l.b16 %v2382
        %v2639 = vunpack.c.l.b16 %v2383
        %v2640 = vunpack.c.l.b16 %v2384
        %v2641 = vunpack.c.l.b16 %v2385
        %v2642 = vunpack.c.l.b16 %v2386
        %v2643 = vunpack.c.l.b16 %v2387
        %v2644 = vunpack.c.l.b16 %v2388
        %v2645 = vunpack.c.l.b16 %v2389
        %v2646 = vunpack.c.l.b16 %v2390
        %v2647 = vunpack.c.l.b16 %v2391
        %v2648 = vunpack.c.l.b16 %v2392
        %v2649 = vunpack.c.l.b16 %v2393
        %v2650 = vunpack.c.l.b16 %v2394
        %v2651 = vunpack.c.l.b16 %v2395
        %v2652 = vunpack.c.l.b16 %v2396
        %v2653 = vunpack.c.l.b16 %v2397
        %v2654 = vunpack.c.l.b16 %v2398
        %v2655 = vunpack.c.l.b16 %v2399
        %v2656 = vunpack.c.l.b16 %v2400
        %v2657 = vunpack.c.l.b16 %v2401
        %v2658 = vunpack.c.l.b16 %v2402
        %v2659 = vunpack.c.l.b16 %v2403
        %v2660 = vunpack.c.l.b16 %v2404
        %v2661 = vunpack.c.l.b16 %v2405
        %v2662 = vunpack.c.l.b16 %v2406
        %v2663 = vunpack.c.l.b16 %v2407
        %v2664 = vunpack.c.l.b16 %v2408
        %v2665 = vunpack.c.l.b16 %v2409
        %v2666 = vunpack.c.l.b16 %v2410
        %v2667 = vunpack.c.l.b16 %v2411
        %v2668 = vunpack.c.l.b16 %v2412
        %v2669 = vunpack.c.l.b16 %v2413
        %v2670 = vunpack.c.l.b16 %v2414
        %v2671 = vunpack.c.l.b16 %v2415
        %v2672 = vunpack.c.l.b16 %v2416
        %v2673 = vunpack.c.l.b16 %v2417
        %v2674 = vunpack.c.l.b16 %v2418
        %v2675 = vunpack.c.l.b16 %v2419
        %v2676 = vunpack.c.l.b16 %v2420
        %v2677 = vunpack.c.l.b16 %v2421
        %v2678 = vunpack.c.l.b16 %v2422
        %v2679 = vunpack.c.l.b16 %v2423
        %v2680 = vpack.c.b16 %v2633, %v2632
        %v2681 = vpack.c.b16 %v2635, %v2634
        %v2682 = vpack.c.b16 %v2637, %v2636
        %v2683 = vpack.c.b16 %v2639, %v2638
        %v2684 = vpack.c.b16 %v2641, %v2640
        %v2685 = vpack.c.b16 %v2643, %v2642
        %v2686 = vpack.c.b16 %v2645, %v2644
        %v2687 = vpack.c.b16 %v2647, %v2646
        %v2688 = vpack.c.b16 %v2649, %v2648
        %v2689 = vpack.c.b16 %v2651, %v2650
        %v2690 = vpack.c.b16 %v2653, %v2652
        %v2691 = vpack.c.b16 %v2655, %v2654
        %v2692 = vpack.c.b16 %v2657, %v2656
        %v2693 = vpack.c.b16 %v2659, %v2658
        %v2694 = vpack.c.b16 %v2661, %v2660
        %v2695 = vpack.c.b16 %v2663, %v2662
        %v2696 = vpack.c.b16 %v2665, %v2664
        %v2697 = vpack.c.b16 %v2667, %v2666
        %v2698 = vpack.c.b16 %v2669, %v2668
        %v2699 = vpack.c.b16 %v2671, %v2670
        %v2700 = vpack.c.b16 %v2673, %v2672
        %v2701 = vpack.c.b16 %v2675, %v2674
        %v2702 = vpack.c.b16 %v2677, %v2676
        %v2703 = vpack.c.b16 %v2679, %v2678
        %2728 = vmatprep.subr.bf16.mxu0 0
        %2729 = vmatpush1.bf16.msra.mxu0 %v2680
        %2730 = vmatprep.subr.bf16.mxu0 0
        %2731 = vmatpush1.bf16.msra.mxu0 %v2681
        %2732 = vmatprep.subr.bf16.mxu0 0
        %2733 = vmatpush1.bf16.msra.mxu0 %v2682
        %2734 = vmatprep.subr.bf16.mxu0 0
        %2735 = vmatpush1.bf16.msra.mxu0 %v2683
        %2736 = vmatprep.subr.bf16.mxu0 0
        %2737 = vmatpush1.bf16.msra.mxu0 %v2684
        %2738 = vmatprep.subr.bf16.mxu0 0
        %2739 = vmatpush1.bf16.msra.mxu0 %v2685
        %2740 = vmatprep.subr.bf16.mxu0 0
        %2741 = vmatpush1.bf16.msra.mxu0 %v2686
        %2742 = vmatprep.subr.bf16.mxu0 0
        %2743 = vmatpush1.bf16.msra.mxu0 %v2687
        %2744 = vmatprep.subr.bf16.mxu0 0
        %2745 = vmatpush1.bf16.msra.mxu0 %v2688
        %2746 = vmatprep.subr.bf16.mxu0 0
        %2747 = vmatpush1.bf16.msra.mxu0 %v2689
        %2748 = vmatprep.subr.bf16.mxu0 0
        %2749 = vmatpush1.bf16.msra.mxu0 %v2690
        %2750 = vmatprep.subr.bf16.mxu0 0
        %2751 = vmatpush1.bf16.msra.mxu0 %v2691
        %2752 = vmatprep.subr.bf16.mxu0 0
        %2753 = vmatpush1.bf16.msra.mxu0 %v2692
        %2754 = vmatprep.subr.bf16.mxu0 0
        %2755 = vmatpush1.bf16.msra.mxu0 %v2693
        %2756 = vmatprep.subr.bf16.mxu0 0
        %2757 = vmatpush1.bf16.msra.mxu0 %v2694
        %2758 = vmatprep.subr.bf16.mxu0 0
        %2759 = vmatpush1.bf16.msra.mxu0 %v2695
        %2760 = vmatprep.mubr.bf16.mxu0 %v2489
        %2761 = vmatmul.mubr.bf16.gmra.mrb[0].mxu0 %v2488
        %v2762 = vpop.f32.mrb[0].mxu0
        %v2763 = vadd.f32 0.0, %v2762
        %v2764 = vpop.f32.mrb[0].mxu0
        %v2765 = vpop.f32.mrb[0].mxu0
        %v2766 = vadd.f32 0.0, %v2765
        %v2767 = vpop.f32.mrb[0].mxu0
        %2768 = vmatprep.mubr.bf16.mxu0 %v2492
        %2769 = vmatmul.mubr.bf16.gmra.mrb[0].mxu0 %v2491
        %v2770 = vpop.f32.mrb[0].mxu0
        %v2771 = vadd.f32 0.0, %v2770
        %v2772 = vpop.f32.mrb[0].mxu0
        %v2773 = vpop.f32.mrb[0].mxu0
        %v2774 = vadd.f32 0.0, %v2773
        %v2775 = vpop.f32.mrb[0].mxu0
        %2776 = vmatprep.mubr.bf16.mxu0 %v2495
        %2777 = vmatmul.mubr.bf16.gmra.mrb[0].mxu0 %v2494
        %v2778 = vpop.f32.mrb[0].mxu0
        %v2779 = vadd.f32 0.0, %v2778
        %v2780 = vpop.f32.mrb[0].mxu0
        %v2781 = vpop.f32.mrb[0].mxu0
        %v2782 = vadd.f32 0.0, %v2781
        %v2783 = vpop.f32.mrb[0].mxu0
        %2784 = vmatprep.mubr.bf16.mxu0 %v2498
        %2785 = vmatmul.mubr.bf16.gmra.mrb[0].mxu0 %v2497
        %v2786 = vpop.f32.mrb[0].mxu0
        %v2787 = vadd.f32 0.0, %v2786
        %v2788 = vpop.f32.mrb[0].mxu0
        %v2789 = vpop.f32.mrb[0].mxu0
        %v2790 = vadd.f32 0.0, %v2789
        %v2791 = vpop.f32.mrb[0].mxu0
        %2792 = vmatprep.mubr.bf16.mxu0 %v2501
        %2793 = vmatmul.mubr.bf16.gmra.mrb[0].mxu0 %v2500
        %v2794 = vpop.f32.mrb[0].mxu0
        %v2795 = vadd.f32 0.0, %v2794
        %v2796 = vpop.f32.mrb[0].mxu0
        %v2797 = vpop.f32.mrb[0].mxu0
        %v2798 = vadd.f32 0.0, %v2797
        %v2799 = vpop.f32.mrb[0].mxu0
        %2800 = vmatprep.mubr.bf16.mxu0 %v2504
        %2801 = vmatmul.mubr.bf16.gmra.mrb[0].mxu0 %v2503
        %v2802 = vpop.f32.mrb[0].mxu0
        %v2803 = vadd.f32 0.0, %v2802
        %v2804 = vpop.f32.mrb[0].mxu0
        %v2805 = vpop.f32.mrb[0].mxu0
        %v2806 = vadd.f32 0.0, %v2805
        %v2807 = vpop.f32.mrb[0].mxu0
        %2808 = vmatprep.mubr.bf16.mxu0 %v2507
        %2809 = vmatmul.mubr.bf16.gmra.mrb[0].mxu0 %v2506
        %v2810 = vpop.f32.mrb[0].mxu0
        %v2811 = vadd.f32 0.0, %v2810
        %v2812 = vpop.f32.mrb[0].mxu0
        %v2813 = vpop.f32.mrb[0].mxu0
        %v2814 = vadd.f32 0.0, %v2813
        %v2815 = vpop.f32.mrb[0].mxu0
        %2816 = vmatprep.mubr.bf16.mxu0 %v2510
        %2817 = vmatmul.mubr.bf16.gmra.mrb[0].mxu0 %v2509
        %v2818 = vpop.f32.mrb[0].mxu0
        %v2819 = vadd.f32 0.0, %v2818
        %v2820 = vpop.f32.mrb[0].mxu0
        %v2821 = vpop.f32.mrb[0].mxu0
        %v2822 = vadd.f32 0.0, %v2821
        %v2823 = vpop.f32.mrb[0].mxu0
        %2824 = vmatprep.mubr.bf16.mxu0 %v2513
        %2825 = vmatmul.mubr.bf16.gmra.mrb[0].mxu0 %v2512
        %v2826 = vpop.f32.mrb[0].mxu0
        %v2827 = vadd.f32 0.0, %v2826
        %v2828 = vpop.f32.mrb[0].mxu0
        %v2829 = vpop.f32.mrb[0].mxu0
        %v2830 = vadd.f32 0.0, %v2829
        %v2831 = vpop.f32.mrb[0].mxu0
        %2832 = vmatprep.mubr.bf16.mxu0 %v2516
        %2833 = vmatmul.mubr.bf16.gmra.mrb[0].mxu0 %v2515
        %v2834 = vpop.f32.mrb[0].mxu0
        %v2835 = vadd.f32 0.0, %v2834
        %v2836 = vpop.f32.mrb[0].mxu0
        %v2837 = vpop.f32.mrb[0].mxu0
        %v2838 = vadd.f32 0.0, %v2837
        %v2839 = vpop.f32.mrb[0].mxu0
        %2840 = vmatprep.mubr.bf16.mxu0 %v2519
        %2841 = vmatmul.mubr.bf16.gmra.mrb[0].mxu0 %v2518
        %v2842 = vpop.f32.mrb[0].mxu0
        %v2843 = vadd.f32 0.0, %v2842
        %v2844 = vpop.f32.mrb[0].mxu0
        %v2845 = vpop.f32.mrb[0].mxu0
        %v2846 = vadd.f32 0.0, %v2845
        %v2847 = vpop.f32.mrb[0].mxu0
        %2848 = vmatprep.mubr.bf16.mxu0 %v2522
        %2849 = vmatmul.mubr.bf16.gmra.mrb[0].mxu0 %v2521
        %v2850 = vpop.f32.mrb[0].mxu0
        %v2851 = vadd.f32 0.0, %v2850
        %v2852 = vpop.f32.mrb[0].mxu0
        %v2853 = vpop.f32.mrb[0].mxu0
        %v2854 = vadd.f32 0.0, %v2853
        %v2855 = vpop.f32.mrb[0].mxu0
        %2856 = vmatprep.mubr.bf16.mxu0 %v2525
        %2857 = vmatmul.mubr.bf16.gmra.mrb[0].mxu0 %v2524
        %v2858 = vpop.f32.mrb[0].mxu0
        %v2859 = vadd.f32 0.0, %v2858
        %v2860 = vpop.f32.mrb[0].mxu0
        %v2861 = vpop.f32.mrb[0].mxu0
        %v2862 = vadd.f32 0.0, %v2861
        %v2863 = vpop.f32.mrb[0].mxu0
        %2864 = vmatprep.mubr.bf16.mxu0 %v2528
        %2865 = vmatmul.mubr.bf16.gmra.mrb[0].mxu0 %v2527
        %v2866 = vpop.f32.mrb[0].mxu0
        %v2867 = vadd.f32 0.0, %v2866
        %v2868 = vpop.f32.mrb[0].mxu0
        %v2869 = vpop.f32.mrb[0].mxu0
        %v2870 = vadd.f32 0.0, %v2869
        %v2871 = vpop.f32.mrb[0].mxu0
        %2872 = vmatprep.mubr.bf16.mxu0 %v2531
        %2873 = vmatmul.mubr.bf16.gmra.mrb[0].mxu0 %v2530
        %v2874 = vpop.f32.mrb[0].mxu0
        %v2875 = vadd.f32 0.0, %v2874
        %v2876 = vpop.f32.mrb[0].mxu0
        %v2877 = vpop.f32.mrb[0].mxu0
        %v2878 = vadd.f32 0.0, %v2877
        %v2879 = vpop.f32.mrb[0].mxu0
        %2880 = vmatprep.mubr.bf16.mxu0 %v2534
        %2881 = vmatmul.mubr.bf16.gmra.mrb[0].mxu0 %v2533
        %v2882 = vpop.f32.mrb[0].mxu0
        %v2883 = vadd.f32 0.0, %v2882
        %v2884 = vpop.f32.mrb[0].mxu0
        %v2885 = vpop.f32.mrb[0].mxu0
        %v2886 = vadd.f32 0.0, %v2885
        %v2887 = vpop.f32.mrb[0].mxu0
        %2888 = vdwg.mxu0
        %2889 = vmatprep.subr.bf16.mxu0 0
        %2890 = vmatpush1.bf16.msra.mxu0 %v2696
        %2891 = vmatprep.subr.bf16.mxu0 0
        %2892 = vmatpush1.bf16.msra.mxu0 %v2697
        %2893 = vmatprep.subr.bf16.mxu0 0
        %2894 = vmatpush1.bf16.msra.mxu0 %v2698
        %2895 = vmatprep.subr.bf16.mxu0 0
        %2896 = vmatpush1.bf16.msra.mxu0 %v2699
        %2897 = vmatprep.subr.bf16.mxu0 0
        %2898 = vmatpush1.bf16.msra.mxu0 %v2700
        %2899 = vmatprep.subr.bf16.mxu0 0
        %2900 = vmatpush1.bf16.msra.mxu0 %v2701
        %2901 = vmatprep.subr.bf16.mxu0 0
        %2902 = vmatpush1.bf16.msra.mxu0 %v2702
        %2903 = vmatprep.subr.bf16.mxu0 0
        %2904 = vmatpush1.bf16.msra.mxu0 %v2703
        %2905 = vmatprep.subr.bf16.mxu0 0
        %2906 = vmatpush1.bf16.msra.mxu0 0
        %2907 = vmatprep.subr.bf16.mxu0 0
        %2908 = vmatpush1.bf16.msra.mxu0 0
        %2909 = vmatprep.subr.bf16.mxu0 0
        %2910 = vmatpush1.bf16.msra.mxu0 0
        %2911 = vmatprep.subr.bf16.mxu0 0
        %2912 = vmatpush1.bf16.msra.mxu0 0
        %2913 = vmatprep.subr.bf16.mxu0 0
        %2914 = vmatpush1.bf16.msra.mxu0 0
        %2915 = vmatprep.subr.bf16.mxu0 0
        %2916 = vmatpush1.bf16.msra.mxu0 0
        %2917 = vmatprep.subr.bf16.mxu0 0
        %2918 = vmatpush1.bf16.msra.mxu0 0
        %2919 = vmatprep.subr.bf16.mxu0 0
        %2920 = vmatpush1.bf16.msra.mxu0 0
        %2921 = vmatprep.mubr.bf16.mxu0 0
        %2922 = vmatmul.mubr.bf16.gmra.mrb[0].mxu0 %v2490
        %v2923 = vpop.f32.mrb[0].mxu0
        %v2924 = vadd.f32 %v2763, %v2923
        %v2925 = vpop.f32.mrb[0].mxu0
        %v2926 = vpop.f32.mrb[0].mxu0
        %v2927 = vadd.f32 %v2766, %v2926
        %v2928 = vpop.f32.mrb[0].mxu0
        %2929 = vmatprep.mubr.bf16.mxu0 0
        %2930 = vmatmul.mubr.bf16.gmra.mrb[0].mxu0 %v2493
        %v2931 = vpop.f32.mrb[0].mxu0
        %v2932 = vadd.f32 %v2771, %v2931
        %v2933 = vpop.f32.mrb[0].mxu0
        %v2934 = vpop.f32.mrb[0].mxu0
        %v2935 = vadd.f32 %v2774, %v2934
        %v2936 = vpop.f32.mrb[0].mxu0
        %2937 = vmatprep.mubr.bf16.mxu0 0
        %2938 = vmatmul.mubr.bf16.gmra.mrb[0].mxu0 %v2496
        %v2939 = vpop.f32.mrb[0].mxu0
        %v2940 = vadd.f32 %v2779, %v2939
        %v2941 = vpop.f32.mrb[0].mxu0
        %v2942 = vpop.f32.mrb[0].mxu0
        %v2943 = vadd.f32 %v2782, %v2942
        %v2944 = vpop.f32.mrb[0].mxu0
        %2945 = vmatprep.mubr.bf16.mxu0 0
        %2946 = vmatmul.mubr.bf16.gmra.mrb[0].mxu0 %v2499
        %v2947 = vpop.f32.mrb[0].mxu0
        %v2948 = vadd.f32 %v2787, %v2947
        %v2949 = vpop.f32.mrb[0].mxu0
        %v2950 = vpop.f32.mrb[0].mxu0
        %v2951 = vadd.f32 %v2790, %v2950
        %v2952 = vpop.f32.mrb[0].mxu0
        %2953 = vmatprep.mubr.bf16.mxu0 0
        %2954 = vmatmul.mubr.bf16.gmra.mrb[0].mxu0 %v2502
        %v2955 = vpop.f32.mrb[0].mxu0
        %v2956 = vadd.f32 %v2795, %v2955
        %v2957 = vpop.f32.mrb[0].mxu0
        %v2958 = vpop.f32.mrb[0].mxu0
        %v2959 = vadd.f32 %v2798, %v2958
        %v2960 = vpop.f32.mrb[0].mxu0
        %2961 = vmatprep.mubr.bf16.mxu0 0
        %2962 = vmatmul.mubr.bf16.gmra.mrb[0].mxu0 %v2505
        %v2963 = vpop.f32.mrb[0].mxu0
        %v2964 = vadd.f32 %v2803, %v2963
        %v2965 = vpop.f32.mrb[0].mxu0
        %v2966 = vpop.f32.mrb[0].mxu0
        %v2967 = vadd.f32 %v2806, %v2966
        %v2968 = vpop.f32.mrb[0].mxu0
        %2969 = vmatprep.mubr.bf16.mxu0 0
        %2970 = vmatmul.mubr.bf16.gmra.mrb[0].mxu0 %v2508
        %v2971 = vpop.f32.mrb[0].mxu0
        %v2972 = vadd.f32 %v2811, %v2971
        %v2973 = vpop.f32.mrb[0].mxu0
        %v2974 = vpop.f32.mrb[0].mxu0
        %v2975 = vadd.f32 %v2814, %v2974
        %v2976 = vpop.f32.mrb[0].mxu0
        %2977 = vmatprep.mubr.bf16.mxu0 0
        %2978 = vmatmul.mubr.bf16.gmra.mrb[0].mxu0 %v2511
        %v2979 = vpop.f32.mrb[0].mxu0
        %v2980 = vadd.f32 %v2819, %v2979
        %v2981 = vpop.f32.mrb[0].mxu0
        %v2982 = vpop.f32.mrb[0].mxu0
        %v2983 = vadd.f32 %v2822, %v2982
        %v2984 = vpop.f32.mrb[0].mxu0
        %2985 = vmatprep.mubr.bf16.mxu0 0
        %2986 = vmatmul.mubr.bf16.gmra.mrb[0].mxu0 %v2514
        %v2987 = vpop.f32.mrb[0].mxu0
        %v2988 = vadd.f32 %v2827, %v2987
        %v2989 = vpop.f32.mrb[0].mxu0
        %v2990 = vpop.f32.mrb[0].mxu0
        %v2991 = vadd.f32 %v2830, %v2990
        %v2992 = vpop.f32.mrb[0].mxu0
        %2993 = vmatprep.mubr.bf16.mxu0 0
        %2994 = vmatmul.mubr.bf16.gmra.mrb[0].mxu0 %v2517
        %v2995 = vpop.f32.mrb[0].mxu0
        %v2996 = vadd.f32 %v2835, %v2995
        %v2997 = vpop.f32.mrb[0].mxu0
        %v2998 = vpop.f32.mrb[0].mxu0
        %v2999 = vadd.f32 %v2838, %v2998
        %v3000 = vpop.f32.mrb[0].mxu0
        %3001 = vmatprep.mubr.bf16.mxu0 0
        %3002 = vmatmul.mubr.bf16.gmra.mrb[0].mxu0 %v2520
        %v3003 = vpop.f32.mrb[0].mxu0
        %v3004 = vadd.f32 %v2843, %v3003
        %v3005 = vpop.f32.mrb[0].mxu0
        %v3006 = vpop.f32.mrb[0].mxu0
        %v3007 = vadd.f32 %v2846, %v3006
        %v3008 = vpop.f32.mrb[0].mxu0
        %3009 = vmatprep.mubr.bf16.mxu0 0
        %3010 = vmatmul.mubr.bf16.gmra.mrb[0].mxu0 %v2523
        %v3011 = vpop.f32.mrb[0].mxu0
        %v3012 = vadd.f32 %v2851, %v3011
        %v3013 = vpop.f32.mrb[0].mxu0
        %v3014 = vpop.f32.mrb[0].mxu0
        %v3015 = vadd.f32 %v2854, %v3014
        %v3016 = vpop.f32.mrb[0].mxu0
        %3017 = vmatprep.mubr.bf16.mxu0 0
        %3018 = vmatmul.mubr.bf16.gmra.mrb[0].mxu0 %v2526
        %v3019 = vpop.f32.mrb[0].mxu0
        %v3020 = vadd.f32 %v2859, %v3019
        %v3021 = vpop.f32.mrb[0].mxu0
        %v3022 = vpop.f32.mrb[0].mxu0
        %v3023 = vadd.f32 %v2862, %v3022
        %v3024 = vpop.f32.mrb[0].mxu0
        %3025 = vmatprep.mubr.bf16.mxu0 0
        %3026 = vmatmul.mubr.bf16.gmra.mrb[0].mxu0 %v2529
        %v3027 = vpop.f32.mrb[0].mxu0
        %v3028 = vadd.f32 %v2867, %v3027
        %v3029 = vpop.f32.mrb[0].mxu0
        %v3030 = vpop.f32.mrb[0].mxu0
        %v3031 = vadd.f32 %v2870, %v3030
        %v3032 = vpop.f32.mrb[0].mxu0
        %3033 = vmatprep.mubr.bf16.mxu0 0
        %3034 = vmatmul.mubr.bf16.gmra.mrb[0].mxu0 %v2532
        %v3035 = vpop.f32.mrb[0].mxu0
        %v3036 = vadd.f32 %v2875, %v3035
        %v3037 = vpop.f32.mrb[0].mxu0
        %v3038 = vpop.f32.mrb[0].mxu0
        %v3039 = vadd.f32 %v2878, %v3038
        %v3040 = vpop.f32.mrb[0].mxu0
        %3041 = vmatprep.mubr.bf16.mxu0 0
        %3042 = vmatmul.mubr.bf16.gmra.mrb[0].mxu0 %v2535
        %v3043 = vpop.f32.mrb[0].mxu0
        %v3044 = vadd.f32 %v2883, %v3043
        %v3045 = vpop.f32.mrb[0].mxu0
        %v3046 = vpop.f32.mrb[0].mxu0
        %v3047 = vadd.f32 %v2886, %v3046
        %v3048 = vpop.f32.mrb[0].mxu0
        %3049 = vdwg.mxu0
        %v3050 = vunpack.c.l.b16 %v1374
        %v3051 = vunpack.c.l.b16 %v1688
        %v3052 = vunpack.c.l.b16 %v1381
        %v3053 = vunpack.c.l.b16 %v1689
        %v3054 = vunpack.c.l.b16 %v1388
        %v3055 = vunpack.c.l.b16 %v1690
        %v3056 = vunpack.c.l.b16 %v1395
        %v3057 = vunpack.c.l.b16 %v1691
        %v3058 = vunpack.c.l.b16 %v1402
        %v3059 = vunpack.c.l.b16 %v1692
        %v3060 = vunpack.c.l.b16 %v1409
        %v3061 = vunpack.c.l.b16 %v1693
        %v3062 = vunpack.c.l.b16 %v1416
        %v3063 = vunpack.c.l.b16 %v1694
        %v3064 = vunpack.c.l.b16 %v1423
        %v3065 = vunpack.c.l.b16 %v1695
        %v3066 = vunpack.c.l.b16 %v1430
        %v3067 = vunpack.c.l.b16 %v1696
        %v3068 = vunpack.c.l.b16 %v1437
        %v3069 = vunpack.c.l.b16 %v1697
        %v3070 = vunpack.c.l.b16 %v1444
        %v3071 = vunpack.c.l.b16 %v1698
        %v3072 = vunpack.c.l.b16 %v1451
        %v3073 = vunpack.c.l.b16 %v1699
        %v3074 = vunpack.c.l.b16 %v1458
        %v3075 = vunpack.c.l.b16 %v1700
        %v3076 = vunpack.c.l.b16 %v1465
        %v3077 = vunpack.c.l.b16 %v1701
        %v3078 = vunpack.c.l.b16 %v1472
        %v3079 = vunpack.c.l.b16 %v1702
        %v3080 = vunpack.c.l.b16 %v1479
        %v3081 = vunpack.c.l.b16 %v1703
        %v3082 = vunpack.c.l.b16 %v1486
        %v3083 = vunpack.c.l.b16 %v1704
        %v3084 = vunpack.c.l.b16 %v1493
        %v3085 = vunpack.c.l.b16 %v1705
        %v3086 = vunpack.c.l.b16 %v1500
        %v3087 = vunpack.c.l.b16 %v1706
        %v3088 = vunpack.c.l.b16 %v1507
        %v3089 = vunpack.c.l.b16 %v1707
        %v3090 = vunpack.c.l.b16 %v1514
        %v3091 = vunpack.c.l.b16 %v1708
        %v3092 = vunpack.c.l.b16 %v1521
        %v3093 = vunpack.c.l.b16 %v1709
        %v3094 = vunpack.c.l.b16 %v1528
        %v3095 = vunpack.c.l.b16 %v1710
        %v3096 = vunpack.c.l.b16 %v1535
        %v3097 = vunpack.c.l.b16 %v1711
        %v3098 = vunpack.c.l.b16 %v1542
        %v3099 = vunpack.c.l.b16 %v1712
        %v3100 = vunpack.c.l.b16 %v1549
        %v3101 = vunpack.c.l.b16 %v1713
        %v3102 = vunpack.c.l.b16 %v1556
        %v3103 = vunpack.c.l.b16 %v1714
        %v3104 = vunpack.c.l.b16 %v1563
        %v3105 = vunpack.c.l.b16 %v1715
        %v3106 = vunpack.c.l.b16 %v1570
        %v3107 = vunpack.c.l.b16 %v1716
        %v3108 = vunpack.c.l.b16 %v1577
        %v3109 = vunpack.c.l.b16 %v1717
        %v3110 = vunpack.c.l.b16 %v1584
        %v3111 = vunpack.c.l.b16 %v1718
        %v3112 = vunpack.c.l.b16 %v1591
        %v3113 = vunpack.c.l.b16 %v1719
        %v3114 = vpack.c.b16 %v1274, %v1272
        %v3115 = vpack.c.b16 %v3052, %v3050
        %v3116 = vpack.c.b16 %v3053, %v3051
        %v3117 = vpack.c.b16 %v1278, %v1276
        %v3118 = vpack.c.b16 %v3056, %v3054
        %v3119 = vpack.c.b16 %v3057, %v3055
        %v3120 = vpack.c.b16 %v1282, %v1280
        %v3121 = vpack.c.b16 %v3060, %v3058
        %v3122 = vpack.c.b16 %v3061, %v3059
        %v3123 = vpack.c.b16 %v1286, %v1284
        %v3124 = vpack.c.b16 %v3064, %v3062
        %v3125 = vpack.c.b16 %v3065, %v3063
        %v3126 = vpack.c.b16 %v1290, %v1288
        %v3127 = vpack.c.b16 %v3068, %v3066
        %v3128 = vpack.c.b16 %v3069, %v3067
        %v3129 = vpack.c.b16 %v1294, %v1292
        %v3130 = vpack.c.b16 %v3072, %v3070
        %v3131 = vpack.c.b16 %v3073, %v3071
        %v3132 = vpack.c.b16 %v1298, %v1296
        %v3133 = vpack.c.b16 %v3076, %v3074
        %v3134 = vpack.c.b16 %v3077, %v3075
        %v3135 = vpack.c.b16 %v1302, %v1300
        %v3136 = vpack.c.b16 %v3080, %v3078
        %v3137 = vpack.c.b16 %v3081, %v3079
        %v3138 = vpack.c.b16 %v1306, %v1304
        %v3139 = vpack.c.b16 %v3084, %v3082
        %v3140 = vpack.c.b16 %v3085, %v3083
        %v3141 = vpack.c.b16 %v1310, %v1308
        %v3142 = vpack.c.b16 %v3088, %v3086
        %v3143 = vpack.c.b16 %v3089, %v3087
        %v3144 = vpack.c.b16 %v1314, %v1312
        %v3145 = vpack.c.b16 %v3092, %v3090
        %v3146 = vpack.c.b16 %v3093, %v3091
        %v3147 = vpack.c.b16 %v1318, %v1316
        %v3148 = vpack.c.b16 %v3096, %v3094
        %v3149 = vpack.c.b16 %v3097, %v3095
        %v3150 = vpack.c.b16 %v1322, %v1320
        %v3151 = vpack.c.b16 %v3100, %v3098
        %v3152 = vpack.c.b16 %v3101, %v3099
        %v3153 = vpack.c.b16 %v1326, %v1324
        %v3154 = vpack.c.b16 %v3104, %v3102
        %v3155 = vpack.c.b16 %v3105, %v3103
        %v3156 = vpack.c.b16 %v1330, %v1328
        %v3157 = vpack.c.b16 %v3108, %v3106
        %v3158 = vpack.c.b16 %v3109, %v3107
        %v3159 = vpack.c.b16 %v1334, %v1332
        %v3160 = vpack.c.b16 %v3112, %v3110
        %v3161 = vpack.c.b16 %v3113, %v3111
        %v3258 = vunpack.c.l.b16 %v1720
        %v3259 = vunpack.c.l.b16 %v1721
        %v3260 = vunpack.c.l.b16 %v1722
        %v3261 = vunpack.c.l.b16 %v1723
        %v3262 = vunpack.c.l.b16 %v1724
        %v3263 = vunpack.c.l.b16 %v1725
        %v3264 = vunpack.c.l.b16 %v1726
        %v3265 = vunpack.c.l.b16 %v1727
        %v3266 = vunpack.c.l.b16 %v1728
        %v3267 = vunpack.c.l.b16 %v1729
        %v3268 = vunpack.c.l.b16 %v1730
        %v3269 = vunpack.c.l.b16 %v1731
        %v3270 = vunpack.c.l.b16 %v1732
        %v3271 = vunpack.c.l.b16 %v1733
        %v3272 = vunpack.c.l.b16 %v1734
        %v3273 = vunpack.c.l.b16 %v1735
        %v3274 = vunpack.c.l.b16 %v1736
        %v3275 = vunpack.c.l.b16 %v1737
        %v3276 = vunpack.c.l.b16 %v1738
        %v3277 = vunpack.c.l.b16 %v1739
        %v3278 = vunpack.c.l.b16 %v1740
        %v3279 = vunpack.c.l.b16 %v1741
        %v3280 = vunpack.c.l.b16 %v1742
        %v3281 = vunpack.c.l.b16 %v1743
        %v3282 = vunpack.c.l.b16 %v1744
        %v3283 = vunpack.c.l.b16 %v1745
        %v3284 = vunpack.c.l.b16 %v1746
        %v3285 = vunpack.c.l.b16 %v1747
        %v3286 = vunpack.c.l.b16 %v1748
        %v3287 = vunpack.c.l.b16 %v1749
        %v3288 = vunpack.c.l.b16 %v1750
        %v3289 = vunpack.c.l.b16 %v1751
        %v3290 = vunpack.c.l.b16 %v1752
        %v3291 = vunpack.c.l.b16 %v1753
        %v3292 = vunpack.c.l.b16 %v1754
        %v3293 = vunpack.c.l.b16 %v1755
        %v3294 = vunpack.c.l.b16 %v1756
        %v3295 = vunpack.c.l.b16 %v1757
        %v3296 = vunpack.c.l.b16 %v1758
        %v3297 = vunpack.c.l.b16 %v1759
        %v3298 = vunpack.c.l.b16 %v1760
        %v3299 = vunpack.c.l.b16 %v1761
        %v3300 = vunpack.c.l.b16 %v1762
        %v3301 = vunpack.c.l.b16 %v1763
        %v3302 = vunpack.c.l.b16 %v1764
        %v3303 = vunpack.c.l.b16 %v1765
        %v3304 = vunpack.c.l.b16 %v1766
        %v3305 = vunpack.c.l.b16 %v1767
        %v3306 = vpack.c.b16 %v3259, %v3258
        %v3307 = vpack.c.b16 %v3261, %v3260
        %v3308 = vpack.c.b16 %v3263, %v3262
        %v3309 = vpack.c.b16 %v3265, %v3264
        %v3310 = vpack.c.b16 %v3267, %v3266
        %v3311 = vpack.c.b16 %v3269, %v3268
        %v3312 = vpack.c.b16 %v3271, %v3270
        %v3313 = vpack.c.b16 %v3273, %v3272
        %v3314 = vpack.c.b16 %v3275, %v3274
        %v3315 = vpack.c.b16 %v3277, %v3276
        %v3316 = vpack.c.b16 %v3279, %v3278
        %v3317 = vpack.c.b16 %v3281, %v3280
        %v3318 = vpack.c.b16 %v3283, %v3282
        %v3319 = vpack.c.b16 %v3285, %v3284
        %v3320 = vpack.c.b16 %v3287, %v3286
        %v3321 = vpack.c.b16 %v3289, %v3288
        %v3322 = vpack.c.b16 %v3291, %v3290
        %v3323 = vpack.c.b16 %v3293, %v3292
        %v3324 = vpack.c.b16 %v3295, %v3294
        %v3325 = vpack.c.b16 %v3297, %v3296
        %v3326 = vpack.c.b16 %v3299, %v3298
        %v3327 = vpack.c.b16 %v3301, %v3300
        %v3328 = vpack.c.b16 %v3303, %v3302
        %v3329 = vpack.c.b16 %v3305, %v3304
        %3354 = vmatprep.subr.bf16.mxu0 0
        %3355 = vmatpush1.bf16.msra.mxu0 %v3306
        %3356 = vmatprep.subr.bf16.mxu0 0
        %3357 = vmatpush1.bf16.msra.mxu0 %v3307
        %3358 = vmatprep.subr.bf16.mxu0 0
        %3359 = vmatpush1.bf16.msra.mxu0 %v3308
        %3360 = vmatprep.subr.bf16.mxu0 0
        %3361 = vmatpush1.bf16.msra.mxu0 %v3309
        %3362 = vmatprep.subr.bf16.mxu0 0
        %3363 = vmatpush1.bf16.msra.mxu0 %v3310
        %3364 = vmatprep.subr.bf16.mxu0 0
        %3365 = vmatpush1.bf16.msra.mxu0 %v3311
        %3366 = vmatprep.subr.bf16.mxu0 0
        %3367 = vmatpush1.bf16.msra.mxu0 %v3312
        %3368 = vmatprep.subr.bf16.mxu0 0
        %3369 = vmatpush1.bf16.msra.mxu0 %v3313
        %3370 = vmatprep.subr.bf16.mxu0 0
        %3371 = vmatpush1.bf16.msra.mxu0 %v3314
        %3372 = vmatprep.subr.bf16.mxu0 0
        %3373 = vmatpush1.bf16.msra.mxu0 %v3315
        %3374 = vmatprep.subr.bf16.mxu0 0
        %3375 = vmatpush1.bf16.msra.mxu0 %v3316
        %3376 = vmatprep.subr.bf16.mxu0 0
        %3377 = vmatpush1.bf16.msra.mxu0 %v3317
        %3378 = vmatprep.subr.bf16.mxu0 0
        %3379 = vmatpush1.bf16.msra.mxu0 %v3318
        %3380 = vmatprep.subr.bf16.mxu0 0
        %3381 = vmatpush1.bf16.msra.mxu0 %v3319
        %3382 = vmatprep.subr.bf16.mxu0 0
        %3383 = vmatpush1.bf16.msra.mxu0 %v3320
        %3384 = vmatprep.subr.bf16.mxu0 0
        %3385 = vmatpush1.bf16.msra.mxu0 %v3321
        %3386 = vmatprep.mubr.bf16.mxu0 %v3115
        %3387 = vmatmul.mubr.bf16.gmra.mrb[0].mxu0 %v3114
        %v3388 = vpop.f32.mrb[0].mxu0
        %v3389 = vadd.f32 %v2924, %v3388
        %v3390 = vpop.f32.mrb[0].mxu0
        %v3391 = vpop.f32.mrb[0].mxu0
        %v3392 = vadd.f32 %v2927, %v3391
        %v3393 = vpop.f32.mrb[0].mxu0
        %3394 = vmatprep.mubr.bf16.mxu0 %v3118
        %3395 = vmatmul.mubr.bf16.gmra.mrb[0].mxu0 %v3117
        %v3396 = vpop.f32.mrb[0].mxu0
        %v3397 = vadd.f32 %v2932, %v3396
        %v3398 = vpop.f32.mrb[0].mxu0
        %v3399 = vpop.f32.mrb[0].mxu0
        %v3400 = vadd.f32 %v2935, %v3399
        %v3401 = vpop.f32.mrb[0].mxu0
        %3402 = vmatprep.mubr.bf16.mxu0 %v3121
        %3403 = vmatmul.mubr.bf16.gmra.mrb[0].mxu0 %v3120
        %v3404 = vpop.f32.mrb[0].mxu0
        %v3405 = vadd.f32 %v2940, %v3404
        %v3406 = vpop.f32.mrb[0].mxu0
        %v3407 = vpop.f32.mrb[0].mxu0
        %v3408 = vadd.f32 %v2943, %v3407
        %v3409 = vpop.f32.mrb[0].mxu0
        %3410 = vmatprep.mubr.bf16.mxu0 %v3124
        %3411 = vmatmul.mubr.bf16.gmra.mrb[0].mxu0 %v3123
        %v3412 = vpop.f32.mrb[0].mxu0
        %v3413 = vadd.f32 %v2948, %v3412
        %v3414 = vpop.f32.mrb[0].mxu0
        %v3415 = vpop.f32.mrb[0].mxu0
        %v3416 = vadd.f32 %v2951, %v3415
        %v3417 = vpop.f32.mrb[0].mxu0
        %3418 = vmatprep.mubr.bf16.mxu0 %v3127
        %3419 = vmatmul.mubr.bf16.gmra.mrb[0].mxu0 %v3126
        %v3420 = vpop.f32.mrb[0].mxu0
        %v3421 = vadd.f32 %v2956, %v3420
        %v3422 = vpop.f32.mrb[0].mxu0
        %v3423 = vpop.f32.mrb[0].mxu0
        %v3424 = vadd.f32 %v2959, %v3423
        %v3425 = vpop.f32.mrb[0].mxu0
        %3426 = vmatprep.mubr.bf16.mxu0 %v3130
        %3427 = vmatmul.mubr.bf16.gmra.mrb[0].mxu0 %v3129
        %v3428 = vpop.f32.mrb[0].mxu0
        %v3429 = vadd.f32 %v2964, %v3428
        %v3430 = vpop.f32.mrb[0].mxu0
        %v3431 = vpop.f32.mrb[0].mxu0
        %v3432 = vadd.f32 %v2967, %v3431
        %v3433 = vpop.f32.mrb[0].mxu0
        %3434 = vmatprep.mubr.bf16.mxu0 %v3133
        %3435 = vmatmul.mubr.bf16.gmra.mrb[0].mxu0 %v3132
        %v3436 = vpop.f32.mrb[0].mxu0
        %v3437 = vadd.f32 %v2972, %v3436
        %v3438 = vpop.f32.mrb[0].mxu0
        %v3439 = vpop.f32.mrb[0].mxu0
        %v3440 = vadd.f32 %v2975, %v3439
        %v3441 = vpop.f32.mrb[0].mxu0
        %3442 = vmatprep.mubr.bf16.mxu0 %v3136
        %3443 = vmatmul.mubr.bf16.gmra.mrb[0].mxu0 %v3135
        %v3444 = vpop.f32.mrb[0].mxu0
        %v3445 = vadd.f32 %v2980, %v3444
        %v3446 = vpop.f32.mrb[0].mxu0
        %v3447 = vpop.f32.mrb[0].mxu0
        %v3448 = vadd.f32 %v2983, %v3447
        %v3449 = vpop.f32.mrb[0].mxu0
        %3450 = vmatprep.mubr.bf16.mxu0 %v3139
        %3451 = vmatmul.mubr.bf16.gmra.mrb[0].mxu0 %v3138
        %v3452 = vpop.f32.mrb[0].mxu0
        %v3453 = vadd.f32 %v2988, %v3452
        %v3454 = vpop.f32.mrb[0].mxu0
        %v3455 = vpop.f32.mrb[0].mxu0
        %v3456 = vadd.f32 %v2991, %v3455
        %v3457 = vpop.f32.mrb[0].mxu0
        %3458 = vmatprep.mubr.bf16.mxu0 %v3142
        %3459 = vmatmul.mubr.bf16.gmra.mrb[0].mxu0 %v3141
        %v3460 = vpop.f32.mrb[0].mxu0
        %v3461 = vadd.f32 %v2996, %v3460
        %v3462 = vpop.f32.mrb[0].mxu0
        %v3463 = vpop.f32.mrb[0].mxu0
        %v3464 = vadd.f32 %v2999, %v3463
        %v3465 = vpop.f32.mrb[0].mxu0
        %3466 = vmatprep.mubr.bf16.mxu0 %v3145
        %3467 = vmatmul.mubr.bf16.gmra.mrb[0].mxu0 %v3144
        %v3468 = vpop.f32.mrb[0].mxu0
        %v3469 = vadd.f32 %v3004, %v3468
        %v3470 = vpop.f32.mrb[0].mxu0
        %v3471 = vpop.f32.mrb[0].mxu0
        %v3472 = vadd.f32 %v3007, %v3471
        %v3473 = vpop.f32.mrb[0].mxu0
        %3474 = vmatprep.mubr.bf16.mxu0 %v3148
        %3475 = vmatmul.mubr.bf16.gmra.mrb[0].mxu0 %v3147
        %v3476 = vpop.f32.mrb[0].mxu0
        %v3477 = vadd.f32 %v3012, %v3476
        %v3478 = vpop.f32.mrb[0].mxu0
        %v3479 = vpop.f32.mrb[0].mxu0
        %v3480 = vadd.f32 %v3015, %v3479
        %v3481 = vpop.f32.mrb[0].mxu0
        %3482 = vmatprep.mubr.bf16.mxu0 %v3151
        %3483 = vmatmul.mubr.bf16.gmra.mrb[0].mxu0 %v3150
        %v3484 = vpop.f32.mrb[0].mxu0
        %v3485 = vadd.f32 %v3020, %v3484
        %v3486 = vpop.f32.mrb[0].mxu0
        %v3487 = vpop.f32.mrb[0].mxu0
        %v3488 = vadd.f32 %v3023, %v3487
        %v3489 = vpop.f32.mrb[0].mxu0
        %3490 = vmatprep.mubr.bf16.mxu0 %v3154
        %3491 = vmatmul.mubr.bf16.gmra.mrb[0].mxu0 %v3153
        %v3492 = vpop.f32.mrb[0].mxu0
        %v3493 = vadd.f32 %v3028, %v3492
        %v3494 = vpop.f32.mrb[0].mxu0
        %v3495 = vpop.f32.mrb[0].mxu0
        %v3496 = vadd.f32 %v3031, %v3495
        %v3497 = vpop.f32.mrb[0].mxu0
        %3498 = vmatprep.mubr.bf16.mxu0 %v3157
        %3499 = vmatmul.mubr.bf16.gmra.mrb[0].mxu0 %v3156
        %v3500 = vpop.f32.mrb[0].mxu0
        %v3501 = vadd.f32 %v3036, %v3500
        %v3502 = vpop.f32.mrb[0].mxu0
        %v3503 = vpop.f32.mrb[0].mxu0
        %v3504 = vadd.f32 %v3039, %v3503
        %v3505 = vpop.f32.mrb[0].mxu0
        %3506 = vmatprep.mubr.bf16.mxu0 %v3160
        %3507 = vmatmul.mubr.bf16.gmra.mrb[0].mxu0 %v3159
        %v3508 = vpop.f32.mrb[0].mxu0
        %v3509 = vadd.f32 %v3044, %v3508
        %v3510 = vpop.f32.mrb[0].mxu0
        %v3511 = vpop.f32.mrb[0].mxu0
        %v3512 = vadd.f32 %v3047, %v3511
        %v3513 = vpop.f32.mrb[0].mxu0
        %3514 = vdwg.mxu0
        %3515 = vmatprep.subr.bf16.mxu0 0
        %3516 = vmatpush1.bf16.msra.mxu0 %v3322
        %3517 = vmatprep.subr.bf16.mxu0 0
        %3518 = vmatpush1.bf16.msra.mxu0 %v3323
        %3519 = vmatprep.subr.bf16.mxu0 0
        %3520 = vmatpush1.bf16.msra.mxu0 %v3324
        %3521 = vmatprep.subr.bf16.mxu0 0
        %3522 = vmatpush1.bf16.msra.mxu0 %v3325
        %3523 = vmatprep.subr.bf16.mxu0 0
        %3524 = vmatpush1.bf16.msra.mxu0 %v3326
        %3525 = vmatprep.subr.bf16.mxu0 0
        %3526 = vmatpush1.bf16.msra.mxu0 %v3327
        %3527 = vmatprep.subr.bf16.mxu0 0
        %3528 = vmatpush1.bf16.msra.mxu0 %v3328
        %3529 = vmatprep.subr.bf16.mxu0 0
        %3530 = vmatpush1.bf16.msra.mxu0 %v3329
        %3531 = vmatprep.subr.bf16.mxu0 0
        %3532 = vmatpush1.bf16.msra.mxu0 0
        %3533 = vmatprep.subr.bf16.mxu0 0
        %3534 = vmatpush1.bf16.msra.mxu0 0
        %3535 = vmatprep.subr.bf16.mxu0 0
        %3536 = vmatpush1.bf16.msra.mxu0 0
        %3537 = vmatprep.subr.bf16.mxu0 0
        %3538 = vmatpush1.bf16.msra.mxu0 0
        %3539 = vmatprep.subr.bf16.mxu0 0
        %3540 = vmatpush1.bf16.msra.mxu0 0
        %3541 = vmatprep.subr.bf16.mxu0 0
        %3542 = vmatpush1.bf16.msra.mxu0 0
        %3543 = vmatprep.subr.bf16.mxu0 0
        %3544 = vmatpush1.bf16.msra.mxu0 0
        %3545 = vmatprep.subr.bf16.mxu0 0
        %3546 = vmatpush1.bf16.msra.mxu0 0
        %3547 = vmatprep.mubr.bf16.mxu0 0
        %3548 = vmatmul.mubr.bf16.gmra.mrb[0].mxu0 %v3116
        %v3549 = vpop.f32.mrb[0].mxu0
        %v3550 = vadd.f32 %v3389, %v3549
        %v3551 = vpop.f32.mrb[0].mxu0
        %v3552 = vpop.f32.mrb[0].mxu0
        %v3553 = vadd.f32 %v3392, %v3552
        %v3554 = vpop.f32.mrb[0].mxu0
        %3555 = vmatprep.mubr.bf16.mxu0 0
        %3556 = vmatmul.mubr.bf16.gmra.mrb[0].mxu0 %v3119
        %v3557 = vpop.f32.mrb[0].mxu0
        %v3558 = vadd.f32 %v3397, %v3557
        %v3559 = vpop.f32.mrb[0].mxu0
        %v3560 = vpop.f32.mrb[0].mxu0
        %v3561 = vadd.f32 %v3400, %v3560
        %v3562 = vpop.f32.mrb[0].mxu0
        %3563 = vmatprep.mubr.bf16.mxu0 0
        %3564 = vmatmul.mubr.bf16.gmra.mrb[0].mxu0 %v3122
        %v3565 = vpop.f32.mrb[0].mxu0
        %v3566 = vadd.f32 %v3405, %v3565
        %v3567 = vpop.f32.mrb[0].mxu0
        %v3568 = vpop.f32.mrb[0].mxu0
        %v3569 = vadd.f32 %v3408, %v3568
        %v3570 = vpop.f32.mrb[0].mxu0
        %3571 = vmatprep.mubr.bf16.mxu0 0
        %3572 = vmatmul.mubr.bf16.gmra.mrb[0].mxu0 %v3125
        %v3573 = vpop.f32.mrb[0].mxu0
        %v3574 = vadd.f32 %v3413, %v3573
        %v3575 = vpop.f32.mrb[0].mxu0
        %v3576 = vpop.f32.mrb[0].mxu0
        %v3577 = vadd.f32 %v3416, %v3576
        %v3578 = vpop.f32.mrb[0].mxu0
        %3579 = vmatprep.mubr.bf16.mxu0 0
        %3580 = vmatmul.mubr.bf16.gmra.mrb[0].mxu0 %v3128
        %v3581 = vpop.f32.mrb[0].mxu0
        %v3582 = vadd.f32 %v3421, %v3581
        %v3583 = vpop.f32.mrb[0].mxu0
        %v3584 = vpop.f32.mrb[0].mxu0
        %v3585 = vadd.f32 %v3424, %v3584
        %v3586 = vpop.f32.mrb[0].mxu0
        %3587 = vmatprep.mubr.bf16.mxu0 0
        %3588 = vmatmul.mubr.bf16.gmra.mrb[0].mxu0 %v3131
        %v3589 = vpop.f32.mrb[0].mxu0
        %v3590 = vadd.f32 %v3429, %v3589
        %v3591 = vpop.f32.mrb[0].mxu0
        %v3592 = vpop.f32.mrb[0].mxu0
        %v3593 = vadd.f32 %v3432, %v3592
        %v3594 = vpop.f32.mrb[0].mxu0
        %3595 = vmatprep.mubr.bf16.mxu0 0
        %3596 = vmatmul.mubr.bf16.gmra.mrb[0].mxu0 %v3134
        %v3597 = vpop.f32.mrb[0].mxu0
        %v3598 = vadd.f32 %v3437, %v3597
        %v3599 = vpop.f32.mrb[0].mxu0
        %v3600 = vpop.f32.mrb[0].mxu0
        %v3601 = vadd.f32 %v3440, %v3600
        %v3602 = vpop.f32.mrb[0].mxu0
        %3603 = vmatprep.mubr.bf16.mxu0 0
        %3604 = vmatmul.mubr.bf16.gmra.mrb[0].mxu0 %v3137
        %v3605 = vpop.f32.mrb[0].mxu0
        %v3606 = vadd.f32 %v3445, %v3605
        %v3607 = vpop.f32.mrb[0].mxu0
        %v3608 = vpop.f32.mrb[0].mxu0
        %v3609 = vadd.f32 %v3448, %v3608
        %v3610 = vpop.f32.mrb[0].mxu0
        %3611 = vmatprep.mubr.bf16.mxu0 0
        %3612 = vmatmul.mubr.bf16.gmra.mrb[0].mxu0 %v3140
        %v3613 = vpop.f32.mrb[0].mxu0
        %v3614 = vadd.f32 %v3453, %v3613
        %v3615 = vpop.f32.mrb[0].mxu0
        %v3616 = vpop.f32.mrb[0].mxu0
        %v3617 = vadd.f32 %v3456, %v3616
        %v3618 = vpop.f32.mrb[0].mxu0
        %3619 = vmatprep.mubr.bf16.mxu0 0
        %3620 = vmatmul.mubr.bf16.gmra.mrb[0].mxu0 %v3143
        %v3621 = vpop.f32.mrb[0].mxu0
        %v3622 = vadd.f32 %v3461, %v3621
        %v3623 = vpop.f32.mrb[0].mxu0
        %v3624 = vpop.f32.mrb[0].mxu0
        %v3625 = vadd.f32 %v3464, %v3624
        %v3626 = vpop.f32.mrb[0].mxu0
        %3627 = vmatprep.mubr.bf16.mxu0 0
        %3628 = vmatmul.mubr.bf16.gmra.mrb[0].mxu0 %v3146
        %v3629 = vpop.f32.mrb[0].mxu0
        %v3630 = vadd.f32 %v3469, %v3629
        %v3631 = vpop.f32.mrb[0].mxu0
        %v3632 = vpop.f32.mrb[0].mxu0
        %v3633 = vadd.f32 %v3472, %v3632
        %v3634 = vpop.f32.mrb[0].mxu0
        %3635 = vmatprep.mubr.bf16.mxu0 0
        %3636 = vmatmul.mubr.bf16.gmra.mrb[0].mxu0 %v3149
        %v3637 = vpop.f32.mrb[0].mxu0
        %v3638 = vadd.f32 %v3477, %v3637
        %v3639 = vpop.f32.mrb[0].mxu0
        %v3640 = vpop.f32.mrb[0].mxu0
        %v3641 = vadd.f32 %v3480, %v3640
        %v3642 = vpop.f32.mrb[0].mxu0
        %3643 = vmatprep.mubr.bf16.mxu0 0
        %3644 = vmatmul.mubr.bf16.gmra.mrb[0].mxu0 %v3152
        %v3645 = vpop.f32.mrb[0].mxu0
        %v3646 = vadd.f32 %v3485, %v3645
        %v3647 = vpop.f32.mrb[0].mxu0
        %v3648 = vpop.f32.mrb[0].mxu0
        %v3649 = vadd.f32 %v3488, %v3648
        %v3650 = vpop.f32.mrb[0].mxu0
        %3651 = vmatprep.mubr.bf16.mxu0 0
        %3652 = vmatmul.mubr.bf16.gmra.mrb[0].mxu0 %v3155
        %v3653 = vpop.f32.mrb[0].mxu0
        %v3654 = vadd.f32 %v3493, %v3653
        %v3655 = vpop.f32.mrb[0].mxu0
        %v3656 = vpop.f32.mrb[0].mxu0
        %v3657 = vadd.f32 %v3496, %v3656
        %v3658 = vpop.f32.mrb[0].mxu0
        %3659 = vmatprep.mubr.bf16.mxu0 0
        %3660 = vmatmul.mubr.bf16.gmra.mrb[0].mxu0 %v3158
        %v3661 = vpop.f32.mrb[0].mxu0
        %v3662 = vadd.f32 %v3501, %v3661
        %v3663 = vpop.f32.mrb[0].mxu0
        %v3664 = vpop.f32.mrb[0].mxu0
        %v3665 = vadd.f32 %v3504, %v3664
        %v3666 = vpop.f32.mrb[0].mxu0
        %3667 = vmatprep.mubr.bf16.mxu0 0
        %3668 = vmatmul.mubr.bf16.gmra.mrb[0].mxu0 %v3161
        %v3669 = vpop.f32.mrb[0].mxu0
        %v3670 = vadd.f32 %v3509, %v3669
        %v3671 = vpop.f32.mrb[0].mxu0
        %v3672 = vpop.f32.mrb[0].mxu0
        %v3673 = vadd.f32 %v3512, %v3672
        %v3674 = vpop.f32.mrb[0].mxu0
        %3675 = vdwg.mxu0
        %s3676 = scalar_lea.vmem [#allocation2], 16
        %v3677 = vld [vmem:[%s3676] sm:$0xf]
        %v3678 = vld [vmem:[%s3676 + $0x8] sm:$0xf]
        %v3679 = vld [vmem:[%s3676 + $0x10] sm:$0xf]
        %v3680 = vld [vmem:[%s3676 + $0x18] sm:$0xf]
        %v3681 = vld [vmem:[%s3676 + $0x20] sm:$0xf]
        %v3682 = vld [vmem:[%s3676 + $0x28] sm:$0xf]
        %v3683 = vld [vmem:[%s3676 + $0x30] sm:$0xf]
        %v3684 = vld [vmem:[%s3676 + $0x38] sm:$0xf]
        %v3685 = vld [vmem:[%s3676 + $0x50] sm:$0xf]
        %v3686 = vld [vmem:[%s3676 + $0x58] sm:$0xf]
        %v3687 = vld [vmem:[%s3676 + $0x60] sm:$0xf]
        %v3688 = vld [vmem:[%s3676 + $0x68] sm:$0xf]
        %v3689 = vld [vmem:[%s3676 + $0x70] sm:$0xf]
        %v3690 = vld [vmem:[%s3676 + $0x78] sm:$0xf]
        %v3691 = vld [vmem:[%s3676 + $0x80] sm:$0xf]
        %v3692 = vld [vmem:[%s3676 + $0x88] sm:$0xf]
        %v3693 = vld [vmem:[%s3676 + $0xa0] sm:$0xf]
        %v3694 = vld [vmem:[%s3676 + $0xa8] sm:$0xf]
        %v3695 = vld [vmem:[%s3676 + $0xb0] sm:$0xf]
        %v3696 = vld [vmem:[%s3676 + $0xb8] sm:$0xf]
        %v3697 = vld [vmem:[%s3676 + $0xc0] sm:$0xf]
        %v3698 = vld [vmem:[%s3676 + $0xc8] sm:$0xf]
        %v3699 = vld [vmem:[%s3676 + $0xd0] sm:$0xf]
        %v3700 = vld [vmem:[%s3676 + $0xd8] sm:$0xf]
        %v3701 = vld [vmem:[%s3676 + $0xf0] sm:$0xf]
        %v3702 = vld [vmem:[%s3676 + $0xf8] sm:$0xf]
        %v3703 = vld [vmem:[%s3676 + $0x100] sm:$0xf]
        %v3704 = vld [vmem:[%s3676 + $0x108] sm:$0xf]
        %v3705 = vld [vmem:[%s3676 + $0x110] sm:$0xf]
        %v3706 = vld [vmem:[%s3676 + $0x118] sm:$0xf]
        %v3707 = vld [vmem:[%s3676 + $0x120] sm:$0xf]
        %v3708 = vld [vmem:[%s3676 + $0x128] sm:$0xf]
        %v3709 = vld [vmem:[%s3676 + $0x4] sm:$0x1]
        %v3710 = vld [vmem:[%s3676 + $0xc] sm:$0x1]
        %v3711 = vld [vmem:[%s3676 + $0x14] sm:$0x1]
        %v3712 = vld [vmem:[%s3676 + $0x1c] sm:$0x1]
        %v3713 = vld [vmem:[%s3676 + $0x24] sm:$0x1]
        %v3714 = vld [vmem:[%s3676 + $0x2c] sm:$0x1]
        %v3715 = vld [vmem:[%s3676 + $0x34] sm:$0x1]
        %v3716 = vld [vmem:[%s3676 + $0x3c] sm:$0x1]
        %v3717 = vld [vmem:[%s3676 + $0x54] sm:$0x1]
        %v3718 = vld [vmem:[%s3676 + $0x5c] sm:$0x1]
        %v3719 = vld [vmem:[%s3676 + $0x64] sm:$0x1]
        %v3720 = vld [vmem:[%s3676 + $0x6c] sm:$0x1]
        %v3721 = vld [vmem:[%s3676 + $0x74] sm:$0x1]
        %v3722 = vld [vmem:[%s3676 + $0x7c] sm:$0x1]
        %v3723 = vld [vmem:[%s3676 + $0x84] sm:$0x1]
        %v3724 = vld [vmem:[%s3676 + $0x8c] sm:$0x1]
        %v3725 = vld [vmem:[%s3676 + $0xa4] sm:$0x1]
        %v3726 = vld [vmem:[%s3676 + $0xac] sm:$0x1]
        %v3727 = vld [vmem:[%s3676 + $0xb4] sm:$0x1]
        %v3728 = vld [vmem:[%s3676 + $0xbc] sm:$0x1]
        %v3729 = vld [vmem:[%s3676 + $0xc4] sm:$0x1]
        %v3730 = vld [vmem:[%s3676 + $0xcc] sm:$0x1]
        %v3731 = vld [vmem:[%s3676 + $0xd4] sm:$0x1]
        %v3732 = vld [vmem:[%s3676 + $0xdc] sm:$0x1]
        %v3733 = vld [vmem:[%s3676 + $0xf4] sm:$0x1]
        %v3734 = vld [vmem:[%s3676 + $0xfc] sm:$0x1]
        %v3735 = vld [vmem:[%s3676 + $0x104] sm:$0x1]
        %v3736 = vld [vmem:[%s3676 + $0x10c] sm:$0x1]
        %v3737 = vld [vmem:[%s3676 + $0x114] sm:$0x1]
        %v3738 = vld [vmem:[%s3676 + $0x11c] sm:$0x1]
        %v3739 = vld [vmem:[%s3676 + $0x124] sm:$0x1]
        %v3740 = vld [vmem:[%s3676 + $0x12c] sm:$0x1]
        %v3741 = vld [vmem:[%s3676] sm:$0xe]
        %v3742 = vld [vmem:[%s3676 + $0x8] sm:$0xe]
        %v3743 = vld [vmem:[%s3676 + $0x10] sm:$0xe]
        %v3744 = vld [vmem:[%s3676 + $0x18] sm:$0xe]
        %v3745 = vld [vmem:[%s3676 + $0x20] sm:$0xe]
        %v3746 = vld [vmem:[%s3676 + $0x28] sm:$0xe]
        %v3747 = vld [vmem:[%s3676 + $0x30] sm:$0xe]
        %v3748 = vld [vmem:[%s3676 + $0x38] sm:$0xe]
        %v3749 = vld [vmem:[%s3676 + $0x50] sm:$0xe]
        %v3750 = vld [vmem:[%s3676 + $0x58] sm:$0xe]
        %v3751 = vld [vmem:[%s3676 + $0x60] sm:$0xe]
        %v3752 = vld [vmem:[%s3676 + $0x68] sm:$0xe]
        %v3753 = vld [vmem:[%s3676 + $0x70] sm:$0xe]
        %v3754 = vld [vmem:[%s3676 + $0x78] sm:$0xe]
        %v3755 = vld [vmem:[%s3676 + $0x80] sm:$0xe]
        %v3756 = vld [vmem:[%s3676 + $0x88] sm:$0xe]
        %v3757 = vld [vmem:[%s3676 + $0xa0] sm:$0xe]
        %v3758 = vld [vmem:[%s3676 + $0xa8] sm:$0xe]
        %v3759 = vld [vmem:[%s3676 + $0xb0] sm:$0xe]
        %v3760 = vld [vmem:[%s3676 + $0xb8] sm:$0xe]
        %v3761 = vld [vmem:[%s3676 + $0xc0] sm:$0xe]
        %v3762 = vld [vmem:[%s3676 + $0xc8] sm:$0xe]
        %v3763 = vld [vmem:[%s3676 + $0xd0] sm:$0xe]
        %v3764 = vld [vmem:[%s3676 + $0xd8] sm:$0xe]
        %v3765 = vld [vmem:[%s3676 + $0xf0] sm:$0xe]
        %v3766 = vld [vmem:[%s3676 + $0xf8] sm:$0xe]
        %v3767 = vld [vmem:[%s3676 + $0x100] sm:$0xe]
        %v3768 = vld [vmem:[%s3676 + $0x108] sm:$0xe]
        %v3769 = vld [vmem:[%s3676 + $0x110] sm:$0xe]
        %v3770 = vld [vmem:[%s3676 + $0x118] sm:$0xe]
        %v3771 = vld [vmem:[%s3676 + $0x120] sm:$0xe]
        %v3772 = vld [vmem:[%s3676 + $0x128] sm:$0xe]
        %v3837 = vunpack.c.l.b16 %v3677
        %v3838 = vunpack.c.l.b16 %v3709
        %v3839 = vunpack.c.l.b16 %v3678
        %v3840 = vunpack.c.l.b16 %v3710
        %v3841 = vunpack.c.l.b16 %v3679
        %v3842 = vunpack.c.l.b16 %v3711
        %v3843 = vunpack.c.l.b16 %v3680
        %v3844 = vunpack.c.l.b16 %v3712
        %v3845 = vunpack.c.l.b16 %v3681
        %v3846 = vunpack.c.l.b16 %v3713
        %v3847 = vunpack.c.l.b16 %v3682
        %v3848 = vunpack.c.l.b16 %v3714
        %v3849 = vunpack.c.l.b16 %v3683
        %v3850 = vunpack.c.l.b16 %v3715
        %v3851 = vunpack.c.l.b16 %v3684
        %v3852 = vunpack.c.l.b16 %v3716
        %v3853 = vunpack.c.l.b16 %v3685
        %v3854 = vunpack.c.l.b16 %v3717
        %v3855 = vunpack.c.l.b16 %v3686
        %v3856 = vunpack.c.l.b16 %v3718
        %v3857 = vunpack.c.l.b16 %v3687
        %v3858 = vunpack.c.l.b16 %v3719
        %v3859 = vunpack.c.l.b16 %v3688
        %v3860 = vunpack.c.l.b16 %v3720
        %v3861 = vunpack.c.l.b16 %v3689
        %v3862 = vunpack.c.l.b16 %v3721
        %v3863 = vunpack.c.l.b16 %v3690
        %v3864 = vunpack.c.l.b16 %v3722
        %v3865 = vunpack.c.l.b16 %v3691
        %v3866 = vunpack.c.l.b16 %v3723
        %v3867 = vunpack.c.l.b16 %v3692
        %v3868 = vunpack.c.l.b16 %v3724
        %v3869 = vunpack.c.l.b16 %v3693
        %v3870 = vunpack.c.l.b16 %v3725
        %v3871 = vunpack.c.l.b16 %v3694
        %v3872 = vunpack.c.l.b16 %v3726
        %v3873 = vunpack.c.l.b16 %v3695
        %v3874 = vunpack.c.l.b16 %v3727
        %v3875 = vunpack.c.l.b16 %v3696
        %v3876 = vunpack.c.l.b16 %v3728
        %v3877 = vunpack.c.l.b16 %v3697
        %v3878 = vunpack.c.l.b16 %v3729
        %v3879 = vunpack.c.l.b16 %v3698
        %v3880 = vunpack.c.l.b16 %v3730
        %v3881 = vunpack.c.l.b16 %v3699
        %v3882 = vunpack.c.l.b16 %v3731
        %v3883 = vunpack.c.l.b16 %v3700
        %v3884 = vunpack.c.l.b16 %v3732
        %v3885 = vunpack.c.l.b16 %v3701
        %v3886 = vunpack.c.l.b16 %v3733
        %v3887 = vunpack.c.l.b16 %v3702
        %v3888 = vunpack.c.l.b16 %v3734
        %v3889 = vunpack.c.l.b16 %v3703
        %v3890 = vunpack.c.l.b16 %v3735
        %v3891 = vunpack.c.l.b16 %v3704
        %v3892 = vunpack.c.l.b16 %v3736
        %v3893 = vunpack.c.l.b16 %v3705
        %v3894 = vunpack.c.l.b16 %v3737
        %v3895 = vunpack.c.l.b16 %v3706
        %v3896 = vunpack.c.l.b16 %v3738
        %v3897 = vunpack.c.l.b16 %v3707
        %v3898 = vunpack.c.l.b16 %v3739
        %v3899 = vunpack.c.l.b16 %v3708
        %v3900 = vunpack.c.l.b16 %v3740
        %v3901 = vpack.c.b16 %v3838, %v3837
        %v3902 = vpack.c.b16 %v3840, %v3839
        %v3903 = vpack.c.b16 %v3842, %v3841
        %v3904 = vpack.c.b16 %v3844, %v3843
        %v3905 = vpack.c.b16 %v3846, %v3845
        %v3906 = vpack.c.b16 %v3848, %v3847
        %v3907 = vpack.c.b16 %v3850, %v3849
        %v3908 = vpack.c.b16 %v3852, %v3851
        %v3909 = vpack.c.b16 %v3854, %v3853
        %v3910 = vpack.c.b16 %v3856, %v3855
        %v3911 = vpack.c.b16 %v3858, %v3857
        %v3912 = vpack.c.b16 %v3860, %v3859
        %v3913 = vpack.c.b16 %v3862, %v3861
        %v3914 = vpack.c.b16 %v3864, %v3863
        %v3915 = vpack.c.b16 %v3866, %v3865
        %v3916 = vpack.c.b16 %v3868, %v3867
        %v3917 = vpack.c.b16 %v3870, %v3869
        %v3918 = vpack.c.b16 %v3872, %v3871
        %v3919 = vpack.c.b16 %v3874, %v3873
        %v3920 = vpack.c.b16 %v3876, %v3875
        %v3921 = vpack.c.b16 %v3878, %v3877
        %v3922 = vpack.c.b16 %v3880, %v3879
        %v3923 = vpack.c.b16 %v3882, %v3881
        %v3924 = vpack.c.b16 %v3884, %v3883
        %v3925 = vpack.c.b16 %v3886, %v3885
        %v3926 = vpack.c.b16 %v3888, %v3887
        %v3927 = vpack.c.b16 %v3890, %v3889
        %v3928 = vpack.c.b16 %v3892, %v3891
        %v3929 = vpack.c.b16 %v3894, %v3893
        %v3930 = vpack.c.b16 %v3896, %v3895
        %v3931 = vpack.c.b16 %v3898, %v3897
        %v3932 = vpack.c.b16 %v3900, %v3899
        %v3934 = vshrl.u32 %v3901, 16
        %v3936 = vshll.u32 %v3901, 16
        %v3938 = vrot.slane %v3936, 1
        %v3939 = vor.u32 %v3934, %v3938
        %v3941 = vshrl.u32 %v3902, 16
        %v3943 = vshll.u32 %v3902, 16
        %v3945 = vrot.slane %v3943, 1
        %v3946 = vor.u32 %v3941, %v3945
        %v3948 = vshrl.u32 %v3903, 16
        %v3950 = vshll.u32 %v3903, 16
        %v3952 = vrot.slane %v3950, 1
        %v3953 = vor.u32 %v3948, %v3952
        %v3955 = vshrl.u32 %v3904, 16
        %v3957 = vshll.u32 %v3904, 16
        %v3959 = vrot.slane %v3957, 1
        %v3960 = vor.u32 %v3955, %v3959
        %v3962 = vshrl.u32 %v3905, 16
        %v3964 = vshll.u32 %v3905, 16
        %v3966 = vrot.slane %v3964, 1
        %v3967 = vor.u32 %v3962, %v3966
        %v3969 = vshrl.u32 %v3906, 16
        %v3971 = vshll.u32 %v3906, 16
        %v3973 = vrot.slane %v3971, 1
        %v3974 = vor.u32 %v3969, %v3973
        %v3976 = vshrl.u32 %v3907, 16
        %v3978 = vshll.u32 %v3907, 16
        %v3980 = vrot.slane %v3978, 1
        %v3981 = vor.u32 %v3976, %v3980
        %v3983 = vshrl.u32 %v3908, 16
        %v3985 = vshll.u32 %v3908, 16
        %v3987 = vrot.slane %v3985, 1
        %v3988 = vor.u32 %v3983, %v3987
        %v3990 = vshrl.u32 %v3909, 16
        %v3992 = vshll.u32 %v3909, 16
        %v3994 = vrot.slane %v3992, 1
        %v3995 = vor.u32 %v3990, %v3994
        %v3997 = vshrl.u32 %v3910, 16
        %v3999 = vshll.u32 %v3910, 16
        %v4001 = vrot.slane %v3999, 1
        %v4002 = vor.u32 %v3997, %v4001
        %v4004 = vshrl.u32 %v3911, 16
        %v4006 = vshll.u32 %v3911, 16
        %v4008 = vrot.slane %v4006, 1
        %v4009 = vor.u32 %v4004, %v4008
        %v4011 = vshrl.u32 %v3912, 16
        %v4013 = vshll.u32 %v3912, 16
        %v4015 = vrot.slane %v4013, 1
        %v4016 = vor.u32 %v4011, %v4015
        %v4018 = vshrl.u32 %v3913, 16
        %v4020 = vshll.u32 %v3913, 16
        %v4022 = vrot.slane %v4020, 1
        %v4023 = vor.u32 %v4018, %v4022
        %v4025 = vshrl.u32 %v3914, 16
        %v4027 = vshll.u32 %v3914, 16
        %v4029 = vrot.slane %v4027, 1
        %v4030 = vor.u32 %v4025, %v4029
        %v4032 = vshrl.u32 %v3915, 16
        %v4034 = vshll.u32 %v3915, 16
        %v4036 = vrot.slane %v4034, 1
        %v4037 = vor.u32 %v4032, %v4036
        %v4039 = vshrl.u32 %v3916, 16
        %v4041 = vshll.u32 %v3916, 16
        %v4043 = vrot.slane %v4041, 1
        %v4044 = vor.u32 %v4039, %v4043
        %v4046 = vshrl.u32 %v3917, 16
        %v4048 = vshll.u32 %v3917, 16
        %v4050 = vrot.slane %v4048, 1
        %v4051 = vor.u32 %v4046, %v4050
        %v4053 = vshrl.u32 %v3918, 16
        %v4055 = vshll.u32 %v3918, 16
        %v4057 = vrot.slane %v4055, 1
        %v4058 = vor.u32 %v4053, %v4057
        %v4060 = vshrl.u32 %v3919, 16
        %v4062 = vshll.u32 %v3919, 16
        %v4064 = vrot.slane %v4062, 1
        %v4065 = vor.u32 %v4060, %v4064
        %v4067 = vshrl.u32 %v3920, 16
        %v4069 = vshll.u32 %v3920, 16
        %v4071 = vrot.slane %v4069, 1
        %v4072 = vor.u32 %v4067, %v4071
        %v4074 = vshrl.u32 %v3921, 16
        %v4076 = vshll.u32 %v3921, 16
        %v4078 = vrot.slane %v4076, 1
        %v4079 = vor.u32 %v4074, %v4078
        %v4081 = vshrl.u32 %v3922, 16
        %v4083 = vshll.u32 %v3922, 16
        %v4085 = vrot.slane %v4083, 1
        %v4086 = vor.u32 %v4081, %v4085
        %v4088 = vshrl.u32 %v3923, 16
        %v4090 = vshll.u32 %v3923, 16
        %v4092 = vrot.slane %v4090, 1
        %v4093 = vor.u32 %v4088, %v4092
        %v4095 = vshrl.u32 %v3924, 16
        %v4097 = vshll.u32 %v3924, 16
        %v4099 = vrot.slane %v4097, 1
        %v4100 = vor.u32 %v4095, %v4099
        %v4102 = vshrl.u32 %v3925, 16
        %v4104 = vshll.u32 %v3925, 16
        %v4106 = vrot.slane %v4104, 1
        %v4107 = vor.u32 %v4102, %v4106
        %v4109 = vshrl.u32 %v3926, 16
        %v4111 = vshll.u32 %v3926, 16
        %v4113 = vrot.slane %v4111, 1
        %v4114 = vor.u32 %v4109, %v4113
        %v4116 = vshrl.u32 %v3927, 16
        %v4118 = vshll.u32 %v3927, 16
        %v4120 = vrot.slane %v4118, 1
        %v4121 = vor.u32 %v4116, %v4120
        %v4123 = vshrl.u32 %v3928, 16
        %v4125 = vshll.u32 %v3928, 16
        %v4127 = vrot.slane %v4125, 1
        %v4128 = vor.u32 %v4123, %v4127
        %v4130 = vshrl.u32 %v3929, 16
        %v4132 = vshll.u32 %v3929, 16
        %v4134 = vrot.slane %v4132, 1
        %v4135 = vor.u32 %v4130, %v4134
        %v4137 = vshrl.u32 %v3930, 16
        %v4139 = vshll.u32 %v3930, 16
        %v4141 = vrot.slane %v4139, 1
        %v4142 = vor.u32 %v4137, %v4141
        %v4144 = vshrl.u32 %v3931, 16
        %v4146 = vshll.u32 %v3931, 16
        %v4148 = vrot.slane %v4146, 1
        %v4149 = vor.u32 %v4144, %v4148
        %v4151 = vshrl.u32 %v3932, 16
        %v4153 = vshll.u32 %v3932, 16
        %v4155 = vrot.slane %v4153, 1
        %v4156 = vor.u32 %v4151, %v4155
        %v4189 = vunpack.c.l.b16 %v3741
        %v4190 = vunpack.c.l.b16 %v3742
        %v4191 = vunpack.c.l.b16 %v3743
        %v4192 = vunpack.c.l.b16 %v3744
        %v4193 = vunpack.c.l.b16 %v3745
        %v4194 = vunpack.c.l.b16 %v3746
        %v4195 = vunpack.c.l.b16 %v3747
        %v4196 = vunpack.c.l.b16 %v3748
        %v4197 = vunpack.c.l.b16 %v3749
        %v4198 = vunpack.c.l.b16 %v3750
        %v4199 = vunpack.c.l.b16 %v3751
        %v4200 = vunpack.c.l.b16 %v3752
        %v4201 = vunpack.c.l.b16 %v3753
        %v4202 = vunpack.c.l.b16 %v3754
        %v4203 = vunpack.c.l.b16 %v3755
        %v4204 = vunpack.c.l.b16 %v3756
        %v4205 = vunpack.c.l.b16 %v3757
        %v4206 = vunpack.c.l.b16 %v3758
        %v4207 = vunpack.c.l.b16 %v3759
        %v4208 = vunpack.c.l.b16 %v3760
        %v4209 = vunpack.c.l.b16 %v3761
        %v4210 = vunpack.c.l.b16 %v3762
        %v4211 = vunpack.c.l.b16 %v3763
        %v4212 = vunpack.c.l.b16 %v3764
        %v4213 = vunpack.c.l.b16 %v3765
        %v4214 = vunpack.c.l.b16 %v3766
        %v4215 = vunpack.c.l.b16 %v3767
        %v4216 = vunpack.c.l.b16 %v3768
        %v4217 = vunpack.c.l.b16 %v3769
        %v4218 = vunpack.c.l.b16 %v3770
        %v4219 = vunpack.c.l.b16 %v3771
        %v4220 = vunpack.c.l.b16 %v3772
        %v4221 = vpack.c.b16 %v3838, %v4189
        %v4222 = vpack.c.b16 %v3840, %v4190
        %v4223 = vpack.c.b16 %v3842, %v4191
        %v4224 = vpack.c.b16 %v3844, %v4192
        %v4225 = vpack.c.b16 %v3846, %v4193
        %v4226 = vpack.c.b16 %v3848, %v4194
        %v4227 = vpack.c.b16 %v3850, %v4195
        %v4228 = vpack.c.b16 %v3852, %v4196
        %v4229 = vpack.c.b16 %v3854, %v4197
        %v4230 = vpack.c.b16 %v3856, %v4198
        %v4231 = vpack.c.b16 %v3858, %v4199
        %v4232 = vpack.c.b16 %v3860, %v4200
        %v4233 = vpack.c.b16 %v3862, %v4201
        %v4234 = vpack.c.b16 %v3864, %v4202
        %v4235 = vpack.c.b16 %v3866, %v4203
        %v4236 = vpack.c.b16 %v3868, %v4204
        %v4237 = vpack.c.b16 %v3870, %v4205
        %v4238 = vpack.c.b16 %v3872, %v4206
        %v4239 = vpack.c.b16 %v3874, %v4207
        %v4240 = vpack.c.b16 %v3876, %v4208
        %v4241 = vpack.c.b16 %v3878, %v4209
        %v4242 = vpack.c.b16 %v3880, %v4210
        %v4243 = vpack.c.b16 %v3882, %v4211
        %v4244 = vpack.c.b16 %v3884, %v4212
        %v4245 = vpack.c.b16 %v3886, %v4213
        %v4246 = vpack.c.b16 %v3888, %v4214
        %v4247 = vpack.c.b16 %v3890, %v4215
        %v4248 = vpack.c.b16 %v3892, %v4216
        %v4249 = vpack.c.b16 %v3894, %v4217
        %v4250 = vpack.c.b16 %v3896, %v4218
        %v4251 = vpack.c.b16 %v3898, %v4219
        %v4252 = vpack.c.b16 %v3900, %v4220
        %v4253 = vrot.slane %v4221, 1
        %v4254 = vrot.slane %v4222, 1
        %v4255 = vrot.slane %v4223, 1
        %v4256 = vrot.slane %v4224, 1
        %v4257 = vrot.slane %v4225, 1
        %v4258 = vrot.slane %v4226, 1
        %v4259 = vrot.slane %v4227, 1
        %v4260 = vrot.slane %v4228, 1
        %v4261 = vrot.slane %v4229, 1
        %v4262 = vrot.slane %v4230, 1
        %v4263 = vrot.slane %v4231, 1
        %v4264 = vrot.slane %v4232, 1
        %v4265 = vrot.slane %v4233, 1
        %v4266 = vrot.slane %v4234, 1
        %v4267 = vrot.slane %v4235, 1
        %v4268 = vrot.slane %v4236, 1
        %v4269 = vrot.slane %v4237, 1
        %v4270 = vrot.slane %v4238, 1
        %v4271 = vrot.slane %v4239, 1
        %v4272 = vrot.slane %v4240, 1
        %v4273 = vrot.slane %v4241, 1
        %v4274 = vrot.slane %v4242, 1
        %v4275 = vrot.slane %v4243, 1
        %v4276 = vrot.slane %v4244, 1
        %v4277 = vrot.slane %v4245, 1
        %v4278 = vrot.slane %v4246, 1
        %v4279 = vrot.slane %v4247, 1
        %v4280 = vrot.slane %v4248, 1
        %v4281 = vrot.slane %v4249, 1
        %v4282 = vrot.slane %v4250, 1
        %v4283 = vrot.slane %v4251, 1
        %v4284 = vrot.slane %v4252, 1
        %v4285 = vld [vmem:[#allocation5 + $0x180] sm:$0xf]
        %v4286 = vld [vmem:[#allocation5 + $0x184] sm:$0xf]
        %v4287 = vld [vmem:[#allocation5 + $0x188] sm:$0xf]
        %v4288 = vld [vmem:[#allocation5 + $0x18c] sm:$0xf]
        %v4289 = vld [vmem:[#allocation5 + $0x190] sm:$0xf]
        %v4290 = vld [vmem:[#allocation5 + $0x194] sm:$0xf]
        %v4291 = vld [vmem:[#allocation5 + $0x198] sm:$0xf]
        %v4292 = vld [vmem:[#allocation5 + $0x19c] sm:$0xf]
        %v4293 = vld [vmem:[#allocation5 + $0x1a0] sm:$0xf]
        %v4294 = vld [vmem:[#allocation5 + $0x1a4] sm:$0xf]
        %v4295 = vld [vmem:[#allocation5 + $0x1a8] sm:$0xf]
        %v4296 = vld [vmem:[#allocation5 + $0x1ac] sm:$0xf]
        %v4297 = vld [vmem:[#allocation5 + $0x1b0] sm:$0xf]
        %v4298 = vld [vmem:[#allocation5 + $0x1b4] sm:$0xf]
        %v4299 = vld [vmem:[#allocation5 + $0x1b8] sm:$0xf]
        %v4300 = vld [vmem:[#allocation5 + $0x1bc] sm:$0xf]
        %v4301 = vld [vmem:[#allocation5 + $0x1c0] sm:$0xf]
        %v4302 = vld [vmem:[#allocation5 + $0x1c4] sm:$0xf]
        %v4303 = vld [vmem:[#allocation5 + $0x1c8] sm:$0xf]
        %v4304 = vld [vmem:[#allocation5 + $0x1cc] sm:$0xf]
        %v4305 = vld [vmem:[#allocation5 + $0x1d0] sm:$0xf]
        %v4306 = vld [vmem:[#allocation5 + $0x1d4] sm:$0xf]
        %v4307 = vld [vmem:[#allocation5 + $0x1d8] sm:$0xf]
        %v4308 = vld [vmem:[#allocation5 + $0x1dc] sm:$0xf]
        %v4309 = vld [vmem:[#allocation5 + $0x1e0] sm:$0xf]
        %v4310 = vld [vmem:[#allocation5 + $0x1e4] sm:$0xf]
        %v4311 = vld [vmem:[#allocation5 + $0x1e8] sm:$0xf]
        %v4312 = vld [vmem:[#allocation5 + $0x1ec] sm:$0xf]
        %v4313 = vld [vmem:[#allocation5 + $0x1f0] sm:$0xf]
        %v4314 = vld [vmem:[#allocation5 + $0x1f4] sm:$0xf]
        %v4315 = vld [vmem:[#allocation5 + $0x1f8] sm:$0xf]
        %v4316 = vld [vmem:[#allocation5 + $0x1fc] sm:$0xf]
        %v4317 = vld [vmem:[#allocation5 + $0x200] sm:$0xf]
        %v4318 = vld [vmem:[#allocation5 + $0x204] sm:$0xf]
        %v4319 = vld [vmem:[#allocation5 + $0x208] sm:$0xf]
        %v4320 = vld [vmem:[#allocation5 + $0x20c] sm:$0xf]
        %v4321 = vld [vmem:[#allocation5 + $0x210] sm:$0xf]
        %v4322 = vld [vmem:[#allocation5 + $0x214] sm:$0xf]
        %v4323 = vld [vmem:[#allocation5 + $0x218] sm:$0xf]
        %v4324 = vld [vmem:[#allocation5 + $0x21c] sm:$0xf]
        %v4325 = vld [vmem:[#allocation5 + $0x220] sm:$0xf]
        %v4326 = vld [vmem:[#allocation5 + $0x224] sm:$0xf]
        %v4327 = vld [vmem:[#allocation5 + $0x228] sm:$0xf]
        %v4328 = vld [vmem:[#allocation5 + $0x22c] sm:$0xf]
        %v4329 = vld [vmem:[#allocation5 + $0x230] sm:$0xf]
        %v4330 = vld [vmem:[#allocation5 + $0x234] sm:$0xf]
        %v4331 = vld [vmem:[#allocation5 + $0x238] sm:$0xf]
        %v4332 = vld [vmem:[#allocation5 + $0x23c] sm:$0xf]
        %v4333 = vunpack.c.l.b16 %v3939
        %v4334 = vunpack.c.l.b16 %v4253
        %v4335 = vunpack.c.l.b16 %v3946
        %v4336 = vunpack.c.l.b16 %v4254
        %v4337 = vunpack.c.l.b16 %v3953
        %v4338 = vunpack.c.l.b16 %v4255
        %v4339 = vunpack.c.l.b16 %v3960
        %v4340 = vunpack.c.l.b16 %v4256
        %v4341 = vunpack.c.l.b16 %v3967
        %v4342 = vunpack.c.l.b16 %v4257
        %v4343 = vunpack.c.l.b16 %v3974
        %v4344 = vunpack.c.l.b16 %v4258
        %v4345 = vunpack.c.l.b16 %v3981
        %v4346 = vunpack.c.l.b16 %v4259
        %v4347 = vunpack.c.l.b16 %v3988
        %v4348 = vunpack.c.l.b16 %v4260
        %v4349 = vunpack.c.l.b16 %v3995
        %v4350 = vunpack.c.l.b16 %v4261
        %v4351 = vunpack.c.l.b16 %v4002
        %v4352 = vunpack.c.l.b16 %v4262
        %v4353 = vunpack.c.l.b16 %v4009
        %v4354 = vunpack.c.l.b16 %v4263
        %v4355 = vunpack.c.l.b16 %v4016
        %v4356 = vunpack.c.l.b16 %v4264
        %v4357 = vunpack.c.l.b16 %v4023
        %v4358 = vunpack.c.l.b16 %v4265
        %v4359 = vunpack.c.l.b16 %v4030
        %v4360 = vunpack.c.l.b16 %v4266
        %v4361 = vunpack.c.l.b16 %v4037
        %v4362 = vunpack.c.l.b16 %v4267
        %v4363 = vunpack.c.l.b16 %v4044
        %v4364 = vunpack.c.l.b16 %v4268
        %v4365 = vunpack.c.l.b16 %v4051
        %v4366 = vunpack.c.l.b16 %v4269
        %v4367 = vunpack.c.l.b16 %v4058
        %v4368 = vunpack.c.l.b16 %v4270
        %v4369 = vunpack.c.l.b16 %v4065
        %v4370 = vunpack.c.l.b16 %v4271
        %v4371 = vunpack.c.l.b16 %v4072
        %v4372 = vunpack.c.l.b16 %v4272
        %v4373 = vunpack.c.l.b16 %v4079
        %v4374 = vunpack.c.l.b16 %v4273
        %v4375 = vunpack.c.l.b16 %v4086
        %v4376 = vunpack.c.l.b16 %v4274
        %v4377 = vunpack.c.l.b16 %v4093
        %v4378 = vunpack.c.l.b16 %v4275
        %v4379 = vunpack.c.l.b16 %v4100
        %v4380 = vunpack.c.l.b16 %v4276
        %v4381 = vunpack.c.l.b16 %v4107
        %v4382 = vunpack.c.l.b16 %v4277
        %v4383 = vunpack.c.l.b16 %v4114
        %v4384 = vunpack.c.l.b16 %v4278
        %v4385 = vunpack.c.l.b16 %v4121
        %v4386 = vunpack.c.l.b16 %v4279
        %v4387 = vunpack.c.l.b16 %v4128
        %v4388 = vunpack.c.l.b16 %v4280
        %v4389 = vunpack.c.l.b16 %v4135
        %v4390 = vunpack.c.l.b16 %v4281
        %v4391 = vunpack.c.l.b16 %v4142
        %v4392 = vunpack.c.l.b16 %v4282
        %v4393 = vunpack.c.l.b16 %v4149
        %v4394 = vunpack.c.l.b16 %v4283
        %v4395 = vunpack.c.l.b16 %v4156
        %v4396 = vunpack.c.l.b16 %v4284
        %v4397 = vpack.c.b16 %v3839, %v3837
        %v4398 = vpack.c.b16 %v4335, %v4333
        %v4399 = vpack.c.b16 %v4336, %v4334
        %v4400 = vpack.c.b16 %v3843, %v3841
        %v4401 = vpack.c.b16 %v4339, %v4337
        %v4402 = vpack.c.b16 %v4340, %v4338
        %v4403 = vpack.c.b16 %v3847, %v3845
        %v4404 = vpack.c.b16 %v4343, %v4341
        %v4405 = vpack.c.b16 %v4344, %v4342
        %v4406 = vpack.c.b16 %v3851, %v3849
        %v4407 = vpack.c.b16 %v4347, %v4345
        %v4408 = vpack.c.b16 %v4348, %v4346
        %v4409 = vpack.c.b16 %v3855, %v3853
        %v4410 = vpack.c.b16 %v4351, %v4349
        %v4411 = vpack.c.b16 %v4352, %v4350
        %v4412 = vpack.c.b16 %v3859, %v3857
        %v4413 = vpack.c.b16 %v4355, %v4353
        %v4414 = vpack.c.b16 %v4356, %v4354
        %v4415 = vpack.c.b16 %v3863, %v3861
        %v4416 = vpack.c.b16 %v4359, %v4357
        %v4417 = vpack.c.b16 %v4360, %v4358
        %v4418 = vpack.c.b16 %v3867, %v3865
        %v4419 = vpack.c.b16 %v4363, %v4361
        %v4420 = vpack.c.b16 %v4364, %v4362
        %v4421 = vpack.c.b16 %v3871, %v3869
        %v4422 = vpack.c.b16 %v4367, %v4365
        %v4423 = vpack.c.b16 %v4368, %v4366
        %v4424 = vpack.c.b16 %v3875, %v3873
        %v4425 = vpack.c.b16 %v4371, %v4369
        %v4426 = vpack.c.b16 %v4372, %v4370
        %v4427 = vpack.c.b16 %v3879, %v3877
        %v4428 = vpack.c.b16 %v4375, %v4373
        %v4429 = vpack.c.b16 %v4376, %v4374
        %v4430 = vpack.c.b16 %v3883, %v3881
        %v4431 = vpack.c.b16 %v4379, %v4377
        %v4432 = vpack.c.b16 %v4380, %v4378
        %v4433 = vpack.c.b16 %v3887, %v3885
        %v4434 = vpack.c.b16 %v4383, %v4381
        %v4435 = vpack.c.b16 %v4384, %v4382
        %v4436 = vpack.c.b16 %v3891, %v3889
        %v4437 = vpack.c.b16 %v4387, %v4385
        %v4438 = vpack.c.b16 %v4388, %v4386
        %v4439 = vpack.c.b16 %v3895, %v3893
        %v4440 = vpack.c.b16 %v4391, %v4389
        %v4441 = vpack.c.b16 %v4392, %v4390
        %v4442 = vpack.c.b16 %v3899, %v3897
        %v4443 = vpack.c.b16 %v4395, %v4393
        %v4444 = vpack.c.b16 %v4396, %v4394
        %v4541 = vunpack.c.l.b16 %v4285
        %v4542 = vunpack.c.l.b16 %v4286
        %v4543 = vunpack.c.l.b16 %v4287
        %v4544 = vunpack.c.l.b16 %v4288
        %v4545 = vunpack.c.l.b16 %v4289
        %v4546 = vunpack.c.l.b16 %v4290
        %v4547 = vunpack.c.l.b16 %v4291
        %v4548 = vunpack.c.l.b16 %v4292
        %v4549 = vunpack.c.l.b16 %v4293
        %v4550 = vunpack.c.l.b16 %v4294
        %v4551 = vunpack.c.l.b16 %v4295
        %v4552 = vunpack.c.l.b16 %v4296
        %v4553 = vunpack.c.l.b16 %v4297
        %v4554 = vunpack.c.l.b16 %v4298
        %v4555 = vunpack.c.l.b16 %v4299
        %v4556 = vunpack.c.l.b16 %v4300
        %v4557 = vunpack.c.l.b16 %v4301
        %v4558 = vunpack.c.l.b16 %v4302
        %v4559 = vunpack.c.l.b16 %v4303
        %v4560 = vunpack.c.l.b16 %v4304
        %v4561 = vunpack.c.l.b16 %v4305
        %v4562 = vunpack.c.l.b16 %v4306
        %v4563 = vunpack.c.l.b16 %v4307
        %v4564 = vunpack.c.l.b16 %v4308
        %v4565 = vunpack.c.l.b16 %v4309
        %v4566 = vunpack.c.l.b16 %v4310
        %v4567 = vunpack.c.l.b16 %v4311
        %v4568 = vunpack.c.l.b16 %v4312
        %v4569 = vunpack.c.l.b16 %v4313
        %v4570 = vunpack.c.l.b16 %v4314
        %v4571 = vunpack.c.l.b16 %v4315
        %v4572 = vunpack.c.l.b16 %v4316
        %v4573 = vunpack.c.l.b16 %v4317
        %v4574 = vunpack.c.l.b16 %v4318
        %v4575 = vunpack.c.l.b16 %v4319
        %v4576 = vunpack.c.l.b16 %v4320
        %v4577 = vunpack.c.l.b16 %v4321
        %v4578 = vunpack.c.l.b16 %v4322
        %v4579 = vunpack.c.l.b16 %v4323
        %v4580 = vunpack.c.l.b16 %v4324
        %v4581 = vunpack.c.l.b16 %v4325
        %v4582 = vunpack.c.l.b16 %v4326
        %v4583 = vunpack.c.l.b16 %v4327
        %v4584 = vunpack.c.l.b16 %v4328
        %v4585 = vunpack.c.l.b16 %v4329
        %v4586 = vunpack.c.l.b16 %v4330
        %v4587 = vunpack.c.l.b16 %v4331
        %v4588 = vunpack.c.l.b16 %v4332
        %v4589 = vpack.c.b16 %v4542, %v4541
        %v4590 = vpack.c.b16 %v4544, %v4543
        %v4591 = vpack.c.b16 %v4546, %v4545
        %v4592 = vpack.c.b16 %v4548, %v4547
        %v4593 = vpack.c.b16 %v4550, %v4549
        %v4594 = vpack.c.b16 %v4552, %v4551
        %v4595 = vpack.c.b16 %v4554, %v4553
        %v4596 = vpack.c.b16 %v4556, %v4555
        %v4597 = vpack.c.b16 %v4558, %v4557
        %v4598 = vpack.c.b16 %v4560, %v4559
        %v4599 = vpack.c.b16 %v4562, %v4561
        %v4600 = vpack.c.b16 %v4564, %v4563
        %v4601 = vpack.c.b16 %v4566, %v4565
        %v4602 = vpack.c.b16 %v4568, %v4567
        %v4603 = vpack.c.b16 %v4570, %v4569
        %v4604 = vpack.c.b16 %v4572, %v4571
        %v4605 = vpack.c.b16 %v4574, %v4573
        %v4606 = vpack.c.b16 %v4576, %v4575
        %v4607 = vpack.c.b16 %v4578, %v4577
        %v4608 = vpack.c.b16 %v4580, %v4579
        %v4609 = vpack.c.b16 %v4582, %v4581
        %v4610 = vpack.c.b16 %v4584, %v4583
        %v4611 = vpack.c.b16 %v4586, %v4585
        %v4612 = vpack.c.b16 %v4588, %v4587
        %4637 = vmatprep.subr.bf16.mxu0 0
        %4638 = vmatpush1.bf16.msra.mxu0 %v4589
        %4639 = vmatprep.subr.bf16.mxu0 0
        %4640 = vmatpush1.bf16.msra.mxu0 %v4590
        %4641 = vmatprep.subr.bf16.mxu0 0
        %4642 = vmatpush1.bf16.msra.mxu0 %v4591
        %4643 = vmatprep.subr.bf16.mxu0 0
        %4644 = vmatpush1.bf16.msra.mxu0 %v4592
        %4645 = vmatprep.subr.bf16.mxu0 0
        %4646 = vmatpush1.bf16.msra.mxu0 %v4593
        %4647 = vmatprep.subr.bf16.mxu0 0
        %4648 = vmatpush1.bf16.msra.mxu0 %v4594
        %4649 = vmatprep.subr.bf16.mxu0 0
        %4650 = vmatpush1.bf16.msra.mxu0 %v4595
        %4651 = vmatprep.subr.bf16.mxu0 0
        %4652 = vmatpush1.bf16.msra.mxu0 %v4596
        %4653 = vmatprep.subr.bf16.mxu0 0
        %4654 = vmatpush1.bf16.msra.mxu0 %v4597
        %4655 = vmatprep.subr.bf16.mxu0 0
        %4656 = vmatpush1.bf16.msra.mxu0 %v4598
        %4657 = vmatprep.subr.bf16.mxu0 0
        %4658 = vmatpush1.bf16.msra.mxu0 %v4599
        %4659 = vmatprep.subr.bf16.mxu0 0
        %4660 = vmatpush1.bf16.msra.mxu0 %v4600
        %4661 = vmatprep.subr.bf16.mxu0 0
        %4662 = vmatpush1.bf16.msra.mxu0 %v4601
        %4663 = vmatprep.subr.bf16.mxu0 0
        %4664 = vmatpush1.bf16.msra.mxu0 %v4602
        %4665 = vmatprep.subr.bf16.mxu0 0
        %4666 = vmatpush1.bf16.msra.mxu0 %v4603
        %4667 = vmatprep.subr.bf16.mxu0 0
        %4668 = vmatpush1.bf16.msra.mxu0 %v4604
        %4669 = vmatprep.mubr.bf16.mxu0 %v4398
        %4670 = vmatmul.mubr.bf16.gmra.mrb[0].mxu0 %v4397
        %v4671 = vpop.f32.mrb[0].mxu0
        %v4672 = vadd.f32 0.0, %v4671
        %v4673 = vpop.f32.mrb[0].mxu0
        %v4674 = vpop.f32.mrb[0].mxu0
        %v4675 = vadd.f32 0.0, %v4674
        %v4676 = vpop.f32.mrb[0].mxu0
        %4677 = vmatprep.mubr.bf16.mxu0 %v4401
        %4678 = vmatmul.mubr.bf16.gmra.mrb[0].mxu0 %v4400
        %v4679 = vpop.f32.mrb[0].mxu0
        %v4680 = vadd.f32 0.0, %v4679
        %v4681 = vpop.f32.mrb[0].mxu0
        %v4682 = vpop.f32.mrb[0].mxu0
        %v4683 = vadd.f32 0.0, %v4682
        %v4684 = vpop.f32.mrb[0].mxu0
        %4685 = vmatprep.mubr.bf16.mxu0 %v4404
        %4686 = vmatmul.mubr.bf16.gmra.mrb[0].mxu0 %v4403
        %v4687 = vpop.f32.mrb[0].mxu0
        %v4688 = vadd.f32 0.0, %v4687
        %v4689 = vpop.f32.mrb[0].mxu0
        %v4690 = vpop.f32.mrb[0].mxu0
        %v4691 = vadd.f32 0.0, %v4690
        %v4692 = vpop.f32.mrb[0].mxu0
        %4693 = vmatprep.mubr.bf16.mxu0 %v4407
        %4694 = vmatmul.mubr.bf16.gmra.mrb[0].mxu0 %v4406
        %v4695 = vpop.f32.mrb[0].mxu0
        %v4696 = vadd.f32 0.0, %v4695
        %v4697 = vpop.f32.mrb[0].mxu0
        %v4698 = vpop.f32.mrb[0].mxu0
        %v4699 = vadd.f32 0.0, %v4698
        %v4700 = vpop.f32.mrb[0].mxu0
        %4701 = vmatprep.mubr.bf16.mxu0 %v4410
        %4702 = vmatmul.mubr.bf16.gmra.mrb[0].mxu0 %v4409
        %v4703 = vpop.f32.mrb[0].mxu0
        %v4704 = vadd.f32 0.0, %v4703
        %v4705 = vpop.f32.mrb[0].mxu0
        %v4706 = vpop.f32.mrb[0].mxu0
        %v4707 = vadd.f32 0.0, %v4706
        %v4708 = vpop.f32.mrb[0].mxu0
        %4709 = vmatprep.mubr.bf16.mxu0 %v4413
        %4710 = vmatmul.mubr.bf16.gmra.mrb[0].mxu0 %v4412
        %v4711 = vpop.f32.mrb[0].mxu0
        %v4712 = vadd.f32 0.0, %v4711
        %v4713 = vpop.f32.mrb[0].mxu0
        %v4714 = vpop.f32.mrb[0].mxu0
        %v4715 = vadd.f32 0.0, %v4714
        %v4716 = vpop.f32.mrb[0].mxu0
        %4717 = vmatprep.mubr.bf16.mxu0 %v4416
        %4718 = vmatmul.mubr.bf16.gmra.mrb[0].mxu0 %v4415
        %v4719 = vpop.f32.mrb[0].mxu0
        %v4720 = vadd.f32 0.0, %v4719
        %v4721 = vpop.f32.mrb[0].mxu0
        %v4722 = vpop.f32.mrb[0].mxu0
        %v4723 = vadd.f32 0.0, %v4722
        %v4724 = vpop.f32.mrb[0].mxu0
        %4725 = vmatprep.mubr.bf16.mxu0 %v4419
        %4726 = vmatmul.mubr.bf16.gmra.mrb[0].mxu0 %v4418
        %v4727 = vpop.f32.mrb[0].mxu0
        %v4728 = vadd.f32 0.0, %v4727
        %v4729 = vpop.f32.mrb[0].mxu0
        %v4730 = vpop.f32.mrb[0].mxu0
        %v4731 = vadd.f32 0.0, %v4730
        %v4732 = vpop.f32.mrb[0].mxu0
        %4733 = vmatprep.mubr.bf16.mxu0 %v4422
        %4734 = vmatmul.mubr.bf16.gmra.mrb[0].mxu0 %v4421
        %v4735 = vpop.f32.mrb[0].mxu0
        %v4736 = vadd.f32 0.0, %v4735
        %v4737 = vpop.f32.mrb[0].mxu0
        %v4738 = vpop.f32.mrb[0].mxu0
        %v4739 = vadd.f32 0.0, %v4738
        %v4740 = vpop.f32.mrb[0].mxu0
        %4741 = vmatprep.mubr.bf16.mxu0 %v4425
        %4742 = vmatmul.mubr.bf16.gmra.mrb[0].mxu0 %v4424
        %v4743 = vpop.f32.mrb[0].mxu0
        %v4744 = vadd.f32 0.0, %v4743
        %v4745 = vpop.f32.mrb[0].mxu0
        %v4746 = vpop.f32.mrb[0].mxu0
        %v4747 = vadd.f32 0.0, %v4746
        %v4748 = vpop.f32.mrb[0].mxu0
        %4749 = vmatprep.mubr.bf16.mxu0 %v4428
        %4750 = vmatmul.mubr.bf16.gmra.mrb[0].mxu0 %v4427
        %v4751 = vpop.f32.mrb[0].mxu0
        %v4752 = vadd.f32 0.0, %v4751
        %v4753 = vpop.f32.mrb[0].mxu0
        %v4754 = vpop.f32.mrb[0].mxu0
        %v4755 = vadd.f32 0.0, %v4754
        %v4756 = vpop.f32.mrb[0].mxu0
        %4757 = vmatprep.mubr.bf16.mxu0 %v4431
        %4758 = vmatmul.mubr.bf16.gmra.mrb[0].mxu0 %v4430
        %v4759 = vpop.f32.mrb[0].mxu0
        %v4760 = vadd.f32 0.0, %v4759
        %v4761 = vpop.f32.mrb[0].mxu0
        %v4762 = vpop.f32.mrb[0].mxu0
        %v4763 = vadd.f32 0.0, %v4762
        %v4764 = vpop.f32.mrb[0].mxu0
        %4765 = vmatprep.mubr.bf16.mxu0 %v4434
        %4766 = vmatmul.mubr.bf16.gmra.mrb[0].mxu0 %v4433
        %v4767 = vpop.f32.mrb[0].mxu0
        %v4768 = vadd.f32 0.0, %v4767
        %v4769 = vpop.f32.mrb[0].mxu0
        %v4770 = vpop.f32.mrb[0].mxu0
        %v4771 = vadd.f32 0.0, %v4770
        %v4772 = vpop.f32.mrb[0].mxu0
        %4773 = vmatprep.mubr.bf16.mxu0 %v4437
        %4774 = vmatmul.mubr.bf16.gmra.mrb[0].mxu0 %v4436
        %v4775 = vpop.f32.mrb[0].mxu0
        %v4776 = vadd.f32 0.0, %v4775
        %v4777 = vpop.f32.mrb[0].mxu0
        %v4778 = vpop.f32.mrb[0].mxu0
        %v4779 = vadd.f32 0.0, %v4778
        %v4780 = vpop.f32.mrb[0].mxu0
        %4781 = vmatprep.mubr.bf16.mxu0 %v4440
        %4782 = vmatmul.mubr.bf16.gmra.mrb[0].mxu0 %v4439
        %v4783 = vpop.f32.mrb[0].mxu0
        %v4784 = vadd.f32 0.0, %v4783
        %v4785 = vpop.f32.mrb[0].mxu0
        %v4786 = vpop.f32.mrb[0].mxu0
        %v4787 = vadd.f32 0.0, %v4786
        %v4788 = vpop.f32.mrb[0].mxu0
        %4789 = vmatprep.mubr.bf16.mxu0 %v4443
        %4790 = vmatmul.mubr.bf16.gmra.mrb[0].mxu0 %v4442
        %v4791 = vpop.f32.mrb[0].mxu0
        %v4792 = vadd.f32 0.0, %v4791
        %v4793 = vpop.f32.mrb[0].mxu0
        %v4794 = vpop.f32.mrb[0].mxu0
        %v4795 = vadd.f32 0.0, %v4794
        %v4796 = vpop.f32.mrb[0].mxu0
        %4797 = vdwg.mxu0
        %4798 = vmatprep.subr.bf16.mxu0 0
        %4799 = vmatpush1.bf16.msra.mxu0 %v4605
        %4800 = vmatprep.subr.bf16.mxu0 0
        %4801 = vmatpush1.bf16.msra.mxu0 %v4606
        %4802 = vmatprep.subr.bf16.mxu0 0
        %4803 = vmatpush1.bf16.msra.mxu0 %v4607
        %4804 = vmatprep.subr.bf16.mxu0 0
        %4805 = vmatpush1.bf16.msra.mxu0 %v4608
        %4806 = vmatprep.subr.bf16.mxu0 0
        %4807 = vmatpush1.bf16.msra.mxu0 %v4609
        %4808 = vmatprep.subr.bf16.mxu0 0
        %4809 = vmatpush1.bf16.msra.mxu0 %v4610
        %4810 = vmatprep.subr.bf16.mxu0 0
        %4811 = vmatpush1.bf16.msra.mxu0 %v4611
        %4812 = vmatprep.subr.bf16.mxu0 0
        %4813 = vmatpush1.bf16.msra.mxu0 %v4612
        %4814 = vmatprep.subr.bf16.mxu0 0
        %4815 = vmatpush1.bf16.msra.mxu0 0
        %4816 = vmatprep.subr.bf16.mxu0 0
        %4817 = vmatpush1.bf16.msra.mxu0 0
        %4818 = vmatprep.subr.bf16.mxu0 0
        %4819 = vmatpush1.bf16.msra.mxu0 0
        %4820 = vmatprep.subr.bf16.mxu0 0
        %4821 = vmatpush1.bf16.msra.mxu0 0
        %4822 = vmatprep.subr.bf16.mxu0 0
        %4823 = vmatpush1.bf16.msra.mxu0 0
        %4824 = vmatprep.subr.bf16.mxu0 0
        %4825 = vmatpush1.bf16.msra.mxu0 0
        %4826 = vmatprep.subr.bf16.mxu0 0
        %4827 = vmatpush1.bf16.msra.mxu0 0
        %4828 = vmatprep.subr.bf16.mxu0 0
        %4829 = vmatpush1.bf16.msra.mxu0 0
        %4830 = vmatprep.mubr.bf16.mxu0 0
        %4831 = vmatmul.mubr.bf16.gmra.mrb[0].mxu0 %v4399
        %v4832 = vpop.f32.mrb[0].mxu0
        %v4833 = vadd.f32 %v4672, %v4832
        %v4834 = vpop.f32.mrb[0].mxu0
        %v4835 = vpop.f32.mrb[0].mxu0
        %v4836 = vadd.f32 %v4675, %v4835
        %v4837 = vpop.f32.mrb[0].mxu0
        %4838 = vmatprep.mubr.bf16.mxu0 0
        %4839 = vmatmul.mubr.bf16.gmra.mrb[0].mxu0 %v4402
        %v4840 = vpop.f32.mrb[0].mxu0
        %v4841 = vadd.f32 %v4680, %v4840
        %v4842 = vpop.f32.mrb[0].mxu0
        %v4843 = vpop.f32.mrb[0].mxu0
        %v4844 = vadd.f32 %v4683, %v4843
        %v4845 = vpop.f32.mrb[0].mxu0
        %4846 = vmatprep.mubr.bf16.mxu0 0
        %4847 = vmatmul.mubr.bf16.gmra.mrb[0].mxu0 %v4405
        %v4848 = vpop.f32.mrb[0].mxu0
        %v4849 = vadd.f32 %v4688, %v4848
        %v4850 = vpop.f32.mrb[0].mxu0
        %v4851 = vpop.f32.mrb[0].mxu0
        %v4852 = vadd.f32 %v4691, %v4851
        %v4853 = vpop.f32.mrb[0].mxu0
        %4854 = vmatprep.mubr.bf16.mxu0 0
        %4855 = vmatmul.mubr.bf16.gmra.mrb[0].mxu0 %v4408
        %v4856 = vpop.f32.mrb[0].mxu0
        %v4857 = vadd.f32 %v4696, %v4856
        %v4858 = vpop.f32.mrb[0].mxu0
        %v4859 = vpop.f32.mrb[0].mxu0
        %v4860 = vadd.f32 %v4699, %v4859
        %v4861 = vpop.f32.mrb[0].mxu0
        %4862 = vmatprep.mubr.bf16.mxu0 0
        %4863 = vmatmul.mubr.bf16.gmra.mrb[0].mxu0 %v4411
        %v4864 = vpop.f32.mrb[0].mxu0
        %v4865 = vadd.f32 %v4704, %v4864
        %v4866 = vpop.f32.mrb[0].mxu0
        %v4867 = vpop.f32.mrb[0].mxu0
        %v4868 = vadd.f32 %v4707, %v4867
        %v4869 = vpop.f32.mrb[0].mxu0
        %4870 = vmatprep.mubr.bf16.mxu0 0
        %4871 = vmatmul.mubr.bf16.gmra.mrb[0].mxu0 %v4414
        %v4872 = vpop.f32.mrb[0].mxu0
        %v4873 = vadd.f32 %v4712, %v4872
        %v4874 = vpop.f32.mrb[0].mxu0
        %v4875 = vpop.f32.mrb[0].mxu0
        %v4876 = vadd.f32 %v4715, %v4875
        %v4877 = vpop.f32.mrb[0].mxu0
        %4878 = vmatprep.mubr.bf16.mxu0 0
        %4879 = vmatmul.mubr.bf16.gmra.mrb[0].mxu0 %v4417
        %v4880 = vpop.f32.mrb[0].mxu0
        %v4881 = vadd.f32 %v4720, %v4880
        %v4882 = vpop.f32.mrb[0].mxu0
        %v4883 = vpop.f32.mrb[0].mxu0
        %v4884 = vadd.f32 %v4723, %v4883
        %v4885 = vpop.f32.mrb[0].mxu0
        %4886 = vmatprep.mubr.bf16.mxu0 0
        %4887 = vmatmul.mubr.bf16.gmra.mrb[0].mxu0 %v4420
        %v4888 = vpop.f32.mrb[0].mxu0
        %v4889 = vadd.f32 %v4728, %v4888
        %v4890 = vpop.f32.mrb[0].mxu0
        %v4891 = vpop.f32.mrb[0].mxu0
        %v4892 = vadd.f32 %v4731, %v4891
        %v4893 = vpop.f32.mrb[0].mxu0
        %4894 = vmatprep.mubr.bf16.mxu0 0
        %4895 = vmatmul.mubr.bf16.gmra.mrb[0].mxu0 %v4423
        %v4896 = vpop.f32.mrb[0].mxu0
        %v4897 = vadd.f32 %v4736, %v4896
        %v4898 = vpop.f32.mrb[0].mxu0
        %v4899 = vpop.f32.mrb[0].mxu0
        %v4900 = vadd.f32 %v4739, %v4899
        %v4901 = vpop.f32.mrb[0].mxu0
        %4902 = vmatprep.mubr.bf16.mxu0 0
        %4903 = vmatmul.mubr.bf16.gmra.mrb[0].mxu0 %v4426
        %v4904 = vpop.f32.mrb[0].mxu0
        %v4905 = vadd.f32 %v4744, %v4904
        %v4906 = vpop.f32.mrb[0].mxu0
        %v4907 = vpop.f32.mrb[0].mxu0
        %v4908 = vadd.f32 %v4747, %v4907
        %v4909 = vpop.f32.mrb[0].mxu0
        %4910 = vmatprep.mubr.bf16.mxu0 0
        %4911 = vmatmul.mubr.bf16.gmra.mrb[0].mxu0 %v4429
        %v4912 = vpop.f32.mrb[0].mxu0
        %v4913 = vadd.f32 %v4752, %v4912
        %v4914 = vpop.f32.mrb[0].mxu0
        %v4915 = vpop.f32.mrb[0].mxu0
        %v4916 = vadd.f32 %v4755, %v4915
        %v4917 = vpop.f32.mrb[0].mxu0
        %4918 = vmatprep.mubr.bf16.mxu0 0
        %4919 = vmatmul.mubr.bf16.gmra.mrb[0].mxu0 %v4432
        %v4920 = vpop.f32.mrb[0].mxu0
        %v4921 = vadd.f32 %v4760, %v4920
        %v4922 = vpop.f32.mrb[0].mxu0
        %v4923 = vpop.f32.mrb[0].mxu0
        %v4924 = vadd.f32 %v4763, %v4923
        %v4925 = vpop.f32.mrb[0].mxu0
        %4926 = vmatprep.mubr.bf16.mxu0 0
        %4927 = vmatmul.mubr.bf16.gmra.mrb[0].mxu0 %v4435
        %v4928 = vpop.f32.mrb[0].mxu0
        %v4929 = vadd.f32 %v4768, %v4928
        %v4930 = vpop.f32.mrb[0].mxu0
        %v4931 = vpop.f32.mrb[0].mxu0
        %v4932 = vadd.f32 %v4771, %v4931
        %v4933 = vpop.f32.mrb[0].mxu0
        %4934 = vmatprep.mubr.bf16.mxu0 0
        %4935 = vmatmul.mubr.bf16.gmra.mrb[0].mxu0 %v4438
        %v4936 = vpop.f32.mrb[0].mxu0
        %v4937 = vadd.f32 %v4776, %v4936
        %v4938 = vpop.f32.mrb[0].mxu0
        %v4939 = vpop.f32.mrb[0].mxu0
        %v4940 = vadd.f32 %v4779, %v4939
        %v4941 = vpop.f32.mrb[0].mxu0
        %4942 = vmatprep.mubr.bf16.mxu0 0
        %4943 = vmatmul.mubr.bf16.gmra.mrb[0].mxu0 %v4441
        %v4944 = vpop.f32.mrb[0].mxu0
        %v4945 = vadd.f32 %v4784, %v4944
        %v4946 = vpop.f32.mrb[0].mxu0
        %v4947 = vpop.f32.mrb[0].mxu0
        %v4948 = vadd.f32 %v4787, %v4947
        %v4949 = vpop.f32.mrb[0].mxu0
        %4950 = vmatprep.mubr.bf16.mxu0 0
        %4951 = vmatmul.mubr.bf16.gmra.mrb[0].mxu0 %v4444
        %v4952 = vpop.f32.mrb[0].mxu0
        %v4953 = vadd.f32 %v4792, %v4952
        %v4954 = vpop.f32.mrb[0].mxu0
        %v4955 = vpop.f32.mrb[0].mxu0
        %v4956 = vadd.f32 %v4795, %v4955
        %v4957 = vpop.f32.mrb[0].mxu0
        %4958 = vdwg.mxu0
        %v4959 = vadd.f32 %v3550, %v4833
        %v4960 = vadd.f32 %v3553, %v4836
        %v4961 = vadd.f32 %v3558, %v4841
        %v4962 = vadd.f32 %v3561, %v4844
        %v4963 = vadd.f32 %v3566, %v4849
        %v4964 = vadd.f32 %v3569, %v4852
        %v4965 = vadd.f32 %v3574, %v4857
        %v4966 = vadd.f32 %v3577, %v4860
        %v4967 = vadd.f32 %v3582, %v4865
        %v4968 = vadd.f32 %v3585, %v4868
        %v4969 = vadd.f32 %v3590, %v4873
        %v4970 = vadd.f32 %v3593, %v4876
        %v4971 = vadd.f32 %v3598, %v4881
        %v4972 = vadd.f32 %v3601, %v4884
        %v4973 = vadd.f32 %v3606, %v4889
        %v4974 = vadd.f32 %v3609, %v4892
        %v4975 = vadd.f32 %v3614, %v4897
        %v4976 = vadd.f32 %v3617, %v4900
        %v4977 = vadd.f32 %v3622, %v4905
        %v4978 = vadd.f32 %v3625, %v4908
        %v4979 = vadd.f32 %v3630, %v4913
        %v4980 = vadd.f32 %v3633, %v4916
        %v4981 = vadd.f32 %v3638, %v4921
        %v4982 = vadd.f32 %v3641, %v4924
        %v4983 = vadd.f32 %v3646, %v4929
        %v4984 = vadd.f32 %v3649, %v4932
        %v4985 = vadd.f32 %v3654, %v4937
        %v4986 = vadd.f32 %v3657, %v4940
        %v4987 = vadd.f32 %v3662, %v4945
        %v4988 = vadd.f32 %v3665, %v4948
        %v4989 = vadd.f32 %v3670, %v4953
        %v4990 = vadd.f32 %v3673, %v4956
        %v4991 = vpack.c.bf16 %v4959, %v4959
        %v4992 = vpack.c.bf16 %v4960, %v4960
        %v4993 = vpack.c.bf16 %v4961, %v4961
        %v4994 = vpack.c.bf16 %v4962, %v4962
        %v4995 = vpack.c.bf16 %v4963, %v4963
        %v4996 = vpack.c.bf16 %v4964, %v4964
        %v4997 = vpack.c.bf16 %v4965, %v4965
        %v4998 = vpack.c.bf16 %v4966, %v4966
        %v4999 = vpack.c.bf16 %v4967, %v4967
        %v5000 = vpack.c.bf16 %v4968, %v4968
        %v5001 = vpack.c.bf16 %v4969, %v4969
        %v5002 = vpack.c.bf16 %v4970, %v4970
        %v5003 = vpack.c.bf16 %v4971, %v4971
        %v5004 = vpack.c.bf16 %v4972, %v4972
        %v5005 = vpack.c.bf16 %v4973, %v4973
        %v5006 = vpack.c.bf16 %v4974, %v4974
        %v5007 = vpack.c.bf16 %v4975, %v4975
        %v5008 = vpack.c.bf16 %v4976, %v4976
        %v5009 = vpack.c.bf16 %v4977, %v4977
        %v5010 = vpack.c.bf16 %v4978, %v4978
        %v5011 = vpack.c.bf16 %v4979, %v4979
        %v5012 = vpack.c.bf16 %v4980, %v4980
        %v5013 = vpack.c.bf16 %v4981, %v4981
        %v5014 = vpack.c.bf16 %v4982, %v4982
        %v5015 = vpack.c.bf16 %v4983, %v4983
        %v5016 = vpack.c.bf16 %v4984, %v4984
        %v5017 = vpack.c.bf16 %v4985, %v4985
        %v5018 = vpack.c.bf16 %v4986, %v4986
        %v5019 = vpack.c.bf16 %v4987, %v4987
        %v5020 = vpack.c.bf16 %v4988, %v4988
        %v5021 = vpack.c.bf16 %v4989, %v4989
        %v5022 = vpack.c.bf16 %v4990, %v4990
        %5023 = vst [vmem:[%s216] sm:$0xf] %v4991
        %5024 = vst [vmem:[%s216 + $0x4] sm:$0xf] %v4992
        %5025 = vst [vmem:[%s216 + $0x8] sm:$0xf] %v4993
        %5026 = vst [vmem:[%s216 + $0xc] sm:$0xf] %v4994
        %5027 = vst [vmem:[%s216 + $0x10] sm:$0xf] %v4995
        %5028 = vst [vmem:[%s216 + $0x14] sm:$0xf] %v4996
        %5029 = vst [vmem:[%s216 + $0x18] sm:$0xf] %v4997
        %5030 = vst [vmem:[%s216 + $0x1c] sm:$0xf] %v4998
        %5031 = vst [vmem:[%s216 + $0x20] sm:$0xf] %v4999
        %5032 = vst [vmem:[%s216 + $0x24] sm:$0xf] %v5000
        %5033 = vst [vmem:[%s216 + $0x28] sm:$0xf] %v5001
        %5034 = vst [vmem:[%s216 + $0x2c] sm:$0xf] %v5002
        %5035 = vst [vmem:[%s216 + $0x30] sm:$0xf] %v5003
        %5036 = vst [vmem:[%s216 + $0x34] sm:$0xf] %v5004
        %5037 = vst [vmem:[%s216 + $0x38] sm:$0xf] %v5005
        %5038 = vst [vmem:[%s216 + $0x3c] sm:$0xf] %v5006
        %5039 = vst [vmem:[%s216 + $0x40] sm:$0xf] %v5007
        %5040 = vst [vmem:[%s216 + $0x44] sm:$0xf] %v5008
        %5041 = vst [vmem:[%s216 + $0x48] sm:$0xf] %v5009
        %5042 = vst [vmem:[%s216 + $0x4c] sm:$0xf] %v5010
        %5043 = vst [vmem:[%s216 + $0x50] sm:$0xf] %v5011
        %5044 = vst [vmem:[%s216 + $0x54] sm:$0xf] %v5012
        %5045 = vst [vmem:[%s216 + $0x58] sm:$0xf] %v5013
        %5046 = vst [vmem:[%s216 + $0x5c] sm:$0xf] %v5014
        %5047 = vst [vmem:[%s216 + $0x60] sm:$0xf] %v5015
        %5048 = vst [vmem:[%s216 + $0x64] sm:$0xf] %v5016
        %5049 = vst [vmem:[%s216 + $0x68] sm:$0xf] %v5017
        %5050 = vst [vmem:[%s216 + $0x6c] sm:$0xf] %v5018
        %5051 = vst [vmem:[%s216 + $0x70] sm:$0xf] %v5019
        %5052 = vst [vmem:[%s216 + $0x74] sm:$0xf] %v5020
        %5053 = vst [vmem:[%s216 + $0x78] sm:$0xf] %v5021
        %5054 = vst [vmem:[%s216 + $0x7c] sm:$0xf] %v5022
        %v5055 = vadd.f32 %v4959, %v4960
        %v5056 = vadd.f32 %v5055, %v4961
        %v5057 = vadd.f32 %v5056, %v4962
        %v5058 = vadd.f32 %v5057, %v4963
        %v5059 = vadd.f32 %v5058, %v4964
        %v5060 = vadd.f32 %v5059, %v4965
        %v5061 = vadd.f32 %v5060, %v4966
        %v5062 = vadd.f32 %v5061, %v4967
        %v5063 = vadd.f32 %v5062, %v4968
        %v5064 = vadd.f32 %v5063, %v4969
        %v5065 = vadd.f32 %v5064, %v4970
        %v5066 = vadd.f32 %v5065, %v4971
        %v5067 = vadd.f32 %v5066, %v4972
        %v5068 = vadd.f32 %v5067, %v4973
        %v5069 = vadd.f32 %v5068, %v4974
        %v5070 = vadd.f32 %v5069, %v4975
        %v5071 = vadd.f32 %v5070, %v4976
        %v5072 = vadd.f32 %v5071, %v4977
        %v5073 = vadd.f32 %v5072, %v4978
        %v5074 = vadd.f32 %v5073, %v4979
        %v5075 = vadd.f32 %v5074, %v4980
        %v5076 = vadd.f32 %v5075, %v4981
        %v5077 = vadd.f32 %v5076, %v4982
        %v5078 = vadd.f32 %v5077, %v4983
        %v5079 = vadd.f32 %v5078, %v4984
        %v5080 = vadd.f32 %v5079, %v4985
        %v5081 = vadd.f32 %v5080, %v4986
        %v5082 = vadd.f32 %v5081, %v4987
        %v5083 = vadd.f32 %v5082, %v4988
        %v5084 = vadd.f32 %v5083, %v4989
        %v5085 = vadd.f32 %v5084, %v4990
        %v5086 = vrot.slane %v5085, 4
        %v5087 = vadd.f32 %v5085, %v5086
        %v5088 = vrot.slane %v5087, 2
        %v5089 = vadd.f32 %v5087, %v5088
        %v5090 = vrot.slane %v5089, 1
        %v5091 = vadd.f32 %v5089, %v5090
        %v5092 = vmul.f32 %v4959, %v4959
        %v5093 = vmul.f32 %v4960, %v4960
        %v5094 = vmul.f32 %v4961, %v4961
        %v5095 = vmul.f32 %v4962, %v4962
        %v5096 = vmul.f32 %v4963, %v4963
        %v5097 = vmul.f32 %v4964, %v4964
        %v5098 = vmul.f32 %v4965, %v4965
        %v5099 = vmul.f32 %v4966, %v4966
        %v5100 = vmul.f32 %v4967, %v4967
        %v5101 = vmul.f32 %v4968, %v4968
        %v5102 = vmul.f32 %v4969, %v4969
        %v5103 = vmul.f32 %v4970, %v4970
        %v5104 = vmul.f32 %v4971, %v4971
        %v5105 = vmul.f32 %v4972, %v4972
        %v5106 = vmul.f32 %v4973, %v4973
        %v5107 = vmul.f32 %v4974, %v4974
        %v5108 = vmul.f32 %v4975, %v4975
        %v5109 = vmul.f32 %v4976, %v4976
        %v5110 = vmul.f32 %v4977, %v4977
        %v5111 = vmul.f32 %v4978, %v4978
        %v5112 = vmul.f32 %v4979, %v4979
        %v5113 = vmul.f32 %v4980, %v4980
        %v5114 = vmul.f32 %v4981, %v4981
        %v5115 = vmul.f32 %v4982, %v4982
        %v5116 = vmul.f32 %v4983, %v4983
        %v5117 = vmul.f32 %v4984, %v4984
        %v5118 = vmul.f32 %v4985, %v4985
        %v5119 = vmul.f32 %v4986, %v4986
        %v5120 = vmul.f32 %v4987, %v4987
        %v5121 = vmul.f32 %v4988, %v4988
        %v5122 = vmul.f32 %v4989, %v4989
        %v5123 = vmul.f32 %v4990, %v4990
        %v5124 = vadd.f32 %v5092, %v5093
        %v5125 = vadd.f32 %v5124, %v5094
        %v5126 = vadd.f32 %v5125, %v5095
        %v5127 = vadd.f32 %v5126, %v5096
        %v5128 = vadd.f32 %v5127, %v5097
        %v5129 = vadd.f32 %v5128, %v5098
        %v5130 = vadd.f32 %v5129, %v5099
        %v5131 = vadd.f32 %v5130, %v5100
        %v5132 = vadd.f32 %v5131, %v5101
        %v5133 = vadd.f32 %v5132, %v5102
        %v5134 = vadd.f32 %v5133, %v5103
        %v5135 = vadd.f32 %v5134, %v5104
        %v5136 = vadd.f32 %v5135, %v5105
        %v5137 = vadd.f32 %v5136, %v5106
        %v5138 = vadd.f32 %v5137, %v5107
        %v5139 = vadd.f32 %v5138, %v5108
        %v5140 = vadd.f32 %v5139, %v5109
        %v5141 = vadd.f32 %v5140, %v5110
        %v5142 = vadd.f32 %v5141, %v5111
        %v5143 = vadd.f32 %v5142, %v5112
        %v5144 = vadd.f32 %v5143, %v5113
        %v5145 = vadd.f32 %v5144, %v5114
        %v5146 = vadd.f32 %v5145, %v5115
        %v5147 = vadd.f32 %v5146, %v5116
        %v5148 = vadd.f32 %v5147, %v5117
        %v5149 = vadd.f32 %v5148, %v5118
        %v5150 = vadd.f32 %v5149, %v5119
        %v5151 = vadd.f32 %v5150, %v5120
        %v5152 = vadd.f32 %v5151, %v5121
        %v5153 = vadd.f32 %v5152, %v5122
        %v5154 = vadd.f32 %v5153, %v5123
        %v5155 = vrot.slane %v5154, 4
        %v5156 = vadd.f32 %v5154, %v5155
        %v5157 = vrot.slane %v5156, 2
        %v5158 = vadd.f32 %v5156, %v5157
        %v5159 = vrot.slane %v5158, 1
        %v5160 = vadd.f32 %v5158, %v5159
        %vm5161 = vcmask 1040384
        %v5162 = vsel %vm5161, %v5091, %v5160
        %5163 = vst [vmem:[%s221] sm:$0x3] %v5162
        %s5164 = smul.u32 4, %s19
        %p5165 = scmp.lt.s32.totalorder %s5164, 7
        %s5166 = scalar_select %p5165, %s5164, 7
        %s5167 = smul.addr %s5166, 8
        %s5168 = smul.addr %s5167, 4
        %s5169 = scalar_lea.vmem %s2, %s5168
        %p5170 = scmp.lt.s32.totalorder %s19, 1
        %s5171 = scalar_select %p5170, %s19, 1
        %s5172 = smul.addr %s5171, 2
        %s5173 = scalar_lea.vmem %s3, %s5172
        // Predicated region
        $region37: #{_lambda_.3} parent=27 // pred_check
          %p5174 = pneg %p84
        $region38: #{_lambda_.3} parent=27 // pred_check_branch
          %5176 = sbr.rel (%p5174) target = $region40
        $region39: #{_lambda_.3} parent=27 // pred_region
          %s5177 = smul.u32 4, %s19
        $region40: #{_lambda_.3} parent=27 // pred_fallthru
          _
        // Predicated region
        $region41: #{_lambda_.3} parent=27 // pred_check
          %p5178 = pneg %p110
        $region42: #{_lambda_.3} parent=27 // pred_check_branch
          %5180 = sbr.rel (%p5178) target = $region44
        $region43: #{_lambda_.3} parent=27 // pred_region
          _
        $region44: #{_lambda_.3} parent=27 // pred_fallthru
          _
      $region28: #{_lambda_.3} parent=5 // pred_fallthru
        _
      %p5181 = scmp.le.s32.totalorder 2, %s14
      // Predicated region
      $region45: #{_lambda_.3} parent=5 // pred_check
        %p5182 = pneg %p5181
      $region46: #{_lambda_.3} parent=5 // pred_check_branch
        %5184 = sbr.rel (%p5182) target = $region48
      $region47: #{_lambda_.3} parent=5 // pred_region
        %s5185 = ssub.s32 %s14, 2
        // Predicated region
        $region49: #{_lambda_.3} parent=47 // pred_check
          %p5186 = pneg %p90
        $region50: #{_lambda_.3} parent=47 // pred_check_branch
          %5188 = sbr.rel (%p5186) target = $region52
        $region51: #{_lambda_.3} parent=47 // pred_region
          %s5189 = smul.u32 4, %s20
          %p5190 = scmp.lt.s32.totalorder %s5189, 7
          %s5191 = scalar_select %p5190, %s5189, 7
          %s5192 = smul.addr %s5191, 8
          %s5193 = smul.addr %s5192, 4
          %s5194 = scalar_lea.vmem %s2, %s5193
        $region52: #{_lambda_.3} parent=47 // pred_fallthru
          _
        // Predicated region
        $region53: #{_lambda_.3} parent=47 // pred_check
          %p5195 = pneg %p116
        $region54: #{_lambda_.3} parent=47 // pred_check_branch
          %5197 = sbr.rel (%p5195) target = $region56
        $region55: #{_lambda_.3} parent=47 // pred_region
          %p5198 = scmp.lt.s32.totalorder %s20, 1
          %s5199 = scalar_select %p5198, %s20, 1
          %s5200 = smul.addr %s5199, 2
          %s5201 = scalar_lea.vmem %s3, %s5200
        $region56: #{_lambda_.3} parent=47 // pred_fallthru
          _
      $region48: #{_lambda_.3} parent=5 // pred_fallthru
        _
    $region6: #{_lambda_.3} parent=1 // loop_footer
      %s18 = sadd.s32 1, %s14
    $region7: #{_lambda_.3} parent=1 // loop_footer_branch
      %13 = sbr.rel target = $region3
    $region8: #{_lambda_.3} parent=1 // loop_exit
      _
    %5202 = vsyncpa [#allocation4], 1
    %s5203 = scalar_lea.sflag [#allocation4], 1
    %5204 = vsyncpa %s5203, 1
    %5205 = vsyncpa [#allocation6], 1

// kernel: _lambda_.4
$region0: #{_lambda_.4}
  #allocation0 [shape = 'u32[]', space=smem, size = 0x4, offset = 0x4, fixed_abs, tag = 'smem constant byte address 0x4 - core index']
  #allocation1 [shape = 'u32[144,128]{1,0:T(1,128)}', space=vmem, size = 0x12000, scoped, tag = 'internal scratch']
  #allocation2 [shape = 'bf16[4,10,10,128]{3,2,1,0:T(8,128)(2,1)}', space=vmem, size = 0x28000, scoped, tag = 'scratch operand']
  %s0 = inlined_call_operand.vmem [shape: bf16[8,8,8,128], index: 0, kind: input, shape index: {}]
  %s1 = inlined_call_operand.vmem [shape: f32[2,128], index: 1, kind: input, shape index: {}]
  %s2 = inlined_call_operand.vmem [shape: bf16[1152,128], index: 2, kind: input, shape index: {}]
  %s3 = inlined_call_operand.vmem [shape: bf16[8,8,8,128], index: 3, kind: output, shape index: {0}]
  %s4 = inlined_call_operand.vmem [shape: f32[2,2,128], index: 4, kind: output, shape index: {1}]
  %5 = xla_tuple %s3, %s4
  %s6 = sld [smem:[#allocation0]]
  $region53: #{_lambda_.4} parent=0
    _
  %s8 = ssub.s32 1, %s6
  %s9 = scalar_select 0, %s8, %s6
  loop: start=0, step=1, limit=4
  $region2: #{_lambda_.4} parent=0 // loop_pre_header
    _
  $region3: #{_lambda_.4} parent=0 // loop_header
    %s11 = sphi 0, %s15
    %p12 = scmp.ge.s32.totalorder %s11, 4
    %s21 = sphi 0, %s23
    %s24 = sphi 0, %s21
    %s25 = sphi 0, %s24
    %s41 = sphi 0, %s25
    %s45 = sphi 0, %s45
    %s47 = sphi 0, %s45
    %s48 = sphi 0, %s47
    %s62 = sphi 0, %s48
    %s66 = sphi 0, %s66
    %s68 = sphi 0, %s66
    %s69 = sphi 0, %s68
    %s83 = sphi 0, %s69
    %s89 = sphi 0, %s91
    %s92 = sphi 0, %s89
    %s93 = sphi 0, %s92
    %s109 = sphi 0, %s93
    %s115 = sphi 0, %s117
    %s118 = sphi 0, %s115
    %s119 = sphi 0, %s118
    %s135 = sphi 0, %s119
  $region4: #{_lambda_.4} parent=0 // loop_header_branch
    %14 = sbr.rel (%p12) target = $region8
  $region5: #{_lambda_.4} parent=0 // loop_body
    %s16 = ssub.s32 %s11, 1
    %s17 = ssub.s32 %s11, 2
    %s18 = sadd.s32 %s11, 1
    %s19 = ssub.s32 %s11, %s18
    %p20 = scmp.eq.s32.totalorder %s19, 0
    %s22 = sadd.s32 %s21, 1
    %s23 = scalar_select %p20, %s21, %s22
    %p26 = pneg %p20
    %p27 = scmp.eq.s32.totalorder %s11, 1
    %p28 = por %p26, %p27
    %p29 = scmp.ne.s32.totalorder %s21, %s24
    %p30 = scmp.eq.s32.totalorder %s11, 0
    %p31 = por %p29, %p30
    %p32 = scmp.ne.s32.totalorder %s21, %s24
    %p33 = scmp.eq.s32.totalorder %s16, 1
    %p34 = por %p32, %p33
    %p35 = scmp.ne.s32.totalorder %s24, %s25
    %p36 = scmp.eq.s32.totalorder %s16, 0
    %p37 = por %p35, %p36
    %p38 = scmp.ne.s32.totalorder %s24, %s25
    %p39 = scmp.eq.s32.totalorder %s17, 1
    %p40 = por %p38, %p39
    %p42 = scmp.ne.s32.totalorder %s25, %s41
    %p43 = scmp.eq.s32.totalorder %s17, 0
    %p44 = por %p42, %p43
    %s46 = sadd.s32 %s45, 1
    %p49 = scmp.eq.s32.totalorder %s11, 1
    %p50 = scmp.ne.s32.totalorder %s45, %s47
    %p51 = scmp.eq.s32.totalorder %s11, 0
    %p52 = por %p50, %p51
    %p53 = scmp.ne.s32.totalorder %s45, %s47
    %p54 = scmp.eq.s32.totalorder %s16, 1
    %p55 = por %p53, %p54
    %p56 = scmp.ne.s32.totalorder %s47, %s48
    %p57 = scmp.eq.s32.totalorder %s16, 0
    %p58 = por %p56, %p57
    %p59 = scmp.ne.s32.totalorder %s47, %s48
    %p60 = scmp.eq.s32.totalorder %s17, 1
    %p61 = por %p59, %p60
    %p63 = scmp.ne.s32.totalorder %s48, %s62
    %p64 = scmp.eq.s32.totalorder %s17, 0
    %p65 = por %p63, %p64
    %s67 = sadd.s32 %s66, 1
    %p70 = scmp.eq.s32.totalorder %s11, 1
    %p71 = scmp.ne.s32.totalorder %s66, %s68
    %p72 = scmp.eq.s32.totalorder %s11, 0
    %p73 = por %p71, %p72
    %p74 = scmp.ne.s32.totalorder %s66, %s68
    %p75 = scmp.eq.s32.totalorder %s16, 1
    %p76 = por %p74, %p75
    %p77 = scmp.ne.s32.totalorder %s68, %s69
    %p78 = scmp.eq.s32.totalorder %s16, 0
    %p79 = por %p77, %p78
    %p80 = scmp.ne.s32.totalorder %s68, %s69
    %p81 = scmp.eq.s32.totalorder %s17, 1
    %p82 = por %p80, %p81
    %p84 = scmp.ne.s32.totalorder %s69, %s83
    %p85 = scmp.eq.s32.totalorder %s17, 0
    %p86 = por %p84, %p85
    %s87 = ssub.s32 %s11, %s18
    %p88 = scmp.eq.s32.totalorder %s87, 0
    %s90 = sadd.s32 %s89, 1
    %s91 = scalar_select %p88, %s89, %s90
    %p94 = pneg %p88
    %p95 = scmp.eq.s32.totalorder %s11, 1
    %p96 = por %p94, %p95
    %p97 = scmp.ne.s32.totalorder %s89, %s92
    %p98 = scmp.eq.s32.totalorder %s11, 0
    %p99 = por %p97, %p98
    %p100 = scmp.ne.s32.totalorder %s89, %s92
    %p101 = scmp.eq.s32.totalorder %s16, 1
    %p102 = por %p100, %p101
    %p103 = scmp.ne.s32.totalorder %s92, %s93
    %p104 = scmp.eq.s32.totalorder %s16, 0
    %p105 = por %p103, %p104
    %p106 = scmp.ne.s32.totalorder %s92, %s93
    %p107 = scmp.eq.s32.totalorder %s17, 1
    %p108 = por %p106, %p107
    %p110 = scmp.ne.s32.totalorder %s93, %s109
    %p111 = scmp.eq.s32.totalorder %s17, 0
    %p112 = por %p110, %p111
    %s113 = ssub.s32 %s11, %s18
    %p114 = scmp.eq.s32.totalorder %s113, 0
    %s116 = sadd.s32 %s115, 1
    %s117 = scalar_select %p114, %s115, %s116
    %p120 = pneg %p114
    %p121 = scmp.eq.s32.totalorder %s11, 1
    %p122 = por %p120, %p121
    %p123 = scmp.ne.s32.totalorder %s115, %s118
    %p124 = scmp.eq.s32.totalorder %s11, 0
    %p125 = por %p123, %p124
    %p126 = scmp.ne.s32.totalorder %s115, %s118
    %p127 = scmp.eq.s32.totalorder %s16, 1
    %p128 = por %p126, %p127
    %p129 = scmp.ne.s32.totalorder %s118, %s119
    %p130 = scmp.eq.s32.totalorder %s16, 0
    %p131 = por %p129, %p130
    %p132 = scmp.ne.s32.totalorder %s118, %s119
    %p133 = scmp.eq.s32.totalorder %s17, 1
    %p134 = por %p132, %p133
    %p136 = scmp.ne.s32.totalorder %s119, %s135
    %p137 = scmp.eq.s32.totalorder %s17, 0
    %p138 = por %p136, %p137
    %p139 = scmp.le.s32.totalorder 1, %s11
    %p140 = scmp.lt.s32.totalorder %s11, 3
    %p141 = pnand %p139, %p140
    %p142 = pneg %p141
    // Predicated region
    $region9: #{_lambda_.4} parent=5 // pred_check
      _
    $region10: #{_lambda_.4} parent=5 // pred_check_branch
      %144 = sbr.rel (%p141) target = $region12
    $region11: #{_lambda_.4} parent=5 // pred_region
      %s145 = ssub.s32 %s11, 1
      // Predicated region
      $region13: #{_lambda_.4} parent=11 // pred_check
        %p146 = pneg %p58
      $region14: #{_lambda_.4} parent=11 // pred_check_branch
        %148 = sbr.rel (%p146) target = $region16
      $region15: #{_lambda_.4} parent=11 // pred_region
        _
      $region16: #{_lambda_.4} parent=11 // pred_fallthru
        _
      // Predicated region
      $region17: #{_lambda_.4} parent=11 // pred_check
        %p149 = pneg %p79
      $region18: #{_lambda_.4} parent=11 // pred_check_branch
        %151 = sbr.rel (%p149) target = $region20
      $region19: #{_lambda_.4} parent=11 // pred_region
        _
      $region20: #{_lambda_.4} parent=11 // pred_fallthru
        _
    $region12: #{_lambda_.4} parent=5 // pred_fallthru
      _
    %p152 = scmp.lt.s32.totalorder %s11, 2
    // Predicated region
    $region21: #{_lambda_.4} parent=5 // pred_check
      %p153 = pneg %p152
    $region22: #{_lambda_.4} parent=5 // pred_check_branch
      %155 = sbr.rel (%p153) target = $region24
    $region23: #{_lambda_.4} parent=5 // pred_region
      // Predicated region
      $region25: #{_lambda_.4} parent=23 // pred_check
        %p156 = pneg %p31
      $region26: #{_lambda_.4} parent=23 // pred_check_branch
        %158 = sbr.rel (%p156) target = $region28
      $region27: #{_lambda_.4} parent=23 // pred_region
        %s159 = smul.u32 4, %s11
        %p160 = scmp.lt.s32.totalorder %s159, 7
        %s161 = scalar_select %p160, %s159, 7
        %s162 = smul.addr %s161, 8
        %s163 = smul.addr %s162, 4
        %s164 = scalar_lea.vmem %s0, %s163
        %s165 = smul.u32 4, %s11
      $region28: #{_lambda_.4} parent=23 // pred_fallthru
        _
    $region24: #{_lambda_.4} parent=5 // pred_fallthru
      _
    %p166 = scmp.le.s32.totalorder 1, %s11
    %p167 = scmp.lt.s32.totalorder %s11, 3
    %p168 = pnand %p166, %p167
    %p169 = pneg %p168
    // Predicated region
    $region29: #{_lambda_.4} parent=5 // pred_check
      _
    $region30: #{_lambda_.4} parent=5 // pred_check_branch
      %171 = sbr.rel (%p168) target = $region32
    $region31: #{_lambda_.4} parent=5 // pred_region
      %s172 = ssub.s32 %s11, 1
      %s173 = smul.u32 4, %s16
      %p174 = scmp.lt.s32.totalorder %s173, 7
      %s175 = scalar_select %p174, %s173, 7
      %s176 = smul.addr %s175, 8
      %s177 = smul.addr %s176, 4
      %s178 = scalar_lea.vmem %s0, %s177
      %p179 = pneg %p37
      %p180 = pneg %p34
      %p181 = pneg %p58
      %p182 = pneg %p55
      %p183 = pneg %p79
      %p184 = pneg %p76
      %p185 = pneg %p105
      %p186 = pneg %p102
      %s187 = smul.u32 4, %s16
      %p188 = scmp.lt.s32.totalorder %s187, 7
      %s189 = scalar_select %p188, %s187, 7
      %s190 = smul.addr %s189, 8
      %s191 = smul.addr %s190, 4
      %s192 = scalar_lea.vmem %s3, %s191
      %p193 = pneg %p131
      %p194 = pneg %p128
      %p195 = scmp.lt.s32.totalorder %s16, 1
      %s196 = scalar_select %p195, %s16, 1
      %s197 = smul.addr %s196, 2
      %s198 = scalar_lea.vmem %s4, %s197
      %s199 = smul.u32 4, %s16
      %p200 = scmp.lt.s32.totalorder %s199, 7
      %s201 = scalar_select %p200, %s199, 7
      %s202 = smul.addr %s201, 8
      %s203 = smul.addr %s202, 4
      %s204 = scalar_lea.vmem %s0, %s203
      %s205 = smul.u32 4, %s16
      %s206 = smul.u32 4, %s16
      %p207 = scmp.lt.s32.totalorder %s206, 7
      %s208 = scalar_select %p207, %s206, 7
      %s209 = smul.addr %s208, 8
      %s210 = smul.addr %s209, 4
      %s211 = scalar_lea.vmem %s3, %s210
      %s212 = smul.u32 4, %s16
      %p213 = scmp.lt.s32.totalorder %s16, 1
      %s214 = scalar_select %p213, %s16, 1
      %s215 = smul.addr %s214, 2
      %s216 = scalar_lea.vmem %s4, %s215
      %v218 = vld [vmem:[%s1] sm:$0x3]
      %v219 = vld [vmem:[%s204] sm:$0xf]
      %v220 = vld [vmem:[%s204 + $0x4] sm:$0xf]
      %v221 = vld [vmem:[%s204 + $0x8] sm:$0xf]
      %v222 = vld [vmem:[%s204 + $0xc] sm:$0xf]
      %v223 = vld [vmem:[%s204 + $0x10] sm:$0xf]
      %v224 = vld [vmem:[%s204 + $0x14] sm:$0xf]
      %v225 = vld [vmem:[%s204 + $0x18] sm:$0xf]
      %v226 = vld [vmem:[%s204 + $0x1c] sm:$0xf]
      %v227 = vld [vmem:[%s204 + $0x20] sm:$0xf]
      %v228 = vld [vmem:[%s204 + $0x24] sm:$0xf]
      %v229 = vld [vmem:[%s204 + $0x28] sm:$0xf]
      %v230 = vld [vmem:[%s204 + $0x2c] sm:$0xf]
      %v231 = vld [vmem:[%s204 + $0x30] sm:$0xf]
      %v232 = vld [vmem:[%s204 + $0x34] sm:$0xf]
      %v233 = vld [vmem:[%s204 + $0x38] sm:$0xf]
      %v234 = vld [vmem:[%s204 + $0x3c] sm:$0xf]
      %v235 = vld [vmem:[%s204 + $0x40] sm:$0xf]
      %v236 = vld [vmem:[%s204 + $0x44] sm:$0xf]
      %v237 = vld [vmem:[%s204 + $0x48] sm:$0xf]
      %v238 = vld [vmem:[%s204 + $0x4c] sm:$0xf]
      %v239 = vld [vmem:[%s204 + $0x50] sm:$0xf]
      %v240 = vld [vmem:[%s204 + $0x54] sm:$0xf]
      %v241 = vld [vmem:[%s204 + $0x58] sm:$0xf]
      %v242 = vld [vmem:[%s204 + $0x5c] sm:$0xf]
      %v243 = vld [vmem:[%s204 + $0x60] sm:$0xf]
      %v244 = vld [vmem:[%s204 + $0x64] sm:$0xf]
      %v245 = vld [vmem:[%s204 + $0x68] sm:$0xf]
      %v246 = vld [vmem:[%s204 + $0x6c] sm:$0xf]
      %v247 = vld [vmem:[%s204 + $0x70] sm:$0xf]
      %v248 = vld [vmem:[%s204 + $0x74] sm:$0xf]
      %v249 = vld [vmem:[%s204 + $0x78] sm:$0xf]
      %v250 = vld [vmem:[%s204 + $0x7c] sm:$0xf]
      %v251 = vunpack.c.l.bf16 %v219
      %v252 = vunpack.c.l.bf16 %v220
      %v253 = vunpack.c.l.bf16 %v221
      %v254 = vunpack.c.l.bf16 %v222
      %v255 = vunpack.c.l.bf16 %v223
      %v256 = vunpack.c.l.bf16 %v224
      %v257 = vunpack.c.l.bf16 %v225
      %v258 = vunpack.c.l.bf16 %v226
      %v259 = vunpack.c.l.bf16 %v227
      %v260 = vunpack.c.l.bf16 %v228
      %v261 = vunpack.c.l.bf16 %v229
      %v262 = vunpack.c.l.bf16 %v230
      %v263 = vunpack.c.l.bf16 %v231
      %v264 = vunpack.c.l.bf16 %v232
      %v265 = vunpack.c.l.bf16 %v233
      %v266 = vunpack.c.l.bf16 %v234
      %v267 = vunpack.c.l.bf16 %v235
      %v268 = vunpack.c.l.bf16 %v236
      %v269 = vunpack.c.l.bf16 %v237
      %v270 = vunpack.c.l.bf16 %v238
      %v271 = vunpack.c.l.bf16 %v239
      %v272 = vunpack.c.l.bf16 %v240
      %v273 = vunpack.c.l.bf16 %v241
      %v274 = vunpack.c.l.bf16 %v242
      %v275 = vunpack.c.l.bf16 %v243
      %v276 = vunpack.c.l.bf16 %v244
      %v277 = vunpack.c.l.bf16 %v245
      %v278 = vunpack.c.l.bf16 %v246
      %v279 = vunpack.c.l.bf16 %v247
      %v280 = vunpack.c.l.bf16 %v248
      %v281 = vunpack.c.l.bf16 %v249
      %v282 = vunpack.c.l.bf16 %v250
      %v283 = vlaneseq
      %v284 = vshrl.u32 %v283, 7
      %v285 = vsub.s32 0, %v284
      %v286 = vrot.slane %v218, %v285
      %v287 = vmul.f32 %v251, %v286
      %v288 = vmul.f32 %v252, %v286
      %v289 = vmul.f32 %v253, %v286
      %v290 = vmul.f32 %v254, %v286
      %v291 = vmul.f32 %v255, %v286
      %v292 = vmul.f32 %v256, %v286
      %v293 = vmul.f32 %v257, %v286
      %v294 = vmul.f32 %v258, %v286
      %v295 = vmul.f32 %v259, %v286
      %v296 = vmul.f32 %v260, %v286
      %v297 = vmul.f32 %v261, %v286
      %v298 = vmul.f32 %v262, %v286
      %v299 = vmul.f32 %v263, %v286
      %v300 = vmul.f32 %v264, %v286
      %v301 = vmul.f32 %v265, %v286
      %v302 = vmul.f32 %v266, %v286
      %v303 = vmul.f32 %v267, %v286
      %v304 = vmul.f32 %v268, %v286
      %v305 = vmul.f32 %v269, %v286
      %v306 = vmul.f32 %v270, %v286
      %v307 = vmul.f32 %v271, %v286
      %v308 = vmul.f32 %v272, %v286
      %v309 = vmul.f32 %v273, %v286
      %v310 = vmul.f32 %v274, %v286
      %v311 = vmul.f32 %v275, %v286
      %v312 = vmul.f32 %v276, %v286
      %v313 = vmul.f32 %v277, %v286
      %v314 = vmul.f32 %v278, %v286
      %v315 = vmul.f32 %v279, %v286
      %v316 = vmul.f32 %v280, %v286
      %v317 = vmul.f32 %v281, %v286
      %v318 = vmul.f32 %v282, %v286
      %v319 = vlaneseq
      %v320 = vshrl.u32 %v319, 7
      %v321 = vsub.s32 1, %v320
      %v322 = vrot.slane %v218, %v321
      %v323 = vadd.f32 %v287, %v322
      %v324 = vadd.f32 %v288, %v322
      %v325 = vadd.f32 %v289, %v322
      %v326 = vadd.f32 %v290, %v322
      %v327 = vadd.f32 %v291, %v322
      %v328 = vadd.f32 %v292, %v322
      %v329 = vadd.f32 %v293, %v322
      %v330 = vadd.f32 %v294, %v322
      %v331 = vadd.f32 %v295, %v322
      %v332 = vadd.f32 %v296, %v322
      %v333 = vadd.f32 %v297, %v322
      %v334 = vadd.f32 %v298, %v322
      %v335 = vadd.f32 %v299, %v322
      %v336 = vadd.f32 %v300, %v322
      %v337 = vadd.f32 %v301, %v322
      %v338 = vadd.f32 %v302, %v322
      %v339 = vadd.f32 %v303, %v322
      %v340 = vadd.f32 %v304, %v322
      %v341 = vadd.f32 %v305, %v322
      %v342 = vadd.f32 %v306, %v322
      %v343 = vadd.f32 %v307, %v322
      %v344 = vadd.f32 %v308, %v322
      %v345 = vadd.f32 %v309, %v322
      %v346 = vadd.f32 %v310, %v322
      %v347 = vadd.f32 %v311, %v322
      %v348 = vadd.f32 %v312, %v322
      %v349 = vadd.f32 %v313, %v322
      %v350 = vadd.f32 %v314, %v322
      %v351 = vadd.f32 %v315, %v322
      %v352 = vadd.f32 %v316, %v322
      %v353 = vadd.f32 %v317, %v322
      %v354 = vadd.f32 %v318, %v322
      %v355 = vmax.f32 %v323, 0.0
      %v356 = vmax.f32 %v324, 0.0
      %v357 = vmax.f32 %v325, 0.0
      %v358 = vmax.f32 %v326, 0.0
      %v359 = vmax.f32 %v327, 0.0
      %v360 = vmax.f32 %v328, 0.0
      %v361 = vmax.f32 %v329, 0.0
      %v362 = vmax.f32 %v330, 0.0
      %v363 = vmax.f32 %v331, 0.0
      %v364 = vmax.f32 %v332, 0.0
      %v365 = vmax.f32 %v333, 0.0
      %v366 = vmax.f32 %v334, 0.0
      %v367 = vmax.f32 %v335, 0.0
      %v368 = vmax.f32 %v336, 0.0
      %v369 = vmax.f32 %v337, 0.0
      %v370 = vmax.f32 %v338, 0.0
      %v371 = vmax.f32 %v339, 0.0
      %v372 = vmax.f32 %v340, 0.0
      %v373 = vmax.f32 %v341, 0.0
      %v374 = vmax.f32 %v342, 0.0
      %v375 = vmax.f32 %v343, 0.0
      %v376 = vmax.f32 %v344, 0.0
      %v377 = vmax.f32 %v345, 0.0
      %v378 = vmax.f32 %v346, 0.0
      %v379 = vmax.f32 %v347, 0.0
      %v380 = vmax.f32 %v348, 0.0
      %v381 = vmax.f32 %v349, 0.0
      %v382 = vmax.f32 %v350, 0.0
      %v383 = vmax.f32 %v351, 0.0
      %v384 = vmax.f32 %v352, 0.0
      %v385 = vmax.f32 %v353, 0.0
      %v386 = vmax.f32 %v354, 0.0
      %v387 = vpack.c.bf16 %v355, %v355
      %v388 = vpack.c.bf16 %v356, %v356
      %v389 = vpack.c.bf16 %v357, %v357
      %v390 = vpack.c.bf16 %v358, %v358
      %v391 = vpack.c.bf16 %v359, %v359
      %v392 = vpack.c.bf16 %v360, %v360
      %v393 = vpack.c.bf16 %v361, %v361
      %v394 = vpack.c.bf16 %v362, %v362
      %v395 = vpack.c.bf16 %v363, %v363
      %v396 = vpack.c.bf16 %v364, %v364
      %v397 = vpack.c.bf16 %v365, %v365
      %v398 = vpack.c.bf16 %v366, %v366
      %v399 = vpack.c.bf16 %v367, %v367
      %v400 = vpack.c.bf16 %v368, %v368
      %v401 = vpack.c.bf16 %v369, %v369
      %v402 = vpack.c.bf16 %v370, %v370
      %v403 = vpack.c.bf16 %v371, %v371
      %v404 = vpack.c.bf16 %v372, %v372
      %v405 = vpack.c.bf16 %v373, %v373
      %v406 = vpack.c.bf16 %v374, %v374
      %v407 = vpack.c.bf16 %v375, %v375
      %v408 = vpack.c.bf16 %v376, %v376
      %v409 = vpack.c.bf16 %v377, %v377
      %v410 = vpack.c.bf16 %v378, %v378
      %v411 = vpack.c.bf16 %v379, %v379
      %v412 = vpack.c.bf16 %v380, %v380
      %v413 = vpack.c.bf16 %v381, %v381
      %v414 = vpack.c.bf16 %v382, %v382
      %v415 = vpack.c.bf16 %v383, %v383
      %v416 = vpack.c.bf16 %v384, %v384
      %v417 = vpack.c.bf16 %v385, %v385
      %v418 = vpack.c.bf16 %v386, %v386
      %419 = vst [vmem:[#allocation2] sm:$0xf] 0
      %420 = vst [vmem:[#allocation2 + $0x4] sm:$0x1] 0
      %421 = vst [vmem:[#allocation2 + $0x50] sm:$0xf] 0
      %422 = vst [vmem:[#allocation2 + $0x54] sm:$0x1] 0
      %423 = vst [vmem:[#allocation2 + $0xa0] sm:$0xf] 0
      %424 = vst [vmem:[#allocation2 + $0xa4] sm:$0x1] 0
      %425 = vst [vmem:[#allocation2 + $0xf0] sm:$0xf] 0
      %426 = vst [vmem:[#allocation2 + $0xf4] sm:$0x1] 0
      %s427 = scalar_lea.vmem [#allocation2], 72
      %428 = vst [vmem:[%s427] sm:$0xf] 0
      %429 = vst [vmem:[%s427 + $0x4] sm:$0x1] 0
      %430 = vst [vmem:[%s427 + $0x50] sm:$0xf] 0
      %431 = vst [vmem:[%s427 + $0x54] sm:$0x1] 0
      %432 = vst [vmem:[%s427 + $0xa0] sm:$0xf] 0
      %433 = vst [vmem:[%s427 + $0xa4] sm:$0x1] 0
      %434 = vst [vmem:[%s427 + $0xf0] sm:$0xf] 0
      %435 = vst [vmem:[%s427 + $0xf4] sm:$0x1] 0
      %s436 = scalar_lea.vmem [#allocation2], 8
      %vm437 = vcmask 1040384
      %vm438 = vsmask.f32 256
      %vm439 = vmand %vm437, %vm438
      %v440 = vld [vmem:[%s436] sm:$0x1]
      %v441 = vsel %vm439, 0, %v440
      %442 = vst [vmem:[%s436] sm:$0x1] %v441
      %v443 = vld [vmem:[%s436 + $0x8] sm:$0x1]
      %v444 = vsel %vm439, 0, %v443
      %445 = vst [vmem:[%s436 + $0x8] sm:$0x1] %v444
      %v446 = vld [vmem:[%s436 + $0x10] sm:$0x1]
      %v447 = vsel %vm439, 0, %v446
      %448 = vst [vmem:[%s436 + $0x10] sm:$0x1] %v447
      %v449 = vld [vmem:[%s436 + $0x18] sm:$0x1]
      %v450 = vsel %vm439, 0, %v449
      %451 = vst [vmem:[%s436 + $0x18] sm:$0x1] %v450
      %v452 = vld [vmem:[%s436 + $0x20] sm:$0x1]
      %v453 = vsel %vm439, 0, %v452
      %454 = vst [vmem:[%s436 + $0x20] sm:$0x1] %v453
      %v455 = vld [vmem:[%s436 + $0x28] sm:$0x1]
      %v456 = vsel %vm439, 0, %v455
      %457 = vst [vmem:[%s436 + $0x28] sm:$0x1] %v456
      %v458 = vld [vmem:[%s436 + $0x30] sm:$0x1]
      %v459 = vsel %vm439, 0, %v458
      %460 = vst [vmem:[%s436 + $0x30] sm:$0x1] %v459
      %v461 = vld [vmem:[%s436 + $0x38] sm:$0x1]
      %v462 = vsel %vm439, 0, %v461
      %463 = vst [vmem:[%s436 + $0x38] sm:$0x1] %v462
      %v464 = vld [vmem:[%s436 + $0x50] sm:$0x1]
      %v465 = vsel %vm439, 0, %v464
      %466 = vst [vmem:[%s436 + $0x50] sm:$0x1] %v465
      %v467 = vld [vmem:[%s436 + $0x58] sm:$0x1]
      %v468 = vsel %vm439, 0, %v467
      %469 = vst [vmem:[%s436 + $0x58] sm:$0x1] %v468
      %v470 = vld [vmem:[%s436 + $0x60] sm:$0x1]
      %v471 = vsel %vm439, 0, %v470
      %472 = vst [vmem:[%s436 + $0x60] sm:$0x1] %v471
      %v473 = vld [vmem:[%s436 + $0x68] sm:$0x1]
      %v474 = vsel %vm439, 0, %v473
      %475 = vst [vmem:[%s436 + $0x68] sm:$0x1] %v474
      %v476 = vld [vmem:[%s436 + $0x70] sm:$0x1]
      %v477 = vsel %vm439, 0, %v476
      %478 = vst [vmem:[%s436 + $0x70] sm:$0x1] %v477
      %v479 = vld [vmem:[%s436 + $0x78] sm:$0x1]
      %v480 = vsel %vm439, 0, %v479
      %481 = vst [vmem:[%s436 + $0x78] sm:$0x1] %v480
      %v482 = vld [vmem:[%s436 + $0x80] sm:$0x1]
      %v483 = vsel %vm439, 0, %v482
      %484 = vst [vmem:[%s436 + $0x80] sm:$0x1] %v483
      %v485 = vld [vmem:[%s436 + $0x88] sm:$0x1]
      %v486 = vsel %vm439, 0, %v485
      %487 = vst [vmem:[%s436 + $0x88] sm:$0x1] %v486
      %v488 = vld [vmem:[%s436 + $0xa0] sm:$0x1]
      %v489 = vsel %vm439, 0, %v488
      %490 = vst [vmem:[%s436 + $0xa0] sm:$0x1] %v489
      %v491 = vld [vmem:[%s436 + $0xa8] sm:$0x1]
      %v492 = vsel %vm439, 0, %v491
      %493 = vst [vmem:[%s436 + $0xa8] sm:$0x1] %v492
      %v494 = vld [vmem:[%s436 + $0xb0] sm:$0x1]
      %v495 = vsel %vm439, 0, %v494
      %496 = vst [vmem:[%s436 + $0xb0] sm:$0x1] %v495
      %v497 = vld [vmem:[%s436 + $0xb8] sm:$0x1]
      %v498 = vsel %vm439, 0, %v497
      %499 = vst [vmem:[%s436 + $0xb8] sm:$0x1] %v498
      %v500 = vld [vmem:[%s436 + $0xc0] sm:$0x1]
      %v501 = vsel %vm439, 0, %v500
      %502 = vst [vmem:[%s436 + $0xc0] sm:$0x1] %v501
      %v503 = vld [vmem:[%s436 + $0xc8] sm:$0x1]
      %v504 = vsel %vm439, 0, %v503
      %505 = vst [vmem:[%s436 + $0xc8] sm:$0x1] %v504
      %v506 = vld [vmem:[%s436 + $0xd0] sm:$0x1]
      %v507 = vsel %vm439, 0, %v506
      %508 = vst [vmem:[%s436 + $0xd0] sm:$0x1] %v507
      %v509 = vld [vmem:[%s436 + $0xd8] sm:$0x1]
      %v510 = vsel %vm439, 0, %v509
      %511 = vst [vmem:[%s436 + $0xd8] sm:$0x1] %v510
      %v512 = vld [vmem:[%s436 + $0xf0] sm:$0x1]
      %v513 = vsel %vm439, 0, %v512
      %514 = vst [vmem:[%s436 + $0xf0] sm:$0x1] %v513
      %v515 = vld [vmem:[%s436 + $0xf8] sm:$0x1]
      %v516 = vsel %vm439, 0, %v515
      %517 = vst [vmem:[%s436 + $0xf8] sm:$0x1] %v516
      %v518 = vld [vmem:[%s436 + $0x100] sm:$0x1]
      %v519 = vsel %vm439, 0, %v518
      %520 = vst [vmem:[%s436 + $0x100] sm:$0x1] %v519
      %v521 = vld [vmem:[%s436 + $0x108] sm:$0x1]
      %v522 = vsel %vm439, 0, %v521
      %523 = vst [vmem:[%s436 + $0x108] sm:$0x1] %v522
      %v524 = vld [vmem:[%s436 + $0x110] sm:$0x1]
      %v525 = vsel %vm439, 0, %v524
      %526 = vst [vmem:[%s436 + $0x110] sm:$0x1] %v525
      %v527 = vld [vmem:[%s436 + $0x118] sm:$0x1]
      %v528 = vsel %vm439, 0, %v527
      %529 = vst [vmem:[%s436 + $0x118] sm:$0x1] %v528
      %v530 = vld [vmem:[%s436 + $0x120] sm:$0x1]
      %v531 = vsel %vm439, 0, %v530
      %532 = vst [vmem:[%s436 + $0x120] sm:$0x1] %v531
      %v533 = vld [vmem:[%s436 + $0x128] sm:$0x1]
      %v534 = vsel %vm439, 0, %v533
      %535 = vst [vmem:[%s436 + $0x128] sm:$0x1] %v534
      %vm536 = vsmask.f32 7938
      %vm537 = vmand %vm437, %vm536
      %v538 = vld [vmem:[%s436 + $0x4] sm:$0x1]
      %v539 = vsel %vm537, 0, %v538
      %540 = vst [vmem:[%s436 + $0x4] sm:$0x1] %v539
      %v541 = vld [vmem:[%s436 + $0xc] sm:$0x1]
      %v542 = vsel %vm537, 0, %v541
      %543 = vst [vmem:[%s436 + $0xc] sm:$0x1] %v542
      %v544 = vld [vmem:[%s436 + $0x14] sm:$0x1]
      %v545 = vsel %vm537, 0, %v544
      %546 = vst [vmem:[%s436 + $0x14] sm:$0x1] %v545
      %v547 = vld [vmem:[%s436 + $0x1c] sm:$0x1]
      %v548 = vsel %vm537, 0, %v547
      %549 = vst [vmem:[%s436 + $0x1c] sm:$0x1] %v548
      %v550 = vld [vmem:[%s436 + $0x24] sm:$0x1]
      %v551 = vsel %vm537, 0, %v550
      %552 = vst [vmem:[%s436 + $0x24] sm:$0x1] %v551
      %v553 = vld [vmem:[%s436 + $0x2c] sm:$0x1]
      %v554 = vsel %vm537, 0, %v553
      %555 = vst [vmem:[%s436 + $0x2c] sm:$0x1] %v554
      %v556 = vld [vmem:[%s436 + $0x34] sm:$0x1]
      %v557 = vsel %vm537, 0, %v556
      %558 = vst [vmem:[%s436 + $0x34] sm:$0x1] %v557
      %v559 = vld [vmem:[%s436 + $0x3c] sm:$0x1]
      %v560 = vsel %vm537, 0, %v559
      %561 = vst [vmem:[%s436 + $0x3c] sm:$0x1] %v560
      %v562 = vld [vmem:[%s436 + $0x54] sm:$0x1]
      %v563 = vsel %vm537, 0, %v562
      %564 = vst [vmem:[%s436 + $0x54] sm:$0x1] %v563
      %v565 = vld [vmem:[%s436 + $0x5c] sm:$0x1]
      %v566 = vsel %vm537, 0, %v565
      %567 = vst [vmem:[%s436 + $0x5c] sm:$0x1] %v566
      %v568 = vld [vmem:[%s436 + $0x64] sm:$0x1]
      %v569 = vsel %vm537, 0, %v568
      %570 = vst [vmem:[%s436 + $0x64] sm:$0x1] %v569
      %v571 = vld [vmem:[%s436 + $0x6c] sm:$0x1]
      %v572 = vsel %vm537, 0, %v571
      %573 = vst [vmem:[%s436 + $0x6c] sm:$0x1] %v572
      %v574 = vld [vmem:[%s436 + $0x74] sm:$0x1]
      %v575 = vsel %vm537, 0, %v574
      %576 = vst [vmem:[%s436 + $0x74] sm:$0x1] %v575
      %v577 = vld [vmem:[%s436 + $0x7c] sm:$0x1]
      %v578 = vsel %vm537, 0, %v577
      %579 = vst [vmem:[%s436 + $0x7c] sm:$0x1] %v578
      %v580 = vld [vmem:[%s436 + $0x84] sm:$0x1]
      %v581 = vsel %vm537, 0, %v580
      %582 = vst [vmem:[%s436 + $0x84] sm:$0x1] %v581
      %v583 = vld [vmem:[%s436 + $0x8c] sm:$0x1]
      %v584 = vsel %vm537, 0, %v583
      %585 = vst [vmem:[%s436 + $0x8c] sm:$0x1] %v584
      %v586 = vld [vmem:[%s436 + $0xa4] sm:$0x1]
      %v587 = vsel %vm537, 0, %v586
      %588 = vst [vmem:[%s436 + $0xa4] sm:$0x1] %v587
      %v589 = vld [vmem:[%s436 + $0xac] sm:$0x1]
      %v590 = vsel %vm537, 0, %v589
      %591 = vst [vmem:[%s436 + $0xac] sm:$0x1] %v590
      %v592 = vld [vmem:[%s436 + $0xb4] sm:$0x1]
      %v593 = vsel %vm537, 0, %v592
      %594 = vst [vmem:[%s436 + $0xb4] sm:$0x1] %v593
      %v595 = vld [vmem:[%s436 + $0xbc] sm:$0x1]
      %v596 = vsel %vm537, 0, %v595
      %597 = vst [vmem:[%s436 + $0xbc] sm:$0x1] %v596
      %v598 = vld [vmem:[%s436 + $0xc4] sm:$0x1]
      %v599 = vsel %vm537, 0, %v598
      %600 = vst [vmem:[%s436 + $0xc4] sm:$0x1] %v599
      %v601 = vld [vmem:[%s436 + $0xcc] sm:$0x1]
      %v602 = vsel %vm537, 0, %v601
      %603 = vst [vmem:[%s436 + $0xcc] sm:$0x1] %v602
      %v604 = vld [vmem:[%s436 + $0xd4] sm:$0x1]
      %v605 = vsel %vm537, 0, %v604
      %606 = vst [vmem:[%s436 + $0xd4] sm:$0x1] %v605
      %v607 = vld [vmem:[%s436 + $0xdc] sm:$0x1]
      %v608 = vsel %vm537, 0, %v607
      %609 = vst [vmem:[%s436 + $0xdc] sm:$0x1] %v608
      %v610 = vld [vmem:[%s436 + $0xf4] sm:$0x1]
      %v611 = vsel %vm537, 0, %v610
      %612 = vst [vmem:[%s436 + $0xf4] sm:$0x1] %v611
      %v613 = vld [vmem:[%s436 + $0xfc] sm:$0x1]
      %v614 = vsel %vm537, 0, %v613
      %615 = vst [vmem:[%s436 + $0xfc] sm:$0x1] %v614
      %v616 = vld [vmem:[%s436 + $0x104] sm:$0x1]
      %v617 = vsel %vm537, 0, %v616
      %618 = vst [vmem:[%s436 + $0x104] sm:$0x1] %v617
      %v619 = vld [vmem:[%s436 + $0x10c] sm:$0x1]
      %v620 = vsel %vm537, 0, %v619
      %621 = vst [vmem:[%s436 + $0x10c] sm:$0x1] %v620
      %v622 = vld [vmem:[%s436 + $0x114] sm:$0x1]
      %v623 = vsel %vm537, 0, %v622
      %624 = vst [vmem:[%s436 + $0x114] sm:$0x1] %v623
      %v625 = vld [vmem:[%s436 + $0x11c] sm:$0x1]
      %v626 = vsel %vm537, 0, %v625
      %627 = vst [vmem:[%s436 + $0x11c] sm:$0x1] %v626
      %v628 = vld [vmem:[%s436 + $0x124] sm:$0x1]
      %v629 = vsel %vm537, 0, %v628
      %630 = vst [vmem:[%s436 + $0x124] sm:$0x1] %v629
      %v631 = vld [vmem:[%s436 + $0x12c] sm:$0x1]
      %v632 = vsel %vm537, 0, %v631
      %633 = vst [vmem:[%s436 + $0x12c] sm:$0x1] %v632
      %v666 = vunpack.c.l.b16 %v387
      %v667 = vunpack.c.l.b16 %v388
      %v668 = vunpack.c.l.b16 %v389
      %v669 = vunpack.c.l.b16 %v390
      %v670 = vunpack.c.l.b16 %v391
      %v671 = vunpack.c.l.b16 %v392
      %v672 = vunpack.c.l.b16 %v393
      %v673 = vunpack.c.l.b16 %v394
      %v674 = vunpack.c.l.b16 %v395
      %v675 = vunpack.c.l.b16 %v396
      %v676 = vunpack.c.l.b16 %v397
      %v677 = vunpack.c.l.b16 %v398
      %v678 = vunpack.c.l.b16 %v399
      %v679 = vunpack.c.l.b16 %v400
      %v680 = vunpack.c.l.b16 %v401
      %v681 = vunpack.c.l.b16 %v402
      %v682 = vunpack.c.l.b16 %v403
      %v683 = vunpack.c.l.b16 %v404
      %v684 = vunpack.c.l.b16 %v405
      %v685 = vunpack.c.l.b16 %v406
      %v686 = vunpack.c.l.b16 %v407
      %v687 = vunpack.c.l.b16 %v408
      %v688 = vunpack.c.l.b16 %v409
      %v689 = vunpack.c.l.b16 %v410
      %v690 = vunpack.c.l.b16 %v411
      %v691 = vunpack.c.l.b16 %v412
      %v692 = vunpack.c.l.b16 %v413
      %v693 = vunpack.c.l.b16 %v414
      %v694 = vunpack.c.l.b16 %v415
      %v695 = vunpack.c.l.b16 %v416
      %v696 = vunpack.c.l.b16 %v417
      %v697 = vunpack.c.l.b16 %v418
      %v698 = vpack.c.b16 %v666, %v666
      %v699 = vpack.c.b16 %v667, %v667
      %v700 = vpack.c.b16 %v668, %v668
      %v701 = vpack.c.b16 %v669, %v669
      %v702 = vpack.c.b16 %v670, %v670
      %v703 = vpack.c.b16 %v671, %v671
      %v704 = vpack.c.b16 %v672, %v672
      %v705 = vpack.c.b16 %v673, %v673
      %v706 = vpack.c.b16 %v674, %v674
      %v707 = vpack.c.b16 %v675, %v675
      %v708 = vpack.c.b16 %v676, %v676
      %v709 = vpack.c.b16 %v677, %v677
      %v710 = vpack.c.b16 %v678, %v678
      %v711 = vpack.c.b16 %v679, %v679
      %v712 = vpack.c.b16 %v680, %v680
      %v713 = vpack.c.b16 %v681, %v681
      %v714 = vpack.c.b16 %v682, %v682
      %v715 = vpack.c.b16 %v683, %v683
      %v716 = vpack.c.b16 %v684, %v684
      %v717 = vpack.c.b16 %v685, %v685
      %v718 = vpack.c.b16 %v686, %v686
      %v719 = vpack.c.b16 %v687, %v687
      %v720 = vpack.c.b16 %v688, %v688
      %v721 = vpack.c.b16 %v689, %v689
      %v722 = vpack.c.b16 %v690, %v690
      %v723 = vpack.c.b16 %v691, %v691
      %v724 = vpack.c.b16 %v692, %v692
      %v725 = vpack.c.b16 %v693, %v693
      %v726 = vpack.c.b16 %v694, %v694
      %v727 = vpack.c.b16 %v695, %v695
      %v728 = vpack.c.b16 %v696, %v696
      %v729 = vpack.c.b16 %v697, %v697
      %v731 = vshrl.u32 %v698, 16
      %v733 = vrot.slane %v731, 7
      %v734 = vshll.u32 %v698, 16
      %v736 = vor.u32 %v733, %v734
      %v737 = vrot.slane %v733, 4
      %v739 = vshrl.u32 %v699, 16
      %v741 = vrot.slane %v739, 7
      %v742 = vshll.u32 %v699, 16
      %v744 = vor.u32 %v741, %v742
      %v745 = vrot.slane %v741, 4
      %v747 = vshrl.u32 %v700, 16
      %v749 = vrot.slane %v747, 7
      %v750 = vshll.u32 %v700, 16
      %v752 = vor.u32 %v749, %v750
      %v753 = vrot.slane %v749, 4
      %v755 = vshrl.u32 %v701, 16
      %v757 = vrot.slane %v755, 7
      %v758 = vshll.u32 %v701, 16
      %v760 = vor.u32 %v757, %v758
      %v761 = vrot.slane %v757, 4
      %v763 = vshrl.u32 %v702, 16
      %v765 = vrot.slane %v763, 7
      %v766 = vshll.u32 %v702, 16
      %v768 = vor.u32 %v765, %v766
      %v769 = vrot.slane %v765, 4
      %v771 = vshrl.u32 %v703, 16
      %v773 = vrot.slane %v771, 7
      %v774 = vshll.u32 %v703, 16
      %v776 = vor.u32 %v773, %v774
      %v777 = vrot.slane %v773, 4
      %v779 = vshrl.u32 %v704, 16
      %v781 = vrot.slane %v779, 7
      %v782 = vshll.u32 %v704, 16
      %v784 = vor.u32 %v781, %v782
      %v785 = vrot.slane %v781, 4
      %v787 = vshrl.u32 %v705, 16
      %v789 = vrot.slane %v787, 7
      %v790 = vshll.u32 %v705, 16
      %v792 = vor.u32 %v789, %v790
      %v793 = vrot.slane %v789, 4
      %v795 = vshrl.u32 %v706, 16
      %v797 = vrot.slane %v795, 7
      %v798 = vshll.u32 %v706, 16
      %v800 = vor.u32 %v797, %v798
      %v801 = vrot.slane %v797, 4
      %v803 = vshrl.u32 %v707, 16
      %v805 = vrot.slane %v803, 7
      %v806 = vshll.u32 %v707, 16
      %v808 = vor.u32 %v805, %v806
      %v809 = vrot.slane %v805, 4
      %v811 = vshrl.u32 %v708, 16
      %v813 = vrot.slane %v811, 7
      %v814 = vshll.u32 %v708, 16
      %v816 = vor.u32 %v813, %v814
      %v817 = vrot.slane %v813, 4
      %v819 = vshrl.u32 %v709, 16
      %v821 = vrot.slane %v819, 7
      %v822 = vshll.u32 %v709, 16
      %v824 = vor.u32 %v821, %v822
      %v825 = vrot.slane %v821, 4
      %v827 = vshrl.u32 %v710, 16
      %v829 = vrot.slane %v827, 7
      %v830 = vshll.u32 %v710, 16
      %v832 = vor.u32 %v829, %v830
      %v833 = vrot.slane %v829, 4
      %v835 = vshrl.u32 %v711, 16
      %v837 = vrot.slane %v835, 7
      %v838 = vshll.u32 %v711, 16
      %v840 = vor.u32 %v837, %v838
      %v841 = vrot.slane %v837, 4
      %v843 = vshrl.u32 %v712, 16
      %v845 = vrot.slane %v843, 7
      %v846 = vshll.u32 %v712, 16
      %v848 = vor.u32 %v845, %v846
      %v849 = vrot.slane %v845, 4
      %v851 = vshrl.u32 %v713, 16
      %v853 = vrot.slane %v851, 7
      %v854 = vshll.u32 %v713, 16
      %v856 = vor.u32 %v853, %v854
      %v857 = vrot.slane %v853, 4
      %v859 = vshrl.u32 %v714, 16
      %v861 = vrot.slane %v859, 7
      %v862 = vshll.u32 %v714, 16
      %v864 = vor.u32 %v861, %v862
      %v865 = vrot.slane %v861, 4
      %v867 = vshrl.u32 %v715, 16
      %v869 = vrot.slane %v867, 7
      %v870 = vshll.u32 %v715, 16
      %v872 = vor.u32 %v869, %v870
      %v873 = vrot.slane %v869, 4
      %v875 = vshrl.u32 %v716, 16
      %v877 = vrot.slane %v875, 7
      %v878 = vshll.u32 %v716, 16
      %v880 = vor.u32 %v877, %v878
      %v881 = vrot.slane %v877, 4
      %v883 = vshrl.u32 %v717, 16
      %v885 = vrot.slane %v883, 7
      %v886 = vshll.u32 %v717, 16
      %v888 = vor.u32 %v885, %v886
      %v889 = vrot.slane %v885, 4
      %v891 = vshrl.u32 %v718, 16
      %v893 = vrot.slane %v891, 7
      %v894 = vshll.u32 %v718, 16
      %v896 = vor.u32 %v893, %v894
      %v897 = vrot.slane %v893, 4
      %v899 = vshrl.u32 %v719, 16
      %v901 = vrot.slane %v899, 7
      %v902 = vshll.u32 %v719, 16
      %v904 = vor.u32 %v901, %v902
      %v905 = vrot.slane %v901, 4
      %v907 = vshrl.u32 %v720, 16
      %v909 = vrot.slane %v907, 7
      %v910 = vshll.u32 %v720, 16
      %v912 = vor.u32 %v909, %v910
      %v913 = vrot.slane %v909, 4
      %v915 = vshrl.u32 %v721, 16
      %v917 = vrot.slane %v915, 7
      %v918 = vshll.u32 %v721, 16
      %v920 = vor.u32 %v917, %v918
      %v921 = vrot.slane %v917, 4
      %v923 = vshrl.u32 %v722, 16
      %v925 = vrot.slane %v923, 7
      %v926 = vshll.u32 %v722, 16
      %v928 = vor.u32 %v925, %v926
      %v929 = vrot.slane %v925, 4
      %v931 = vshrl.u32 %v723, 16
      %v933 = vrot.slane %v931, 7
      %v934 = vshll.u32 %v723, 16
      %v936 = vor.u32 %v933, %v934
      %v937 = vrot.slane %v933, 4
      %v939 = vshrl.u32 %v724, 16
      %v941 = vrot.slane %v939, 7
      %v942 = vshll.u32 %v724, 16
      %v944 = vor.u32 %v941, %v942
      %v945 = vrot.slane %v941, 4
      %v947 = vshrl.u32 %v725, 16
      %v949 = vrot.slane %v947, 7
      %v950 = vshll.u32 %v725, 16
      %v952 = vor.u32 %v949, %v950
      %v953 = vrot.slane %v949, 4
      %v955 = vshrl.u32 %v726, 16
      %v957 = vrot.slane %v955, 7
      %v958 = vshll.u32 %v726, 16
      %v960 = vor.u32 %v957, %v958
      %v961 = vrot.slane %v957, 4
      %v963 = vshrl.u32 %v727, 16
      %v965 = vrot.slane %v963, 7
      %v966 = vshll.u32 %v727, 16
      %v968 = vor.u32 %v965, %v966
      %v969 = vrot.slane %v965, 4
      %v971 = vshrl.u32 %v728, 16
      %v973 = vrot.slane %v971, 7
      %v974 = vshll.u32 %v728, 16
      %v976 = vor.u32 %v973, %v974
      %v977 = vrot.slane %v973, 4
      %v979 = vshrl.u32 %v729, 16
      %v981 = vrot.slane %v979, 7
      %v982 = vshll.u32 %v729, 16
      %v984 = vor.u32 %v981, %v982
      %v985 = vrot.slane %v981, 4
      %vm1050 = vcmask 1043456
      %vm1051 = vmand %vm1050, %vm536
      %v1052 = vld [vmem:[%s436] sm:$0xf]
      %v1053 = vsel %vm1051, %v736, %v1052
      %1054 = vst [vmem:[%s436] sm:$0xf] %v1053
      %v1055 = vld [vmem:[%s436 + $0x4] sm:$0x1]
      %v1056 = vsel %vm439, %v737, %v1055
      %1057 = vst [vmem:[%s436 + $0x4] sm:$0x1] %v1056
      %v1058 = vld [vmem:[%s436 + $0x8] sm:$0xf]
      %v1059 = vsel %vm1051, %v744, %v1058
      %1060 = vst [vmem:[%s436 + $0x8] sm:$0xf] %v1059
      %v1061 = vld [vmem:[%s436 + $0xc] sm:$0x1]
      %v1062 = vsel %vm439, %v745, %v1061
      %1063 = vst [vmem:[%s436 + $0xc] sm:$0x1] %v1062
      %v1064 = vld [vmem:[%s436 + $0x10] sm:$0xf]
      %v1065 = vsel %vm1051, %v752, %v1064
      %1066 = vst [vmem:[%s436 + $0x10] sm:$0xf] %v1065
      %v1067 = vld [vmem:[%s436 + $0x14] sm:$0x1]
      %v1068 = vsel %vm439, %v753, %v1067
      %1069 = vst [vmem:[%s436 + $0x14] sm:$0x1] %v1068
      %v1070 = vld [vmem:[%s436 + $0x18] sm:$0xf]
      %v1071 = vsel %vm1051, %v760, %v1070
      %1072 = vst [vmem:[%s436 + $0x18] sm:$0xf] %v1071
      %v1073 = vld [vmem:[%s436 + $0x1c] sm:$0x1]
      %v1074 = vsel %vm439, %v761, %v1073
      %1075 = vst [vmem:[%s436 + $0x1c] sm:$0x1] %v1074
      %v1076 = vld [vmem:[%s436 + $0x20] sm:$0xf]
      %v1077 = vsel %vm1051, %v768, %v1076
      %1078 = vst [vmem:[%s436 + $0x20] sm:$0xf] %v1077
      %v1079 = vld [vmem:[%s436 + $0x24] sm:$0x1]
      %v1080 = vsel %vm439, %v769, %v1079
      %1081 = vst [vmem:[%s436 + $0x24] sm:$0x1] %v1080
      %v1082 = vld [vmem:[%s436 + $0x28] sm:$0xf]
      %v1083 = vsel %vm1051, %v776, %v1082
      %1084 = vst [vmem:[%s436 + $0x28] sm:$0xf] %v1083
      %v1085 = vld [vmem:[%s436 + $0x2c] sm:$0x1]
      %v1086 = vsel %vm439, %v777, %v1085
      %1087 = vst [vmem:[%s436 + $0x2c] sm:$0x1] %v1086
      %v1088 = vld [vmem:[%s436 + $0x30] sm:$0xf]
      %v1089 = vsel %vm1051, %v784, %v1088
      %1090 = vst [vmem:[%s436 + $0x30] sm:$0xf] %v1089
      %v1091 = vld [vmem:[%s436 + $0x34] sm:$0x1]
      %v1092 = vsel %vm439, %v785, %v1091
      %1093 = vst [vmem:[%s436 + $0x34] sm:$0x1] %v1092
      %v1094 = vld [vmem:[%s436 + $0x38] sm:$0xf]
      %v1095 = vsel %vm1051, %v792, %v1094
      %1096 = vst [vmem:[%s436 + $0x38] sm:$0xf] %v1095
      %v1097 = vld [vmem:[%s436 + $0x3c] sm:$0x1]
      %v1098 = vsel %vm439, %v793, %v1097
      %1099 = vst [vmem:[%s436 + $0x3c] sm:$0x1] %v1098
      %v1100 = vld [vmem:[%s436 + $0x50] sm:$0xf]
      %v1101 = vsel %vm1051, %v800, %v1100
      %1102 = vst [vmem:[%s436 + $0x50] sm:$0xf] %v1101
      %v1103 = vld [vmem:[%s436 + $0x54] sm:$0x1]
      %v1104 = vsel %vm439, %v801, %v1103
      %1105 = vst [vmem:[%s436 + $0x54] sm:$0x1] %v1104
      %v1106 = vld [vmem:[%s436 + $0x58] sm:$0xf]
      %v1107 = vsel %vm1051, %v808, %v1106
      %1108 = vst [vmem:[%s436 + $0x58] sm:$0xf] %v1107
      %v1109 = vld [vmem:[%s436 + $0x5c] sm:$0x1]
      %v1110 = vsel %vm439, %v809, %v1109
      %1111 = vst [vmem:[%s436 + $0x5c] sm:$0x1] %v1110
      %v1112 = vld [vmem:[%s436 + $0x60] sm:$0xf]
      %v1113 = vsel %vm1051, %v816, %v1112
      %1114 = vst [vmem:[%s436 + $0x60] sm:$0xf] %v1113
      %v1115 = vld [vmem:[%s436 + $0x64] sm:$0x1]
      %v1116 = vsel %vm439, %v817, %v1115
      %1117 = vst [vmem:[%s436 + $0x64] sm:$0x1] %v1116
      %v1118 = vld [vmem:[%s436 + $0x68] sm:$0xf]
      %v1119 = vsel %vm1051, %v824, %v1118
      %1120 = vst [vmem:[%s436 + $0x68] sm:$0xf] %v1119
      %v1121 = vld [vmem:[%s436 + $0x6c] sm:$0x1]
      %v1122 = vsel %vm439, %v825, %v1121
      %1123 = vst [vmem:[%s436 + $0x6c] sm:$0x1] %v1122
      %v1124 = vld [vmem:[%s436 + $0x70] sm:$0xf]
      %v1125 = vsel %vm1051, %v832, %v1124
      %1126 = vst [vmem:[%s436 + $0x70] sm:$0xf] %v1125
      %v1127 = vld [vmem:[%s436 + $0x74] sm:$0x1]
      %v1128 = vsel %vm439, %v833, %v1127
      %1129 = vst [vmem:[%s436 + $0x74] sm:$0x1] %v1128
      %v1130 = vld [vmem:[%s436 + $0x78] sm:$0xf]
      %v1131 = vsel %vm1051, %v840, %v1130
      %1132 = vst [vmem:[%s436 + $0x78] sm:$0xf] %v1131
      %v1133 = vld [vmem:[%s436 + $0x7c] sm:$0x1]
      %v1134 = vsel %vm439, %v841, %v1133
      %1135 = vst [vmem:[%s436 + $0x7c] sm:$0x1] %v1134
      %v1136 = vld [vmem:[%s436 + $0x80] sm:$0xf]
      %v1137 = vsel %vm1051, %v848, %v1136
      %1138 = vst [vmem:[%s436 + $0x80] sm:$0xf] %v1137
      %v1139 = vld [vmem:[%s436 + $0x84] sm:$0x1]
      %v1140 = vsel %vm439, %v849, %v1139
      %1141 = vst [vmem:[%s436 + $0x84] sm:$0x1] %v1140
      %v1142 = vld [vmem:[%s436 + $0x88] sm:$0xf]
      %v1143 = vsel %vm1051, %v856, %v1142
      %1144 = vst [vmem:[%s436 + $0x88] sm:$0xf] %v1143
      %v1145 = vld [vmem:[%s436 + $0x8c] sm:$0x1]
      %v1146 = vsel %vm439, %v857, %v1145
      %1147 = vst [vmem:[%s436 + $0x8c] sm:$0x1] %v1146
      %v1148 = vld [vmem:[%s436 + $0xa0] sm:$0xf]
      %v1149 = vsel %vm1051, %v864, %v1148
      %1150 = vst [vmem:[%s436 + $0xa0] sm:$0xf] %v1149
      %v1151 = vld [vmem:[%s436 + $0xa4] sm:$0x1]
      %v1152 = vsel %vm439, %v865, %v1151
      %1153 = vst [vmem:[%s436 + $0xa4] sm:$0x1] %v1152
      %v1154 = vld [vmem:[%s436 + $0xa8] sm:$0xf]
      %v1155 = vsel %vm1051, %v872, %v1154
      %1156 = vst [vmem:[%s436 + $0xa8] sm:$0xf] %v1155
      %v1157 = vld [vmem:[%s436 + $0xac] sm:$0x1]
      %v1158 = vsel %vm439, %v873, %v1157
      %1159 = vst [vmem:[%s436 + $0xac] sm:$0x1] %v1158
      %v1160 = vld [vmem:[%s436 + $0xb0] sm:$0xf]
      %v1161 = vsel %vm1051, %v880, %v1160
      %1162 = vst [vmem:[%s436 + $0xb0] sm:$0xf] %v1161
      %v1163 = vld [vmem:[%s436 + $0xb4] sm:$0x1]
      %v1164 = vsel %vm439, %v881, %v1163
      %1165 = vst [vmem:[%s436 + $0xb4] sm:$0x1] %v1164
      %v1166 = vld [vmem:[%s436 + $0xb8] sm:$0xf]
      %v1167 = vsel %vm1051, %v888, %v1166
      %1168 = vst [vmem:[%s436 + $0xb8] sm:$0xf] %v1167
      %v1169 = vld [vmem:[%s436 + $0xbc] sm:$0x1]
      %v1170 = vsel %vm439, %v889, %v1169
      %1171 = vst [vmem:[%s436 + $0xbc] sm:$0x1] %v1170
      %v1172 = vld [vmem:[%s436 + $0xc0] sm:$0xf]
      %v1173 = vsel %vm1051, %v896, %v1172
      %1174 = vst [vmem:[%s436 + $0xc0] sm:$0xf] %v1173
      %v1175 = vld [vmem:[%s436 + $0xc4] sm:$0x1]
      %v1176 = vsel %vm439, %v897, %v1175
      %1177 = vst [vmem:[%s436 + $0xc4] sm:$0x1] %v1176
      %v1178 = vld [vmem:[%s436 + $0xc8] sm:$0xf]
      %v1179 = vsel %vm1051, %v904, %v1178
      %1180 = vst [vmem:[%s436 + $0xc8] sm:$0xf] %v1179
      %v1181 = vld [vmem:[%s436 + $0xcc] sm:$0x1]
      %v1182 = vsel %vm439, %v905, %v1181
      %1183 = vst [vmem:[%s436 + $0xcc] sm:$0x1] %v1182
      %v1184 = vld [vmem:[%s436 + $0xd0] sm:$0xf]
      %v1185 = vsel %vm1051, %v912, %v1184
      %1186 = vst [vmem:[%s436 + $0xd0] sm:$0xf] %v1185
      %v1187 = vld [vmem:[%s436 + $0xd4] sm:$0x1]
      %v1188 = vsel %vm439, %v913, %v1187
      %1189 = vst [vmem:[%s436 + $0xd4] sm:$0x1] %v1188
      %v1190 = vld [vmem:[%s436 + $0xd8] sm:$0xf]
      %v1191 = vsel %vm1051, %v920, %v1190
      %1192 = vst [vmem:[%s436 + $0xd8] sm:$0xf] %v1191
      %v1193 = vld [vmem:[%s436 + $0xdc] sm:$0x1]
      %v1194 = vsel %vm439, %v921, %v1193
      %1195 = vst [vmem:[%s436 + $0xdc] sm:$0x1] %v1194
      %v1196 = vld [vmem:[%s436 + $0xf0] sm:$0xf]
      %v1197 = vsel %vm1051, %v928, %v1196
      %1198 = vst [vmem:[%s436 + $0xf0] sm:$0xf] %v1197
      %v1199 = vld [vmem:[%s436 + $0xf4] sm:$0x1]
      %v1200 = vsel %vm439, %v929, %v1199
      %1201 = vst [vmem:[%s436 + $0xf4] sm:$0x1] %v1200
      %v1202 = vld [vmem:[%s436 + $0xf8] sm:$0xf]
      %v1203 = vsel %vm1051, %v936, %v1202
      %1204 = vst [vmem:[%s436 + $0xf8] sm:$0xf] %v1203
      %v1205 = vld [vmem:[%s436 + $0xfc] sm:$0x1]
      %v1206 = vsel %vm439, %v937, %v1205
      %1207 = vst [vmem:[%s436 + $0xfc] sm:$0x1] %v1206
      %v1208 = vld [vmem:[%s436 + $0x100] sm:$0xf]
      %v1209 = vsel %vm1051, %v944, %v1208
      %1210 = vst [vmem:[%s436 + $0x100] sm:$0xf] %v1209
      %v1211 = vld [vmem:[%s436 + $0x104] sm:$0x1]
      %v1212 = vsel %vm439, %v945, %v1211
      %1213 = vst [vmem:[%s436 + $0x104] sm:$0x1] %v1212
      %v1214 = vld [vmem:[%s436 + $0x108] sm:$0xf]
      %v1215 = vsel %vm1051, %v952, %v1214
      %1216 = vst [vmem:[%s436 + $0x108] sm:$0xf] %v1215
      %v1217 = vld [vmem:[%s436 + $0x10c] sm:$0x1]
      %v1218 = vsel %vm439, %v953, %v1217
      %1219 = vst [vmem:[%s436 + $0x10c] sm:$0x1] %v1218
      %v1220 = vld [vmem:[%s436 + $0x110] sm:$0xf]
      %v1221 = vsel %vm1051, %v960, %v1220
      %1222 = vst [vmem:[%s436 + $0x110] sm:$0xf] %v1221
      %v1223 = vld [vmem:[%s436 + $0x114] sm:$0x1]
      %v1224 = vsel %vm439, %v961, %v1223
      %1225 = vst [vmem:[%s436 + $0x114] sm:$0x1] %v1224
      %v1226 = vld [vmem:[%s436 + $0x118] sm:$0xf]
      %v1227 = vsel %vm1051, %v968, %v1226
      %1228 = vst [vmem:[%s436 + $0x118] sm:$0xf] %v1227
      %v1229 = vld [vmem:[%s436 + $0x11c] sm:$0x1]
      %v1230 = vsel %vm439, %v969, %v1229
      %1231 = vst [vmem:[%s436 + $0x11c] sm:$0x1] %v1230
      %v1232 = vld [vmem:[%s436 + $0x120] sm:$0xf]
      %v1233 = vsel %vm1051, %v976, %v1232
      %1234 = vst [vmem:[%s436 + $0x120] sm:$0xf] %v1233
      %v1235 = vld [vmem:[%s436 + $0x124] sm:$0x1]
      %v1236 = vsel %vm439, %v977, %v1235
      %1237 = vst [vmem:[%s436 + $0x124] sm:$0x1] %v1236
      %v1238 = vld [vmem:[%s436 + $0x128] sm:$0xf]
      %v1239 = vsel %vm1051, %v984, %v1238
      %1240 = vst [vmem:[%s436 + $0x128] sm:$0xf] %v1239
      %v1241 = vld [vmem:[%s436 + $0x12c] sm:$0x1]
      %v1242 = vsel %vm439, %v985, %v1241
      %1243 = vst [vmem:[%s436 + $0x12c] sm:$0x1] %v1242
      %v1244 = vld [vmem:[#allocation2] sm:$0xf]
      %v1245 = vld [vmem:[#allocation2 + $0x8] sm:$0xf]
      %v1246 = vld [vmem:[#allocation2 + $0x10] sm:$0xf]
      %v1247 = vld [vmem:[#allocation2 + $0x18] sm:$0xf]
      %v1248 = vld [vmem:[#allocation2 + $0x20] sm:$0xf]
      %v1249 = vld [vmem:[#allocation2 + $0x28] sm:$0xf]
      %v1250 = vld [vmem:[#allocation2 + $0x30] sm:$0xf]
      %v1251 = vld [vmem:[#allocation2 + $0x38] sm:$0xf]
      %v1252 = vld [vmem:[#allocation2 + $0x50] sm:$0xf]
      %v1253 = vld [vmem:[#allocation2 + $0x58] sm:$0xf]
      %v1254 = vld [vmem:[#allocation2 + $0x60] sm:$0xf]
      %v1255 = vld [vmem:[#allocation2 + $0x68] sm:$0xf]
      %v1256 = vld [vmem:[#allocation2 + $0x70] sm:$0xf]
      %v1257 = vld [vmem:[#allocation2 + $0x78] sm:$0xf]
      %v1258 = vld [vmem:[#allocation2 + $0x80] sm:$0xf]
      %v1259 = vld [vmem:[#allocation2 + $0x88] sm:$0xf]
      %v1260 = vld [vmem:[#allocation2 + $0xa0] sm:$0xf]
      %v1261 = vld [vmem:[#allocation2 + $0xa8] sm:$0xf]
      %v1262 = vld [vmem:[#allocation2 + $0xb0] sm:$0xf]
      %v1263 = vld [vmem:[#allocation2 + $0xb8] sm:$0xf]
      %v1264 = vld [vmem:[#allocation2 + $0xc0] sm:$0xf]
      %v1265 = vld [vmem:[#allocation2 + $0xc8] sm:$0xf]
      %v1266 = vld [vmem:[#allocation2 + $0xd0] sm:$0xf]
      %v1267 = vld [vmem:[#allocation2 + $0xd8] sm:$0xf]
      %v1268 = vld [vmem:[#allocation2 + $0xf0] sm:$0xf]
      %v1269 = vld [vmem:[#allocation2 + $0xf8] sm:$0xf]
      %v1270 = vld [vmem:[#allocation2 + $0x100] sm:$0xf]
      %v1271 = vld [vmem:[#allocation2 + $0x108] sm:$0xf]
      %v1272 = vld [vmem:[#allocation2 + $0x110] sm:$0xf]
      %v1273 = vld [vmem:[#allocation2 + $0x118] sm:$0xf]
      %v1274 = vld [vmem:[#allocation2 + $0x120] sm:$0xf]
      %v1275 = vld [vmem:[#allocation2 + $0x128] sm:$0xf]
      %v1276 = vld [vmem:[#allocation2 + $0x4] sm:$0x1]
      %v1277 = vld [vmem:[#allocation2 + $0xc] sm:$0x1]
      %v1278 = vld [vmem:[#allocation2 + $0x14] sm:$0x1]
      %v1279 = vld [vmem:[#allocation2 + $0x1c] sm:$0x1]
      %v1280 = vld [vmem:[#allocation2 + $0x24] sm:$0x1]
      %v1281 = vld [vmem:[#allocation2 + $0x2c] sm:$0x1]
      %v1282 = vld [vmem:[#allocation2 + $0x34] sm:$0x1]
      %v1283 = vld [vmem:[#allocation2 + $0x3c] sm:$0x1]
      %v1284 = vld [vmem:[#allocation2 + $0x54] sm:$0x1]
      %v1285 = vld [vmem:[#allocation2 + $0x5c] sm:$0x1]
      %v1286 = vld [vmem:[#allocation2 + $0x64] sm:$0x1]
      %v1287 = vld [vmem:[#allocation2 + $0x6c] sm:$0x1]
      %v1288 = vld [vmem:[#allocation2 + $0x74] sm:$0x1]
      %v1289 = vld [vmem:[#allocation2 + $0x7c] sm:$0x1]
      %v1290 = vld [vmem:[#allocation2 + $0x84] sm:$0x1]
      %v1291 = vld [vmem:[#allocation2 + $0x8c] sm:$0x1]
      %v1292 = vld [vmem:[#allocation2 + $0xa4] sm:$0x1]
      %v1293 = vld [vmem:[#allocation2 + $0xac] sm:$0x1]
      %v1294 = vld [vmem:[#allocation2 + $0xb4] sm:$0x1]
      %v1295 = vld [vmem:[#allocation2 + $0xbc] sm:$0x1]
      %v1296 = vld [vmem:[#allocation2 + $0xc4] sm:$0x1]
      %v1297 = vld [vmem:[#allocation2 + $0xcc] sm:$0x1]
      %v1298 = vld [vmem:[#allocation2 + $0xd4] sm:$0x1]
      %v1299 = vld [vmem:[#allocation2 + $0xdc] sm:$0x1]
      %v1300 = vld [vmem:[#allocation2 + $0xf4] sm:$0x1]
      %v1301 = vld [vmem:[#allocation2 + $0xfc] sm:$0x1]
      %v1302 = vld [vmem:[#allocation2 + $0x104] sm:$0x1]
      %v1303 = vld [vmem:[#allocation2 + $0x10c] sm:$0x1]
      %v1304 = vld [vmem:[#allocation2 + $0x114] sm:$0x1]
      %v1305 = vld [vmem:[#allocation2 + $0x11c] sm:$0x1]
      %v1306 = vld [vmem:[#allocation2 + $0x124] sm:$0x1]
      %v1307 = vld [vmem:[#allocation2 + $0x12c] sm:$0x1]
      %v1308 = vld [vmem:[#allocation2] sm:$0xe]
      %v1309 = vld [vmem:[#allocation2 + $0x8] sm:$0xe]
      %v1310 = vld [vmem:[#allocation2 + $0x10] sm:$0xe]
      %v1311 = vld [vmem:[#allocation2 + $0x18] sm:$0xe]
      %v1312 = vld [vmem:[#allocation2 + $0x20] sm:$0xe]
      %v1313 = vld [vmem:[#allocation2 + $0x28] sm:$0xe]
      %v1314 = vld [vmem:[#allocation2 + $0x30] sm:$0xe]
      %v1315 = vld [vmem:[#allocation2 + $0x38] sm:$0xe]
      %v1316 = vld [vmem:[#allocation2 + $0x50] sm:$0xe]
      %v1317 = vld [vmem:[#allocation2 + $0x58] sm:$0xe]
      %v1318 = vld [vmem:[#allocation2 + $0x60] sm:$0xe]
      %v1319 = vld [vmem:[#allocation2 + $0x68] sm:$0xe]
      %v1320 = vld [vmem:[#allocation2 + $0x70] sm:$0xe]
      %v1321 = vld [vmem:[#allocation2 + $0x78] sm:$0xe]
      %v1322 = vld [vmem:[#allocation2 + $0x80] sm:$0xe]
      %v1323 = vld [vmem:[#allocation2 + $0x88] sm:$0xe]
      %v1324 = vld [vmem:[#allocation2 + $0xa0] sm:$0xe]
      %v1325 = vld [vmem:[#allocation2 + $0xa8] sm:$0xe]
      %v1326 = vld [vmem:[#allocation2 + $0xb0] sm:$0xe]
      %v1327 = vld [vmem:[#allocation2 + $0xb8] sm:$0xe]
      %v1328 = vld [vmem:[#allocation2 + $0xc0] sm:$0xe]
      %v1329 = vld [vmem:[#allocation2 + $0xc8] sm:$0xe]
      %v1330 = vld [vmem:[#allocation2 + $0xd0] sm:$0xe]
      %v1331 = vld [vmem:[#allocation2 + $0xd8] sm:$0xe]
      %v1332 = vld [vmem:[#allocation2 + $0xf0] sm:$0xe]
      %v1333 = vld [vmem:[#allocation2 + $0xf8] sm:$0xe]
      %v1334 = vld [vmem:[#allocation2 + $0x100] sm:$0xe]
      %v1335 = vld [vmem:[#allocation2 + $0x108] sm:$0xe]
      %v1336 = vld [vmem:[#allocation2 + $0x110] sm:$0xe]
      %v1337 = vld [vmem:[#allocation2 + $0x118] sm:$0xe]
      %v1338 = vld [vmem:[#allocation2 + $0x120] sm:$0xe]
      %v1339 = vld [vmem:[#allocation2 + $0x128] sm:$0xe]
      %v1404 = vunpack.c.l.b16 %v1244
      %v1405 = vunpack.c.l.b16 %v1276
      %v1406 = vunpack.c.l.b16 %v1245
      %v1407 = vunpack.c.l.b16 %v1277
      %v1408 = vunpack.c.l.b16 %v1246
      %v1409 = vunpack.c.l.b16 %v1278
      %v1410 = vunpack.c.l.b16 %v1247
      %v1411 = vunpack.c.l.b16 %v1279
      %v1412 = vunpack.c.l.b16 %v1248
      %v1413 = vunpack.c.l.b16 %v1280
      %v1414 = vunpack.c.l.b16 %v1249
      %v1415 = vunpack.c.l.b16 %v1281
      %v1416 = vunpack.c.l.b16 %v1250
      %v1417 = vunpack.c.l.b16 %v1282
      %v1418 = vunpack.c.l.b16 %v1251
      %v1419 = vunpack.c.l.b16 %v1283
      %v1420 = vunpack.c.l.b16 %v1252
      %v1421 = vunpack.c.l.b16 %v1284
      %v1422 = vunpack.c.l.b16 %v1253
      %v1423 = vunpack.c.l.b16 %v1285
      %v1424 = vunpack.c.l.b16 %v1254
      %v1425 = vunpack.c.l.b16 %v1286
      %v1426 = vunpack.c.l.b16 %v1255
      %v1427 = vunpack.c.l.b16 %v1287
      %v1428 = vunpack.c.l.b16 %v1256
      %v1429 = vunpack.c.l.b16 %v1288
      %v1430 = vunpack.c.l.b16 %v1257
      %v1431 = vunpack.c.l.b16 %v1289
      %v1432 = vunpack.c.l.b16 %v1258
      %v1433 = vunpack.c.l.b16 %v1290
      %v1434 = vunpack.c.l.b16 %v1259
      %v1435 = vunpack.c.l.b16 %v1291
      %v1436 = vunpack.c.l.b16 %v1260
      %v1437 = vunpack.c.l.b16 %v1292
      %v1438 = vunpack.c.l.b16 %v1261
      %v1439 = vunpack.c.l.b16 %v1293
      %v1440 = vunpack.c.l.b16 %v1262
      %v1441 = vunpack.c.l.b16 %v1294
      %v1442 = vunpack.c.l.b16 %v1263
      %v1443 = vunpack.c.l.b16 %v1295
      %v1444 = vunpack.c.l.b16 %v1264
      %v1445 = vunpack.c.l.b16 %v1296
      %v1446 = vunpack.c.l.b16 %v1265
      %v1447 = vunpack.c.l.b16 %v1297
      %v1448 = vunpack.c.l.b16 %v1266
      %v1449 = vunpack.c.l.b16 %v1298
      %v1450 = vunpack.c.l.b16 %v1267
      %v1451 = vunpack.c.l.b16 %v1299
      %v1452 = vunpack.c.l.b16 %v1268
      %v1453 = vunpack.c.l.b16 %v1300
      %v1454 = vunpack.c.l.b16 %v1269
      %v1455 = vunpack.c.l.b16 %v1301
      %v1456 = vunpack.c.l.b16 %v1270
      %v1457 = vunpack.c.l.b16 %v1302
      %v1458 = vunpack.c.l.b16 %v1271
      %v1459 = vunpack.c.l.b16 %v1303
      %v1460 = vunpack.c.l.b16 %v1272
      %v1461 = vunpack.c.l.b16 %v1304
      %v1462 = vunpack.c.l.b16 %v1273
      %v1463 = vunpack.c.l.b16 %v1305
      %v1464 = vunpack.c.l.b16 %v1274
      %v1465 = vunpack.c.l.b16 %v1306
      %v1466 = vunpack.c.l.b16 %v1275
      %v1467 = vunpack.c.l.b16 %v1307
      %v1468 = vpack.c.b16 %v1405, %v1404
      %v1469 = vpack.c.b16 %v1407, %v1406
      %v1470 = vpack.c.b16 %v1409, %v1408
      %v1471 = vpack.c.b16 %v1411, %v1410
      %v1472 = vpack.c.b16 %v1413, %v1412
      %v1473 = vpack.c.b16 %v1415, %v1414
      %v1474 = vpack.c.b16 %v1417, %v1416
      %v1475 = vpack.c.b16 %v1419, %v1418
      %v1476 = vpack.c.b16 %v1421, %v1420
      %v1477 = vpack.c.b16 %v1423, %v1422
      %v1478 = vpack.c.b16 %v1425, %v1424
      %v1479 = vpack.c.b16 %v1427, %v1426
      %v1480 = vpack.c.b16 %v1429, %v1428
      %v1481 = vpack.c.b16 %v1431, %v1430
      %v1482 = vpack.c.b16 %v1433, %v1432
      %v1483 = vpack.c.b16 %v1435, %v1434
      %v1484 = vpack.c.b16 %v1437, %v1436
      %v1485 = vpack.c.b16 %v1439, %v1438
      %v1486 = vpack.c.b16 %v1441, %v1440
      %v1487 = vpack.c.b16 %v1443, %v1442
      %v1488 = vpack.c.b16 %v1445, %v1444
      %v1489 = vpack.c.b16 %v1447, %v1446
      %v1490 = vpack.c.b16 %v1449, %v1448
      %v1491 = vpack.c.b16 %v1451, %v1450
      %v1492 = vpack.c.b16 %v1453, %v1452
      %v1493 = vpack.c.b16 %v1455, %v1454
      %v1494 = vpack.c.b16 %v1457, %v1456
      %v1495 = vpack.c.b16 %v1459, %v1458
      %v1496 = vpack.c.b16 %v1461, %v1460
      %v1497 = vpack.c.b16 %v1463, %v1462
      %v1498 = vpack.c.b16 %v1465, %v1464
      %v1499 = vpack.c.b16 %v1467, %v1466
      %v1501 = vshrl.u32 %v1468, 16
      %v1503 = vshll.u32 %v1468, 16
      %v1505 = vrot.slane %v1503, 1
      %v1506 = vor.u32 %v1501, %v1505
      %v1508 = vshrl.u32 %v1469, 16
      %v1510 = vshll.u32 %v1469, 16
      %v1512 = vrot.slane %v1510, 1
      %v1513 = vor.u32 %v1508, %v1512
      %v1515 = vshrl.u32 %v1470, 16
      %v1517 = vshll.u32 %v1470, 16
      %v1519 = vrot.slane %v1517, 1
      %v1520 = vor.u32 %v1515, %v1519
      %v1522 = vshrl.u32 %v1471, 16
      %v1524 = vshll.u32 %v1471, 16
      %v1526 = vrot.slane %v1524, 1
      %v1527 = vor.u32 %v1522, %v1526
      %v1529 = vshrl.u32 %v1472, 16
      %v1531 = vshll.u32 %v1472, 16
      %v1533 = vrot.slane %v1531, 1
      %v1534 = vor.u32 %v1529, %v1533
      %v1536 = vshrl.u32 %v1473, 16
      %v1538 = vshll.u32 %v1473, 16
      %v1540 = vrot.slane %v1538, 1
      %v1541 = vor.u32 %v1536, %v1540
      %v1543 = vshrl.u32 %v1474, 16
      %v1545 = vshll.u32 %v1474, 16
      %v1547 = vrot.slane %v1545, 1
      %v1548 = vor.u32 %v1543, %v1547
      %v1550 = vshrl.u32 %v1475, 16
      %v1552 = vshll.u32 %v1475, 16
      %v1554 = vrot.slane %v1552, 1
      %v1555 = vor.u32 %v1550, %v1554
      %v1557 = vshrl.u32 %v1476, 16
      %v1559 = vshll.u32 %v1476, 16
      %v1561 = vrot.slane %v1559, 1
      %v1562 = vor.u32 %v1557, %v1561
      %v1564 = vshrl.u32 %v1477, 16
      %v1566 = vshll.u32 %v1477, 16
      %v1568 = vrot.slane %v1566, 1
      %v1569 = vor.u32 %v1564, %v1568
      %v1571 = vshrl.u32 %v1478, 16
      %v1573 = vshll.u32 %v1478, 16
      %v1575 = vrot.slane %v1573, 1
      %v1576 = vor.u32 %v1571, %v1575
      %v1578 = vshrl.u32 %v1479, 16
      %v1580 = vshll.u32 %v1479, 16
      %v1582 = vrot.slane %v1580, 1
      %v1583 = vor.u32 %v1578, %v1582
      %v1585 = vshrl.u32 %v1480, 16
      %v1587 = vshll.u32 %v1480, 16
      %v1589 = vrot.slane %v1587, 1
      %v1590 = vor.u32 %v1585, %v1589
      %v1592 = vshrl.u32 %v1481, 16
      %v1594 = vshll.u32 %v1481, 16
      %v1596 = vrot.slane %v1594, 1
      %v1597 = vor.u32 %v1592, %v1596
      %v1599 = vshrl.u32 %v1482, 16
      %v1601 = vshll.u32 %v1482, 16
      %v1603 = vrot.slane %v1601, 1
      %v1604 = vor.u32 %v1599, %v1603
      %v1606 = vshrl.u32 %v1483, 16
      %v1608 = vshll.u32 %v1483, 16
      %v1610 = vrot.slane %v1608, 1
      %v1611 = vor.u32 %v1606, %v1610
      %v1613 = vshrl.u32 %v1484, 16
      %v1615 = vshll.u32 %v1484, 16
      %v1617 = vrot.slane %v1615, 1
      %v1618 = vor.u32 %v1613, %v1617
      %v1620 = vshrl.u32 %v1485, 16
      %v1622 = vshll.u32 %v1485, 16
      %v1624 = vrot.slane %v1622, 1
      %v1625 = vor.u32 %v1620, %v1624
      %v1627 = vshrl.u32 %v1486, 16
      %v1629 = vshll.u32 %v1486, 16
      %v1631 = vrot.slane %v1629, 1
      %v1632 = vor.u32 %v1627, %v1631
      %v1634 = vshrl.u32 %v1487, 16
      %v1636 = vshll.u32 %v1487, 16
      %v1638 = vrot.slane %v1636, 1
      %v1639 = vor.u32 %v1634, %v1638
      %v1641 = vshrl.u32 %v1488, 16
      %v1643 = vshll.u32 %v1488, 16
      %v1645 = vrot.slane %v1643, 1
      %v1646 = vor.u32 %v1641, %v1645
      %v1648 = vshrl.u32 %v1489, 16
      %v1650 = vshll.u32 %v1489, 16
      %v1652 = vrot.slane %v1650, 1
      %v1653 = vor.u32 %v1648, %v1652
      %v1655 = vshrl.u32 %v1490, 16
      %v1657 = vshll.u32 %v1490, 16
      %v1659 = vrot.slane %v1657, 1
      %v1660 = vor.u32 %v1655, %v1659
      %v1662 = vshrl.u32 %v1491, 16
      %v1664 = vshll.u32 %v1491, 16
      %v1666 = vrot.slane %v1664, 1
      %v1667 = vor.u32 %v1662, %v1666
      %v1669 = vshrl.u32 %v1492, 16
      %v1671 = vshll.u32 %v1492, 16
      %v1673 = vrot.slane %v1671, 1
      %v1674 = vor.u32 %v1669, %v1673
      %v1676 = vshrl.u32 %v1493, 16
      %v1678 = vshll.u32 %v1493, 16
      %v1680 = vrot.slane %v1678, 1
      %v1681 = vor.u32 %v1676, %v1680
      %v1683 = vshrl.u32 %v1494, 16
      %v1685 = vshll.u32 %v1494, 16
      %v1687 = vrot.slane %v1685, 1
      %v1688 = vor.u32 %v1683, %v1687
      %v1690 = vshrl.u32 %v1495, 16
      %v1692 = vshll.u32 %v1495, 16
      %v1694 = vrot.slane %v1692, 1
      %v1695 = vor.u32 %v1690, %v1694
      %v1697 = vshrl.u32 %v1496, 16
      %v1699 = vshll.u32 %v1496, 16
      %v1701 = vrot.slane %v1699, 1
      %v1702 = vor.u32 %v1697, %v1701
      %v1704 = vshrl.u32 %v1497, 16
      %v1706 = vshll.u32 %v1497, 16
      %v1708 = vrot.slane %v1706, 1
      %v1709 = vor.u32 %v1704, %v1708
      %v1711 = vshrl.u32 %v1498, 16
      %v1713 = vshll.u32 %v1498, 16
      %v1715 = vrot.slane %v1713, 1
      %v1716 = vor.u32 %v1711, %v1715
      %v1718 = vshrl.u32 %v1499, 16
      %v1720 = vshll.u32 %v1499, 16
      %v1722 = vrot.slane %v1720, 1
      %v1723 = vor.u32 %v1718, %v1722
      %v1756 = vunpack.c.l.b16 %v1308
      %v1757 = vunpack.c.l.b16 %v1309
      %v1758 = vunpack.c.l.b16 %v1310
      %v1759 = vunpack.c.l.b16 %v1311
      %v1760 = vunpack.c.l.b16 %v1312
      %v1761 = vunpack.c.l.b16 %v1313
      %v1762 = vunpack.c.l.b16 %v1314
      %v1763 = vunpack.c.l.b16 %v1315
      %v1764 = vunpack.c.l.b16 %v1316
      %v1765 = vunpack.c.l.b16 %v1317
      %v1766 = vunpack.c.l.b16 %v1318
      %v1767 = vunpack.c.l.b16 %v1319
      %v1768 = vunpack.c.l.b16 %v1320
      %v1769 = vunpack.c.l.b16 %v1321
      %v1770 = vunpack.c.l.b16 %v1322
      %v1771 = vunpack.c.l.b16 %v1323
      %v1772 = vunpack.c.l.b16 %v1324
      %v1773 = vunpack.c.l.b16 %v1325
      %v1774 = vunpack.c.l.b16 %v1326
      %v1775 = vunpack.c.l.b16 %v1327
      %v1776 = vunpack.c.l.b16 %v1328
      %v1777 = vunpack.c.l.b16 %v1329
      %v1778 = vunpack.c.l.b16 %v1330
      %v1779 = vunpack.c.l.b16 %v1331
      %v1780 = vunpack.c.l.b16 %v1332
      %v1781 = vunpack.c.l.b16 %v1333
      %v1782 = vunpack.c.l.b16 %v1334
      %v1783 = vunpack.c.l.b16 %v1335
      %v1784 = vunpack.c.l.b16 %v1336
      %v1785 = vunpack.c.l.b16 %v1337
      %v1786 = vunpack.c.l.b16 %v1338
      %v1787 = vunpack.c.l.b16 %v1339
      %v1788 = vpack.c.b16 %v1405, %v1756
      %v1789 = vpack.c.b16 %v1407, %v1757
      %v1790 = vpack.c.b16 %v1409, %v1758
      %v1791 = vpack.c.b16 %v1411, %v1759
      %v1792 = vpack.c.b16 %v1413, %v1760
      %v1793 = vpack.c.b16 %v1415, %v1761
      %v1794 = vpack.c.b16 %v1417, %v1762
      %v1795 = vpack.c.b16 %v1419, %v1763
      %v1796 = vpack.c.b16 %v1421, %v1764
      %v1797 = vpack.c.b16 %v1423, %v1765
      %v1798 = vpack.c.b16 %v1425, %v1766
      %v1799 = vpack.c.b16 %v1427, %v1767
      %v1800 = vpack.c.b16 %v1429, %v1768
      %v1801 = vpack.c.b16 %v1431, %v1769
      %v1802 = vpack.c.b16 %v1433, %v1770
      %v1803 = vpack.c.b16 %v1435, %v1771
      %v1804 = vpack.c.b16 %v1437, %v1772
      %v1805 = vpack.c.b16 %v1439, %v1773
      %v1806 = vpack.c.b16 %v1441, %v1774
      %v1807 = vpack.c.b16 %v1443, %v1775
      %v1808 = vpack.c.b16 %v1445, %v1776
      %v1809 = vpack.c.b16 %v1447, %v1777
      %v1810 = vpack.c.b16 %v1449, %v1778
      %v1811 = vpack.c.b16 %v1451, %v1779
      %v1812 = vpack.c.b16 %v1453, %v1780
      %v1813 = vpack.c.b16 %v1455, %v1781
      %v1814 = vpack.c.b16 %v1457, %v1782
      %v1815 = vpack.c.b16 %v1459, %v1783
      %v1816 = vpack.c.b16 %v1461, %v1784
      %v1817 = vpack.c.b16 %v1463, %v1785
      %v1818 = vpack.c.b16 %v1465, %v1786
      %v1819 = vpack.c.b16 %v1467, %v1787
      %v1820 = vrot.slane %v1788, 1
      %v1821 = vrot.slane %v1789, 1
      %v1822 = vrot.slane %v1790, 1
      %v1823 = vrot.slane %v1791, 1
      %v1824 = vrot.slane %v1792, 1
      %v1825 = vrot.slane %v1793, 1
      %v1826 = vrot.slane %v1794, 1
      %v1827 = vrot.slane %v1795, 1
      %v1828 = vrot.slane %v1796, 1
      %v1829 = vrot.slane %v1797, 1
      %v1830 = vrot.slane %v1798, 1
      %v1831 = vrot.slane %v1799, 1
      %v1832 = vrot.slane %v1800, 1
      %v1833 = vrot.slane %v1801, 1
      %v1834 = vrot.slane %v1802, 1
      %v1835 = vrot.slane %v1803, 1
      %v1836 = vrot.slane %v1804, 1
      %v1837 = vrot.slane %v1805, 1
      %v1838 = vrot.slane %v1806, 1
      %v1839 = vrot.slane %v1807, 1
      %v1840 = vrot.slane %v1808, 1
      %v1841 = vrot.slane %v1809, 1
      %v1842 = vrot.slane %v1810, 1
      %v1843 = vrot.slane %v1811, 1
      %v1844 = vrot.slane %v1812, 1
      %v1845 = vrot.slane %v1813, 1
      %v1846 = vrot.slane %v1814, 1
      %v1847 = vrot.slane %v1815, 1
      %v1848 = vrot.slane %v1816, 1
      %v1849 = vrot.slane %v1817, 1
      %v1850 = vrot.slane %v1818, 1
      %v1851 = vrot.slane %v1819, 1
      %v1852 = vld [vmem:[%s2] sm:$0xf]
      %v1853 = vld [vmem:[%s2 + $0x4] sm:$0xf]
      %v1854 = vld [vmem:[%s2 + $0x8] sm:$0xf]
      %v1855 = vld [vmem:[%s2 + $0xc] sm:$0xf]
      %v1856 = vld [vmem:[%s2 + $0x10] sm:$0xf]
      %v1857 = vld [vmem:[%s2 + $0x14] sm:$0xf]
      %v1858 = vld [vmem:[%s2 + $0x18] sm:$0xf]
      %v1859 = vld [vmem:[%s2 + $0x1c] sm:$0xf]
      %v1860 = vld [vmem:[%s2 + $0x20] sm:$0xf]
      %v1861 = vld [vmem:[%s2 + $0x24] sm:$0xf]
      %v1862 = vld [vmem:[%s2 + $0x28] sm:$0xf]
      %v1863 = vld [vmem:[%s2 + $0x2c] sm:$0xf]
      %v1864 = vld [vmem:[%s2 + $0x30] sm:$0xf]
      %v1865 = vld [vmem:[%s2 + $0x34] sm:$0xf]
      %v1866 = vld [vmem:[%s2 + $0x38] sm:$0xf]
      %v1867 = vld [vmem:[%s2 + $0x3c] sm:$0xf]
      %v1868 = vld [vmem:[%s2 + $0x40] sm:$0xf]
      %v1869 = vld [vmem:[%s2 + $0x44] sm:$0xf]
      %v1870 = vld [vmem:[%s2 + $0x48] sm:$0xf]
      %v1871 = vld [vmem:[%s2 + $0x4c] sm:$0xf]
      %v1872 = vld [vmem:[%s2 + $0x50] sm:$0xf]
      %v1873 = vld [vmem:[%s2 + $0x54] sm:$0xf]
      %v1874 = vld [vmem:[%s2 + $0x58] sm:$0xf]
      %v1875 = vld [vmem:[%s2 + $0x5c] sm:$0xf]
      %v1876 = vld [vmem:[%s2 + $0x60] sm:$0xf]
      %v1877 = vld [vmem:[%s2 + $0x64] sm:$0xf]
      %v1878 = vld [vmem:[%s2 + $0x68] sm:$0xf]
      %v1879 = vld [vmem:[%s2 + $0x6c] sm:$0xf]
      %v1880 = vld [vmem:[%s2 + $0x70] sm:$0xf]
      %v1881 = vld [vmem:[%s2 + $0x74] sm:$0xf]
      %v1882 = vld [vmem:[%s2 + $0x78] sm:$0xf]
      %v1883 = vld [vmem:[%s2 + $0x7c] sm:$0xf]
      %v1884 = vld [vmem:[%s2 + $0x80] sm:$0xf]
      %v1885 = vld [vmem:[%s2 + $0x84] sm:$0xf]
      %v1886 = vld [vmem:[%s2 + $0x88] sm:$0xf]
      %v1887 = vld [vmem:[%s2 + $0x8c] sm:$0xf]
      %v1888 = vld [vmem:[%s2 + $0x90] sm:$0xf]
      %v1889 = vld [vmem:[%s2 + $0x94] sm:$0xf]
      %v1890 = vld [vmem:[%s2 + $0x98] sm:$0xf]
      %v1891 = vld [vmem:[%s2 + $0x9c] sm:$0xf]
      %v1892 = vld [vmem:[%s2 + $0xa0] sm:$0xf]
      %v1893 = vld [vmem:[%s2 + $0xa4] sm:$0xf]
      %v1894 = vld [vmem:[%s2 + $0xa8] sm:$0xf]
      %v1895 = vld [vmem:[%s2 + $0xac] sm:$0xf]
      %v1896 = vld [vmem:[%s2 + $0xb0] sm:$0xf]
      %v1897 = vld [vmem:[%s2 + $0xb4] sm:$0xf]
      %v1898 = vld [vmem:[%s2 + $0xb8] sm:$0xf]
      %v1899 = vld [vmem:[%s2 + $0xbc] sm:$0xf]
      %v1900 = vld [vmem:[%s436] sm:$0xf]
      %v1901 = vld [vmem:[%s436 + $0x8] sm:$0xf]
      %v1902 = vld [vmem:[%s436 + $0x10] sm:$0xf]
      %v1903 = vld [vmem:[%s436 + $0x18] sm:$0xf]
      %v1904 = vld [vmem:[%s436 + $0x20] sm:$0xf]
      %v1905 = vld [vmem:[%s436 + $0x28] sm:$0xf]
      %v1906 = vld [vmem:[%s436 + $0x30] sm:$0xf]
      %v1907 = vld [vmem:[%s436 + $0x38] sm:$0xf]
      %v1908 = vld [vmem:[%s436 + $0x50] sm:$0xf]
      %v1909 = vld [vmem:[%s436 + $0x58] sm:$0xf]
      %v1910 = vld [vmem:[%s436 + $0x60] sm:$0xf]
      %v1911 = vld [vmem:[%s436 + $0x68] sm:$0xf]
      %v1912 = vld [vmem:[%s436 + $0x70] sm:$0xf]
      %v1913 = vld [vmem:[%s436 + $0x78] sm:$0xf]
      %v1914 = vld [vmem:[%s436 + $0x80] sm:$0xf]
      %v1915 = vld [vmem:[%s436 + $0x88] sm:$0xf]
      %v1916 = vld [vmem:[%s436 + $0xa0] sm:$0xf]
      %v1917 = vld [vmem:[%s436 + $0xa8] sm:$0xf]
      %v1918 = vld [vmem:[%s436 + $0xb0] sm:$0xf]
      %v1919 = vld [vmem:[%s436 + $0xb8] sm:$0xf]
      %v1920 = vld [vmem:[%s436 + $0xc0] sm:$0xf]
      %v1921 = vld [vmem:[%s436 + $0xc8] sm:$0xf]
      %v1922 = vld [vmem:[%s436 + $0xd0] sm:$0xf]
      %v1923 = vld [vmem:[%s436 + $0xd8] sm:$0xf]
      %v1924 = vld [vmem:[%s436 + $0xf0] sm:$0xf]
      %v1925 = vld [vmem:[%s436 + $0xf8] sm:$0xf]
      %v1926 = vld [vmem:[%s436 + $0x100] sm:$0xf]
      %v1927 = vld [vmem:[%s436 + $0x108] sm:$0xf]
      %v1928 = vld [vmem:[%s436 + $0x110] sm:$0xf]
      %v1929 = vld [vmem:[%s436 + $0x118] sm:$0xf]
      %v1930 = vld [vmem:[%s436 + $0x120] sm:$0xf]
      %v1931 = vld [vmem:[%s436 + $0x128] sm:$0xf]
      %v1932 = vld [vmem:[%s436 + $0x4] sm:$0x1]
      %v1933 = vld [vmem:[%s436 + $0xc] sm:$0x1]
      %v1934 = vld [vmem:[%s436 + $0x14] sm:$0x1]
      %v1935 = vld [vmem:[%s436 + $0x1c] sm:$0x1]
      %v1936 = vld [vmem:[%s436 + $0x24] sm:$0x1]
      %v1937 = vld [vmem:[%s436 + $0x2c] sm:$0x1]
      %v1938 = vld [vmem:[%s436 + $0x34] sm:$0x1]
      %v1939 = vld [vmem:[%s436 + $0x3c] sm:$0x1]
      %v1940 = vld [vmem:[%s436 + $0x54] sm:$0x1]
      %v1941 = vld [vmem:[%s436 + $0x5c] sm:$0x1]
      %v1942 = vld [vmem:[%s436 + $0x64] sm:$0x1]
      %v1943 = vld [vmem:[%s436 + $0x6c] sm:$0x1]
      %v1944 = vld [vmem:[%s436 + $0x74] sm:$0x1]
      %v1945 = vld [vmem:[%s436 + $0x7c] sm:$0x1]
      %v1946 = vld [vmem:[%s436 + $0x84] sm:$0x1]
      %v1947 = vld [vmem:[%s436 + $0x8c] sm:$0x1]
      %v1948 = vld [vmem:[%s436 + $0xa4] sm:$0x1]
      %v1949 = vld [vmem:[%s436 + $0xac] sm:$0x1]
      %v1950 = vld [vmem:[%s436 + $0xb4] sm:$0x1]
      %v1951 = vld [vmem:[%s436 + $0xbc] sm:$0x1]
      %v1952 = vld [vmem:[%s436 + $0xc4] sm:$0x1]
      %v1953 = vld [vmem:[%s436 + $0xcc] sm:$0x1]
      %v1954 = vld [vmem:[%s436 + $0xd4] sm:$0x1]
      %v1955 = vld [vmem:[%s436 + $0xdc] sm:$0x1]
      %v1956 = vld [vmem:[%s436 + $0xf4] sm:$0x1]
      %v1957 = vld [vmem:[%s436 + $0xfc] sm:$0x1]
      %v1958 = vld [vmem:[%s436 + $0x104] sm:$0x1]
      %v1959 = vld [vmem:[%s436 + $0x10c] sm:$0x1]
      %v1960 = vld [vmem:[%s436 + $0x114] sm:$0x1]
      %v1961 = vld [vmem:[%s436 + $0x11c] sm:$0x1]
      %v1962 = vld [vmem:[%s436 + $0x124] sm:$0x1]
      %v1963 = vld [vmem:[%s436 + $0x12c] sm:$0x1]
      %v1964 = vld [vmem:[%s436] sm:$0xe]
      %v1965 = vld [vmem:[%s436 + $0x8] sm:$0xe]
      %v1966 = vld [vmem:[%s436 + $0x10] sm:$0xe]
      %v1967 = vld [vmem:[%s436 + $0x18] sm:$0xe]
      %v1968 = vld [vmem:[%s436 + $0x20] sm:$0xe]
      %v1969 = vld [vmem:[%s436 + $0x28] sm:$0xe]
      %v1970 = vld [vmem:[%s436 + $0x30] sm:$0xe]
      %v1971 = vld [vmem:[%s436 + $0x38] sm:$0xe]
      %v1972 = vld [vmem:[%s436 + $0x50] sm:$0xe]
      %v1973 = vld [vmem:[%s436 + $0x58] sm:$0xe]
      %v1974 = vld [vmem:[%s436 + $0x60] sm:$0xe]
      %v1975 = vld [vmem:[%s436 + $0x68] sm:$0xe]
      %v1976 = vld [vmem:[%s436 + $0x70] sm:$0xe]
      %v1977 = vld [vmem:[%s436 + $0x78] sm:$0xe]
      %v1978 = vld [vmem:[%s436 + $0x80] sm:$0xe]
      %v1979 = vld [vmem:[%s436 + $0x88] sm:$0xe]
      %v1980 = vld [vmem:[%s436 + $0xa0] sm:$0xe]
      %v1981 = vld [vmem:[%s436 + $0xa8] sm:$0xe]
      %v1982 = vld [vmem:[%s436 + $0xb0] sm:$0xe]
      %v1983 = vld [vmem:[%s436 + $0xb8] sm:$0xe]
      %v1984 = vld [vmem:[%s436 + $0xc0] sm:$0xe]
      %v1985 = vld [vmem:[%s436 + $0xc8] sm:$0xe]
      %v1986 = vld [vmem:[%s436 + $0xd0] sm:$0xe]
      %v1987 = vld [vmem:[%s436 + $0xd8] sm:$0xe]
      %v1988 = vld [vmem:[%s436 + $0xf0] sm:$0xe]
      %v1989 = vld [vmem:[%s436 + $0xf8] sm:$0xe]
      %v1990 = vld [vmem:[%s436 + $0x100] sm:$0xe]
      %v1991 = vld [vmem:[%s436 + $0x108] sm:$0xe]
      %v1992 = vld [vmem:[%s436 + $0x110] sm:$0xe]
      %v1993 = vld [vmem:[%s436 + $0x118] sm:$0xe]
      %v1994 = vld [vmem:[%s436 + $0x120] sm:$0xe]
      %v1995 = vld [vmem:[%s436 + $0x128] sm:$0xe]
      %v2060 = vunpack.c.l.b16 %v1900
      %v2061 = vunpack.c.l.b16 %v1932
      %v2062 = vunpack.c.l.b16 %v1901
      %v2063 = vunpack.c.l.b16 %v1933
      %v2064 = vunpack.c.l.b16 %v1902
      %v2065 = vunpack.c.l.b16 %v1934
      %v2066 = vunpack.c.l.b16 %v1903
      %v2067 = vunpack.c.l.b16 %v1935
      %v2068 = vunpack.c.l.b16 %v1904
      %v2069 = vunpack.c.l.b16 %v1936
      %v2070 = vunpack.c.l.b16 %v1905
      %v2071 = vunpack.c.l.b16 %v1937
      %v2072 = vunpack.c.l.b16 %v1906
      %v2073 = vunpack.c.l.b16 %v1938
      %v2074 = vunpack.c.l.b16 %v1907
      %v2075 = vunpack.c.l.b16 %v1939
      %v2076 = vunpack.c.l.b16 %v1908
      %v2077 = vunpack.c.l.b16 %v1940
      %v2078 = vunpack.c.l.b16 %v1909
      %v2079 = vunpack.c.l.b16 %v1941
      %v2080 = vunpack.c.l.b16 %v1910
      %v2081 = vunpack.c.l.b16 %v1942
      %v2082 = vunpack.c.l.b16 %v1911
      %v2083 = vunpack.c.l.b16 %v1943
      %v2084 = vunpack.c.l.b16 %v1912
      %v2085 = vunpack.c.l.b16 %v1944
      %v2086 = vunpack.c.l.b16 %v1913
      %v2087 = vunpack.c.l.b16 %v1945
      %v2088 = vunpack.c.l.b16 %v1914
      %v2089 = vunpack.c.l.b16 %v1946
      %v2090 = vunpack.c.l.b16 %v1915
      %v2091 = vunpack.c.l.b16 %v1947
      %v2092 = vunpack.c.l.b16 %v1916
      %v2093 = vunpack.c.l.b16 %v1948
      %v2094 = vunpack.c.l.b16 %v1917
      %v2095 = vunpack.c.l.b16 %v1949
      %v2096 = vunpack.c.l.b16 %v1918
      %v2097 = vunpack.c.l.b16 %v1950
      %v2098 = vunpack.c.l.b16 %v1919
      %v2099 = vunpack.c.l.b16 %v1951
      %v2100 = vunpack.c.l.b16 %v1920
      %v2101 = vunpack.c.l.b16 %v1952
      %v2102 = vunpack.c.l.b16 %v1921
      %v2103 = vunpack.c.l.b16 %v1953
      %v2104 = vunpack.c.l.b16 %v1922
      %v2105 = vunpack.c.l.b16 %v1954
      %v2106 = vunpack.c.l.b16 %v1923
      %v2107 = vunpack.c.l.b16 %v1955
      %v2108 = vunpack.c.l.b16 %v1924
      %v2109 = vunpack.c.l.b16 %v1956
      %v2110 = vunpack.c.l.b16 %v1925
      %v2111 = vunpack.c.l.b16 %v1957
      %v2112 = vunpack.c.l.b16 %v1926
      %v2113 = vunpack.c.l.b16 %v1958
      %v2114 = vunpack.c.l.b16 %v1927
      %v2115 = vunpack.c.l.b16 %v1959
      %v2116 = vunpack.c.l.b16 %v1928
      %v2117 = vunpack.c.l.b16 %v1960
      %v2118 = vunpack.c.l.b16 %v1929
      %v2119 = vunpack.c.l.b16 %v1961
      %v2120 = vunpack.c.l.b16 %v1930
      %v2121 = vunpack.c.l.b16 %v1962
      %v2122 = vunpack.c.l.b16 %v1931
      %v2123 = vunpack.c.l.b16 %v1963
      %v2124 = vpack.c.b16 %v2061, %v2060
      %v2125 = vpack.c.b16 %v2063, %v2062
      %v2126 = vpack.c.b16 %v2065, %v2064
      %v2127 = vpack.c.b16 %v2067, %v2066
      %v2128 = vpack.c.b16 %v2069, %v2068
      %v2129 = vpack.c.b16 %v2071, %v2070
      %v2130 = vpack.c.b16 %v2073, %v2072
      %v2131 = vpack.c.b16 %v2075, %v2074
      %v2132 = vpack.c.b16 %v2077, %v2076
      %v2133 = vpack.c.b16 %v2079, %v2078
      %v2134 = vpack.c.b16 %v2081, %v2080
      %v2135 = vpack.c.b16 %v2083, %v2082
      %v2136 = vpack.c.b16 %v2085, %v2084
      %v2137 = vpack.c.b16 %v2087, %v2086
      %v2138 = vpack.c.b16 %v2089, %v2088
      %v2139 = vpack.c.b16 %v2091, %v2090
      %v2140 = vpack.c.b16 %v2093, %v2092
      %v2141 = vpack.c.b16 %v2095, %v2094
      %v2142 = vpack.c.b16 %v2097, %v2096
      %v2143 = vpack.c.b16 %v2099, %v2098
      %v2144 = vpack.c.b16 %v2101, %v2100
      %v2145 = vpack.c.b16 %v2103, %v2102
      %v2146 = vpack.c.b16 %v2105, %v2104
      %v2147 = vpack.c.b16 %v2107, %v2106
      %v2148 = vpack.c.b16 %v2109, %v2108
      %v2149 = vpack.c.b16 %v2111, %v2110
      %v2150 = vpack.c.b16 %v2113, %v2112
      %v2151 = vpack.c.b16 %v2115, %v2114
      %v2152 = vpack.c.b16 %v2117, %v2116
      %v2153 = vpack.c.b16 %v2119, %v2118
      %v2154 = vpack.c.b16 %v2121, %v2120
      %v2155 = vpack.c.b16 %v2123, %v2122
      %v2157 = vshrl.u32 %v2124, 16
      %v2159 = vshll.u32 %v2124, 16
      %v2161 = vrot.slane %v2159, 1
      %v2162 = vor.u32 %v2157, %v2161
      %v2164 = vshrl.u32 %v2125, 16
      %v2166 = vshll.u32 %v2125, 16
      %v2168 = vrot.slane %v2166, 1
      %v2169 = vor.u32 %v2164, %v2168
      %v2171 = vshrl.u32 %v2126, 16
      %v2173 = vshll.u32 %v2126, 16
      %v2175 = vrot.slane %v2173, 1
      %v2176 = vor.u32 %v2171, %v2175
      %v2178 = vshrl.u32 %v2127, 16
      %v2180 = vshll.u32 %v2127, 16
      %v2182 = vrot.slane %v2180, 1
      %v2183 = vor.u32 %v2178, %v2182
      %v2185 = vshrl.u32 %v2128, 16
      %v2187 = vshll.u32 %v2128, 16
      %v2189 = vrot.slane %v2187, 1
      %v2190 = vor.u32 %v2185, %v2189
      %v2192 = vshrl.u32 %v2129, 16
      %v2194 = vshll.u32 %v2129, 16
      %v2196 = vrot.slane %v2194, 1
      %v2197 = vor.u32 %v2192, %v2196
      %v2199 = vshrl.u32 %v2130, 16
      %v2201 = vshll.u32 %v2130, 16
      %v2203 = vrot.slane %v2201, 1
      %v2204 = vor.u32 %v2199, %v2203
      %v2206 = vshrl.u32 %v2131, 16
      %v2208 = vshll.u32 %v2131, 16
      %v2210 = vrot.slane %v2208, 1
      %v2211 = vor.u32 %v2206, %v2210
      %v2213 = vshrl.u32 %v2132, 16
      %v2215 = vshll.u32 %v2132, 16
      %v2217 = vrot.slane %v2215, 1
      %v2218 = vor.u32 %v2213, %v2217
      %v2220 = vshrl.u32 %v2133, 16
      %v2222 = vshll.u32 %v2133, 16
      %v2224 = vrot.slane %v2222, 1
      %v2225 = vor.u32 %v2220, %v2224
      %v2227 = vshrl.u32 %v2134, 16
      %v2229 = vshll.u32 %v2134, 16
      %v2231 = vrot.slane %v2229, 1
      %v2232 = vor.u32 %v2227, %v2231
      %v2234 = vshrl.u32 %v2135, 16
      %v2236 = vshll.u32 %v2135, 16
      %v2238 = vrot.slane %v2236, 1
      %v2239 = vor.u32 %v2234, %v2238
      %v2241 = vshrl.u32 %v2136, 16
      %v2243 = vshll.u32 %v2136, 16
      %v2245 = vrot.slane %v2243, 1
      %v2246 = vor.u32 %v2241, %v2245
      %v2248 = vshrl.u32 %v2137, 16
      %v2250 = vshll.u32 %v2137, 16
      %v2252 = vrot.slane %v2250, 1
      %v2253 = vor.u32 %v2248, %v2252
      %v2255 = vshrl.u32 %v2138, 16
      %v2257 = vshll.u32 %v2138, 16
      %v2259 = vrot.slane %v2257, 1
      %v2260 = vor.u32 %v2255, %v2259
      %v2262 = vshrl.u32 %v2139, 16
      %v2264 = vshll.u32 %v2139, 16
      %v2266 = vrot.slane %v2264, 1
      %v2267 = vor.u32 %v2262, %v2266
      %v2269 = vshrl.u32 %v2140, 16
      %v2271 = vshll.u32 %v2140, 16
      %v2273 = vrot.slane %v2271, 1
      %v2274 = vor.u32 %v2269, %v2273
      %v2276 = vshrl.u32 %v2141, 16
      %v2278 = vshll.u32 %v2141, 16
      %v2280 = vrot.slane %v2278, 1
      %v2281 = vor.u32 %v2276, %v2280
      %v2283 = vshrl.u32 %v2142, 16
      %v2285 = vshll.u32 %v2142, 16
      %v2287 = vrot.slane %v2285, 1
      %v2288 = vor.u32 %v2283, %v2287
      %v2290 = vshrl.u32 %v2143, 16
      %v2292 = vshll.u32 %v2143, 16
      %v2294 = vrot.slane %v2292, 1
      %v2295 = vor.u32 %v2290, %v2294
      %v2297 = vshrl.u32 %v2144, 16
      %v2299 = vshll.u32 %v2144, 16
      %v2301 = vrot.slane %v2299, 1
      %v2302 = vor.u32 %v2297, %v2301
      %v2304 = vshrl.u32 %v2145, 16
      %v2306 = vshll.u32 %v2145, 16
      %v2308 = vrot.slane %v2306, 1
      %v2309 = vor.u32 %v2304, %v2308
      %v2311 = vshrl.u32 %v2146, 16
      %v2313 = vshll.u32 %v2146, 16
      %v2315 = vrot.slane %v2313, 1
      %v2316 = vor.u32 %v2311, %v2315
      %v2318 = vshrl.u32 %v2147, 16
      %v2320 = vshll.u32 %v2147, 16
      %v2322 = vrot.slane %v2320, 1
      %v2323 = vor.u32 %v2318, %v2322
      %v2325 = vshrl.u32 %v2148, 16
      %v2327 = vshll.u32 %v2148, 16
      %v2329 = vrot.slane %v2327, 1
      %v2330 = vor.u32 %v2325, %v2329
      %v2332 = vshrl.u32 %v2149, 16
      %v2334 = vshll.u32 %v2149, 16
      %v2336 = vrot.slane %v2334, 1
      %v2337 = vor.u32 %v2332, %v2336
      %v2339 = vshrl.u32 %v2150, 16
      %v2341 = vshll.u32 %v2150, 16
      %v2343 = vrot.slane %v2341, 1
      %v2344 = vor.u32 %v2339, %v2343
      %v2346 = vshrl.u32 %v2151, 16
      %v2348 = vshll.u32 %v2151, 16
      %v2350 = vrot.slane %v2348, 1
      %v2351 = vor.u32 %v2346, %v2350
      %v2353 = vshrl.u32 %v2152, 16
      %v2355 = vshll.u32 %v2152, 16
      %v2357 = vrot.slane %v2355, 1
      %v2358 = vor.u32 %v2353, %v2357
      %v2360 = vshrl.u32 %v2153, 16
      %v2362 = vshll.u32 %v2153, 16
      %v2364 = vrot.slane %v2362, 1
      %v2365 = vor.u32 %v2360, %v2364
      %v2367 = vshrl.u32 %v2154, 16
      %v2369 = vshll.u32 %v2154, 16
      %v2371 = vrot.slane %v2369, 1
      %v2372 = vor.u32 %v2367, %v2371
      %v2374 = vshrl.u32 %v2155, 16
      %v2376 = vshll.u32 %v2155, 16
      %v2378 = vrot.slane %v2376, 1
      %v2379 = vor.u32 %v2374, %v2378
      %v2412 = vunpack.c.l.b16 %v1964
      %v2413 = vunpack.c.l.b16 %v1965
      %v2414 = vunpack.c.l.b16 %v1966
      %v2415 = vunpack.c.l.b16 %v1967
      %v2416 = vunpack.c.l.b16 %v1968
      %v2417 = vunpack.c.l.b16 %v1969
      %v2418 = vunpack.c.l.b16 %v1970
      %v2419 = vunpack.c.l.b16 %v1971
      %v2420 = vunpack.c.l.b16 %v1972
      %v2421 = vunpack.c.l.b16 %v1973
      %v2422 = vunpack.c.l.b16 %v1974
      %v2423 = vunpack.c.l.b16 %v1975
      %v2424 = vunpack.c.l.b16 %v1976
      %v2425 = vunpack.c.l.b16 %v1977
      %v2426 = vunpack.c.l.b16 %v1978
      %v2427 = vunpack.c.l.b16 %v1979
      %v2428 = vunpack.c.l.b16 %v1980
      %v2429 = vunpack.c.l.b16 %v1981
      %v2430 = vunpack.c.l.b16 %v1982
      %v2431 = vunpack.c.l.b16 %v1983
      %v2432 = vunpack.c.l.b16 %v1984
      %v2433 = vunpack.c.l.b16 %v1985
      %v2434 = vunpack.c.l.b16 %v1986
      %v2435 = vunpack.c.l.b16 %v1987
      %v2436 = vunpack.c.l.b16 %v1988
      %v2437 = vunpack.c.l.b16 %v1989
      %v2438 = vunpack.c.l.b16 %v1990
      %v2439 = vunpack.c.l.b16 %v1991
      %v2440 = vunpack.c.l.b16 %v1992
      %v2441 = vunpack.c.l.b16 %v1993
      %v2442 = vunpack.c.l.b16 %v1994
      %v2443 = vunpack.c.l.b16 %v1995
      %v2444 = vpack.c.b16 %v2061, %v2412
      %v2445 = vpack.c.b16 %v2063, %v2413
      %v2446 = vpack.c.b16 %v2065, %v2414
      %v2447 = vpack.c.b16 %v2067, %v2415
      %v2448 = vpack.c.b16 %v2069, %v2416
      %v2449 = vpack.c.b16 %v2071, %v2417
      %v2450 = vpack.c.b16 %v2073, %v2418
      %v2451 = vpack.c.b16 %v2075, %v2419
      %v2452 = vpack.c.b16 %v2077, %v2420
      %v2453 = vpack.c.b16 %v2079, %v2421
      %v2454 = vpack.c.b16 %v2081, %v2422
      %v2455 = vpack.c.b16 %v2083, %v2423
      %v2456 = vpack.c.b16 %v2085, %v2424
      %v2457 = vpack.c.b16 %v2087, %v2425
      %v2458 = vpack.c.b16 %v2089, %v2426
      %v2459 = vpack.c.b16 %v2091, %v2427
      %v2460 = vpack.c.b16 %v2093, %v2428
      %v2461 = vpack.c.b16 %v2095, %v2429
      %v2462 = vpack.c.b16 %v2097, %v2430
      %v2463 = vpack.c.b16 %v2099, %v2431
      %v2464 = vpack.c.b16 %v2101, %v2432
      %v2465 = vpack.c.b16 %v2103, %v2433
      %v2466 = vpack.c.b16 %v2105, %v2434
      %v2467 = vpack.c.b16 %v2107, %v2435
      %v2468 = vpack.c.b16 %v2109, %v2436
      %v2469 = vpack.c.b16 %v2111, %v2437
      %v2470 = vpack.c.b16 %v2113, %v2438
      %v2471 = vpack.c.b16 %v2115, %v2439
      %v2472 = vpack.c.b16 %v2117, %v2440
      %v2473 = vpack.c.b16 %v2119, %v2441
      %v2474 = vpack.c.b16 %v2121, %v2442
      %v2475 = vpack.c.b16 %v2123, %v2443
      %v2476 = vrot.slane %v2444, 1
      %v2477 = vrot.slane %v2445, 1
      %v2478 = vrot.slane %v2446, 1
      %v2479 = vrot.slane %v2447, 1
      %v2480 = vrot.slane %v2448, 1
      %v2481 = vrot.slane %v2449, 1
      %v2482 = vrot.slane %v2450, 1
      %v2483 = vrot.slane %v2451, 1
      %v2484 = vrot.slane %v2452, 1
      %v2485 = vrot.slane %v2453, 1
      %v2486 = vrot.slane %v2454, 1
      %v2487 = vrot.slane %v2455, 1
      %v2488 = vrot.slane %v2456, 1
      %v2489 = vrot.slane %v2457, 1
      %v2490 = vrot.slane %v2458, 1
      %v2491 = vrot.slane %v2459, 1
      %v2492 = vrot.slane %v2460, 1
      %v2493 = vrot.slane %v2461, 1
      %v2494 = vrot.slane %v2462, 1
      %v2495 = vrot.slane %v2463, 1
      %v2496 = vrot.slane %v2464, 1
      %v2497 = vrot.slane %v2465, 1
      %v2498 = vrot.slane %v2466, 1
      %v2499 = vrot.slane %v2467, 1
      %v2500 = vrot.slane %v2468, 1
      %v2501 = vrot.slane %v2469, 1
      %v2502 = vrot.slane %v2470, 1
      %v2503 = vrot.slane %v2471, 1
      %v2504 = vrot.slane %v2472, 1
      %v2505 = vrot.slane %v2473, 1
      %v2506 = vrot.slane %v2474, 1
      %v2507 = vrot.slane %v2475, 1
      %v2508 = vld [vmem:[%s2 + $0xc0] sm:$0xf]
      %v2509 = vld [vmem:[%s2 + $0xc4] sm:$0xf]
      %v2510 = vld [vmem:[%s2 + $0xc8] sm:$0xf]
      %v2511 = vld [vmem:[%s2 + $0xcc] sm:$0xf]
      %v2512 = vld [vmem:[%s2 + $0xd0] sm:$0xf]
      %v2513 = vld [vmem:[%s2 + $0xd4] sm:$0xf]
      %v2514 = vld [vmem:[%s2 + $0xd8] sm:$0xf]
      %v2515 = vld [vmem:[%s2 + $0xdc] sm:$0xf]
      %v2516 = vld [vmem:[%s2 + $0xe0] sm:$0xf]
      %v2517 = vld [vmem:[%s2 + $0xe4] sm:$0xf]
      %v2518 = vld [vmem:[%s2 + $0xe8] sm:$0xf]
      %v2519 = vld [vmem:[%s2 + $0xec] sm:$0xf]
      %v2520 = vld [vmem:[%s2 + $0xf0] sm:$0xf]
      %v2521 = vld [vmem:[%s2 + $0xf4] sm:$0xf]
      %v2522 = vld [vmem:[%s2 + $0xf8] sm:$0xf]
      %v2523 = vld [vmem:[%s2 + $0xfc] sm:$0xf]
      %v2524 = vld [vmem:[%s2 + $0x100] sm:$0xf]
      %v2525 = vld [vmem:[%s2 + $0x104] sm:$0xf]
      %v2526 = vld [vmem:[%s2 + $0x108] sm:$0xf]
      %v2527 = vld [vmem:[%s2 + $0x10c] sm:$0xf]
      %v2528 = vld [vmem:[%s2 + $0x110] sm:$0xf]
      %v2529 = vld [vmem:[%s2 + $0x114] sm:$0xf]
      %v2530 = vld [vmem:[%s2 + $0x118] sm:$0xf]
      %v2531 = vld [vmem:[%s2 + $0x11c] sm:$0xf]
      %v2532 = vld [vmem:[%s2 + $0x120] sm:$0xf]
      %v2533 = vld [vmem:[%s2 + $0x124] sm:$0xf]
      %v2534 = vld [vmem:[%s2 + $0x128] sm:$0xf]
      %v2535 = vld [vmem:[%s2 + $0x12c] sm:$0xf]
      %v2536 = vld [vmem:[%s2 + $0x130] sm:$0xf]
      %v2537 = vld [vmem:[%s2 + $0x134] sm:$0xf]
      %v2538 = vld [vmem:[%s2 + $0x138] sm:$0xf]
      %v2539 = vld [vmem:[%s2 + $0x13c] sm:$0xf]
      %v2540 = vld [vmem:[%s2 + $0x140] sm:$0xf]
      %v2541 = vld [vmem:[%s2 + $0x144] sm:$0xf]
      %v2542 = vld [vmem:[%s2 + $0x148] sm:$0xf]
      %v2543 = vld [vmem:[%s2 + $0x14c] sm:$0xf]
      %v2544 = vld [vmem:[%s2 + $0x150] sm:$0xf]
      %v2545 = vld [vmem:[%s2 + $0x154] sm:$0xf]
      %v2546 = vld [vmem:[%s2 + $0x158] sm:$0xf]
      %v2547 = vld [vmem:[%s2 + $0x15c] sm:$0xf]
      %v2548 = vld [vmem:[%s2 + $0x160] sm:$0xf]
      %v2549 = vld [vmem:[%s2 + $0x164] sm:$0xf]
      %v2550 = vld [vmem:[%s2 + $0x168] sm:$0xf]
      %v2551 = vld [vmem:[%s2 + $0x16c] sm:$0xf]
      %v2552 = vld [vmem:[%s2 + $0x170] sm:$0xf]
      %v2553 = vld [vmem:[%s2 + $0x174] sm:$0xf]
      %v2554 = vld [vmem:[%s2 + $0x178] sm:$0xf]
      %v2555 = vld [vmem:[%s2 + $0x17c] sm:$0xf]
      %v2556 = vunpack.c.l.b16 %v2162
      %v2557 = vunpack.c.l.b16 %v2476
      %v2558 = vunpack.c.l.b16 %v2169
      %v2559 = vunpack.c.l.b16 %v2477
      %v2560 = vunpack.c.l.b16 %v2176
      %v2561 = vunpack.c.l.b16 %v2478
      %v2562 = vunpack.c.l.b16 %v2183
      %v2563 = vunpack.c.l.b16 %v2479
      %v2564 = vunpack.c.l.b16 %v2190
      %v2565 = vunpack.c.l.b16 %v2480
      %v2566 = vunpack.c.l.b16 %v2197
      %v2567 = vunpack.c.l.b16 %v2481
      %v2568 = vunpack.c.l.b16 %v2204
      %v2569 = vunpack.c.l.b16 %v2482
      %v2570 = vunpack.c.l.b16 %v2211
      %v2571 = vunpack.c.l.b16 %v2483
      %v2572 = vunpack.c.l.b16 %v2218
      %v2573 = vunpack.c.l.b16 %v2484
      %v2574 = vunpack.c.l.b16 %v2225
      %v2575 = vunpack.c.l.b16 %v2485
      %v2576 = vunpack.c.l.b16 %v2232
      %v2577 = vunpack.c.l.b16 %v2486
      %v2578 = vunpack.c.l.b16 %v2239
      %v2579 = vunpack.c.l.b16 %v2487
      %v2580 = vunpack.c.l.b16 %v2246
      %v2581 = vunpack.c.l.b16 %v2488
      %v2582 = vunpack.c.l.b16 %v2253
      %v2583 = vunpack.c.l.b16 %v2489
      %v2584 = vunpack.c.l.b16 %v2260
      %v2585 = vunpack.c.l.b16 %v2490
      %v2586 = vunpack.c.l.b16 %v2267
      %v2587 = vunpack.c.l.b16 %v2491
      %v2588 = vunpack.c.l.b16 %v2274
      %v2589 = vunpack.c.l.b16 %v2492
      %v2590 = vunpack.c.l.b16 %v2281
      %v2591 = vunpack.c.l.b16 %v2493
      %v2592 = vunpack.c.l.b16 %v2288
      %v2593 = vunpack.c.l.b16 %v2494
      %v2594 = vunpack.c.l.b16 %v2295
      %v2595 = vunpack.c.l.b16 %v2495
      %v2596 = vunpack.c.l.b16 %v2302
      %v2597 = vunpack.c.l.b16 %v2496
      %v2598 = vunpack.c.l.b16 %v2309
      %v2599 = vunpack.c.l.b16 %v2497
      %v2600 = vunpack.c.l.b16 %v2316
      %v2601 = vunpack.c.l.b16 %v2498
      %v2602 = vunpack.c.l.b16 %v2323
      %v2603 = vunpack.c.l.b16 %v2499
      %v2604 = vunpack.c.l.b16 %v2330
      %v2605 = vunpack.c.l.b16 %v2500
      %v2606 = vunpack.c.l.b16 %v2337
      %v2607 = vunpack.c.l.b16 %v2501
      %v2608 = vunpack.c.l.b16 %v2344
      %v2609 = vunpack.c.l.b16 %v2502
      %v2610 = vunpack.c.l.b16 %v2351
      %v2611 = vunpack.c.l.b16 %v2503
      %v2612 = vunpack.c.l.b16 %v2358
      %v2613 = vunpack.c.l.b16 %v2504
      %v2614 = vunpack.c.l.b16 %v2365
      %v2615 = vunpack.c.l.b16 %v2505
      %v2616 = vunpack.c.l.b16 %v2372
      %v2617 = vunpack.c.l.b16 %v2506
      %v2618 = vunpack.c.l.b16 %v2379
      %v2619 = vunpack.c.l.b16 %v2507
      %v2620 = vpack.c.b16 %v2062, %v2060
      %v2621 = vpack.c.b16 %v2558, %v2556
      %v2622 = vpack.c.b16 %v2559, %v2557
      %v2623 = vpack.c.b16 %v2066, %v2064
      %v2624 = vpack.c.b16 %v2562, %v2560
      %v2625 = vpack.c.b16 %v2563, %v2561
      %v2626 = vpack.c.b16 %v2070, %v2068
      %v2627 = vpack.c.b16 %v2566, %v2564
      %v2628 = vpack.c.b16 %v2567, %v2565
      %v2629 = vpack.c.b16 %v2074, %v2072
      %v2630 = vpack.c.b16 %v2570, %v2568
      %v2631 = vpack.c.b16 %v2571, %v2569
      %v2632 = vpack.c.b16 %v2078, %v2076
      %v2633 = vpack.c.b16 %v2574, %v2572
      %v2634 = vpack.c.b16 %v2575, %v2573
      %v2635 = vpack.c.b16 %v2082, %v2080
      %v2636 = vpack.c.b16 %v2578, %v2576
      %v2637 = vpack.c.b16 %v2579, %v2577
      %v2638 = vpack.c.b16 %v2086, %v2084
      %v2639 = vpack.c.b16 %v2582, %v2580
      %v2640 = vpack.c.b16 %v2583, %v2581
      %v2641 = vpack.c.b16 %v2090, %v2088
      %v2642 = vpack.c.b16 %v2586, %v2584
      %v2643 = vpack.c.b16 %v2587, %v2585
      %v2644 = vpack.c.b16 %v2094, %v2092
      %v2645 = vpack.c.b16 %v2590, %v2588
      %v2646 = vpack.c.b16 %v2591, %v2589
      %v2647 = vpack.c.b16 %v2098, %v2096
      %v2648 = vpack.c.b16 %v2594, %v2592
      %v2649 = vpack.c.b16 %v2595, %v2593
      %v2650 = vpack.c.b16 %v2102, %v2100
      %v2651 = vpack.c.b16 %v2598, %v2596
      %v2652 = vpack.c.b16 %v2599, %v2597
      %v2653 = vpack.c.b16 %v2106, %v2104
      %v2654 = vpack.c.b16 %v2602, %v2600
      %v2655 = vpack.c.b16 %v2603, %v2601
      %v2656 = vpack.c.b16 %v2110, %v2108
      %v2657 = vpack.c.b16 %v2606, %v2604
      %v2658 = vpack.c.b16 %v2607, %v2605
      %v2659 = vpack.c.b16 %v2114, %v2112
      %v2660 = vpack.c.b16 %v2610, %v2608
      %v2661 = vpack.c.b16 %v2611, %v2609
      %v2662 = vpack.c.b16 %v2118, %v2116
      %v2663 = vpack.c.b16 %v2614, %v2612
      %v2664 = vpack.c.b16 %v2615, %v2613
      %v2665 = vpack.c.b16 %v2122, %v2120
      %v2666 = vpack.c.b16 %v2618, %v2616
      %v2667 = vpack.c.b16 %v2619, %v2617
      %v2764 = vunpack.c.l.b16 %v2508
      %v2765 = vunpack.c.l.b16 %v2509
      %v2766 = vunpack.c.l.b16 %v2510
      %v2767 = vunpack.c.l.b16 %v2511
      %v2768 = vunpack.c.l.b16 %v2512
      %v2769 = vunpack.c.l.b16 %v2513
      %v2770 = vunpack.c.l.b16 %v2514
      %v2771 = vunpack.c.l.b16 %v2515
      %v2772 = vunpack.c.l.b16 %v2516
      %v2773 = vunpack.c.l.b16 %v2517
      %v2774 = vunpack.c.l.b16 %v2518
      %v2775 = vunpack.c.l.b16 %v2519
      %v2776 = vunpack.c.l.b16 %v2520
      %v2777 = vunpack.c.l.b16 %v2521
      %v2778 = vunpack.c.l.b16 %v2522
      %v2779 = vunpack.c.l.b16 %v2523
      %v2780 = vunpack.c.l.b16 %v2524
      %v2781 = vunpack.c.l.b16 %v2525
      %v2782 = vunpack.c.l.b16 %v2526
      %v2783 = vunpack.c.l.b16 %v2527
      %v2784 = vunpack.c.l.b16 %v2528
      %v2785 = vunpack.c.l.b16 %v2529
      %v2786 = vunpack.c.l.b16 %v2530
      %v2787 = vunpack.c.l.b16 %v2531
      %v2788 = vunpack.c.l.b16 %v2532
      %v2789 = vunpack.c.l.b16 %v2533
      %v2790 = vunpack.c.l.b16 %v2534
      %v2791 = vunpack.c.l.b16 %v2535
      %v2792 = vunpack.c.l.b16 %v2536
      %v2793 = vunpack.c.l.b16 %v2537
      %v2794 = vunpack.c.l.b16 %v2538
      %v2795 = vunpack.c.l.b16 %v2539
      %v2796 = vunpack.c.l.b16 %v2540
      %v2797 = vunpack.c.l.b16 %v2541
      %v2798 = vunpack.c.l.b16 %v2542
      %v2799 = vunpack.c.l.b16 %v2543
      %v2800 = vunpack.c.l.b16 %v2544
      %v2801 = vunpack.c.l.b16 %v2545
      %v2802 = vunpack.c.l.b16 %v2546
      %v2803 = vunpack.c.l.b16 %v2547
      %v2804 = vunpack.c.l.b16 %v2548
      %v2805 = vunpack.c.l.b16 %v2549
      %v2806 = vunpack.c.l.b16 %v2550
      %v2807 = vunpack.c.l.b16 %v2551
      %v2808 = vunpack.c.l.b16 %v2552
      %v2809 = vunpack.c.l.b16 %v2553
      %v2810 = vunpack.c.l.b16 %v2554
      %v2811 = vunpack.c.l.b16 %v2555
      %v2812 = vpack.c.b16 %v2765, %v2764
      %v2813 = vpack.c.b16 %v2767, %v2766
      %v2814 = vpack.c.b16 %v2769, %v2768
      %v2815 = vpack.c.b16 %v2771, %v2770
      %v2816 = vpack.c.b16 %v2773, %v2772
      %v2817 = vpack.c.b16 %v2775, %v2774
      %v2818 = vpack.c.b16 %v2777, %v2776
      %v2819 = vpack.c.b16 %v2779, %v2778
      %v2820 = vpack.c.b16 %v2781, %v2780
      %v2821 = vpack.c.b16 %v2783, %v2782
      %v2822 = vpack.c.b16 %v2785, %v2784
      %v2823 = vpack.c.b16 %v2787, %v2786
      %v2824 = vpack.c.b16 %v2789, %v2788
      %v2825 = vpack.c.b16 %v2791, %v2790
      %v2826 = vpack.c.b16 %v2793, %v2792
      %v2827 = vpack.c.b16 %v2795, %v2794
      %v2828 = vpack.c.b16 %v2797, %v2796
      %v2829 = vpack.c.b16 %v2799, %v2798
      %v2830 = vpack.c.b16 %v2801, %v2800
      %v2831 = vpack.c.b16 %v2803, %v2802
      %v2832 = vpack.c.b16 %v2805, %v2804
      %v2833 = vpack.c.b16 %v2807, %v2806
      %v2834 = vpack.c.b16 %v2809, %v2808
      %v2835 = vpack.c.b16 %v2811, %v2810
      %2860 = vmatprep.subr.bf16.mxu0 0
      %2861 = vmatpush1.bf16.msra.mxu0 %v2812
      %2862 = vmatprep.subr.bf16.mxu0 0
      %2863 = vmatpush1.bf16.msra.mxu0 %v2813
      %2864 = vmatprep.subr.bf16.mxu0 0
      %2865 = vmatpush1.bf16.msra.mxu0 %v2814
      %2866 = vmatprep.subr.bf16.mxu0 0
      %2867 = vmatpush1.bf16.msra.mxu0 %v2815
      %2868 = vmatprep.subr.bf16.mxu0 0
      %2869 = vmatpush1.bf16.msra.mxu0 %v2816
      %2870 = vmatprep.subr.bf16.mxu0 0
      %2871 = vmatpush1.bf16.msra.mxu0 %v2817
      %2872 = vmatprep.subr.bf16.mxu0 0
      %2873 = vmatpush1.bf16.msra.mxu0 %v2818
      %2874 = vmatprep.subr.bf16.mxu0 0
      %2875 = vmatpush1.bf16.msra.mxu0 %v2819
      %2876 = vmatprep.subr.bf16.mxu0 0
      %2877 = vmatpush1.bf16.msra.mxu0 %v2820
      %2878 = vmatprep.subr.bf16.mxu0 0
      %2879 = vmatpush1.bf16.msra.mxu0 %v2821
      %2880 = vmatprep.subr.bf16.mxu0 0
      %2881 = vmatpush1.bf16.msra.mxu0 %v2822
      %2882 = vmatprep.subr.bf16.mxu0 0
      %2883 = vmatpush1.bf16.msra.mxu0 %v2823
      %2884 = vmatprep.subr.bf16.mxu0 0
      %2885 = vmatpush1.bf16.msra.mxu0 %v2824
      %2886 = vmatprep.subr.bf16.mxu0 0
      %2887 = vmatpush1.bf16.msra.mxu0 %v2825
      %2888 = vmatprep.subr.bf16.mxu0 0
      %2889 = vmatpush1.bf16.msra.mxu0 %v2826
      %2890 = vmatprep.subr.bf16.mxu0 0
      %2891 = vmatpush1.bf16.msra.mxu0 %v2827
      %2892 = vmatprep.mubr.bf16.mxu0 %v2621
      %2893 = vmatmul.mubr.bf16.gmra.mrb[0].mxu0 %v2620
      %v2894 = vpop.f32.mrb[0].mxu0
      %v2895 = vadd.f32 0.0, %v2894
      %v2896 = vpop.f32.mrb[0].mxu0
      %v2897 = vpop.f32.mrb[0].mxu0
      %v2898 = vadd.f32 0.0, %v2897
      %v2899 = vpop.f32.mrb[0].mxu0
      %2900 = vmatprep.mubr.bf16.mxu0 %v2624
      %2901 = vmatmul.mubr.bf16.gmra.mrb[0].mxu0 %v2623
      %v2902 = vpop.f32.mrb[0].mxu0
      %v2903 = vadd.f32 0.0, %v2902
      %v2904 = vpop.f32.mrb[0].mxu0
      %v2905 = vpop.f32.mrb[0].mxu0
      %v2906 = vadd.f32 0.0, %v2905
      %v2907 = vpop.f32.mrb[0].mxu0
      %2908 = vmatprep.mubr.bf16.mxu0 %v2627
      %2909 = vmatmul.mubr.bf16.gmra.mrb[0].mxu0 %v2626
      %v2910 = vpop.f32.mrb[0].mxu0
      %v2911 = vadd.f32 0.0, %v2910
      %v2912 = vpop.f32.mrb[0].mxu0
      %v2913 = vpop.f32.mrb[0].mxu0
      %v2914 = vadd.f32 0.0, %v2913
      %v2915 = vpop.f32.mrb[0].mxu0
      %2916 = vmatprep.mubr.bf16.mxu0 %v2630
      %2917 = vmatmul.mubr.bf16.gmra.mrb[0].mxu0 %v2629
      %v2918 = vpop.f32.mrb[0].mxu0
      %v2919 = vadd.f32 0.0, %v2918
      %v2920 = vpop.f32.mrb[0].mxu0
      %v2921 = vpop.f32.mrb[0].mxu0
      %v2922 = vadd.f32 0.0, %v2921
      %v2923 = vpop.f32.mrb[0].mxu0
      %2924 = vmatprep.mubr.bf16.mxu0 %v2633
      %2925 = vmatmul.mubr.bf16.gmra.mrb[0].mxu0 %v2632
      %v2926 = vpop.f32.mrb[0].mxu0
      %v2927 = vadd.f32 0.0, %v2926
      %v2928 = vpop.f32.mrb[0].mxu0
      %v2929 = vpop.f32.mrb[0].mxu0
      %v2930 = vadd.f32 0.0, %v2929
      %v2931 = vpop.f32.mrb[0].mxu0
      %2932 = vmatprep.mubr.bf16.mxu0 %v2636
      %2933 = vmatmul.mubr.bf16.gmra.mrb[0].mxu0 %v2635
      %v2934 = vpop.f32.mrb[0].mxu0
      %v2935 = vadd.f32 0.0, %v2934
      %v2936 = vpop.f32.mrb[0].mxu0
      %v2937 = vpop.f32.mrb[0].mxu0
      %v2938 = vadd.f32 0.0, %v2937
      %v2939 = vpop.f32.mrb[0].mxu0
      %2940 = vmatprep.mubr.bf16.mxu0 %v2639
      %2941 = vmatmul.mubr.bf16.gmra.mrb[0].mxu0 %v2638
      %v2942 = vpop.f32.mrb[0].mxu0
      %v2943 = vadd.f32 0.0, %v2942
      %v2944 = vpop.f32.mrb[0].mxu0
      %v2945 = vpop.f32.mrb[0].mxu0
      %v2946 = vadd.f32 0.0, %v2945
      %v2947 = vpop.f32.mrb[0].mxu0
      %2948 = vmatprep.mubr.bf16.mxu0 %v2642
      %2949 = vmatmul.mubr.bf16.gmra.mrb[0].mxu0 %v2641
      %v2950 = vpop.f32.mrb[0].mxu0
      %v2951 = vadd.f32 0.0, %v2950
      %v2952 = vpop.f32.mrb[0].mxu0
      %v2953 = vpop.f32.mrb[0].mxu0
      %v2954 = vadd.f32 0.0, %v2953
      %v2955 = vpop.f32.mrb[0].mxu0
      %2956 = vmatprep.mubr.bf16.mxu0 %v2645
      %2957 = vmatmul.mubr.bf16.gmra.mrb[0].mxu0 %v2644
      %v2958 = vpop.f32.mrb[0].mxu0
      %v2959 = vadd.f32 0.0, %v2958
      %v2960 = vpop.f32.mrb[0].mxu0
      %v2961 = vpop.f32.mrb[0].mxu0
      %v2962 = vadd.f32 0.0, %v2961
      %v2963 = vpop.f32.mrb[0].mxu0
      %2964 = vmatprep.mubr.bf16.mxu0 %v2648
      %2965 = vmatmul.mubr.bf16.gmra.mrb[0].mxu0 %v2647
      %v2966 = vpop.f32.mrb[0].mxu0
      %v2967 = vadd.f32 0.0, %v2966
      %v2968 = vpop.f32.mrb[0].mxu0
      %v2969 = vpop.f32.mrb[0].mxu0
      %v2970 = vadd.f32 0.0, %v2969
      %v2971 = vpop.f32.mrb[0].mxu0
      %2972 = vmatprep.mubr.bf16.mxu0 %v2651
      %2973 = vmatmul.mubr.bf16.gmra.mrb[0].mxu0 %v2650
      %v2974 = vpop.f32.mrb[0].mxu0
      %v2975 = vadd.f32 0.0, %v2974
      %v2976 = vpop.f32.mrb[0].mxu0
      %v2977 = vpop.f32.mrb[0].mxu0
      %v2978 = vadd.f32 0.0, %v2977
      %v2979 = vpop.f32.mrb[0].mxu0
      %2980 = vmatprep.mubr.bf16.mxu0 %v2654
      %2981 = vmatmul.mubr.bf16.gmra.mrb[0].mxu0 %v2653
      %v2982 = vpop.f32.mrb[0].mxu0
      %v2983 = vadd.f32 0.0, %v2982
      %v2984 = vpop.f32.mrb[0].mxu0
      %v2985 = vpop.f32.mrb[0].mxu0
      %v2986 = vadd.f32 0.0, %v2985
      %v2987 = vpop.f32.mrb[0].mxu0
      %2988 = vmatprep.mubr.bf16.mxu0 %v2657
      %2989 = vmatmul.mubr.bf16.gmra.mrb[0].mxu0 %v2656
      %v2990 = vpop.f32.mrb[0].mxu0
      %v2991 = vadd.f32 0.0, %v2990
      %v2992 = vpop.f32.mrb[0].mxu0
      %v2993 = vpop.f32.mrb[0].mxu0
      %v2994 = vadd.f32 0.0, %v2993
      %v2995 = vpop.f32.mrb[0].mxu0
      %2996 = vmatprep.mubr.bf16.mxu0 %v2660
      %2997 = vmatmul.mubr.bf16.gmra.mrb[0].mxu0 %v2659
      %v2998 = vpop.f32.mrb[0].mxu0
      %v2999 = vadd.f32 0.0, %v2998
      %v3000 = vpop.f32.mrb[0].mxu0
      %v3001 = vpop.f32.mrb[0].mxu0
      %v3002 = vadd.f32 0.0, %v3001
      %v3003 = vpop.f32.mrb[0].mxu0
      %3004 = vmatprep.mubr.bf16.mxu0 %v2663
      %3005 = vmatmul.mubr.bf16.gmra.mrb[0].mxu0 %v2662
      %v3006 = vpop.f32.mrb[0].mxu0
      %v3007 = vadd.f32 0.0, %v3006
      %v3008 = vpop.f32.mrb[0].mxu0
      %v3009 = vpop.f32.mrb[0].mxu0
      %v3010 = vadd.f32 0.0, %v3009
      %v3011 = vpop.f32.mrb[0].mxu0
      %3012 = vmatprep.mubr.bf16.mxu0 %v2666
      %3013 = vmatmul.mubr.bf16.gmra.mrb[0].mxu0 %v2665
      %v3014 = vpop.f32.mrb[0].mxu0
      %v3015 = vadd.f32 0.0, %v3014
      %v3016 = vpop.f32.mrb[0].mxu0
      %v3017 = vpop.f32.mrb[0].mxu0
      %v3018 = vadd.f32 0.0, %v3017
      %v3019 = vpop.f32.mrb[0].mxu0
      %3020 = vdwg.mxu0
      %3021 = vmatprep.subr.bf16.mxu0 0
      %3022 = vmatpush1.bf16.msra.mxu0 %v2828
      %3023 = vmatprep.subr.bf16.mxu0 0
      %3024 = vmatpush1.bf16.msra.mxu0 %v2829
      %3025 = vmatprep.subr.bf16.mxu0 0
      %3026 = vmatpush1.bf16.msra.mxu0 %v2830
      %3027 = vmatprep.subr.bf16.mxu0 0
      %3028 = vmatpush1.bf16.msra.mxu0 %v2831
      %3029 = vmatprep.subr.bf16.mxu0 0
      %3030 = vmatpush1.bf16.msra.mxu0 %v2832
      %3031 = vmatprep.subr.bf16.mxu0 0
      %3032 = vmatpush1.bf16.msra.mxu0 %v2833
      %3033 = vmatprep.subr.bf16.mxu0 0
      %3034 = vmatpush1.bf16.msra.mxu0 %v2834
      %3035 = vmatprep.subr.bf16.mxu0 0
      %3036 = vmatpush1.bf16.msra.mxu0 %v2835
      %3037 = vmatprep.subr.bf16.mxu0 0
      %3038 = vmatpush1.bf16.msra.mxu0 0
      %3039 = vmatprep.subr.bf16.mxu0 0
      %3040 = vmatpush1.bf16.msra.mxu0 0
      %3041 = vmatprep.subr.bf16.mxu0 0
      %3042 = vmatpush1.bf16.msra.mxu0 0
      %3043 = vmatprep.subr.bf16.mxu0 0
      %3044 = vmatpush1.bf16.msra.mxu0 0
      %3045 = vmatprep.subr.bf16.mxu0 0
      %3046 = vmatpush1.bf16.msra.mxu0 0
      %3047 = vmatprep.subr.bf16.mxu0 0
      %3048 = vmatpush1.bf16.msra.mxu0 0
      %3049 = vmatprep.subr.bf16.mxu0 0
      %3050 = vmatpush1.bf16.msra.mxu0 0
      %3051 = vmatprep.subr.bf16.mxu0 0
      %3052 = vmatpush1.bf16.msra.mxu0 0
      %3053 = vmatprep.mubr.bf16.mxu0 0
      %3054 = vmatmul.mubr.bf16.gmra.mrb[0].mxu0 %v2622
      %v3055 = vpop.f32.mrb[0].mxu0
      %v3056 = vadd.f32 %v2895, %v3055
      %v3057 = vpop.f32.mrb[0].mxu0
      %v3058 = vpop.f32.mrb[0].mxu0
      %v3059 = vadd.f32 %v2898, %v3058
      %v3060 = vpop.f32.mrb[0].mxu0
      %3061 = vmatprep.mubr.bf16.mxu0 0
      %3062 = vmatmul.mubr.bf16.gmra.mrb[0].mxu0 %v2625
      %v3063 = vpop.f32.mrb[0].mxu0
      %v3064 = vadd.f32 %v2903, %v3063
      %v3065 = vpop.f32.mrb[0].mxu0
      %v3066 = vpop.f32.mrb[0].mxu0
      %v3067 = vadd.f32 %v2906, %v3066
      %v3068 = vpop.f32.mrb[0].mxu0
      %3069 = vmatprep.mubr.bf16.mxu0 0
      %3070 = vmatmul.mubr.bf16.gmra.mrb[0].mxu0 %v2628
      %v3071 = vpop.f32.mrb[0].mxu0
      %v3072 = vadd.f32 %v2911, %v3071
      %v3073 = vpop.f32.mrb[0].mxu0
      %v3074 = vpop.f32.mrb[0].mxu0
      %v3075 = vadd.f32 %v2914, %v3074
      %v3076 = vpop.f32.mrb[0].mxu0
      %3077 = vmatprep.mubr.bf16.mxu0 0
      %3078 = vmatmul.mubr.bf16.gmra.mrb[0].mxu0 %v2631
      %v3079 = vpop.f32.mrb[0].mxu0
      %v3080 = vadd.f32 %v2919, %v3079
      %v3081 = vpop.f32.mrb[0].mxu0
      %v3082 = vpop.f32.mrb[0].mxu0
      %v3083 = vadd.f32 %v2922, %v3082
      %v3084 = vpop.f32.mrb[0].mxu0
      %3085 = vmatprep.mubr.bf16.mxu0 0
      %3086 = vmatmul.mubr.bf16.gmra.mrb[0].mxu0 %v2634
      %v3087 = vpop.f32.mrb[0].mxu0
      %v3088 = vadd.f32 %v2927, %v3087
      %v3089 = vpop.f32.mrb[0].mxu0
      %v3090 = vpop.f32.mrb[0].mxu0
      %v3091 = vadd.f32 %v2930, %v3090
      %v3092 = vpop.f32.mrb[0].mxu0
      %3093 = vmatprep.mubr.bf16.mxu0 0
      %3094 = vmatmul.mubr.bf16.gmra.mrb[0].mxu0 %v2637
      %v3095 = vpop.f32.mrb[0].mxu0
      %v3096 = vadd.f32 %v2935, %v3095
      %v3097 = vpop.f32.mrb[0].mxu0
      %v3098 = vpop.f32.mrb[0].mxu0
      %v3099 = vadd.f32 %v2938, %v3098
      %v3100 = vpop.f32.mrb[0].mxu0
      %3101 = vmatprep.mubr.bf16.mxu0 0
      %3102 = vmatmul.mubr.bf16.gmra.mrb[0].mxu0 %v2640
      %v3103 = vpop.f32.mrb[0].mxu0
      %v3104 = vadd.f32 %v2943, %v3103
      %v3105 = vpop.f32.mrb[0].mxu0
      %v3106 = vpop.f32.mrb[0].mxu0
      %v3107 = vadd.f32 %v2946, %v3106
      %v3108 = vpop.f32.mrb[0].mxu0
      %3109 = vmatprep.mubr.bf16.mxu0 0
      %3110 = vmatmul.mubr.bf16.gmra.mrb[0].mxu0 %v2643
      %v3111 = vpop.f32.mrb[0].mxu0
      %v3112 = vadd.f32 %v2951, %v3111
      %v3113 = vpop.f32.mrb[0].mxu0
      %v3114 = vpop.f32.mrb[0].mxu0
      %v3115 = vadd.f32 %v2954, %v3114
      %v3116 = vpop.f32.mrb[0].mxu0
      %3117 = vmatprep.mubr.bf16.mxu0 0
      %3118 = vmatmul.mubr.bf16.gmra.mrb[0].mxu0 %v2646
      %v3119 = vpop.f32.mrb[0].mxu0
      %v3120 = vadd.f32 %v2959, %v3119
      %v3121 = vpop.f32.mrb[0].mxu0
      %v3122 = vpop.f32.mrb[0].mxu0
      %v3123 = vadd.f32 %v2962, %v3122
      %v3124 = vpop.f32.mrb[0].mxu0
      %3125 = vmatprep.mubr.bf16.mxu0 0
      %3126 = vmatmul.mubr.bf16.gmra.mrb[0].mxu0 %v2649
      %v3127 = vpop.f32.mrb[0].mxu0
      %v3128 = vadd.f32 %v2967, %v3127
      %v3129 = vpop.f32.mrb[0].mxu0
      %v3130 = vpop.f32.mrb[0].mxu0
      %v3131 = vadd.f32 %v2970, %v3130
      %v3132 = vpop.f32.mrb[0].mxu0
      %3133 = vmatprep.mubr.bf16.mxu0 0
      %3134 = vmatmul.mubr.bf16.gmra.mrb[0].mxu0 %v2652
      %v3135 = vpop.f32.mrb[0].mxu0
      %v3136 = vadd.f32 %v2975, %v3135
      %v3137 = vpop.f32.mrb[0].mxu0
      %v3138 = vpop.f32.mrb[0].mxu0
      %v3139 = vadd.f32 %v2978, %v3138
      %v3140 = vpop.f32.mrb[0].mxu0
      %3141 = vmatprep.mubr.bf16.mxu0 0
      %3142 = vmatmul.mubr.bf16.gmra.mrb[0].mxu0 %v2655
      %v3143 = vpop.f32.mrb[0].mxu0
      %v3144 = vadd.f32 %v2983, %v3143
      %v3145 = vpop.f32.mrb[0].mxu0
      %v3146 = vpop.f32.mrb[0].mxu0
      %v3147 = vadd.f32 %v2986, %v3146
      %v3148 = vpop.f32.mrb[0].mxu0
      %3149 = vmatprep.mubr.bf16.mxu0 0
      %3150 = vmatmul.mubr.bf16.gmra.mrb[0].mxu0 %v2658
      %v3151 = vpop.f32.mrb[0].mxu0
      %v3152 = vadd.f32 %v2991, %v3151
      %v3153 = vpop.f32.mrb[0].mxu0
      %v3154 = vpop.f32.mrb[0].mxu0
      %v3155 = vadd.f32 %v2994, %v3154
      %v3156 = vpop.f32.mrb[0].mxu0
      %3157 = vmatprep.mubr.bf16.mxu0 0
      %3158 = vmatmul.mubr.bf16.gmra.mrb[0].mxu0 %v2661
      %v3159 = vpop.f32.mrb[0].mxu0
      %v3160 = vadd.f32 %v2999, %v3159
      %v3161 = vpop.f32.mrb[0].mxu0
      %v3162 = vpop.f32.mrb[0].mxu0
      %v3163 = vadd.f32 %v3002, %v3162
      %v3164 = vpop.f32.mrb[0].mxu0
      %3165 = vmatprep.mubr.bf16.mxu0 0
      %3166 = vmatmul.mubr.bf16.gmra.mrb[0].mxu0 %v2664
      %v3167 = vpop.f32.mrb[0].mxu0
      %v3168 = vadd.f32 %v3007, %v3167
      %v3169 = vpop.f32.mrb[0].mxu0
      %v3170 = vpop.f32.mrb[0].mxu0
      %v3171 = vadd.f32 %v3010, %v3170
      %v3172 = vpop.f32.mrb[0].mxu0
      %3173 = vmatprep.mubr.bf16.mxu0 0
      %3174 = vmatmul.mubr.bf16.gmra.mrb[0].mxu0 %v2667
      %v3175 = vpop.f32.mrb[0].mxu0
      %v3176 = vadd.f32 %v3015, %v3175
      %v3177 = vpop.f32.mrb[0].mxu0
      %v3178 = vpop.f32.mrb[0].mxu0
      %v3179 = vadd.f32 %v3018, %v3178
      %v3180 = vpop.f32.mrb[0].mxu0
      %3181 = vdwg.mxu0
      %v3182 = vunpack.c.l.b16 %v1506
      %v3183 = vunpack.c.l.b16 %v1820
      %v3184 = vunpack.c.l.b16 %v1513
      %v3185 = vunpack.c.l.b16 %v1821
      %v3186 = vunpack.c.l.b16 %v1520
      %v3187 = vunpack.c.l.b16 %v1822
      %v3188 = vunpack.c.l.b16 %v1527
      %v3189 = vunpack.c.l.b16 %v1823
      %v3190 = vunpack.c.l.b16 %v1534
      %v3191 = vunpack.c.l.b16 %v1824
      %v3192 = vunpack.c.l.b16 %v1541
      %v3193 = vunpack.c.l.b16 %v1825
      %v3194 = vunpack.c.l.b16 %v1548
      %v3195 = vunpack.c.l.b16 %v1826
      %v3196 = vunpack.c.l.b16 %v1555
      %v3197 = vunpack.c.l.b16 %v1827
      %v3198 = vunpack.c.l.b16 %v1562
      %v3199 = vunpack.c.l.b16 %v1828
      %v3200 = vunpack.c.l.b16 %v1569
      %v3201 = vunpack.c.l.b16 %v1829
      %v3202 = vunpack.c.l.b16 %v1576
      %v3203 = vunpack.c.l.b16 %v1830
      %v3204 = vunpack.c.l.b16 %v1583
      %v3205 = vunpack.c.l.b16 %v1831
      %v3206 = vunpack.c.l.b16 %v1590
      %v3207 = vunpack.c.l.b16 %v1832
      %v3208 = vunpack.c.l.b16 %v1597
      %v3209 = vunpack.c.l.b16 %v1833
      %v3210 = vunpack.c.l.b16 %v1604
      %v3211 = vunpack.c.l.b16 %v1834
      %v3212 = vunpack.c.l.b16 %v1611
      %v3213 = vunpack.c.l.b16 %v1835
      %v3214 = vunpack.c.l.b16 %v1618
      %v3215 = vunpack.c.l.b16 %v1836
      %v3216 = vunpack.c.l.b16 %v1625
      %v3217 = vunpack.c.l.b16 %v1837
      %v3218 = vunpack.c.l.b16 %v1632
      %v3219 = vunpack.c.l.b16 %v1838
      %v3220 = vunpack.c.l.b16 %v1639
      %v3221 = vunpack.c.l.b16 %v1839
      %v3222 = vunpack.c.l.b16 %v1646
      %v3223 = vunpack.c.l.b16 %v1840
      %v3224 = vunpack.c.l.b16 %v1653
      %v3225 = vunpack.c.l.b16 %v1841
      %v3226 = vunpack.c.l.b16 %v1660
      %v3227 = vunpack.c.l.b16 %v1842
      %v3228 = vunpack.c.l.b16 %v1667
      %v3229 = vunpack.c.l.b16 %v1843
      %v3230 = vunpack.c.l.b16 %v1674
      %v3231 = vunpack.c.l.b16 %v1844
      %v3232 = vunpack.c.l.b16 %v1681
      %v3233 = vunpack.c.l.b16 %v1845
      %v3234 = vunpack.c.l.b16 %v1688
      %v3235 = vunpack.c.l.b16 %v1846
      %v3236 = vunpack.c.l.b16 %v1695
      %v3237 = vunpack.c.l.b16 %v1847
      %v3238 = vunpack.c.l.b16 %v1702
      %v3239 = vunpack.c.l.b16 %v1848
      %v3240 = vunpack.c.l.b16 %v1709
      %v3241 = vunpack.c.l.b16 %v1849
      %v3242 = vunpack.c.l.b16 %v1716
      %v3243 = vunpack.c.l.b16 %v1850
      %v3244 = vunpack.c.l.b16 %v1723
      %v3245 = vunpack.c.l.b16 %v1851
      %v3246 = vpack.c.b16 %v1406, %v1404
      %v3247 = vpack.c.b16 %v3184, %v3182
      %v3248 = vpack.c.b16 %v3185, %v3183
      %v3249 = vpack.c.b16 %v1410, %v1408
      %v3250 = vpack.c.b16 %v3188, %v3186
      %v3251 = vpack.c.b16 %v3189, %v3187
      %v3252 = vpack.c.b16 %v1414, %v1412
      %v3253 = vpack.c.b16 %v3192, %v3190
      %v3254 = vpack.c.b16 %v3193, %v3191
      %v3255 = vpack.c.b16 %v1418, %v1416
      %v3256 = vpack.c.b16 %v3196, %v3194
      %v3257 = vpack.c.b16 %v3197, %v3195
      %v3258 = vpack.c.b16 %v1422, %v1420
      %v3259 = vpack.c.b16 %v3200, %v3198
      %v3260 = vpack.c.b16 %v3201, %v3199
      %v3261 = vpack.c.b16 %v1426, %v1424
      %v3262 = vpack.c.b16 %v3204, %v3202
      %v3263 = vpack.c.b16 %v3205, %v3203
      %v3264 = vpack.c.b16 %v1430, %v1428
      %v3265 = vpack.c.b16 %v3208, %v3206
      %v3266 = vpack.c.b16 %v3209, %v3207
      %v3267 = vpack.c.b16 %v1434, %v1432
      %v3268 = vpack.c.b16 %v3212, %v3210
      %v3269 = vpack.c.b16 %v3213, %v3211
      %v3270 = vpack.c.b16 %v1438, %v1436
      %v3271 = vpack.c.b16 %v3216, %v3214
      %v3272 = vpack.c.b16 %v3217, %v3215
      %v3273 = vpack.c.b16 %v1442, %v1440
      %v3274 = vpack.c.b16 %v3220, %v3218
      %v3275 = vpack.c.b16 %v3221, %v3219
      %v3276 = vpack.c.b16 %v1446, %v1444
      %v3277 = vpack.c.b16 %v3224, %v3222
      %v3278 = vpack.c.b16 %v3225, %v3223
      %v3279 = vpack.c.b16 %v1450, %v1448
      %v3280 = vpack.c.b16 %v3228, %v3226
      %v3281 = vpack.c.b16 %v3229, %v3227
      %v3282 = vpack.c.b16 %v1454, %v1452
      %v3283 = vpack.c.b16 %v3232, %v3230
      %v3284 = vpack.c.b16 %v3233, %v3231
      %v3285 = vpack.c.b16 %v1458, %v1456
      %v3286 = vpack.c.b16 %v3236, %v3234
      %v3287 = vpack.c.b16 %v3237, %v3235
      %v3288 = vpack.c.b16 %v1462, %v1460
      %v3289 = vpack.c.b16 %v3240, %v3238
      %v3290 = vpack.c.b16 %v3241, %v3239
      %v3291 = vpack.c.b16 %v1466, %v1464
      %v3292 = vpack.c.b16 %v3244, %v3242
      %v3293 = vpack.c.b16 %v3245, %v3243
      %v3390 = vunpack.c.l.b16 %v1852
      %v3391 = vunpack.c.l.b16 %v1853
      %v3392 = vunpack.c.l.b16 %v1854
      %v3393 = vunpack.c.l.b16 %v1855
      %v3394 = vunpack.c.l.b16 %v1856
      %v3395 = vunpack.c.l.b16 %v1857
      %v3396 = vunpack.c.l.b16 %v1858
      %v3397 = vunpack.c.l.b16 %v1859
      %v3398 = vunpack.c.l.b16 %v1860
      %v3399 = vunpack.c.l.b16 %v1861
      %v3400 = vunpack.c.l.b16 %v1862
      %v3401 = vunpack.c.l.b16 %v1863
      %v3402 = vunpack.c.l.b16 %v1864
      %v3403 = vunpack.c.l.b16 %v1865
      %v3404 = vunpack.c.l.b16 %v1866
      %v3405 = vunpack.c.l.b16 %v1867
      %v3406 = vunpack.c.l.b16 %v1868
      %v3407 = vunpack.c.l.b16 %v1869
      %v3408 = vunpack.c.l.b16 %v1870
      %v3409 = vunpack.c.l.b16 %v1871
      %v3410 = vunpack.c.l.b16 %v1872
      %v3411 = vunpack.c.l.b16 %v1873
      %v3412 = vunpack.c.l.b16 %v1874
      %v3413 = vunpack.c.l.b16 %v1875
      %v3414 = vunpack.c.l.b16 %v1876
      %v3415 = vunpack.c.l.b16 %v1877
      %v3416 = vunpack.c.l.b16 %v1878
      %v3417 = vunpack.c.l.b16 %v1879
      %v3418 = vunpack.c.l.b16 %v1880
      %v3419 = vunpack.c.l.b16 %v1881
      %v3420 = vunpack.c.l.b16 %v1882
      %v3421 = vunpack.c.l.b16 %v1883
      %v3422 = vunpack.c.l.b16 %v1884
      %v3423 = vunpack.c.l.b16 %v1885
      %v3424 = vunpack.c.l.b16 %v1886
      %v3425 = vunpack.c.l.b16 %v1887
      %v3426 = vunpack.c.l.b16 %v1888
      %v3427 = vunpack.c.l.b16 %v1889
      %v3428 = vunpack.c.l.b16 %v1890
      %v3429 = vunpack.c.l.b16 %v1891
      %v3430 = vunpack.c.l.b16 %v1892
      %v3431 = vunpack.c.l.b16 %v1893
      %v3432 = vunpack.c.l.b16 %v1894
      %v3433 = vunpack.c.l.b16 %v1895
      %v3434 = vunpack.c.l.b16 %v1896
      %v3435 = vunpack.c.l.b16 %v1897
      %v3436 = vunpack.c.l.b16 %v1898
      %v3437 = vunpack.c.l.b16 %v1899
      %v3438 = vpack.c.b16 %v3391, %v3390
      %v3439 = vpack.c.b16 %v3393, %v3392
      %v3440 = vpack.c.b16 %v3395, %v3394
      %v3441 = vpack.c.b16 %v3397, %v3396
      %v3442 = vpack.c.b16 %v3399, %v3398
      %v3443 = vpack.c.b16 %v3401, %v3400
      %v3444 = vpack.c.b16 %v3403, %v3402
      %v3445 = vpack.c.b16 %v3405, %v3404
      %v3446 = vpack.c.b16 %v3407, %v3406
      %v3447 = vpack.c.b16 %v3409, %v3408
      %v3448 = vpack.c.b16 %v3411, %v3410
      %v3449 = vpack.c.b16 %v3413, %v3412
      %v3450 = vpack.c.b16 %v3415, %v3414
      %v3451 = vpack.c.b16 %v3417, %v3416
      %v3452 = vpack.c.b16 %v3419, %v3418
      %v3453 = vpack.c.b16 %v3421, %v3420
      %v3454 = vpack.c.b16 %v3423, %v3422
      %v3455 = vpack.c.b16 %v3425, %v3424
      %v3456 = vpack.c.b16 %v3427, %v3426
      %v3457 = vpack.c.b16 %v3429, %v3428
      %v3458 = vpack.c.b16 %v3431, %v3430
      %v3459 = vpack.c.b16 %v3433, %v3432
      %v3460 = vpack.c.b16 %v3435, %v3434
      %v3461 = vpack.c.b16 %v3437, %v3436
      %3486 = vmatprep.subr.bf16.mxu0 0
      %3487 = vmatpush1.bf16.msra.mxu0 %v3438
      %3488 = vmatprep.subr.bf16.mxu0 0
      %3489 = vmatpush1.bf16.msra.mxu0 %v3439
      %3490 = vmatprep.subr.bf16.mxu0 0
      %3491 = vmatpush1.bf16.msra.mxu0 %v3440
      %3492 = vmatprep.subr.bf16.mxu0 0
      %3493 = vmatpush1.bf16.msra.mxu0 %v3441
      %3494 = vmatprep.subr.bf16.mxu0 0
      %3495 = vmatpush1.bf16.msra.mxu0 %v3442
      %3496 = vmatprep.subr.bf16.mxu0 0
      %3497 = vmatpush1.bf16.msra.mxu0 %v3443
      %3498 = vmatprep.subr.bf16.mxu0 0
      %3499 = vmatpush1.bf16.msra.mxu0 %v3444
      %3500 = vmatprep.subr.bf16.mxu0 0
      %3501 = vmatpush1.bf16.msra.mxu0 %v3445
      %3502 = vmatprep.subr.bf16.mxu0 0
      %3503 = vmatpush1.bf16.msra.mxu0 %v3446
      %3504 = vmatprep.subr.bf16.mxu0 0
      %3505 = vmatpush1.bf16.msra.mxu0 %v3447
      %3506 = vmatprep.subr.bf16.mxu0 0
      %3507 = vmatpush1.bf16.msra.mxu0 %v3448
      %3508 = vmatprep.subr.bf16.mxu0 0
      %3509 = vmatpush1.bf16.msra.mxu0 %v3449
      %3510 = vmatprep.subr.bf16.mxu0 0
      %3511 = vmatpush1.bf16.msra.mxu0 %v3450
      %3512 = vmatprep.subr.bf16.mxu0 0
      %3513 = vmatpush1.bf16.msra.mxu0 %v3451
      %3514 = vmatprep.subr.bf16.mxu0 0
      %3515 = vmatpush1.bf16.msra.mxu0 %v3452
      %3516 = vmatprep.subr.bf16.mxu0 0
      %3517 = vmatpush1.bf16.msra.mxu0 %v3453
      %3518 = vmatprep.mubr.bf16.mxu0 %v3247
      %3519 = vmatmul.mubr.bf16.gmra.mrb[0].mxu0 %v3246
      %v3520 = vpop.f32.mrb[0].mxu0
      %v3521 = vadd.f32 %v3056, %v3520
      %v3522 = vpop.f32.mrb[0].mxu0
      %v3523 = vpop.f32.mrb[0].mxu0
      %v3524 = vadd.f32 %v3059, %v3523
      %v3525 = vpop.f32.mrb[0].mxu0
      %3526 = vmatprep.mubr.bf16.mxu0 %v3250
      %3527 = vmatmul.mubr.bf16.gmra.mrb[0].mxu0 %v3249
      %v3528 = vpop.f32.mrb[0].mxu0
      %v3529 = vadd.f32 %v3064, %v3528
      %v3530 = vpop.f32.mrb[0].mxu0
      %v3531 = vpop.f32.mrb[0].mxu0
      %v3532 = vadd.f32 %v3067, %v3531
      %v3533 = vpop.f32.mrb[0].mxu0
      %3534 = vmatprep.mubr.bf16.mxu0 %v3253
      %3535 = vmatmul.mubr.bf16.gmra.mrb[0].mxu0 %v3252
      %v3536 = vpop.f32.mrb[0].mxu0
      %v3537 = vadd.f32 %v3072, %v3536
      %v3538 = vpop.f32.mrb[0].mxu0
      %v3539 = vpop.f32.mrb[0].mxu0
      %v3540 = vadd.f32 %v3075, %v3539
      %v3541 = vpop.f32.mrb[0].mxu0
      %3542 = vmatprep.mubr.bf16.mxu0 %v3256
      %3543 = vmatmul.mubr.bf16.gmra.mrb[0].mxu0 %v3255
      %v3544 = vpop.f32.mrb[0].mxu0
      %v3545 = vadd.f32 %v3080, %v3544
      %v3546 = vpop.f32.mrb[0].mxu0
      %v3547 = vpop.f32.mrb[0].mxu0
      %v3548 = vadd.f32 %v3083, %v3547
      %v3549 = vpop.f32.mrb[0].mxu0
      %3550 = vmatprep.mubr.bf16.mxu0 %v3259
      %3551 = vmatmul.mubr.bf16.gmra.mrb[0].mxu0 %v3258
      %v3552 = vpop.f32.mrb[0].mxu0
      %v3553 = vadd.f32 %v3088, %v3552
      %v3554 = vpop.f32.mrb[0].mxu0
      %v3555 = vpop.f32.mrb[0].mxu0
      %v3556 = vadd.f32 %v3091, %v3555
      %v3557 = vpop.f32.mrb[0].mxu0
      %3558 = vmatprep.mubr.bf16.mxu0 %v3262
      %3559 = vmatmul.mubr.bf16.gmra.mrb[0].mxu0 %v3261
      %v3560 = vpop.f32.mrb[0].mxu0
      %v3561 = vadd.f32 %v3096, %v3560
      %v3562 = vpop.f32.mrb[0].mxu0
      %v3563 = vpop.f32.mrb[0].mxu0
      %v3564 = vadd.f32 %v3099, %v3563
      %v3565 = vpop.f32.mrb[0].mxu0
      %3566 = vmatprep.mubr.bf16.mxu0 %v3265
      %3567 = vmatmul.mubr.bf16.gmra.mrb[0].mxu0 %v3264
      %v3568 = vpop.f32.mrb[0].mxu0
      %v3569 = vadd.f32 %v3104, %v3568
      %v3570 = vpop.f32.mrb[0].mxu0
      %v3571 = vpop.f32.mrb[0].mxu0
      %v3572 = vadd.f32 %v3107, %v3571
      %v3573 = vpop.f32.mrb[0].mxu0
      %3574 = vmatprep.mubr.bf16.mxu0 %v3268
      %3575 = vmatmul.mubr.bf16.gmra.mrb[0].mxu0 %v3267
      %v3576 = vpop.f32.mrb[0].mxu0
      %v3577 = vadd.f32 %v3112, %v3576
      %v3578 = vpop.f32.mrb[0].mxu0
      %v3579 = vpop.f32.mrb[0].mxu0
      %v3580 = vadd.f32 %v3115, %v3579
      %v3581 = vpop.f32.mrb[0].mxu0
      %3582 = vmatprep.mubr.bf16.mxu0 %v3271
      %3583 = vmatmul.mubr.bf16.gmra.mrb[0].mxu0 %v3270
      %v3584 = vpop.f32.mrb[0].mxu0
      %v3585 = vadd.f32 %v3120, %v3584
      %v3586 = vpop.f32.mrb[0].mxu0
      %v3587 = vpop.f32.mrb[0].mxu0
      %v3588 = vadd.f32 %v3123, %v3587
      %v3589 = vpop.f32.mrb[0].mxu0
      %3590 = vmatprep.mubr.bf16.mxu0 %v3274
      %3591 = vmatmul.mubr.bf16.gmra.mrb[0].mxu0 %v3273
      %v3592 = vpop.f32.mrb[0].mxu0
      %v3593 = vadd.f32 %v3128, %v3592
      %v3594 = vpop.f32.mrb[0].mxu0
      %v3595 = vpop.f32.mrb[0].mxu0
      %v3596 = vadd.f32 %v3131, %v3595
      %v3597 = vpop.f32.mrb[0].mxu0
      %3598 = vmatprep.mubr.bf16.mxu0 %v3277
      %3599 = vmatmul.mubr.bf16.gmra.mrb[0].mxu0 %v3276
      %v3600 = vpop.f32.mrb[0].mxu0
      %v3601 = vadd.f32 %v3136, %v3600
      %v3602 = vpop.f32.mrb[0].mxu0
      %v3603 = vpop.f32.mrb[0].mxu0
      %v3604 = vadd.f32 %v3139, %v3603
      %v3605 = vpop.f32.mrb[0].mxu0
      %3606 = vmatprep.mubr.bf16.mxu0 %v3280
      %3607 = vmatmul.mubr.bf16.gmra.mrb[0].mxu0 %v3279
      %v3608 = vpop.f32.mrb[0].mxu0
      %v3609 = vadd.f32 %v3144, %v3608
      %v3610 = vpop.f32.mrb[0].mxu0
      %v3611 = vpop.f32.mrb[0].mxu0
      %v3612 = vadd.f32 %v3147, %v3611
      %v3613 = vpop.f32.mrb[0].mxu0
      %3614 = vmatprep.mubr.bf16.mxu0 %v3283
      %3615 = vmatmul.mubr.bf16.gmra.mrb[0].mxu0 %v3282
      %v3616 = vpop.f32.mrb[0].mxu0
      %v3617 = vadd.f32 %v3152, %v3616
      %v3618 = vpop.f32.mrb[0].mxu0
      %v3619 = vpop.f32.mrb[0].mxu0
      %v3620 = vadd.f32 %v3155, %v3619
      %v3621 = vpop.f32.mrb[0].mxu0
      %3622 = vmatprep.mubr.bf16.mxu0 %v3286
      %3623 = vmatmul.mubr.bf16.gmra.mrb[0].mxu0 %v3285
      %v3624 = vpop.f32.mrb[0].mxu0
      %v3625 = vadd.f32 %v3160, %v3624
      %v3626 = vpop.f32.mrb[0].mxu0
      %v3627 = vpop.f32.mrb[0].mxu0
      %v3628 = vadd.f32 %v3163, %v3627
      %v3629 = vpop.f32.mrb[0].mxu0
      %3630 = vmatprep.mubr.bf16.mxu0 %v3289
      %3631 = vmatmul.mubr.bf16.gmra.mrb[0].mxu0 %v3288
      %v3632 = vpop.f32.mrb[0].mxu0
      %v3633 = vadd.f32 %v3168, %v3632
      %v3634 = vpop.f32.mrb[0].mxu0
      %v3635 = vpop.f32.mrb[0].mxu0
      %v3636 = vadd.f32 %v3171, %v3635
      %v3637 = vpop.f32.mrb[0].mxu0
      %3638 = vmatprep.mubr.bf16.mxu0 %v3292
      %3639 = vmatmul.mubr.bf16.gmra.mrb[0].mxu0 %v3291
      %v3640 = vpop.f32.mrb[0].mxu0
      %v3641 = vadd.f32 %v3176, %v3640
      %v3642 = vpop.f32.mrb[0].mxu0
      %v3643 = vpop.f32.mrb[0].mxu0
      %v3644 = vadd.f32 %v3179, %v3643
      %v3645 = vpop.f32.mrb[0].mxu0
      %3646 = vdwg.mxu0
      %3647 = vmatprep.subr.bf16.mxu0 0
      %3648 = vmatpush1.bf16.msra.mxu0 %v3454
      %3649 = vmatprep.subr.bf16.mxu0 0
      %3650 = vmatpush1.bf16.msra.mxu0 %v3455
      %3651 = vmatprep.subr.bf16.mxu0 0
      %3652 = vmatpush1.bf16.msra.mxu0 %v3456
      %3653 = vmatprep.subr.bf16.mxu0 0
      %3654 = vmatpush1.bf16.msra.mxu0 %v3457
      %3655 = vmatprep.subr.bf16.mxu0 0
      %3656 = vmatpush1.bf16.msra.mxu0 %v3458
      %3657 = vmatprep.subr.bf16.mxu0 0
      %3658 = vmatpush1.bf16.msra.mxu0 %v3459
      %3659 = vmatprep.subr.bf16.mxu0 0
      %3660 = vmatpush1.bf16.msra.mxu0 %v3460
      %3661 = vmatprep.subr.bf16.mxu0 0
      %3662 = vmatpush1.bf16.msra.mxu0 %v3461
      %3663 = vmatprep.subr.bf16.mxu0 0
      %3664 = vmatpush1.bf16.msra.mxu0 0
      %3665 = vmatprep.subr.bf16.mxu0 0
      %3666 = vmatpush1.bf16.msra.mxu0 0
      %3667 = vmatprep.subr.bf16.mxu0 0
      %3668 = vmatpush1.bf16.msra.mxu0 0
      %3669 = vmatprep.subr.bf16.mxu0 0
      %3670 = vmatpush1.bf16.msra.mxu0 0
      %3671 = vmatprep.subr.bf16.mxu0 0
      %3672 = vmatpush1.bf16.msra.mxu0 0
      %3673 = vmatprep.subr.bf16.mxu0 0
      %3674 = vmatpush1.bf16.msra.mxu0 0
      %3675 = vmatprep.subr.bf16.mxu0 0
      %3676 = vmatpush1.bf16.msra.mxu0 0
      %3677 = vmatprep.subr.bf16.mxu0 0
      %3678 = vmatpush1.bf16.msra.mxu0 0
      %3679 = vmatprep.mubr.bf16.mxu0 0
      %3680 = vmatmul.mubr.bf16.gmra.mrb[0].mxu0 %v3248
      %v3681 = vpop.f32.mrb[0].mxu0
      %v3682 = vadd.f32 %v3521, %v3681
      %v3683 = vpop.f32.mrb[0].mxu0
      %v3684 = vpop.f32.mrb[0].mxu0
      %v3685 = vadd.f32 %v3524, %v3684
      %v3686 = vpop.f32.mrb[0].mxu0
      %3687 = vmatprep.mubr.bf16.mxu0 0
      %3688 = vmatmul.mubr.bf16.gmra.mrb[0].mxu0 %v3251
      %v3689 = vpop.f32.mrb[0].mxu0
      %v3690 = vadd.f32 %v3529, %v3689
      %v3691 = vpop.f32.mrb[0].mxu0
      %v3692 = vpop.f32.mrb[0].mxu0
      %v3693 = vadd.f32 %v3532, %v3692
      %v3694 = vpop.f32.mrb[0].mxu0
      %3695 = vmatprep.mubr.bf16.mxu0 0
      %3696 = vmatmul.mubr.bf16.gmra.mrb[0].mxu0 %v3254
      %v3697 = vpop.f32.mrb[0].mxu0
      %v3698 = vadd.f32 %v3537, %v3697
      %v3699 = vpop.f32.mrb[0].mxu0
      %v3700 = vpop.f32.mrb[0].mxu0
      %v3701 = vadd.f32 %v3540, %v3700
      %v3702 = vpop.f32.mrb[0].mxu0
      %3703 = vmatprep.mubr.bf16.mxu0 0
      %3704 = vmatmul.mubr.bf16.gmra.mrb[0].mxu0 %v3257
      %v3705 = vpop.f32.mrb[0].mxu0
      %v3706 = vadd.f32 %v3545, %v3705
      %v3707 = vpop.f32.mrb[0].mxu0
      %v3708 = vpop.f32.mrb[0].mxu0
      %v3709 = vadd.f32 %v3548, %v3708
      %v3710 = vpop.f32.mrb[0].mxu0
      %3711 = vmatprep.mubr.bf16.mxu0 0
      %3712 = vmatmul.mubr.bf16.gmra.mrb[0].mxu0 %v3260
      %v3713 = vpop.f32.mrb[0].mxu0
      %v3714 = vadd.f32 %v3553, %v3713
      %v3715 = vpop.f32.mrb[0].mxu0
      %v3716 = vpop.f32.mrb[0].mxu0
      %v3717 = vadd.f32 %v3556, %v3716
      %v3718 = vpop.f32.mrb[0].mxu0
      %3719 = vmatprep.mubr.bf16.mxu0 0
      %3720 = vmatmul.mubr.bf16.gmra.mrb[0].mxu0 %v3263
      %v3721 = vpop.f32.mrb[0].mxu0
      %v3722 = vadd.f32 %v3561, %v3721
      %v3723 = vpop.f32.mrb[0].mxu0
      %v3724 = vpop.f32.mrb[0].mxu0
      %v3725 = vadd.f32 %v3564, %v3724
      %v3726 = vpop.f32.mrb[0].mxu0
      %3727 = vmatprep.mubr.bf16.mxu0 0
      %3728 = vmatmul.mubr.bf16.gmra.mrb[0].mxu0 %v3266
      %v3729 = vpop.f32.mrb[0].mxu0
      %v3730 = vadd.f32 %v3569, %v3729
      %v3731 = vpop.f32.mrb[0].mxu0
      %v3732 = vpop.f32.mrb[0].mxu0
      %v3733 = vadd.f32 %v3572, %v3732
      %v3734 = vpop.f32.mrb[0].mxu0
      %3735 = vmatprep.mubr.bf16.mxu0 0
      %3736 = vmatmul.mubr.bf16.gmra.mrb[0].mxu0 %v3269
      %v3737 = vpop.f32.mrb[0].mxu0
      %v3738 = vadd.f32 %v3577, %v3737
      %v3739 = vpop.f32.mrb[0].mxu0
      %v3740 = vpop.f32.mrb[0].mxu0
      %v3741 = vadd.f32 %v3580, %v3740
      %v3742 = vpop.f32.mrb[0].mxu0
      %3743 = vmatprep.mubr.bf16.mxu0 0
      %3744 = vmatmul.mubr.bf16.gmra.mrb[0].mxu0 %v3272
      %v3745 = vpop.f32.mrb[0].mxu0
      %v3746 = vadd.f32 %v3585, %v3745
      %v3747 = vpop.f32.mrb[0].mxu0
      %v3748 = vpop.f32.mrb[0].mxu0
      %v3749 = vadd.f32 %v3588, %v3748
      %v3750 = vpop.f32.mrb[0].mxu0
      %3751 = vmatprep.mubr.bf16.mxu0 0
      %3752 = vmatmul.mubr.bf16.gmra.mrb[0].mxu0 %v3275
      %v3753 = vpop.f32.mrb[0].mxu0
      %v3754 = vadd.f32 %v3593, %v3753
      %v3755 = vpop.f32.mrb[0].mxu0
      %v3756 = vpop.f32.mrb[0].mxu0
      %v3757 = vadd.f32 %v3596, %v3756
      %v3758 = vpop.f32.mrb[0].mxu0
      %3759 = vmatprep.mubr.bf16.mxu0 0
      %3760 = vmatmul.mubr.bf16.gmra.mrb[0].mxu0 %v3278
      %v3761 = vpop.f32.mrb[0].mxu0
      %v3762 = vadd.f32 %v3601, %v3761
      %v3763 = vpop.f32.mrb[0].mxu0
      %v3764 = vpop.f32.mrb[0].mxu0
      %v3765 = vadd.f32 %v3604, %v3764
      %v3766 = vpop.f32.mrb[0].mxu0
      %3767 = vmatprep.mubr.bf16.mxu0 0
      %3768 = vmatmul.mubr.bf16.gmra.mrb[0].mxu0 %v3281
      %v3769 = vpop.f32.mrb[0].mxu0
      %v3770 = vadd.f32 %v3609, %v3769
      %v3771 = vpop.f32.mrb[0].mxu0
      %v3772 = vpop.f32.mrb[0].mxu0
      %v3773 = vadd.f32 %v3612, %v3772
      %v3774 = vpop.f32.mrb[0].mxu0
      %3775 = vmatprep.mubr.bf16.mxu0 0
      %3776 = vmatmul.mubr.bf16.gmra.mrb[0].mxu0 %v3284
      %v3777 = vpop.f32.mrb[0].mxu0
      %v3778 = vadd.f32 %v3617, %v3777
      %v3779 = vpop.f32.mrb[0].mxu0
      %v3780 = vpop.f32.mrb[0].mxu0
      %v3781 = vadd.f32 %v3620, %v3780
      %v3782 = vpop.f32.mrb[0].mxu0
      %3783 = vmatprep.mubr.bf16.mxu0 0
      %3784 = vmatmul.mubr.bf16.gmra.mrb[0].mxu0 %v3287
      %v3785 = vpop.f32.mrb[0].mxu0
      %v3786 = vadd.f32 %v3625, %v3785
      %v3787 = vpop.f32.mrb[0].mxu0
      %v3788 = vpop.f32.mrb[0].mxu0
      %v3789 = vadd.f32 %v3628, %v3788
      %v3790 = vpop.f32.mrb[0].mxu0
      %3791 = vmatprep.mubr.bf16.mxu0 0
      %3792 = vmatmul.mubr.bf16.gmra.mrb[0].mxu0 %v3290
      %v3793 = vpop.f32.mrb[0].mxu0
      %v3794 = vadd.f32 %v3633, %v3793
      %v3795 = vpop.f32.mrb[0].mxu0
      %v3796 = vpop.f32.mrb[0].mxu0
      %v3797 = vadd.f32 %v3636, %v3796
      %v3798 = vpop.f32.mrb[0].mxu0
      %3799 = vmatprep.mubr.bf16.mxu0 0
      %3800 = vmatmul.mubr.bf16.gmra.mrb[0].mxu0 %v3293
      %v3801 = vpop.f32.mrb[0].mxu0
      %v3802 = vadd.f32 %v3641, %v3801
      %v3803 = vpop.f32.mrb[0].mxu0
      %v3804 = vpop.f32.mrb[0].mxu0
      %v3805 = vadd.f32 %v3644, %v3804
      %v3806 = vpop.f32.mrb[0].mxu0
      %3807 = vdwg.mxu0
      %s3808 = scalar_lea.vmem [#allocation2], 16
      %v3809 = vld [vmem:[%s3808] sm:$0xf]
      %v3810 = vld [vmem:[%s3808 + $0x8] sm:$0xf]
      %v3811 = vld [vmem:[%s3808 + $0x10] sm:$0xf]
      %v3812 = vld [vmem:[%s3808 + $0x18] sm:$0xf]
      %v3813 = vld [vmem:[%s3808 + $0x20] sm:$0xf]
      %v3814 = vld [vmem:[%s3808 + $0x28] sm:$0xf]
      %v3815 = vld [vmem:[%s3808 + $0x30] sm:$0xf]
      %v3816 = vld [vmem:[%s3808 + $0x38] sm:$0xf]
      %v3817 = vld [vmem:[%s3808 + $0x50] sm:$0xf]
      %v3818 = vld [vmem:[%s3808 + $0x58] sm:$0xf]
      %v3819 = vld [vmem:[%s3808 + $0x60] sm:$0xf]
      %v3820 = vld [vmem:[%s3808 + $0x68] sm:$0xf]
      %v3821 = vld [vmem:[%s3808 + $0x70] sm:$0xf]
      %v3822 = vld [vmem:[%s3808 + $0x78] sm:$0xf]
      %v3823 = vld [vmem:[%s3808 + $0x80] sm:$0xf]
      %v3824 = vld [vmem:[%s3808 + $0x88] sm:$0xf]
      %v3825 = vld [vmem:[%s3808 + $0xa0] sm:$0xf]
      %v3826 = vld [vmem:[%s3808 + $0xa8] sm:$0xf]
      %v3827 = vld [vmem:[%s3808 + $0xb0] sm:$0xf]
      %v3828 = vld [vmem:[%s3808 + $0xb8] sm:$0xf]
      %v3829 = vld [vmem:[%s3808 + $0xc0] sm:$0xf]
      %v3830 = vld [vmem:[%s3808 + $0xc8] sm:$0xf]
      %v3831 = vld [vmem:[%s3808 + $0xd0] sm:$0xf]
      %v3832 = vld [vmem:[%s3808 + $0xd8] sm:$0xf]
      %v3833 = vld [vmem:[%s3808 + $0xf0] sm:$0xf]
      %v3834 = vld [vmem:[%s3808 + $0xf8] sm:$0xf]
      %v3835 = vld [vmem:[%s3808 + $0x100] sm:$0xf]
      %v3836 = vld [vmem:[%s3808 + $0x108] sm:$0xf]
      %v3837 = vld [vmem:[%s3808 + $0x110] sm:$0xf]
      %v3838 = vld [vmem:[%s3808 + $0x118] sm:$0xf]
      %v3839 = vld [vmem:[%s3808 + $0x120] sm:$0xf]
      %v3840 = vld [vmem:[%s3808 + $0x128] sm:$0xf]
      %v3841 = vld [vmem:[%s3808 + $0x4] sm:$0x1]
      %v3842 = vld [vmem:[%s3808 + $0xc] sm:$0x1]
      %v3843 = vld [vmem:[%s3808 + $0x14] sm:$0x1]
      %v3844 = vld [vmem:[%s3808 + $0x1c] sm:$0x1]
      %v3845 = vld [vmem:[%s3808 + $0x24] sm:$0x1]
      %v3846 = vld [vmem:[%s3808 + $0x2c] sm:$0x1]
      %v3847 = vld [vmem:[%s3808 + $0x34] sm:$0x1]
      %v3848 = vld [vmem:[%s3808 + $0x3c] sm:$0x1]
      %v3849 = vld [vmem:[%s3808 + $0x54] sm:$0x1]
      %v3850 = vld [vmem:[%s3808 + $0x5c] sm:$0x1]
      %v3851 = vld [vmem:[%s3808 + $0x64] sm:$0x1]
      %v3852 = vld [vmem:[%s3808 + $0x6c] sm:$0x1]
      %v3853 = vld [vmem:[%s3808 + $0x74] sm:$0x1]
      %v3854 = vld [vmem:[%s3808 + $0x7c] sm:$0x1]
      %v3855 = vld [vmem:[%s3808 + $0x84] sm:$0x1]
      %v3856 = vld [vmem:[%s3808 + $0x8c] sm:$0x1]
      %v3857 = vld [vmem:[%s3808 + $0xa4] sm:$0x1]
      %v3858 = vld [vmem:[%s3808 + $0xac] sm:$0x1]
      %v3859 = vld [vmem:[%s3808 + $0xb4] sm:$0x1]
      %v3860 = vld [vmem:[%s3808 + $0xbc] sm:$0x1]
      %v3861 = vld [vmem:[%s3808 + $0xc4] sm:$0x1]
      %v3862 = vld [vmem:[%s3808 + $0xcc] sm:$0x1]
      %v3863 = vld [vmem:[%s3808 + $0xd4] sm:$0x1]
      %v3864 = vld [vmem:[%s3808 + $0xdc] sm:$0x1]
      %v3865 = vld [vmem:[%s3808 + $0xf4] sm:$0x1]
      %v3866 = vld [vmem:[%s3808 + $0xfc] sm:$0x1]
      %v3867 = vld [vmem:[%s3808 + $0x104] sm:$0x1]
      %v3868 = vld [vmem:[%s3808 + $0x10c] sm:$0x1]
      %v3869 = vld [vmem:[%s3808 + $0x114] sm:$0x1]
      %v3870 = vld [vmem:[%s3808 + $0x11c] sm:$0x1]
      %v3871 = vld [vmem:[%s3808 + $0x124] sm:$0x1]
      %v3872 = vld [vmem:[%s3808 + $0x12c] sm:$0x1]
      %v3873 = vld [vmem:[%s3808] sm:$0xe]
      %v3874 = vld [vmem:[%s3808 + $0x8] sm:$0xe]
      %v3875 = vld [vmem:[%s3808 + $0x10] sm:$0xe]
      %v3876 = vld [vmem:[%s3808 + $0x18] sm:$0xe]
      %v3877 = vld [vmem:[%s3808 + $0x20] sm:$0xe]
      %v3878 = vld [vmem:[%s3808 + $0x28] sm:$0xe]
      %v3879 = vld [vmem:[%s3808 + $0x30] sm:$0xe]
      %v3880 = vld [vmem:[%s3808 + $0x38] sm:$0xe]
      %v3881 = vld [vmem:[%s3808 + $0x50] sm:$0xe]
      %v3882 = vld [vmem:[%s3808 + $0x58] sm:$0xe]
      %v3883 = vld [vmem:[%s3808 + $0x60] sm:$0xe]
      %v3884 = vld [vmem:[%s3808 + $0x68] sm:$0xe]
      %v3885 = vld [vmem:[%s3808 + $0x70] sm:$0xe]
      %v3886 = vld [vmem:[%s3808 + $0x78] sm:$0xe]
      %v3887 = vld [vmem:[%s3808 + $0x80] sm:$0xe]
      %v3888 = vld [vmem:[%s3808 + $0x88] sm:$0xe]
      %v3889 = vld [vmem:[%s3808 + $0xa0] sm:$0xe]
      %v3890 = vld [vmem:[%s3808 + $0xa8] sm:$0xe]
      %v3891 = vld [vmem:[%s3808 + $0xb0] sm:$0xe]
      %v3892 = vld [vmem:[%s3808 + $0xb8] sm:$0xe]
      %v3893 = vld [vmem:[%s3808 + $0xc0] sm:$0xe]
      %v3894 = vld [vmem:[%s3808 + $0xc8] sm:$0xe]
      %v3895 = vld [vmem:[%s3808 + $0xd0] sm:$0xe]
      %v3896 = vld [vmem:[%s3808 + $0xd8] sm:$0xe]
      %v3897 = vld [vmem:[%s3808 + $0xf0] sm:$0xe]
      %v3898 = vld [vmem:[%s3808 + $0xf8] sm:$0xe]
      %v3899 = vld [vmem:[%s3808 + $0x100] sm:$0xe]
      %v3900 = vld [vmem:[%s3808 + $0x108] sm:$0xe]
      %v3901 = vld [vmem:[%s3808 + $0x110] sm:$0xe]
      %v3902 = vld [vmem:[%s3808 + $0x118] sm:$0xe]
      %v3903 = vld [vmem:[%s3808 + $0x120] sm:$0xe]
      %v3904 = vld [vmem:[%s3808 + $0x128] sm:$0xe]
      %v3969 = vunpack.c.l.b16 %v3809
      %v3970 = vunpack.c.l.b16 %v3841
      %v3971 = vunpack.c.l.b16 %v3810
      %v3972 = vunpack.c.l.b16 %v3842
      %v3973 = vunpack.c.l.b16 %v3811
      %v3974 = vunpack.c.l.b16 %v3843
      %v3975 = vunpack.c.l.b16 %v3812
      %v3976 = vunpack.c.l.b16 %v3844
      %v3977 = vunpack.c.l.b16 %v3813
      %v3978 = vunpack.c.l.b16 %v3845
      %v3979 = vunpack.c.l.b16 %v3814
      %v3980 = vunpack.c.l.b16 %v3846
      %v3981 = vunpack.c.l.b16 %v3815
      %v3982 = vunpack.c.l.b16 %v3847
      %v3983 = vunpack.c.l.b16 %v3816
      %v3984 = vunpack.c.l.b16 %v3848
      %v3985 = vunpack.c.l.b16 %v3817
      %v3986 = vunpack.c.l.b16 %v3849
      %v3987 = vunpack.c.l.b16 %v3818
      %v3988 = vunpack.c.l.b16 %v3850
      %v3989 = vunpack.c.l.b16 %v3819
      %v3990 = vunpack.c.l.b16 %v3851
      %v3991 = vunpack.c.l.b16 %v3820
      %v3992 = vunpack.c.l.b16 %v3852
      %v3993 = vunpack.c.l.b16 %v3821
      %v3994 = vunpack.c.l.b16 %v3853
      %v3995 = vunpack.c.l.b16 %v3822
      %v3996 = vunpack.c.l.b16 %v3854
      %v3997 = vunpack.c.l.b16 %v3823
      %v3998 = vunpack.c.l.b16 %v3855
      %v3999 = vunpack.c.l.b16 %v3824
      %v4000 = vunpack.c.l.b16 %v3856
      %v4001 = vunpack.c.l.b16 %v3825
      %v4002 = vunpack.c.l.b16 %v3857
      %v4003 = vunpack.c.l.b16 %v3826
      %v4004 = vunpack.c.l.b16 %v3858
      %v4005 = vunpack.c.l.b16 %v3827
      %v4006 = vunpack.c.l.b16 %v3859
      %v4007 = vunpack.c.l.b16 %v3828
      %v4008 = vunpack.c.l.b16 %v3860
      %v4009 = vunpack.c.l.b16 %v3829
      %v4010 = vunpack.c.l.b16 %v3861
      %v4011 = vunpack.c.l.b16 %v3830
      %v4012 = vunpack.c.l.b16 %v3862
      %v4013 = vunpack.c.l.b16 %v3831
      %v4014 = vunpack.c.l.b16 %v3863
      %v4015 = vunpack.c.l.b16 %v3832
      %v4016 = vunpack.c.l.b16 %v3864
      %v4017 = vunpack.c.l.b16 %v3833
      %v4018 = vunpack.c.l.b16 %v3865
      %v4019 = vunpack.c.l.b16 %v3834
      %v4020 = vunpack.c.l.b16 %v3866
      %v4021 = vunpack.c.l.b16 %v3835
      %v4022 = vunpack.c.l.b16 %v3867
      %v4023 = vunpack.c.l.b16 %v3836
      %v4024 = vunpack.c.l.b16 %v3868
      %v4025 = vunpack.c.l.b16 %v3837
      %v4026 = vunpack.c.l.b16 %v3869
      %v4027 = vunpack.c.l.b16 %v3838
      %v4028 = vunpack.c.l.b16 %v3870
      %v4029 = vunpack.c.l.b16 %v3839
      %v4030 = vunpack.c.l.b16 %v3871
      %v4031 = vunpack.c.l.b16 %v3840
      %v4032 = vunpack.c.l.b16 %v3872
      %v4033 = vpack.c.b16 %v3970, %v3969
      %v4034 = vpack.c.b16 %v3972, %v3971
      %v4035 = vpack.c.b16 %v3974, %v3973
      %v4036 = vpack.c.b16 %v3976, %v3975
      %v4037 = vpack.c.b16 %v3978, %v3977
      %v4038 = vpack.c.b16 %v3980, %v3979
      %v4039 = vpack.c.b16 %v3982, %v3981
      %v4040 = vpack.c.b16 %v3984, %v3983
      %v4041 = vpack.c.b16 %v3986, %v3985
      %v4042 = vpack.c.b16 %v3988, %v3987
      %v4043 = vpack.c.b16 %v3990, %v3989
      %v4044 = vpack.c.b16 %v3992, %v3991
      %v4045 = vpack.c.b16 %v3994, %v3993
      %v4046 = vpack.c.b16 %v3996, %v3995
      %v4047 = vpack.c.b16 %v3998, %v3997
      %v4048 = vpack.c.b16 %v4000, %v3999
      %v4049 = vpack.c.b16 %v4002, %v4001
      %v4050 = vpack.c.b16 %v4004, %v4003
      %v4051 = vpack.c.b16 %v4006, %v4005
      %v4052 = vpack.c.b16 %v4008, %v4007
      %v4053 = vpack.c.b16 %v4010, %v4009
      %v4054 = vpack.c.b16 %v4012, %v4011
      %v4055 = vpack.c.b16 %v4014, %v4013
      %v4056 = vpack.c.b16 %v4016, %v4015
      %v4057 = vpack.c.b16 %v4018, %v4017
      %v4058 = vpack.c.b16 %v4020, %v4019
      %v4059 = vpack.c.b16 %v4022, %v4021
      %v4060 = vpack.c.b16 %v4024, %v4023
      %v4061 = vpack.c.b16 %v4026, %v4025
      %v4062 = vpack.c.b16 %v4028, %v4027
      %v4063 = vpack.c.b16 %v4030, %v4029
      %v4064 = vpack.c.b16 %v4032, %v4031
      %v4066 = vshrl.u32 %v4033, 16
      %v4068 = vshll.u32 %v4033, 16
      %v4070 = vrot.slane %v4068, 1
      %v4071 = vor.u32 %v4066, %v4070
      %v4073 = vshrl.u32 %v4034, 16
      %v4075 = vshll.u32 %v4034, 16
      %v4077 = vrot.slane %v4075, 1
      %v4078 = vor.u32 %v4073, %v4077
      %v4080 = vshrl.u32 %v4035, 16
      %v4082 = vshll.u32 %v4035, 16
      %v4084 = vrot.slane %v4082, 1
      %v4085 = vor.u32 %v4080, %v4084
      %v4087 = vshrl.u32 %v4036, 16
      %v4089 = vshll.u32 %v4036, 16
      %v4091 = vrot.slane %v4089, 1
      %v4092 = vor.u32 %v4087, %v4091
      %v4094 = vshrl.u32 %v4037, 16
      %v4096 = vshll.u32 %v4037, 16
      %v4098 = vrot.slane %v4096, 1
      %v4099 = vor.u32 %v4094, %v4098
      %v4101 = vshrl.u32 %v4038, 16
      %v4103 = vshll.u32 %v4038, 16
      %v4105 = vrot.slane %v4103, 1
      %v4106 = vor.u32 %v4101, %v4105
      %v4108 = vshrl.u32 %v4039, 16
      %v4110 = vshll.u32 %v4039, 16
      %v4112 = vrot.slane %v4110, 1
      %v4113 = vor.u32 %v4108, %v4112
      %v4115 = vshrl.u32 %v4040, 16
      %v4117 = vshll.u32 %v4040, 16
      %v4119 = vrot.slane %v4117, 1
      %v4120 = vor.u32 %v4115, %v4119
      %v4122 = vshrl.u32 %v4041, 16
      %v4124 = vshll.u32 %v4041, 16
      %v4126 = vrot.slane %v4124, 1
      %v4127 = vor.u32 %v4122, %v4126
      %v4129 = vshrl.u32 %v4042, 16
      %v4131 = vshll.u32 %v4042, 16
      %v4133 = vrot.slane %v4131, 1
      %v4134 = vor.u32 %v4129, %v4133
      %v4136 = vshrl.u32 %v4043, 16
      %v4138 = vshll.u32 %v4043, 16
      %v4140 = vrot.slane %v4138, 1
      %v4141 = vor.u32 %v4136, %v4140
      %v4143 = vshrl.u32 %v4044, 16
      %v4145 = vshll.u32 %v4044, 16
      %v4147 = vrot.slane %v4145, 1
      %v4148 = vor.u32 %v4143, %v4147
      %v4150 = vshrl.u32 %v4045, 16
      %v4152 = vshll.u32 %v4045, 16
      %v4154 = vrot.slane %v4152, 1
      %v4155 = vor.u32 %v4150, %v4154
      %v4157 = vshrl.u32 %v4046, 16
      %v4159 = vshll.u32 %v4046, 16
      %v4161 = vrot.slane %v4159, 1
      %v4162 = vor.u32 %v4157, %v4161
      %v4164 = vshrl.u32 %v4047, 16
      %v4166 = vshll.u32 %v4047, 16
      %v4168 = vrot.slane %v4166, 1
      %v4169 = vor.u32 %v4164, %v4168
      %v4171 = vshrl.u32 %v4048, 16
      %v4173 = vshll.u32 %v4048, 16
      %v4175 = vrot.slane %v4173, 1
      %v4176 = vor.u32 %v4171, %v4175
      %v4178 = vshrl.u32 %v4049, 16
      %v4180 = vshll.u32 %v4049, 16
      %v4182 = vrot.slane %v4180, 1
      %v4183 = vor.u32 %v4178, %v4182
      %v4185 = vshrl.u32 %v4050, 16
      %v4187 = vshll.u32 %v4050, 16
      %v4189 = vrot.slane %v4187, 1
      %v4190 = vor.u32 %v4185, %v4189
      %v4192 = vshrl.u32 %v4051, 16
      %v4194 = vshll.u32 %v4051, 16
      %v4196 = vrot.slane %v4194, 1
      %v4197 = vor.u32 %v4192, %v4196
      %v4199 = vshrl.u32 %v4052, 16
      %v4201 = vshll.u32 %v4052, 16
      %v4203 = vrot.slane %v4201, 1
      %v4204 = vor.u32 %v4199, %v4203
      %v4206 = vshrl.u32 %v4053, 16
      %v4208 = vshll.u32 %v4053, 16
      %v4210 = vrot.slane %v4208, 1
      %v4211 = vor.u32 %v4206, %v4210
      %v4213 = vshrl.u32 %v4054, 16
      %v4215 = vshll.u32 %v4054, 16
      %v4217 = vrot.slane %v4215, 1
      %v4218 = vor.u32 %v4213, %v4217
      %v4220 = vshrl.u32 %v4055, 16
      %v4222 = vshll.u32 %v4055, 16
      %v4224 = vrot.slane %v4222, 1
      %v4225 = vor.u32 %v4220, %v4224
      %v4227 = vshrl.u32 %v4056, 16
      %v4229 = vshll.u32 %v4056, 16
      %v4231 = vrot.slane %v4229, 1
      %v4232 = vor.u32 %v4227, %v4231
      %v4234 = vshrl.u32 %v4057, 16
      %v4236 = vshll.u32 %v4057, 16
      %v4238 = vrot.slane %v4236, 1
      %v4239 = vor.u32 %v4234, %v4238
      %v4241 = vshrl.u32 %v4058, 16
      %v4243 = vshll.u32 %v4058, 16
      %v4245 = vrot.slane %v4243, 1
      %v4246 = vor.u32 %v4241, %v4245
      %v4248 = vshrl.u32 %v4059, 16
      %v4250 = vshll.u32 %v4059, 16
      %v4252 = vrot.slane %v4250, 1
      %v4253 = vor.u32 %v4248, %v4252
      %v4255 = vshrl.u32 %v4060, 16
      %v4257 = vshll.u32 %v4060, 16
      %v4259 = vrot.slane %v4257, 1
      %v4260 = vor.u32 %v4255, %v4259
      %v4262 = vshrl.u32 %v4061, 16
      %v4264 = vshll.u32 %v4061, 16
      %v4266 = vrot.slane %v4264, 1
      %v4267 = vor.u32 %v4262, %v4266
      %v4269 = vshrl.u32 %v4062, 16
      %v4271 = vshll.u32 %v4062, 16
      %v4273 = vrot.slane %v4271, 1
      %v4274 = vor.u32 %v4269, %v4273
      %v4276 = vshrl.u32 %v4063, 16
      %v4278 = vshll.u32 %v4063, 16
      %v4280 = vrot.slane %v4278, 1
      %v4281 = vor.u32 %v4276, %v4280
      %v4283 = vshrl.u32 %v4064, 16
      %v4285 = vshll.u32 %v4064, 16
      %v4287 = vrot.slane %v4285, 1
      %v4288 = vor.u32 %v4283, %v4287
      %v4321 = vunpack.c.l.b16 %v3873
      %v4322 = vunpack.c.l.b16 %v3874
      %v4323 = vunpack.c.l.b16 %v3875
      %v4324 = vunpack.c.l.b16 %v3876
      %v4325 = vunpack.c.l.b16 %v3877
      %v4326 = vunpack.c.l.b16 %v3878
      %v4327 = vunpack.c.l.b16 %v3879
      %v4328 = vunpack.c.l.b16 %v3880
      %v4329 = vunpack.c.l.b16 %v3881
      %v4330 = vunpack.c.l.b16 %v3882
      %v4331 = vunpack.c.l.b16 %v3883
      %v4332 = vunpack.c.l.b16 %v3884
      %v4333 = vunpack.c.l.b16 %v3885
      %v4334 = vunpack.c.l.b16 %v3886
      %v4335 = vunpack.c.l.b16 %v3887
      %v4336 = vunpack.c.l.b16 %v3888
      %v4337 = vunpack.c.l.b16 %v3889
      %v4338 = vunpack.c.l.b16 %v3890
      %v4339 = vunpack.c.l.b16 %v3891
      %v4340 = vunpack.c.l.b16 %v3892
      %v4341 = vunpack.c.l.b16 %v3893
      %v4342 = vunpack.c.l.b16 %v3894
      %v4343 = vunpack.c.l.b16 %v3895
      %v4344 = vunpack.c.l.b16 %v3896
      %v4345 = vunpack.c.l.b16 %v3897
      %v4346 = vunpack.c.l.b16 %v3898
      %v4347 = vunpack.c.l.b16 %v3899
      %v4348 = vunpack.c.l.b16 %v3900
      %v4349 = vunpack.c.l.b16 %v3901
      %v4350 = vunpack.c.l.b16 %v3902
      %v4351 = vunpack.c.l.b16 %v3903
      %v4352 = vunpack.c.l.b16 %v3904
      %v4353 = vpack.c.b16 %v3970, %v4321
      %v4354 = vpack.c.b16 %v3972, %v4322
      %v4355 = vpack.c.b16 %v3974, %v4323
      %v4356 = vpack.c.b16 %v3976, %v4324
      %v4357 = vpack.c.b16 %v3978, %v4325
      %v4358 = vpack.c.b16 %v3980, %v4326
      %v4359 = vpack.c.b16 %v3982, %v4327
      %v4360 = vpack.c.b16 %v3984, %v4328
      %v4361 = vpack.c.b16 %v3986, %v4329
      %v4362 = vpack.c.b16 %v3988, %v4330
      %v4363 = vpack.c.b16 %v3990, %v4331
      %v4364 = vpack.c.b16 %v3992, %v4332
      %v4365 = vpack.c.b16 %v3994, %v4333
      %v4366 = vpack.c.b16 %v3996, %v4334
      %v4367 = vpack.c.b16 %v3998, %v4335
      %v4368 = vpack.c.b16 %v4000, %v4336
      %v4369 = vpack.c.b16 %v4002, %v4337
      %v4370 = vpack.c.b16 %v4004, %v4338
      %v4371 = vpack.c.b16 %v4006, %v4339
      %v4372 = vpack.c.b16 %v4008, %v4340
      %v4373 = vpack.c.b16 %v4010, %v4341
      %v4374 = vpack.c.b16 %v4012, %v4342
      %v4375 = vpack.c.b16 %v4014, %v4343
      %v4376 = vpack.c.b16 %v4016, %v4344
      %v4377 = vpack.c.b16 %v4018, %v4345
      %v4378 = vpack.c.b16 %v4020, %v4346
      %v4379 = vpack.c.b16 %v4022, %v4347
      %v4380 = vpack.c.b16 %v4024, %v4348
      %v4381 = vpack.c.b16 %v4026, %v4349
      %v4382 = vpack.c.b16 %v4028, %v4350
      %v4383 = vpack.c.b16 %v4030, %v4351
      %v4384 = vpack.c.b16 %v4032, %v4352
      %v4385 = vrot.slane %v4353, 1
      %v4386 = vrot.slane %v4354, 1
      %v4387 = vrot.slane %v4355, 1
      %v4388 = vrot.slane %v4356, 1
      %v4389 = vrot.slane %v4357, 1
      %v4390 = vrot.slane %v4358, 1
      %v4391 = vrot.slane %v4359, 1
      %v4392 = vrot.slane %v4360, 1
      %v4393 = vrot.slane %v4361, 1
      %v4394 = vrot.slane %v4362, 1
      %v4395 = vrot.slane %v4363, 1
      %v4396 = vrot.slane %v4364, 1
      %v4397 = vrot.slane %v4365, 1
      %v4398 = vrot.slane %v4366, 1
      %v4399 = vrot.slane %v4367, 1
      %v4400 = vrot.slane %v4368, 1
      %v4401 = vrot.slane %v4369, 1
      %v4402 = vrot.slane %v4370, 1
      %v4403 = vrot.slane %v4371, 1
      %v4404 = vrot.slane %v4372, 1
      %v4405 = vrot.slane %v4373, 1
      %v4406 = vrot.slane %v4374, 1
      %v4407 = vrot.slane %v4375, 1
      %v4408 = vrot.slane %v4376, 1
      %v4409 = vrot.slane %v4377, 1
      %v4410 = vrot.slane %v4378, 1
      %v4411 = vrot.slane %v4379, 1
      %v4412 = vrot.slane %v4380, 1
      %v4413 = vrot.slane %v4381, 1
      %v4414 = vrot.slane %v4382, 1
      %v4415 = vrot.slane %v4383, 1
      %v4416 = vrot.slane %v4384, 1
      %v4417 = vld [vmem:[%s2 + $0x180] sm:$0xf]
      %v4418 = vld [vmem:[%s2 + $0x184] sm:$0xf]
      %v4419 = vld [vmem:[%s2 + $0x188] sm:$0xf]
      %v4420 = vld [vmem:[%s2 + $0x18c] sm:$0xf]
      %v4421 = vld [vmem:[%s2 + $0x190] sm:$0xf]
      %v4422 = vld [vmem:[%s2 + $0x194] sm:$0xf]
      %v4423 = vld [vmem:[%s2 + $0x198] sm:$0xf]
      %v4424 = vld [vmem:[%s2 + $0x19c] sm:$0xf]
      %v4425 = vld [vmem:[%s2 + $0x1a0] sm:$0xf]
      %v4426 = vld [vmem:[%s2 + $0x1a4] sm:$0xf]
      %v4427 = vld [vmem:[%s2 + $0x1a8] sm:$0xf]
      %v4428 = vld [vmem:[%s2 + $0x1ac] sm:$0xf]
      %v4429 = vld [vmem:[%s2 + $0x1b0] sm:$0xf]
      %v4430 = vld [vmem:[%s2 + $0x1b4] sm:$0xf]
      %v4431 = vld [vmem:[%s2 + $0x1b8] sm:$0xf]
      %v4432 = vld [vmem:[%s2 + $0x1bc] sm:$0xf]
      %v4433 = vld [vmem:[%s2 + $0x1c0] sm:$0xf]
      %v4434 = vld [vmem:[%s2 + $0x1c4] sm:$0xf]
      %v4435 = vld [vmem:[%s2 + $0x1c8] sm:$0xf]
      %v4436 = vld [vmem:[%s2 + $0x1cc] sm:$0xf]
      %v4437 = vld [vmem:[%s2 + $0x1d0] sm:$0xf]
      %v4438 = vld [vmem:[%s2 + $0x1d4] sm:$0xf]
      %v4439 = vld [vmem:[%s2 + $0x1d8] sm:$0xf]
      %v4440 = vld [vmem:[%s2 + $0x1dc] sm:$0xf]
      %v4441 = vld [vmem:[%s2 + $0x1e0] sm:$0xf]
      %v4442 = vld [vmem:[%s2 + $0x1e4] sm:$0xf]
      %v4443 = vld [vmem:[%s2 + $0x1e8] sm:$0xf]
      %v4444 = vld [vmem:[%s2 + $0x1ec] sm:$0xf]
      %v4445 = vld [vmem:[%s2 + $0x1f0] sm:$0xf]
      %v4446 = vld [vmem:[%s2 + $0x1f4] sm:$0xf]
      %v4447 = vld [vmem:[%s2 + $0x1f8] sm:$0xf]
      %v4448 = vld [vmem:[%s2 + $0x1fc] sm:$0xf]
      %v4449 = vld [vmem:[%s2 + $0x200] sm:$0xf]
      %v4450 = vld [vmem:[%s2 + $0x204] sm:$0xf]
      %v4451 = vld [vmem:[%s2 + $0x208] sm:$0xf]
      %v4452 = vld [vmem:[%s2 + $0x20c] sm:$0xf]
      %v4453 = vld [vmem:[%s2 + $0x210] sm:$0xf]
      %v4454 = vld [vmem:[%s2 + $0x214] sm:$0xf]
      %v4455 = vld [vmem:[%s2 + $0x218] sm:$0xf]
      %v4456 = vld [vmem:[%s2 + $0x21c] sm:$0xf]
      %v4457 = vld [vmem:[%s2 + $0x220] sm:$0xf]
      %v4458 = vld [vmem:[%s2 + $0x224] sm:$0xf]
      %v4459 = vld [vmem:[%s2 + $0x228] sm:$0xf]
      %v4460 = vld [vmem:[%s2 + $0x22c] sm:$0xf]
      %v4461 = vld [vmem:[%s2 + $0x230] sm:$0xf]
      %v4462 = vld [vmem:[%s2 + $0x234] sm:$0xf]
      %v4463 = vld [vmem:[%s2 + $0x238] sm:$0xf]
      %v4464 = vld [vmem:[%s2 + $0x23c] sm:$0xf]
      %v4465 = vunpack.c.l.b16 %v4071
      %v4466 = vunpack.c.l.b16 %v4385
      %v4467 = vunpack.c.l.b16 %v4078
      %v4468 = vunpack.c.l.b16 %v4386
      %v4469 = vunpack.c.l.b16 %v4085
      %v4470 = vunpack.c.l.b16 %v4387
      %v4471 = vunpack.c.l.b16 %v4092
      %v4472 = vunpack.c.l.b16 %v4388
      %v4473 = vunpack.c.l.b16 %v4099
      %v4474 = vunpack.c.l.b16 %v4389
      %v4475 = vunpack.c.l.b16 %v4106
      %v4476 = vunpack.c.l.b16 %v4390
      %v4477 = vunpack.c.l.b16 %v4113
      %v4478 = vunpack.c.l.b16 %v4391
      %v4479 = vunpack.c.l.b16 %v4120
      %v4480 = vunpack.c.l.b16 %v4392
      %v4481 = vunpack.c.l.b16 %v4127
      %v4482 = vunpack.c.l.b16 %v4393
      %v4483 = vunpack.c.l.b16 %v4134
      %v4484 = vunpack.c.l.b16 %v4394
      %v4485 = vunpack.c.l.b16 %v4141
      %v4486 = vunpack.c.l.b16 %v4395
      %v4487 = vunpack.c.l.b16 %v4148
      %v4488 = vunpack.c.l.b16 %v4396
      %v4489 = vunpack.c.l.b16 %v4155
      %v4490 = vunpack.c.l.b16 %v4397
      %v4491 = vunpack.c.l.b16 %v4162
      %v4492 = vunpack.c.l.b16 %v4398
      %v4493 = vunpack.c.l.b16 %v4169
      %v4494 = vunpack.c.l.b16 %v4399
      %v4495 = vunpack.c.l.b16 %v4176
      %v4496 = vunpack.c.l.b16 %v4400
      %v4497 = vunpack.c.l.b16 %v4183
      %v4498 = vunpack.c.l.b16 %v4401
      %v4499 = vunpack.c.l.b16 %v4190
      %v4500 = vunpack.c.l.b16 %v4402
      %v4501 = vunpack.c.l.b16 %v4197
      %v4502 = vunpack.c.l.b16 %v4403
      %v4503 = vunpack.c.l.b16 %v4204
      %v4504 = vunpack.c.l.b16 %v4404
      %v4505 = vunpack.c.l.b16 %v4211
      %v4506 = vunpack.c.l.b16 %v4405
      %v4507 = vunpack.c.l.b16 %v4218
      %v4508 = vunpack.c.l.b16 %v4406
      %v4509 = vunpack.c.l.b16 %v4225
      %v4510 = vunpack.c.l.b16 %v4407
      %v4511 = vunpack.c.l.b16 %v4232
      %v4512 = vunpack.c.l.b16 %v4408
      %v4513 = vunpack.c.l.b16 %v4239
      %v4514 = vunpack.c.l.b16 %v4409
      %v4515 = vunpack.c.l.b16 %v4246
      %v4516 = vunpack.c.l.b16 %v4410
      %v4517 = vunpack.c.l.b16 %v4253
      %v4518 = vunpack.c.l.b16 %v4411
      %v4519 = vunpack.c.l.b16 %v4260
      %v4520 = vunpack.c.l.b16 %v4412
      %v4521 = vunpack.c.l.b16 %v4267
      %v4522 = vunpack.c.l.b16 %v4413
      %v4523 = vunpack.c.l.b16 %v4274
      %v4524 = vunpack.c.l.b16 %v4414
      %v4525 = vunpack.c.l.b16 %v4281
      %v4526 = vunpack.c.l.b16 %v4415
      %v4527 = vunpack.c.l.b16 %v4288
      %v4528 = vunpack.c.l.b16 %v4416
      %v4529 = vpack.c.b16 %v3971, %v3969
      %v4530 = vpack.c.b16 %v4467, %v4465
      %v4531 = vpack.c.b16 %v4468, %v4466
      %v4532 = vpack.c.b16 %v3975, %v3973
      %v4533 = vpack.c.b16 %v4471, %v4469
      %v4534 = vpack.c.b16 %v4472, %v4470
      %v4535 = vpack.c.b16 %v3979, %v3977
      %v4536 = vpack.c.b16 %v4475, %v4473
      %v4537 = vpack.c.b16 %v4476, %v4474
      %v4538 = vpack.c.b16 %v3983, %v3981
      %v4539 = vpack.c.b16 %v4479, %v4477
      %v4540 = vpack.c.b16 %v4480, %v4478
      %v4541 = vpack.c.b16 %v3987, %v3985
      %v4542 = vpack.c.b16 %v4483, %v4481
      %v4543 = vpack.c.b16 %v4484, %v4482
      %v4544 = vpack.c.b16 %v3991, %v3989
      %v4545 = vpack.c.b16 %v4487, %v4485
      %v4546 = vpack.c.b16 %v4488, %v4486
      %v4547 = vpack.c.b16 %v3995, %v3993
      %v4548 = vpack.c.b16 %v4491, %v4489
      %v4549 = vpack.c.b16 %v4492, %v4490
      %v4550 = vpack.c.b16 %v3999, %v3997
      %v4551 = vpack.c.b16 %v4495, %v4493
      %v4552 = vpack.c.b16 %v4496, %v4494
      %v4553 = vpack.c.b16 %v4003, %v4001
      %v4554 = vpack.c.b16 %v4499, %v4497
      %v4555 = vpack.c.b16 %v4500, %v4498
      %v4556 = vpack.c.b16 %v4007, %v4005
      %v4557 = vpack.c.b16 %v4503, %v4501
      %v4558 = vpack.c.b16 %v4504, %v4502
      %v4559 = vpack.c.b16 %v4011, %v4009
      %v4560 = vpack.c.b16 %v4507, %v4505
      %v4561 = vpack.c.b16 %v4508, %v4506
      %v4562 = vpack.c.b16 %v4015, %v4013
      %v4563 = vpack.c.b16 %v4511, %v4509
      %v4564 = vpack.c.b16 %v4512, %v4510
      %v4565 = vpack.c.b16 %v4019, %v4017
      %v4566 = vpack.c.b16 %v4515, %v4513
      %v4567 = vpack.c.b16 %v4516, %v4514
      %v4568 = vpack.c.b16 %v4023, %v4021
      %v4569 = vpack.c.b16 %v4519, %v4517
      %v4570 = vpack.c.b16 %v4520, %v4518
      %v4571 = vpack.c.b16 %v4027, %v4025
      %v4572 = vpack.c.b16 %v4523, %v4521
      %v4573 = vpack.c.b16 %v4524, %v4522
      %v4574 = vpack.c.b16 %v4031, %v4029
      %v4575 = vpack.c.b16 %v4527, %v4525
      %v4576 = vpack.c.b16 %v4528, %v4526
      %v4673 = vunpack.c.l.b16 %v4417
      %v4674 = vunpack.c.l.b16 %v4418
      %v4675 = vunpack.c.l.b16 %v4419
      %v4676 = vunpack.c.l.b16 %v4420
      %v4677 = vunpack.c.l.b16 %v4421
      %v4678 = vunpack.c.l.b16 %v4422
      %v4679 = vunpack.c.l.b16 %v4423
      %v4680 = vunpack.c.l.b16 %v4424
      %v4681 = vunpack.c.l.b16 %v4425
      %v4682 = vunpack.c.l.b16 %v4426
      %v4683 = vunpack.c.l.b16 %v4427
      %v4684 = vunpack.c.l.b16 %v4428
      %v4685 = vunpack.c.l.b16 %v4429
      %v4686 = vunpack.c.l.b16 %v4430
      %v4687 = vunpack.c.l.b16 %v4431
      %v4688 = vunpack.c.l.b16 %v4432
      %v4689 = vunpack.c.l.b16 %v4433
      %v4690 = vunpack.c.l.b16 %v4434
      %v4691 = vunpack.c.l.b16 %v4435
      %v4692 = vunpack.c.l.b16 %v4436
      %v4693 = vunpack.c.l.b16 %v4437
      %v4694 = vunpack.c.l.b16 %v4438
      %v4695 = vunpack.c.l.b16 %v4439
      %v4696 = vunpack.c.l.b16 %v4440
      %v4697 = vunpack.c.l.b16 %v4441
      %v4698 = vunpack.c.l.b16 %v4442
      %v4699 = vunpack.c.l.b16 %v4443
      %v4700 = vunpack.c.l.b16 %v4444
      %v4701 = vunpack.c.l.b16 %v4445
      %v4702 = vunpack.c.l.b16 %v4446
      %v4703 = vunpack.c.l.b16 %v4447
      %v4704 = vunpack.c.l.b16 %v4448
      %v4705 = vunpack.c.l.b16 %v4449
      %v4706 = vunpack.c.l.b16 %v4450
      %v4707 = vunpack.c.l.b16 %v4451
      %v4708 = vunpack.c.l.b16 %v4452
      %v4709 = vunpack.c.l.b16 %v4453
      %v4710 = vunpack.c.l.b16 %v4454
      %v4711 = vunpack.c.l.b16 %v4455
      %v4712 = vunpack.c.l.b16 %v4456
      %v4713 = vunpack.c.l.b16 %v4457
      %v4714 = vunpack.c.l.b16 %v4458
      %v4715 = vunpack.c.l.b16 %v4459
      %v4716 = vunpack.c.l.b16 %v4460
      %v4717 = vunpack.c.l.b16 %v4461
      %v4718 = vunpack.c.l.b16 %v4462
      %v4719 = vunpack.c.l.b16 %v4463
      %v4720 = vunpack.c.l.b16 %v4464
      %v4721 = vpack.c.b16 %v4674, %v4673
      %v4722 = vpack.c.b16 %v4676, %v4675
      %v4723 = vpack.c.b16 %v4678, %v4677
      %v4724 = vpack.c.b16 %v4680, %v4679
      %v4725 = vpack.c.b16 %v4682, %v4681
      %v4726 = vpack.c.b16 %v4684, %v4683
      %v4727 = vpack.c.b16 %v4686, %v4685
      %v4728 = vpack.c.b16 %v4688, %v4687
      %v4729 = vpack.c.b16 %v4690, %v4689
      %v4730 = vpack.c.b16 %v4692, %v4691
      %v4731 = vpack.c.b16 %v4694, %v4693
      %v4732 = vpack.c.b16 %v4696, %v4695
      %v4733 = vpack.c.b16 %v4698, %v4697
      %v4734 = vpack.c.b16 %v4700, %v4699
      %v4735 = vpack.c.b16 %v4702, %v4701
      %v4736 = vpack.c.b16 %v4704, %v4703
      %v4737 = vpack.c.b16 %v4706, %v4705
      %v4738 = vpack.c.b16 %v4708, %v4707
      %v4739 = vpack.c.b16 %v4710, %v4709
      %v4740 = vpack.c.b16 %v4712, %v4711
      %v4741 = vpack.c.b16 %v4714, %v4713
      %v4742 = vpack.c.b16 %v4716, %v4715
      %v4743 = vpack.c.b16 %v4718, %v4717
      %v4744 = vpack.c.b16 %v4720, %v4719
      %4769 = vmatprep.subr.bf16.mxu0 0
      %4770 = vmatpush1.bf16.msra.mxu0 %v4721
      %4771 = vmatprep.subr.bf16.mxu0 0
      %4772 = vmatpush1.bf16.msra.mxu0 %v4722
      %4773 = vmatprep.subr.bf16.mxu0 0
      %4774 = vmatpush1.bf16.msra.mxu0 %v4723
      %4775 = vmatprep.subr.bf16.mxu0 0
      %4776 = vmatpush1.bf16.msra.mxu0 %v4724
      %4777 = vmatprep.subr.bf16.mxu0 0
      %4778 = vmatpush1.bf16.msra.mxu0 %v4725
      %4779 = vmatprep.subr.bf16.mxu0 0
      %4780 = vmatpush1.bf16.msra.mxu0 %v4726
      %4781 = vmatprep.subr.bf16.mxu0 0
      %4782 = vmatpush1.bf16.msra.mxu0 %v4727
      %4783 = vmatprep.subr.bf16.mxu0 0
      %4784 = vmatpush1.bf16.msra.mxu0 %v4728
      %4785 = vmatprep.subr.bf16.mxu0 0
      %4786 = vmatpush1.bf16.msra.mxu0 %v4729
      %4787 = vmatprep.subr.bf16.mxu0 0
      %4788 = vmatpush1.bf16.msra.mxu0 %v4730
      %4789 = vmatprep.subr.bf16.mxu0 0
      %4790 = vmatpush1.bf16.msra.mxu0 %v4731
      %4791 = vmatprep.subr.bf16.mxu0 0
      %4792 = vmatpush1.bf16.msra.mxu0 %v4732
      %4793 = vmatprep.subr.bf16.mxu0 0
      %4794 = vmatpush1.bf16.msra.mxu0 %v4733
      %4795 = vmatprep.subr.bf16.mxu0 0
      %4796 = vmatpush1.bf16.msra.mxu0 %v4734
      %4797 = vmatprep.subr.bf16.mxu0 0
      %4798 = vmatpush1.bf16.msra.mxu0 %v4735
      %4799 = vmatprep.subr.bf16.mxu0 0
      %4800 = vmatpush1.bf16.msra.mxu0 %v4736
      %4801 = vmatprep.mubr.bf16.mxu0 %v4530
      %4802 = vmatmul.mubr.bf16.gmra.mrb[0].mxu0 %v4529
      %v4803 = vpop.f32.mrb[0].mxu0
      %v4804 = vadd.f32 0.0, %v4803
      %v4805 = vpop.f32.mrb[0].mxu0
      %v4806 = vpop.f32.mrb[0].mxu0
      %v4807 = vadd.f32 0.0, %v4806
      %v4808 = vpop.f32.mrb[0].mxu0
      %4809 = vmatprep.mubr.bf16.mxu0 %v4533
      %4810 = vmatmul.mubr.bf16.gmra.mrb[0].mxu0 %v4532
      %v4811 = vpop.f32.mrb[0].mxu0
      %v4812 = vadd.f32 0.0, %v4811
      %v4813 = vpop.f32.mrb[0].mxu0
      %v4814 = vpop.f32.mrb[0].mxu0
      %v4815 = vadd.f32 0.0, %v4814
      %v4816 = vpop.f32.mrb[0].mxu0
      %4817 = vmatprep.mubr.bf16.mxu0 %v4536
      %4818 = vmatmul.mubr.bf16.gmra.mrb[0].mxu0 %v4535
      %v4819 = vpop.f32.mrb[0].mxu0
      %v4820 = vadd.f32 0.0, %v4819
      %v4821 = vpop.f32.mrb[0].mxu0
      %v4822 = vpop.f32.mrb[0].mxu0
      %v4823 = vadd.f32 0.0, %v4822
      %v4824 = vpop.f32.mrb[0].mxu0
      %4825 = vmatprep.mubr.bf16.mxu0 %v4539
      %4826 = vmatmul.mubr.bf16.gmra.mrb[0].mxu0 %v4538
      %v4827 = vpop.f32.mrb[0].mxu0
      %v4828 = vadd.f32 0.0, %v4827
      %v4829 = vpop.f32.mrb[0].mxu0
      %v4830 = vpop.f32.mrb[0].mxu0
      %v4831 = vadd.f32 0.0, %v4830
      %v4832 = vpop.f32.mrb[0].mxu0
      %4833 = vmatprep.mubr.bf16.mxu0 %v4542
      %4834 = vmatmul.mubr.bf16.gmra.mrb[0].mxu0 %v4541
      %v4835 = vpop.f32.mrb[0].mxu0
      %v4836 = vadd.f32 0.0, %v4835
      %v4837 = vpop.f32.mrb[0].mxu0
      %v4838 = vpop.f32.mrb[0].mxu0
      %v4839 = vadd.f32 0.0, %v4838
      %v4840 = vpop.f32.mrb[0].mxu0
      %4841 = vmatprep.mubr.bf16.mxu0 %v4545
      %4842 = vmatmul.mubr.bf16.gmra.mrb[0].mxu0 %v4544
      %v4843 = vpop.f32.mrb[0].mxu0
      %v4844 = vadd.f32 0.0, %v4843
      %v4845 = vpop.f32.mrb[0].mxu0
      %v4846 = vpop.f32.mrb[0].mxu0
      %v4847 = vadd.f32 0.0, %v4846
      %v4848 = vpop.f32.mrb[0].mxu0
      %4849 = vmatprep.mubr.bf16.mxu0 %v4548
      %4850 = vmatmul.mubr.bf16.gmra.mrb[0].mxu0 %v4547
      %v4851 = vpop.f32.mrb[0].mxu0
      %v4852 = vadd.f32 0.0, %v4851
      %v4853 = vpop.f32.mrb[0].mxu0
      %v4854 = vpop.f32.mrb[0].mxu0
      %v4855 = vadd.f32 0.0, %v4854
      %v4856 = vpop.f32.mrb[0].mxu0
      %4857 = vmatprep.mubr.bf16.mxu0 %v4551
      %4858 = vmatmul.mubr.bf16.gmra.mrb[0].mxu0 %v4550
      %v4859 = vpop.f32.mrb[0].mxu0
      %v4860 = vadd.f32 0.0, %v4859
      %v4861 = vpop.f32.mrb[0].mxu0
      %v4862 = vpop.f32.mrb[0].mxu0
      %v4863 = vadd.f32 0.0, %v4862
      %v4864 = vpop.f32.mrb[0].mxu0
      %4865 = vmatprep.mubr.bf16.mxu0 %v4554
      %4866 = vmatmul.mubr.bf16.gmra.mrb[0].mxu0 %v4553
      %v4867 = vpop.f32.mrb[0].mxu0
      %v4868 = vadd.f32 0.0, %v4867
      %v4869 = vpop.f32.mrb[0].mxu0
      %v4870 = vpop.f32.mrb[0].mxu0
      %v4871 = vadd.f32 0.0, %v4870
      %v4872 = vpop.f32.mrb[0].mxu0
      %4873 = vmatprep.mubr.bf16.mxu0 %v4557
      %4874 = vmatmul.mubr.bf16.gmra.mrb[0].mxu0 %v4556
      %v4875 = vpop.f32.mrb[0].mxu0
      %v4876 = vadd.f32 0.0, %v4875
      %v4877 = vpop.f32.mrb[0].mxu0
      %v4878 = vpop.f32.mrb[0].mxu0
      %v4879 = vadd.f32 0.0, %v4878
      %v4880 = vpop.f32.mrb[0].mxu0
      %4881 = vmatprep.mubr.bf16.mxu0 %v4560
      %4882 = vmatmul.mubr.bf16.gmra.mrb[0].mxu0 %v4559
      %v4883 = vpop.f32.mrb[0].mxu0
      %v4884 = vadd.f32 0.0, %v4883
      %v4885 = vpop.f32.mrb[0].mxu0
      %v4886 = vpop.f32.mrb[0].mxu0
      %v4887 = vadd.f32 0.0, %v4886
      %v4888 = vpop.f32.mrb[0].mxu0
      %4889 = vmatprep.mubr.bf16.mxu0 %v4563
      %4890 = vmatmul.mubr.bf16.gmra.mrb[0].mxu0 %v4562
      %v4891 = vpop.f32.mrb[0].mxu0
      %v4892 = vadd.f32 0.0, %v4891
      %v4893 = vpop.f32.mrb[0].mxu0
      %v4894 = vpop.f32.mrb[0].mxu0
      %v4895 = vadd.f32 0.0, %v4894
      %v4896 = vpop.f32.mrb[0].mxu0
      %4897 = vmatprep.mubr.bf16.mxu0 %v4566
      %4898 = vmatmul.mubr.bf16.gmra.mrb[0].mxu0 %v4565
      %v4899 = vpop.f32.mrb[0].mxu0
      %v4900 = vadd.f32 0.0, %v4899
      %v4901 = vpop.f32.mrb[0].mxu0
      %v4902 = vpop.f32.mrb[0].mxu0
      %v4903 = vadd.f32 0.0, %v4902
      %v4904 = vpop.f32.mrb[0].mxu0
      %4905 = vmatprep.mubr.bf16.mxu0 %v4569
      %4906 = vmatmul.mubr.bf16.gmra.mrb[0].mxu0 %v4568
      %v4907 = vpop.f32.mrb[0].mxu0
      %v4908 = vadd.f32 0.0, %v4907
      %v4909 = vpop.f32.mrb[0].mxu0
      %v4910 = vpop.f32.mrb[0].mxu0
      %v4911 = vadd.f32 0.0, %v4910
      %v4912 = vpop.f32.mrb[0].mxu0
      %4913 = vmatprep.mubr.bf16.mxu0 %v4572
      %4914 = vmatmul.mubr.bf16.gmra.mrb[0].mxu0 %v4571
      %v4915 = vpop.f32.mrb[0].mxu0
      %v4916 = vadd.f32 0.0, %v4915
      %v4917 = vpop.f32.mrb[0].mxu0
      %v4918 = vpop.f32.mrb[0].mxu0
      %v4919 = vadd.f32 0.0, %v4918
      %v4920 = vpop.f32.mrb[0].mxu0
      %4921 = vmatprep.mubr.bf16.mxu0 %v4575
      %4922 = vmatmul.mubr.bf16.gmra.mrb[0].mxu0 %v4574
      %v4923 = vpop.f32.mrb[0].mxu0
      %v4924 = vadd.f32 0.0, %v4923
      %v4925 = vpop.f32.mrb[0].mxu0
      %v4926 = vpop.f32.mrb[0].mxu0
      %v4927 = vadd.f32 0.0, %v4926
      %v4928 = vpop.f32.mrb[0].mxu0
      %4929 = vdwg.mxu0
      %4930 = vmatprep.subr.bf16.mxu0 0
      %4931 = vmatpush1.bf16.msra.mxu0 %v4737
      %4932 = vmatprep.subr.bf16.mxu0 0
      %4933 = vmatpush1.bf16.msra.mxu0 %v4738
      %4934 = vmatprep.subr.bf16.mxu0 0
      %4935 = vmatpush1.bf16.msra.mxu0 %v4739
      %4936 = vmatprep.subr.bf16.mxu0 0
      %4937 = vmatpush1.bf16.msra.mxu0 %v4740
      %4938 = vmatprep.subr.bf16.mxu0 0
      %4939 = vmatpush1.bf16.msra.mxu0 %v4741
      %4940 = vmatprep.subr.bf16.mxu0 0
      %4941 = vmatpush1.bf16.msra.mxu0 %v4742
      %4942 = vmatprep.subr.bf16.mxu0 0
      %4943 = vmatpush1.bf16.msra.mxu0 %v4743
      %4944 = vmatprep.subr.bf16.mxu0 0
      %4945 = vmatpush1.bf16.msra.mxu0 %v4744
      %4946 = vmatprep.subr.bf16.mxu0 0
      %4947 = vmatpush1.bf16.msra.mxu0 0
      %4948 = vmatprep.subr.bf16.mxu0 0
      %4949 = vmatpush1.bf16.msra.mxu0 0
      %4950 = vmatprep.subr.bf16.mxu0 0
      %4951 = vmatpush1.bf16.msra.mxu0 0
      %4952 = vmatprep.subr.bf16.mxu0 0
      %4953 = vmatpush1.bf16.msra.mxu0 0
      %4954 = vmatprep.subr.bf16.mxu0 0
      %4955 = vmatpush1.bf16.msra.mxu0 0
      %4956 = vmatprep.subr.bf16.mxu0 0
      %4957 = vmatpush1.bf16.msra.mxu0 0
      %4958 = vmatprep.subr.bf16.mxu0 0
      %4959 = vmatpush1.bf16.msra.mxu0 0
      %4960 = vmatprep.subr.bf16.mxu0 0
      %4961 = vmatpush1.bf16.msra.mxu0 0
      %4962 = vmatprep.mubr.bf16.mxu0 0
      %4963 = vmatmul.mubr.bf16.gmra.mrb[0].mxu0 %v4531
      %v4964 = vpop.f32.mrb[0].mxu0
      %v4965 = vadd.f32 %v4804, %v4964
      %v4966 = vpop.f32.mrb[0].mxu0
      %v4967 = vpop.f32.mrb[0].mxu0
      %v4968 = vadd.f32 %v4807, %v4967
      %v4969 = vpop.f32.mrb[0].mxu0
      %4970 = vmatprep.mubr.bf16.mxu0 0
      %4971 = vmatmul.mubr.bf16.gmra.mrb[0].mxu0 %v4534
      %v4972 = vpop.f32.mrb[0].mxu0
      %v4973 = vadd.f32 %v4812, %v4972
      %v4974 = vpop.f32.mrb[0].mxu0
      %v4975 = vpop.f32.mrb[0].mxu0
      %v4976 = vadd.f32 %v4815, %v4975
      %v4977 = vpop.f32.mrb[0].mxu0
      %4978 = vmatprep.mubr.bf16.mxu0 0
      %4979 = vmatmul.mubr.bf16.gmra.mrb[0].mxu0 %v4537
      %v4980 = vpop.f32.mrb[0].mxu0
      %v4981 = vadd.f32 %v4820, %v4980
      %v4982 = vpop.f32.mrb[0].mxu0
      %v4983 = vpop.f32.mrb[0].mxu0
      %v4984 = vadd.f32 %v4823, %v4983
      %v4985 = vpop.f32.mrb[0].mxu0
      %4986 = vmatprep.mubr.bf16.mxu0 0
      %4987 = vmatmul.mubr.bf16.gmra.mrb[0].mxu0 %v4540
      %v4988 = vpop.f32.mrb[0].mxu0
      %v4989 = vadd.f32 %v4828, %v4988
      %v4990 = vpop.f32.mrb[0].mxu0
      %v4991 = vpop.f32.mrb[0].mxu0
      %v4992 = vadd.f32 %v4831, %v4991
      %v4993 = vpop.f32.mrb[0].mxu0
      %4994 = vmatprep.mubr.bf16.mxu0 0
      %4995 = vmatmul.mubr.bf16.gmra.mrb[0].mxu0 %v4543
      %v4996 = vpop.f32.mrb[0].mxu0
      %v4997 = vadd.f32 %v4836, %v4996
      %v4998 = vpop.f32.mrb[0].mxu0
      %v4999 = vpop.f32.mrb[0].mxu0
      %v5000 = vadd.f32 %v4839, %v4999
      %v5001 = vpop.f32.mrb[0].mxu0
      %5002 = vmatprep.mubr.bf16.mxu0 0
      %5003 = vmatmul.mubr.bf16.gmra.mrb[0].mxu0 %v4546
      %v5004 = vpop.f32.mrb[0].mxu0
      %v5005 = vadd.f32 %v4844, %v5004
      %v5006 = vpop.f32.mrb[0].mxu0
      %v5007 = vpop.f32.mrb[0].mxu0
      %v5008 = vadd.f32 %v4847, %v5007
      %v5009 = vpop.f32.mrb[0].mxu0
      %5010 = vmatprep.mubr.bf16.mxu0 0
      %5011 = vmatmul.mubr.bf16.gmra.mrb[0].mxu0 %v4549
      %v5012 = vpop.f32.mrb[0].mxu0
      %v5013 = vadd.f32 %v4852, %v5012
      %v5014 = vpop.f32.mrb[0].mxu0
      %v5015 = vpop.f32.mrb[0].mxu0
      %v5016 = vadd.f32 %v4855, %v5015
      %v5017 = vpop.f32.mrb[0].mxu0
      %5018 = vmatprep.mubr.bf16.mxu0 0
      %5019 = vmatmul.mubr.bf16.gmra.mrb[0].mxu0 %v4552
      %v5020 = vpop.f32.mrb[0].mxu0
      %v5021 = vadd.f32 %v4860, %v5020
      %v5022 = vpop.f32.mrb[0].mxu0
      %v5023 = vpop.f32.mrb[0].mxu0
      %v5024 = vadd.f32 %v4863, %v5023
      %v5025 = vpop.f32.mrb[0].mxu0
      %5026 = vmatprep.mubr.bf16.mxu0 0
      %5027 = vmatmul.mubr.bf16.gmra.mrb[0].mxu0 %v4555
      %v5028 = vpop.f32.mrb[0].mxu0
      %v5029 = vadd.f32 %v4868, %v5028
      %v5030 = vpop.f32.mrb[0].mxu0
      %v5031 = vpop.f32.mrb[0].mxu0
      %v5032 = vadd.f32 %v4871, %v5031
      %v5033 = vpop.f32.mrb[0].mxu0
      %5034 = vmatprep.mubr.bf16.mxu0 0
      %5035 = vmatmul.mubr.bf16.gmra.mrb[0].mxu0 %v4558
      %v5036 = vpop.f32.mrb[0].mxu0
      %v5037 = vadd.f32 %v4876, %v5036
      %v5038 = vpop.f32.mrb[0].mxu0
      %v5039 = vpop.f32.mrb[0].mxu0
      %v5040 = vadd.f32 %v4879, %v5039
      %v5041 = vpop.f32.mrb[0].mxu0
      %5042 = vmatprep.mubr.bf16.mxu0 0
      %5043 = vmatmul.mubr.bf16.gmra.mrb[0].mxu0 %v4561
      %v5044 = vpop.f32.mrb[0].mxu0
      %v5045 = vadd.f32 %v4884, %v5044
      %v5046 = vpop.f32.mrb[0].mxu0
      %v5047 = vpop.f32.mrb[0].mxu0
      %v5048 = vadd.f32 %v4887, %v5047
      %v5049 = vpop.f32.mrb[0].mxu0
      %5050 = vmatprep.mubr.bf16.mxu0 0
      %5051 = vmatmul.mubr.bf16.gmra.mrb[0].mxu0 %v4564
      %v5052 = vpop.f32.mrb[0].mxu0
      %v5053 = vadd.f32 %v4892, %v5052
      %v5054 = vpop.f32.mrb[0].mxu0
      %v5055 = vpop.f32.mrb[0].mxu0
      %v5056 = vadd.f32 %v4895, %v5055
      %v5057 = vpop.f32.mrb[0].mxu0
      %5058 = vmatprep.mubr.bf16.mxu0 0
      %5059 = vmatmul.mubr.bf16.gmra.mrb[0].mxu0 %v4567
      %v5060 = vpop.f32.mrb[0].mxu0
      %v5061 = vadd.f32 %v4900, %v5060
      %v5062 = vpop.f32.mrb[0].mxu0
      %v5063 = vpop.f32.mrb[0].mxu0
      %v5064 = vadd.f32 %v4903, %v5063
      %v5065 = vpop.f32.mrb[0].mxu0
      %5066 = vmatprep.mubr.bf16.mxu0 0
      %5067 = vmatmul.mubr.bf16.gmra.mrb[0].mxu0 %v4570
      %v5068 = vpop.f32.mrb[0].mxu0
      %v5069 = vadd.f32 %v4908, %v5068
      %v5070 = vpop.f32.mrb[0].mxu0
      %v5071 = vpop.f32.mrb[0].mxu0
      %v5072 = vadd.f32 %v4911, %v5071
      %v5073 = vpop.f32.mrb[0].mxu0
      %5074 = vmatprep.mubr.bf16.mxu0 0
      %5075 = vmatmul.mubr.bf16.gmra.mrb[0].mxu0 %v4573
      %v5076 = vpop.f32.mrb[0].mxu0
      %v5077 = vadd.f32 %v4916, %v5076
      %v5078 = vpop.f32.mrb[0].mxu0
      %v5079 = vpop.f32.mrb[0].mxu0
      %v5080 = vadd.f32 %v4919, %v5079
      %v5081 = vpop.f32.mrb[0].mxu0
      %5082 = vmatprep.mubr.bf16.mxu0 0
      %5083 = vmatmul.mubr.bf16.gmra.mrb[0].mxu0 %v4576
      %v5084 = vpop.f32.mrb[0].mxu0
      %v5085 = vadd.f32 %v4924, %v5084
      %v5086 = vpop.f32.mrb[0].mxu0
      %v5087 = vpop.f32.mrb[0].mxu0
      %v5088 = vadd.f32 %v4927, %v5087
      %v5089 = vpop.f32.mrb[0].mxu0
      %5090 = vdwg.mxu0
      %v5091 = vadd.f32 %v3682, %v4965
      %v5092 = vadd.f32 %v3685, %v4968
      %v5093 = vadd.f32 %v3690, %v4973
      %v5094 = vadd.f32 %v3693, %v4976
      %v5095 = vadd.f32 %v3698, %v4981
      %v5096 = vadd.f32 %v3701, %v4984
      %v5097 = vadd.f32 %v3706, %v4989
      %v5098 = vadd.f32 %v3709, %v4992
      %v5099 = vadd.f32 %v3714, %v4997
      %v5100 = vadd.f32 %v3717, %v5000
      %v5101 = vadd.f32 %v3722, %v5005
      %v5102 = vadd.f32 %v3725, %v5008
      %v5103 = vadd.f32 %v3730, %v5013
      %v5104 = vadd.f32 %v3733, %v5016
      %v5105 = vadd.f32 %v3738, %v5021
      %v5106 = vadd.f32 %v3741, %v5024
      %v5107 = vadd.f32 %v3746, %v5029
      %v5108 = vadd.f32 %v3749, %v5032
      %v5109 = vadd.f32 %v3754, %v5037
      %v5110 = vadd.f32 %v3757, %v5040
      %v5111 = vadd.f32 %v3762, %v5045
      %v5112 = vadd.f32 %v3765, %v5048
      %v5113 = vadd.f32 %v3770, %v5053
      %v5114 = vadd.f32 %v3773, %v5056
      %v5115 = vadd.f32 %v3778, %v5061
      %v5116 = vadd.f32 %v3781, %v5064
      %v5117 = vadd.f32 %v3786, %v5069
      %v5118 = vadd.f32 %v3789, %v5072
      %v5119 = vadd.f32 %v3794, %v5077
      %v5120 = vadd.f32 %v3797, %v5080
      %v5121 = vadd.f32 %v3802, %v5085
      %v5122 = vadd.f32 %v3805, %v5088
      %v5123 = vpack.c.bf16 %v5091, %v5091
      %v5124 = vpack.c.bf16 %v5092, %v5092
      %v5125 = vpack.c.bf16 %v5093, %v5093
      %v5126 = vpack.c.bf16 %v5094, %v5094
      %v5127 = vpack.c.bf16 %v5095, %v5095
      %v5128 = vpack.c.bf16 %v5096, %v5096
      %v5129 = vpack.c.bf16 %v5097, %v5097
      %v5130 = vpack.c.bf16 %v5098, %v5098
      %v5131 = vpack.c.bf16 %v5099, %v5099
      %v5132 = vpack.c.bf16 %v5100, %v5100
      %v5133 = vpack.c.bf16 %v5101, %v5101
      %v5134 = vpack.c.bf16 %v5102, %v5102
      %v5135 = vpack.c.bf16 %v5103, %v5103
      %v5136 = vpack.c.bf16 %v5104, %v5104
      %v5137 = vpack.c.bf16 %v5105, %v5105
      %v5138 = vpack.c.bf16 %v5106, %v5106
      %v5139 = vpack.c.bf16 %v5107, %v5107
      %v5140 = vpack.c.bf16 %v5108, %v5108
      %v5141 = vpack.c.bf16 %v5109, %v5109
      %v5142 = vpack.c.bf16 %v5110, %v5110
      %v5143 = vpack.c.bf16 %v5111, %v5111
      %v5144 = vpack.c.bf16 %v5112, %v5112
      %v5145 = vpack.c.bf16 %v5113, %v5113
      %v5146 = vpack.c.bf16 %v5114, %v5114
      %v5147 = vpack.c.bf16 %v5115, %v5115
      %v5148 = vpack.c.bf16 %v5116, %v5116
      %v5149 = vpack.c.bf16 %v5117, %v5117
      %v5150 = vpack.c.bf16 %v5118, %v5118
      %v5151 = vpack.c.bf16 %v5119, %v5119
      %v5152 = vpack.c.bf16 %v5120, %v5120
      %v5153 = vpack.c.bf16 %v5121, %v5121
      %v5154 = vpack.c.bf16 %v5122, %v5122
      %5155 = vst [vmem:[%s211] sm:$0xf] %v5123
      %5156 = vst [vmem:[%s211 + $0x4] sm:$0xf] %v5124
      %5157 = vst [vmem:[%s211 + $0x8] sm:$0xf] %v5125
      %5158 = vst [vmem:[%s211 + $0xc] sm:$0xf] %v5126
      %5159 = vst [vmem:[%s211 + $0x10] sm:$0xf] %v5127
      %5160 = vst [vmem:[%s211 + $0x14] sm:$0xf] %v5128
      %5161 = vst [vmem:[%s211 + $0x18] sm:$0xf] %v5129
      %5162 = vst [vmem:[%s211 + $0x1c] sm:$0xf] %v5130
      %5163 = vst [vmem:[%s211 + $0x20] sm:$0xf] %v5131
      %5164 = vst [vmem:[%s211 + $0x24] sm:$0xf] %v5132
      %5165 = vst [vmem:[%s211 + $0x28] sm:$0xf] %v5133
      %5166 = vst [vmem:[%s211 + $0x2c] sm:$0xf] %v5134
      %5167 = vst [vmem:[%s211 + $0x30] sm:$0xf] %v5135
      %5168 = vst [vmem:[%s211 + $0x34] sm:$0xf] %v5136
      %5169 = vst [vmem:[%s211 + $0x38] sm:$0xf] %v5137
      %5170 = vst [vmem:[%s211 + $0x3c] sm:$0xf] %v5138
      %5171 = vst [vmem:[%s211 + $0x40] sm:$0xf] %v5139
      %5172 = vst [vmem:[%s211 + $0x44] sm:$0xf] %v5140
      %5173 = vst [vmem:[%s211 + $0x48] sm:$0xf] %v5141
      %5174 = vst [vmem:[%s211 + $0x4c] sm:$0xf] %v5142
      %5175 = vst [vmem:[%s211 + $0x50] sm:$0xf] %v5143
      %5176 = vst [vmem:[%s211 + $0x54] sm:$0xf] %v5144
      %5177 = vst [vmem:[%s211 + $0x58] sm:$0xf] %v5145
      %5178 = vst [vmem:[%s211 + $0x5c] sm:$0xf] %v5146
      %5179 = vst [vmem:[%s211 + $0x60] sm:$0xf] %v5147
      %5180 = vst [vmem:[%s211 + $0x64] sm:$0xf] %v5148
      %5181 = vst [vmem:[%s211 + $0x68] sm:$0xf] %v5149
      %5182 = vst [vmem:[%s211 + $0x6c] sm:$0xf] %v5150
      %5183 = vst [vmem:[%s211 + $0x70] sm:$0xf] %v5151
      %5184 = vst [vmem:[%s211 + $0x74] sm:$0xf] %v5152
      %5185 = vst [vmem:[%s211 + $0x78] sm:$0xf] %v5153
      %5186 = vst [vmem:[%s211 + $0x7c] sm:$0xf] %v5154
      %v5187 = vadd.f32 %v5091, %v5092
      %v5188 = vadd.f32 %v5187, %v5093
      %v5189 = vadd.f32 %v5188, %v5094
      %v5190 = vadd.f32 %v5189, %v5095
      %v5191 = vadd.f32 %v5190, %v5096
      %v5192 = vadd.f32 %v5191, %v5097
      %v5193 = vadd.f32 %v5192, %v5098
      %v5194 = vadd.f32 %v5193, %v5099
      %v5195 = vadd.f32 %v5194, %v5100
      %v5196 = vadd.f32 %v5195, %v5101
      %v5197 = vadd.f32 %v5196, %v5102
      %v5198 = vadd.f32 %v5197, %v5103
      %v5199 = vadd.f32 %v5198, %v5104
      %v5200 = vadd.f32 %v5199, %v5105
      %v5201 = vadd.f32 %v5200, %v5106
      %v5202 = vadd.f32 %v5201, %v5107
      %v5203 = vadd.f32 %v5202, %v5108
      %v5204 = vadd.f32 %v5203, %v5109
      %v5205 = vadd.f32 %v5204, %v5110
      %v5206 = vadd.f32 %v5205, %v5111
      %v5207 = vadd.f32 %v5206, %v5112
      %v5208 = vadd.f32 %v5207, %v5113
      %v5209 = vadd.f32 %v5208, %v5114
      %v5210 = vadd.f32 %v5209, %v5115
      %v5211 = vadd.f32 %v5210, %v5116
      %v5212 = vadd.f32 %v5211, %v5117
      %v5213 = vadd.f32 %v5212, %v5118
      %v5214 = vadd.f32 %v5213, %v5119
      %v5215 = vadd.f32 %v5214, %v5120
      %v5216 = vadd.f32 %v5215, %v5121
      %v5217 = vadd.f32 %v5216, %v5122
      %v5218 = vrot.slane %v5217, 4
      %v5219 = vadd.f32 %v5217, %v5218
      %v5220 = vrot.slane %v5219, 2
      %v5221 = vadd.f32 %v5219, %v5220
      %v5222 = vrot.slane %v5221, 1
      %v5223 = vadd.f32 %v5221, %v5222
      %v5224 = vmul.f32 %v5091, %v5091
      %v5225 = vmul.f32 %v5092, %v5092
      %v5226 = vmul.f32 %v5093, %v5093
      %v5227 = vmul.f32 %v5094, %v5094
      %v5228 = vmul.f32 %v5095, %v5095
      %v5229 = vmul.f32 %v5096, %v5096
      %v5230 = vmul.f32 %v5097, %v5097
      %v5231 = vmul.f32 %v5098, %v5098
      %v5232 = vmul.f32 %v5099, %v5099
      %v5233 = vmul.f32 %v5100, %v5100
      %v5234 = vmul.f32 %v5101, %v5101
      %v5235 = vmul.f32 %v5102, %v5102
      %v5236 = vmul.f32 %v5103, %v5103
      %v5237 = vmul.f32 %v5104, %v5104
      %v5238 = vmul.f32 %v5105, %v5105
      %v5239 = vmul.f32 %v5106, %v5106
      %v5240 = vmul.f32 %v5107, %v5107
      %v5241 = vmul.f32 %v5108, %v5108
      %v5242 = vmul.f32 %v5109, %v5109
      %v5243 = vmul.f32 %v5110, %v5110
      %v5244 = vmul.f32 %v5111, %v5111
      %v5245 = vmul.f32 %v5112, %v5112
      %v5246 = vmul.f32 %v5113, %v5113
      %v5247 = vmul.f32 %v5114, %v5114
      %v5248 = vmul.f32 %v5115, %v5115
      %v5249 = vmul.f32 %v5116, %v5116
      %v5250 = vmul.f32 %v5117, %v5117
      %v5251 = vmul.f32 %v5118, %v5118
      %v5252 = vmul.f32 %v5119, %v5119
      %v5253 = vmul.f32 %v5120, %v5120
      %v5254 = vmul.f32 %v5121, %v5121
      %v5255 = vmul.f32 %v5122, %v5122
      %v5256 = vadd.f32 %v5224, %v5225
      %v5257 = vadd.f32 %v5256, %v5226
      %v5258 = vadd.f32 %v5257, %v5227
      %v5259 = vadd.f32 %v5258, %v5228
      %v5260 = vadd.f32 %v5259, %v5229
      %v5261 = vadd.f32 %v5260, %v5230
      %v5262 = vadd.f32 %v5261, %v5231
      %v5263 = vadd.f32 %v5262, %v5232
      %v5264 = vadd.f32 %v5263, %v5233
      %v5265 = vadd.f32 %v5264, %v5234
      %v5266 = vadd.f32 %v5265, %v5235
      %v5267 = vadd.f32 %v5266, %v5236
      %v5268 = vadd.f32 %v5267, %v5237
      %v5269 = vadd.f32 %v5268, %v5238
      %v5270 = vadd.f32 %v5269, %v5239
      %v5271 = vadd.f32 %v5270, %v5240
      %v5272 = vadd.f32 %v5271, %v5241
      %v5273 = vadd.f32 %v5272, %v5242
      %v5274 = vadd.f32 %v5273, %v5243
      %v5275 = vadd.f32 %v5274, %v5244
      %v5276 = vadd.f32 %v5275, %v5245
      %v5277 = vadd.f32 %v5276, %v5246
      %v5278 = vadd.f32 %v5277, %v5247
      %v5279 = vadd.f32 %v5278, %v5248
      %v5280 = vadd.f32 %v5279, %v5249
      %v5281 = vadd.f32 %v5280, %v5250
      %v5282 = vadd.f32 %v5281, %v5251
      %v5283 = vadd.f32 %v5282, %v5252
      %v5284 = vadd.f32 %v5283, %v5253
      %v5285 = vadd.f32 %v5284, %v5254
      %v5286 = vadd.f32 %v5285, %v5255
      %v5287 = vrot.slane %v5286, 4
      %v5288 = vadd.f32 %v5286, %v5287
      %v5289 = vrot.slane %v5288, 2
      %v5290 = vadd.f32 %v5288, %v5289
      %v5291 = vrot.slane %v5290, 1
      %v5292 = vadd.f32 %v5290, %v5291
      %vm5293 = vcmask 1040384
      %v5294 = vsel %vm5293, %v5223, %v5292
      %5295 = vst [vmem:[%s216] sm:$0x3] %v5294
      %s5296 = smul.u32 4, %s16
      %p5297 = scmp.lt.s32.totalorder %s5296, 7
      %s5298 = scalar_select %p5297, %s5296, 7
      %s5299 = smul.addr %s5298, 8
      %s5300 = smul.addr %s5299, 4
      %s5301 = scalar_lea.vmem %s3, %s5300
      %p5302 = scmp.lt.s32.totalorder %s16, 1
      %s5303 = scalar_select %p5302, %s16, 1
      %s5304 = smul.addr %s5303, 2
      %s5305 = scalar_lea.vmem %s4, %s5304
      // Predicated region
      $region33: #{_lambda_.4} parent=31 // pred_check
        %p5306 = pneg %p102
      $region34: #{_lambda_.4} parent=31 // pred_check_branch
        %5308 = sbr.rel (%p5306) target = $region36
      $region35: #{_lambda_.4} parent=31 // pred_region
        %s5309 = smul.u32 4, %s16
      $region36: #{_lambda_.4} parent=31 // pred_fallthru
        _
      // Predicated region
      $region37: #{_lambda_.4} parent=31 // pred_check
        %p5310 = pneg %p128
      $region38: #{_lambda_.4} parent=31 // pred_check_branch
        %5312 = sbr.rel (%p5310) target = $region40
      $region39: #{_lambda_.4} parent=31 // pred_region
        _
      $region40: #{_lambda_.4} parent=31 // pred_fallthru
        _
    $region32: #{_lambda_.4} parent=5 // pred_fallthru
      _
    %p5313 = scmp.le.s32.totalorder 2, %s11
    // Predicated region
    $region41: #{_lambda_.4} parent=5 // pred_check
      %p5314 = pneg %p5313
    $region42: #{_lambda_.4} parent=5 // pred_check_branch
      %5316 = sbr.rel (%p5314) target = $region44
    $region43: #{_lambda_.4} parent=5 // pred_region
      %s5317 = ssub.s32 %s11, 2
      // Predicated region
      $region45: #{_lambda_.4} parent=43 // pred_check
        %p5318 = pneg %p108
      $region46: #{_lambda_.4} parent=43 // pred_check_branch
        %5320 = sbr.rel (%p5318) target = $region48
      $region47: #{_lambda_.4} parent=43 // pred_region
        %s5321 = smul.u32 4, %s17
        %p5322 = scmp.lt.s32.totalorder %s5321, 7
        %s5323 = scalar_select %p5322, %s5321, 7
        %s5324 = smul.addr %s5323, 8
        %s5325 = smul.addr %s5324, 4
        %s5326 = scalar_lea.vmem %s3, %s5325
      $region48: #{_lambda_.4} parent=43 // pred_fallthru
        _
      // Predicated region
      $region49: #{_lambda_.4} parent=43 // pred_check
        %p5327 = pneg %p134
      $region50: #{_lambda_.4} parent=43 // pred_check_branch
        %5329 = sbr.rel (%p5327) target = $region52
      $region51: #{_lambda_.4} parent=43 // pred_region
        %p5330 = scmp.lt.s32.totalorder %s17, 1
        %s5331 = scalar_select %p5330, %s17, 1
        %s5332 = smul.addr %s5331, 2
        %s5333 = scalar_lea.vmem %s4, %s5332
      $region52: #{_lambda_.4} parent=43 // pred_fallthru
        _
    $region44: #{_lambda_.4} parent=5 // pred_fallthru
      _
  $region6: #{_lambda_.4} parent=0 // loop_footer
    %s15 = sadd.s32 1, %s11
  $region7: #{_lambda_.4} parent=0 // loop_footer_branch
    %10 = sbr.rel target = $region3
  $region8: #{_lambda_.4} parent=0 // loop_exit
    _

</llo_original>
